<compile_context>
chip_gen: v7x
topology: tpu7x:2x2x1
jax: 0.10.0
libtpu: 0.0.40
codegen_flags: <defaults>
</compile_context>

<pallas_src>
import math
import functools

import numpy as np
import jax
import jax.numpy as jnp
from jax.experimental import pallas as pl
from jax.experimental.pallas import tpu as pltpu


# ----------------------------- model hyper-params ---------------------------
VOCAB = 4
DIM = 64
DEPTH = 5
KERNEL_SIZE = 7              # depthwise mixer kernel
PATCH_SIZE = 7               # patch-embed kernel
PATCH_STRIDE = PATCH_SIZE - 2  # = 5 (stride = patch_size - 2 in the module)
ADAPTOUT = 7
N_CLASSES = 100
CLS_HIDDEN = 1000

# lane-dense padded head dims (zero-padded -> mathematically identical)
HID_PAD = 1024               # 1000 -> 1024
OUT_PAD = 128                # 100  -> 128 (extra columns sliced off outside)


# ------------------------------- fused kernel -------------------------------
def _convmixer_kernel(patches_ref, pe_w_ref, pe_b_ref,
                      dw_w_ref, dw_b_ref, pw_w_ref, pw_b_ref,
                      pool_ref, w1_ref, b1_ref, w2_ref, b2_ref,
                      out_ref, pad_ref,
                      *, B, L, dim, depth, k2, adaptout):
    pad = k2 // 2

    # zero the padded depthwise scratch once; only its centre rows are
    # rewritten each layer, so the halo rows stay zero (Conv1d zero padding).
    pad_ref[...] = jnp.zeros_like(pad_ref)

    # ---- patch embedding: Conv1d(vocab->dim, k=7, s=5) as im2col matmul + ReLU
    x_all = jnp.dot(patches_ref[...].astype(jnp.bfloat16), pe_w_ref[...],
                    preferred_element_type=jnp.float32)
    x_all = jnp.maximum(x_all + pe_b_ref[...], 0.0)            # (B*L, dim)

    # ---- per-batch mixer blocks, pooling and head (B is tiny and static) ----
    for b in range(B):
        xb = x_all[b * L:(b + 1) * L, :]                       # (L, dim)

        for l in range(depth):
            # depthwise Conv1d(k=7, groups=dim, padding=3) + ReLU, residual add
            pad_ref[pad:pad + L, :] = xb
            wl = dw_w_ref[l]                                   # (k2, dim) f32
            acc = jnp.zeros((L, dim), jnp.float32) + dw_b_ref[l:l + 1, :]
            for k in range(k2):
                acc = acc + pad_ref[k:k + L, :] * wl[k:k + 1, :]
            xb = jnp.maximum(acc, 0.0) + xb                    # Residual

            # pointwise Conv1d(k=1) + ReLU  (bf16 MXU operands, f32 accumulate)
            y = jnp.dot(xb.astype(jnp.bfloat16), pw_w_ref[l],
                        preferred_element_type=jnp.float32)
            xb = jnp.maximum(y + pw_b_ref[l:l + 1, :], 0.0)

        # AdaptiveAvgPool1d(adaptout) along time as a small pooling matmul
        pooled = jnp.dot(pool_ref[...], xb,
                         preferred_element_type=jnp.float32)   # (adaptout, dim)

        # head: Linear(dim*adaptout, 1000) + ReLU + Linear(1000, 100) + Sigmoid
        # (first Linear as a sum of per-time-step matmuls -> no in-kernel flatten)
        h1 = jnp.zeros((1, w1_ref.shape[-1]), jnp.float32)
        for t in range(adaptout):
            h1 = h1 + jnp.dot(pooled[t:t + 1, :].astype(jnp.bfloat16),
                              w1_ref[t], preferred_element_type=jnp.float32)
        h1 = jnp.maximum(h1 + b1_ref[...], 0.0)
        o = jnp.dot(h1.astype(jnp.bfloat16), w2_ref[...],
                    preferred_element_type=jnp.float32) + b2_ref[...]
        out_ref[b:b + 1, :] = jax.nn.sigmoid(o)


# ------------------------------- JAX glue ------------------------------------
def _adaptive_pool_matrix(L, out):
    """Exact nn.AdaptiveAvgPool1d averaging matrix, shape (out, L)."""
    P = np.zeros((out, L), np.float32)
    for o in range(out):
        s = (o * L) // out
        e = -(-((o + 1) * L) // out)          # ceil division
        P[o, s:e] = 1.0 / float(e - s)
    return jnp.asarray(P)


def _im2col_1d(x, kernel_size, stride):
    """x: (B, L_in, C) channels-last -> (B*L_out, kernel_size*C), (k, c) order."""
    B, L_in, C = x.shape
    L_out = (L_in - kernel_size) // stride + 1
    cols = [x[:, t * stride:t * stride + kernel_size, :].reshape(B, kernel_size * C)
            for t in range(L_out)]
    return jnp.stack(cols, axis=1).reshape(B * L_out, kernel_size * C), L_out


def init_params(key):
    ks = jax.random.split(key, 10)
    kc = PATCH_SIZE * VOCAB

    def nrm(k, shape, fan_in):
        return jax.random.normal(k, shape, jnp.float32) / math.sqrt(fan_in)

    # patch-embed Conv1d weight, im2col layout: pe_w[k*vocab + c, cout]
    pe_w = nrm(ks[0], (kc, DIM), kc).astype(jnp.bfloat16)
    pe_b = 0.01 * jax.random.normal(ks[1], (1, DIM), jnp.float32)

    # depthwise convs: dw_w[l, k, c] (<-> torch weight[c, 0, k]); VPU path -> f32
    dw_w = nrm(ks[2], (DEPTH, KERNEL_SIZE, DIM), KERNEL_SIZE)
    dw_b = 0.01 * jax.random.normal(ks[3], (DEPTH, DIM), jnp.float32)

    # pointwise convs: pw_w[l, cin, cout] (<-> torch weight[cout, cin, 0].T)
    pw_w = nrm(ks[4], (DEPTH, DIM, DIM), DIM).astype(jnp.bfloat16)
    pw_b = 0.01 * jax.random.normal(ks[5], (DEPTH, DIM), jnp.float32)

    # head Linear(dim*adaptout, 1000): stored as (adaptout, dim, HID_PAD) with
    # w1[t, c, n] == torch_w1[n, c*adaptout + t]; hidden cols >= 1000 are zero.
    w1 = nrm(ks[6], (ADAPTOUT, DIM, HID_PAD), DIM * ADAPTOUT)
    w1 = w1.at[:, :, CLS_HIDDEN:].set(0.0).astype(jnp.bfloat16)
    b1 = 0.01 * jax.random.normal(ks[7], (1, HID_PAD), jnp.float32)
    b1 = b1.at[:, CLS_HIDDEN:].set(0.0)

    # head Linear(1000, 100): padded to (HID_PAD, OUT_PAD) with zeros
    w2 = nrm(ks[8], (HID_PAD, OUT_PAD), CLS_HIDDEN)
    w2 = w2.at[CLS_HIDDEN:, :].set(0.0)
    w2 = w2.at[:, N_CLASSES:].set(0.0).astype(jnp.bfloat16)
    b2 = 0.01 * jax.random.normal(ks[9], (1, OUT_PAD), jnp.float32)
    b2 = b2.at[:, N_CLASSES:].set(0.0)

    return dict(pe_w=pe_w, pe_b=pe_b, dw_w=dw_w, dw_b=dw_b,
                pw_w=pw_w, pw_b=pw_b, w1=w1, b1=b1, w2=w2, b2=b2)


def convmixer_forward(x, params):
    B = x.shape[0]
    patches, L = _im2col_1d(x, PATCH_SIZE, PATCH_STRIDE)       # (B*L, K*vocab)
    pool = _adaptive_pool_matrix(L, ADAPTOUT)                  # (adaptout, L)

    kernel = functools.partial(_convmixer_kernel, B=B, L=L, dim=DIM,
                               depth=DEPTH, k2=KERNEL_SIZE, adaptout=ADAPTOUT)

    def full(nd):
        return lambda i: (0,) * nd

    out = pl.pallas_call(
        kernel,
        out_shape=jax.ShapeDtypeStruct((B, OUT_PAD), jnp.float32),
        grid=(1,),
        in_specs=[
            pl.BlockSpec(patches.shape, full(2)),
            pl.BlockSpec(params["pe_w"].shape, full(2)),
            pl.BlockSpec(params["pe_b"].shape, full(2)),
            pl.BlockSpec(params["dw_w"].shape, full(3)),
            pl.BlockSpec(params["dw_b"].shape, full(2)),
            pl.BlockSpec(params["pw_w"].shape, full(3)),
            pl.BlockSpec(params["pw_b"].shape, full(2)),
            pl.BlockSpec(pool.shape, full(2)),
            pl.BlockSpec(params["w1"].shape, full(3)),
            pl.BlockSpec(params["b1"].shape, full(2)),
            pl.BlockSpec(params["w2"].shape, full(2)),
            pl.BlockSpec(params["b2"].shape, full(2)),
        ],
        out_specs=pl.BlockSpec((B, OUT_PAD), full(2)),
        scratch_shapes=[
            pltpu.VMEM((L + 2 * (KERNEL_SIZE // 2), DIM), jnp.float32),
        ],
        compiler_params=pltpu.CompilerParams(
            dimension_semantics=("arbitrary",)),
    )(patches, params["pe_w"], params["pe_b"],
      params["dw_w"], params["dw_b"], params["pw_w"], params["pw_b"],
      pool, params["w1"], params["b1"], params["w2"], params["b2"])

    return out[:, :N_CLASSES]


if __name__ == "__main__":
    # ConvMixer defaults: vocab=4, dim=64, depth=5, kernel_size=7, patch_size=7,
    # adaptout=7, n_classes=100.  Input is (B, L, vocab) channels-last
    # (the module transposes to NCL internally).  L=72 -> L_out = (72-7)//5+1 = 14.
    B, L_IN = 2, 72

    key = jax.random.PRNGKey(0)
    k_in, k_par = jax.random.split(key)
    x = jax.random.normal(k_in, (B, L_IN, VOCAB), jnp.float32)
    params = init_params(k_par)

    out = convmixer_forward(x, params)
    out = jax.block_until_ready(out)

    assert out.shape == (B, N_CLASSES), out.shape
    assert bool(jnp.all(jnp.isfinite(out)))
    assert bool(jnp.all((out >= 0.0) & (out <= 1.0)))   # sigmoid output range
    print("KERNEL_OK")
</pallas_src>

<mosaic_0001>
module attributes {stable_mosaic.version = 11 : i64} {
  func.func @_convmixer_kernel(%arg0: i32, %arg1: memref<28x28xf32, #tpu.memory_space<vmem>>, %arg2: memref<28x64xbf16, #tpu.memory_space<vmem>>, %arg3: memref<1x64xf32, #tpu.memory_space<vmem>>, %arg4: memref<5x7x64xf32, #tpu.memory_space<vmem>>, %arg5: memref<5x64xf32, #tpu.memory_space<vmem>>, %arg6: memref<5x64x64xbf16, #tpu.memory_space<vmem>>, %arg7: memref<5x64xf32, #tpu.memory_space<vmem>>, %arg8: memref<7x14xf32, #tpu.memory_space<vmem>>, %arg9: memref<7x64x1024xbf16, #tpu.memory_space<vmem>>, %arg10: memref<1x1024xf32, #tpu.memory_space<vmem>>, %arg11: memref<1024x128xbf16, #tpu.memory_space<vmem>>, %arg12: memref<1x128xf32, #tpu.memory_space<vmem>>, %arg13: memref<2x128xf32, #tpu.memory_space<vmem>>, %arg14: memref<20x64xf32, #tpu.memory_space<vmem>>) attributes {dimension_semantics = [#tpu.dimension_semantics<arbitrary>], iteration_bounds = array<i64: 1>, scalar_prefetch = 0 : i64, scratch_operands = 1 : i64, tpu.core_type = #tpu.core_type<tc>, window_params = [{pipeline_mode = #tpu.pipeline_mode<synchronous>, transform_indices = @transform_0, window_bounds = array<i64: 28, 28>}, {pipeline_mode = #tpu.pipeline_mode<synchronous>, transform_indices = @transform_1, window_bounds = array<i64: 28, 64>}, {pipeline_mode = #tpu.pipeline_mode<synchronous>, transform_indices = @transform_2, window_bounds = array<i64: 1, 64>}, {pipeline_mode = #tpu.pipeline_mode<synchronous>, transform_indices = @transform_3, window_bounds = array<i64: 5, 7, 64>}, {pipeline_mode = #tpu.pipeline_mode<synchronous>, transform_indices = @transform_4, window_bounds = array<i64: 5, 64>}, {pipeline_mode = #tpu.pipeline_mode<synchronous>, transform_indices = @transform_5, window_bounds = array<i64: 5, 64, 64>}, {pipeline_mode = #tpu.pipeline_mode<synchronous>, transform_indices = @transform_6, window_bounds = array<i64: 5, 64>}, {pipeline_mode = #tpu.pipeline_mode<synchronous>, transform_indices = @transform_7, window_bounds = array<i64: 7, 14>}, {pipeline_mode = #tpu.pipeline_mode<synchronous>, transform_indices = @transform_8, window_bounds = array<i64: 7, 64, 1024>}, {pipeline_mode = #tpu.pipeline_mode<synchronous>, transform_indices = @transform_9, window_bounds = array<i64: 1, 1024>}, {pipeline_mode = #tpu.pipeline_mode<synchronous>, transform_indices = @transform_10, window_bounds = array<i64: 1024, 128>}, {pipeline_mode = #tpu.pipeline_mode<synchronous>, transform_indices = @transform_11, window_bounds = array<i64: 1, 128>}, {pipeline_mode = #tpu.pipeline_mode<synchronous>, transform_indices = @transform_12, window_bounds = array<i64: 2, 128>}]} {
    %cst = arith.constant 0.000000e+00 : f32
    %0 = vector.broadcast %cst : f32 to vector<20x64xf32>
    %c0 = arith.constant 0 : index
    %c0_0 = arith.constant 0 : index
    %1 = vector.load %arg14[%c0, %c0_0] : memref<20x64xf32, #tpu.memory_space<vmem>>, vector<20x64xf32>
    tpu.vector_store %arg14[%c0, %c0_0], %0 {strides = array<i32>} : memref<20x64xf32, #tpu.memory_space<vmem>>, vector<20x64xf32>,
    %c0_1 = arith.constant 0 : index
    %c0_2 = arith.constant 0 : index
    %2 = vector.load %arg1[%c0_1, %c0_2] : memref<28x28xf32, #tpu.memory_space<vmem>>, vector<28x28xf32>
    %3 = arith.truncf %2 : vector<28x28xf32> to vector<28x28xbf16>
    %c0_3 = arith.constant 0 : index
    %c0_4 = arith.constant 0 : index
    %4 = vector.load %arg2[%c0_3, %c0_4] : memref<28x64xbf16, #tpu.memory_space<vmem>>, vector<28x64xbf16>
    %cst_5 = arith.constant dense<0.000000e+00> : vector<28x64xf32>
    %5 = tpu.matmul %3, %4, %cst_5 {dimension_numbers = #tpu.dot_dimension_numbers<[1], [0], [0], [1], [0, 0, 1, 1], [], []>} : vector<28x28xbf16>, vector<28x64xbf16>, vector<28x64xf32> -> vector<28x64xf32>
    %c0_6 = arith.constant 0 : index
    %c0_7 = arith.constant 0 : index
    %6 = vector.load %arg3[%c0_6, %c0_7] : memref<1x64xf32, #tpu.memory_space<vmem>>, vector<1x64xf32>
    %7 = vector.broadcast %6 : vector<1x64xf32> to vector<28x64xf32>
    %8 = arith.addf %5, %7 : vector<28x64xf32>
    %cst_8 = arith.constant 0.000000e+00 : f32
    %9 = vector.broadcast %cst_8 : f32 to vector<28x64xf32>
    %10 = arith.maximumf %8, %9 : vector<28x64xf32>
    %11 = vector.extract_strided_slice %10 {offsets = [0, 0], sizes = [14, 64], strides = [1, 1]} : vector<28x64xf32> to vector<14x64xf32>
    %c3 = arith.constant 3 : index
    %c0_9 = arith.constant 0 : index
    %12 = vector.load %arg14[%c3, %c0_9] : memref<20x64xf32, #tpu.memory_space<vmem>>, vector<14x64xf32>
    tpu.vector_store %arg14[%c3, %c0_9], %11 {strides = array<i32>} : memref<20x64xf32, #tpu.memory_space<vmem>>, vector<14x64xf32>,
    %c0_10 = arith.constant 0 : index
    %c0_11 = arith.constant 0 : index
    %c0_12 = arith.constant 0 : index
    %13 = vector.load %arg4[%c0_10, %c0_11, %c0_12] : memref<5x7x64xf32, #tpu.memory_space<vmem>>, vector<1x7x64xf32>
    %14 = vector.shape_cast %13 : vector<1x7x64xf32> to vector<7x64xf32>
    %cst_13 = arith.constant 0.000000e+00 : f32
    %15 = vector.broadcast %cst_13 : f32 to vector<14x64xf32>
    %c0_14 = arith.constant 0 : index
    %c0_15 = arith.constant 0 : index
    %16 = vector.load %arg5[%c0_14, %c0_15] : memref<5x64xf32, #tpu.memory_space<vmem>>, vector<1x64xf32>
    %17 = vector.broadcast %16 : vector<1x64xf32> to vector<14x64xf32>
    %18 = arith.addf %15, %17 : vector<14x64xf32>
    %c0_16 = arith.constant 0 : index
    %c0_17 = arith.constant 0 : index
    %19 = vector.load %arg14[%c0_16, %c0_17] : memref<20x64xf32, #tpu.memory_space<vmem>>, vector<14x64xf32>
    %20 = vector.extract_strided_slice %14 {offsets = [0, 0], sizes = [1, 64], strides = [1, 1]} : vector<7x64xf32> to vector<1x64xf32>
    %21 = vector.broadcast %20 : vector<1x64xf32> to vector<14x64xf32>
    %22 = arith.mulf %19, %21 : vector<14x64xf32>
    %23 = arith.addf %18, %22 : vector<14x64xf32>
    %c1 = arith.constant 1 : index
    %c0_18 = arith.constant 0 : index
    %24 = vector.load %arg14[%c1, %c0_18] : memref<20x64xf32, #tpu.memory_space<vmem>>, vector<14x64xf32>
    %25 = vector.extract_strided_slice %14 {offsets = [1, 0], sizes = [1, 64], strides = [1, 1]} : vector<7x64xf32> to vector<1x64xf32>
    %26 = vector.broadcast %25 : vector<1x64xf32> to vector<14x64xf32>
    %27 = arith.mulf %24, %26 : vector<14x64xf32>
    %28 = arith.addf %23, %27 : vector<14x64xf32>
    %c2 = arith.constant 2 : index
    %c0_19 = arith.constant 0 : index
    %29 = vector.load %arg14[%c2, %c0_19] : memref<20x64xf32, #tpu.memory_space<vmem>>, vector<14x64xf32>
    %30 = vector.extract_strided_slice %14 {offsets = [2, 0], sizes = [1, 64], strides = [1, 1]} : vector<7x64xf32> to vector<1x64xf32>
    %31 = vector.broadcast %30 : vector<1x64xf32> to vector<14x64xf32>
    %32 = arith.mulf %29, %31 : vector<14x64xf32>
    %33 = arith.addf %28, %32 : vector<14x64xf32>
    %c3_20 = arith.constant 3 : index
    %c0_21 = arith.constant 0 : index
    %34 = vector.load %arg14[%c3_20, %c0_21] : memref<20x64xf32, #tpu.memory_space<vmem>>, vector<14x64xf32>
    %35 = vector.extract_strided_slice %14 {offsets = [3, 0], sizes = [1, 64], strides = [1, 1]} : vector<7x64xf32> to vector<1x64xf32>
    %36 = vector.broadcast %35 : vector<1x64xf32> to vector<14x64xf32>
    %37 = arith.mulf %34, %36 : vector<14x64xf32>
    %38 = arith.addf %33, %37 : vector<14x64xf32>
    %c4 = arith.constant 4 : index
    %c0_22 = arith.constant 0 : index
    %39 = vector.load %arg14[%c4, %c0_22] : memref<20x64xf32, #tpu.memory_space<vmem>>, vector<14x64xf32>
    %40 = vector.extract_strided_slice %14 {offsets = [4, 0], sizes = [1, 64], strides = [1, 1]} : vector<7x64xf32> to vector<1x64xf32>
    %41 = vector.broadcast %40 : vector<1x64xf32> to vector<14x64xf32>
    %42 = arith.mulf %39, %41 : vector<14x64xf32>
    %43 = arith.addf %38, %42 : vector<14x64xf32>
    %c5 = arith.constant 5 : index
    %c0_23 = arith.constant 0 : index
    %44 = vector.load %arg14[%c5, %c0_23] : memref<20x64xf32, #tpu.memory_space<vmem>>, vector<14x64xf32>
    %45 = vector.extract_strided_slice %14 {offsets = [5, 0], sizes = [1, 64], strides = [1, 1]} : vector<7x64xf32> to vector<1x64xf32>
    %46 = vector.broadcast %45 : vector<1x64xf32> to vector<14x64xf32>
    %47 = arith.mulf %44, %46 : vector<14x64xf32>
    %48 = arith.addf %43, %47 : vector<14x64xf32>
    %c6 = arith.constant 6 : index
    %c0_24 = arith.constant 0 : index
    %49 = vector.load %arg14[%c6, %c0_24] : memref<20x64xf32, #tpu.memory_space<vmem>>, vector<14x64xf32>
    %50 = vector.extract_strided_slice %14 {offsets = [6, 0], sizes = [1, 64], strides = [1, 1]} : vector<7x64xf32> to vector<1x64xf32>
    %51 = vector.broadcast %50 : vector<1x64xf32> to vector<14x64xf32>
    %52 = arith.mulf %49, %51 : vector<14x64xf32>
    %53 = arith.addf %48, %52 : vector<14x64xf32>
    %cst_25 = arith.constant 0.000000e+00 : f32
    %54 = vector.broadcast %cst_25 : f32 to vector<14x64xf32>
    %55 = arith.maximumf %53, %54 : vector<14x64xf32>
    %56 = arith.addf %55, %11 : vector<14x64xf32>
    %57 = arith.truncf %56 : vector<14x64xf32> to vector<14x64xbf16>
    %c0_26 = arith.constant 0 : index
    %c0_27 = arith.constant 0 : index
    %c0_28 = arith.constant 0 : index
    %58 = vector.load %arg6[%c0_26, %c0_27, %c0_28] : memref<5x64x64xbf16, #tpu.memory_space<vmem>>, vector<1x64x64xbf16>
    %59 = vector.shape_cast %58 : vector<1x64x64xbf16> to vector<64x64xbf16>
    %cst_29 = arith.constant dense<0.000000e+00> : vector<14x64xf32>
    %60 = tpu.matmul %57, %59, %cst_29 {dimension_numbers = #tpu.dot_dimension_numbers<[1], [0], [0], [1], [0, 0, 1, 1], [], []>} : vector<14x64xbf16>, vector<64x64xbf16>, vector<14x64xf32> -> vector<14x64xf32>
    %c0_30 = arith.constant 0 : index
    %c0_31 = arith.constant 0 : index
    %61 = vector.load %arg7[%c0_30, %c0_31] : memref<5x64xf32, #tpu.memory_space<vmem>>, vector<1x64xf32>
    %62 = vector.broadcast %61 : vector<1x64xf32> to vector<14x64xf32>
    %63 = arith.addf %60, %62 : vector<14x64xf32>
    %cst_32 = arith.constant 0.000000e+00 : f32
    %64 = vector.broadcast %cst_32 : f32 to vector<14x64xf32>
    %65 = arith.maximumf %63, %64 : vector<14x64xf32>
    %c3_33 = arith.constant 3 : index
    %c0_34 = arith.constant 0 : index
    %66 = vector.load %arg14[%c3_33, %c0_34] : memref<20x64xf32, #tpu.memory_space<vmem>>, vector<14x64xf32>
    tpu.vector_store %arg14[%c3_33, %c0_34], %65 {strides = array<i32>} : memref<20x64xf32, #tpu.memory_space<vmem>>, vector<14x64xf32>,
    %c1_35 = arith.constant 1 : index
    %c0_36 = arith.constant 0 : index
    %c0_37 = arith.constant 0 : index
    %67 = vector.load %arg4[%c1_35, %c0_36, %c0_37] : memref<5x7x64xf32, #tpu.memory_space<vmem>>, vector<1x7x64xf32>
    %68 = vector.shape_cast %67 : vector<1x7x64xf32> to vector<7x64xf32>
    %cst_38 = arith.constant 0.000000e+00 : f32
    %69 = vector.broadcast %cst_38 : f32 to vector<14x64xf32>
    %c1_39 = arith.constant 1 : index
    %c0_40 = arith.constant 0 : index
    %70 = vector.load %arg5[%c1_39, %c0_40] : memref<5x64xf32, #tpu.memory_space<vmem>>, vector<1x64xf32>
    %71 = vector.broadcast %70 : vector<1x64xf32> to vector<14x64xf32>
    %72 = arith.addf %69, %71 : vector<14x64xf32>
    %c0_41 = arith.constant 0 : index
    %c0_42 = arith.constant 0 : index
    %73 = vector.load %arg14[%c0_41, %c0_42] : memref<20x64xf32, #tpu.memory_space<vmem>>, vector<14x64xf32>
    %74 = vector.extract_strided_slice %68 {offsets = [0, 0], sizes = [1, 64], strides = [1, 1]} : vector<7x64xf32> to vector<1x64xf32>
    %75 = vector.broadcast %74 : vector<1x64xf32> to vector<14x64xf32>
    %76 = arith.mulf %73, %75 : vector<14x64xf32>
    %77 = arith.addf %72, %76 : vector<14x64xf32>
    %c1_43 = arith.constant 1 : index
    %c0_44 = arith.constant 0 : index
    %78 = vector.load %arg14[%c1_43, %c0_44] : memref<20x64xf32, #tpu.memory_space<vmem>>, vector<14x64xf32>
    %79 = vector.extract_strided_slice %68 {offsets = [1, 0], sizes = [1, 64], strides = [1, 1]} : vector<7x64xf32> to vector<1x64xf32>
    %80 = vector.broadcast %79 : vector<1x64xf32> to vector<14x64xf32>
    %81 = arith.mulf %78, %80 : vector<14x64xf32>
    %82 = arith.addf %77, %81 : vector<14x64xf32>
    %c2_45 = arith.constant 2 : index
    %c0_46 = arith.constant 0 : index
    %83 = vector.load %arg14[%c2_45, %c0_46] : memref<20x64xf32, #tpu.memory_space<vmem>>, vector<14x64xf32>
    %84 = vector.extract_strided_slice %68 {offsets = [2, 0], sizes = [1, 64], strides = [1, 1]} : vector<7x64xf32> to vector<1x64xf32>
    %85 = vector.broadcast %84 : vector<1x64xf32> to vector<14x64xf32>
    %86 = arith.mulf %83, %85 : vector<14x64xf32>
    %87 = arith.addf %82, %86 : vector<14x64xf32>
    %c3_47 = arith.constant 3 : index
    %c0_48 = arith.constant 0 : index
    %88 = vector.load %arg14[%c3_47, %c0_48] : memref<20x64xf32, #tpu.memory_space<vmem>>, vector<14x64xf32>
    %89 = vector.extract_strided_slice %68 {offsets = [3, 0], sizes = [1, 64], strides = [1, 1]} : vector<7x64xf32> to vector<1x64xf32>
    %90 = vector.broadcast %89 : vector<1x64xf32> to vector<14x64xf32>
    %91 = arith.mulf %88, %90 : vector<14x64xf32>
    %92 = arith.addf %87, %91 : vector<14x64xf32>
    %c4_49 = arith.constant 4 : index
    %c0_50 = arith.constant 0 : index
    %93 = vector.load %arg14[%c4_49, %c0_50] : memref<20x64xf32, #tpu.memory_space<vmem>>, vector<14x64xf32>
    %94 = vector.extract_strided_slice %68 {offsets = [4, 0], sizes = [1, 64], strides = [1, 1]} : vector<7x64xf32> to vector<1x64xf32>
    %95 = vector.broadcast %94 : vector<1x64xf32> to vector<14x64xf32>
    %96 = arith.mulf %93, %95 : vector<14x64xf32>
    %97 = arith.addf %92, %96 : vector<14x64xf32>
    %c5_51 = arith.constant 5 : index
    %c0_52 = arith.constant 0 : index
    %98 = vector.load %arg14[%c5_51, %c0_52] : memref<20x64xf32, #tpu.memory_space<vmem>>, vector<14x64xf32>
    %99 = vector.extract_strided_slice %68 {offsets = [5, 0], sizes = [1, 64], strides = [1, 1]} : vector<7x64xf32> to vector<1x64xf32>
    %100 = vector.broadcast %99 : vector<1x64xf32> to vector<14x64xf32>
    %101 = arith.mulf %98, %100 : vector<14x64xf32>
    %102 = arith.addf %97, %101 : vector<14x64xf32>
    %c6_53 = arith.constant 6 : index
    %c0_54 = arith.constant 0 : index
    %103 = vector.load %arg14[%c6_53, %c0_54] : memref<20x64xf32, #tpu.memory_space<vmem>>, vector<14x64xf32>
    %104 = vector.extract_strided_slice %68 {offsets = [6, 0], sizes = [1, 64], strides = [1, 1]} : vector<7x64xf32> to vector<1x64xf32>
    %105 = vector.broadcast %104 : vector<1x64xf32> to vector<14x64xf32>
    %106 = arith.mulf %103, %105 : vector<14x64xf32>
    %107 = arith.addf %102, %106 : vector<14x64xf32>
    %cst_55 = arith.constant 0.000000e+00 : f32
    %108 = vector.broadcast %cst_55 : f32 to vector<14x64xf32>
    %109 = arith.maximumf %107, %108 : vector<14x64xf32>
    %110 = arith.addf %109, %65 : vector<14x64xf32>
    %111 = arith.truncf %110 : vector<14x64xf32> to vector<14x64xbf16>
    %c1_56 = arith.constant 1 : index
    %c0_57 = arith.constant 0 : index
    %c0_58 = arith.constant 0 : index
    %112 = vector.load %arg6[%c1_56, %c0_57, %c0_58] : memref<5x64x64xbf16, #tpu.memory_space<vmem>>, vector<1x64x64xbf16>
    %113 = vector.shape_cast %112 : vector<1x64x64xbf16> to vector<64x64xbf16>
    %cst_59 = arith.constant dense<0.000000e+00> : vector<14x64xf32>
    %114 = tpu.matmul %111, %113, %cst_59 {dimension_numbers = #tpu.dot_dimension_numbers<[1], [0], [0], [1], [0, 0, 1, 1], [], []>} : vector<14x64xbf16>, vector<64x64xbf16>, vector<14x64xf32> -> vector<14x64xf32>
    %c1_60 = arith.constant 1 : index
    %c0_61 = arith.constant 0 : index
    %115 = vector.load %arg7[%c1_60, %c0_61] : memref<5x64xf32, #tpu.memory_space<vmem>>, vector<1x64xf32>
    %116 = vector.broadcast %115 : vector<1x64xf32> to vector<14x64xf32>
    %117 = arith.addf %114, %116 : vector<14x64xf32>
    %cst_62 = arith.constant 0.000000e+00 : f32
    %118 = vector.broadcast %cst_62 : f32 to vector<14x64xf32>
    %119 = arith.maximumf %117, %118 : vector<14x64xf32>
    %c3_63 = arith.constant 3 : index
    %c0_64 = arith.constant 0 : index
    %120 = vector.load %arg14[%c3_63, %c0_64] : memref<20x64xf32, #tpu.memory_space<vmem>>, vector<14x64xf32>
    tpu.vector_store %arg14[%c3_63, %c0_64], %119 {strides = array<i32>} : memref<20x64xf32, #tpu.memory_space<vmem>>, vector<14x64xf32>,
    %c2_65 = arith.constant 2 : index
    %c0_66 = arith.constant 0 : index
    %c0_67 = arith.constant 0 : index
    %121 = vector.load %arg4[%c2_65, %c0_66, %c0_67] : memref<5x7x64xf32, #tpu.memory_space<vmem>>, vector<1x7x64xf32>
    %122 = vector.shape_cast %121 : vector<1x7x64xf32> to vector<7x64xf32>
    %cst_68 = arith.constant 0.000000e+00 : f32
    %123 = vector.broadcast %cst_68 : f32 to vector<14x64xf32>
    %c2_69 = arith.constant 2 : index
    %c0_70 = arith.constant 0 : index
    %124 = vector.load %arg5[%c2_69, %c0_70] : memref<5x64xf32, #tpu.memory_space<vmem>>, vector<1x64xf32>
    %125 = vector.broadcast %124 : vector<1x64xf32> to vector<14x64xf32>
    %126 = arith.addf %123, %125 : vector<14x64xf32>
    %c0_71 = arith.constant 0 : index
    %c0_72 = arith.constant 0 : index
    %127 = vector.load %arg14[%c0_71, %c0_72] : memref<20x64xf32, #tpu.memory_space<vmem>>, vector<14x64xf32>
    %128 = vector.extract_strided_slice %122 {offsets = [0, 0], sizes = [1, 64], strides = [1, 1]} : vector<7x64xf32> to vector<1x64xf32>
    %129 = vector.broadcast %128 : vector<1x64xf32> to vector<14x64xf32>
    %130 = arith.mulf %127, %129 : vector<14x64xf32>
    %131 = arith.addf %126, %130 : vector<14x64xf32>
    %c1_73 = arith.constant 1 : index
    %c0_74 = arith.constant 0 : index
    %132 = vector.load %arg14[%c1_73, %c0_74] : memref<20x64xf32, #tpu.memory_space<vmem>>, vector<14x64xf32>
    %133 = vector.extract_strided_slice %122 {offsets = [1, 0], sizes = [1, 64], strides = [1, 1]} : vector<7x64xf32> to vector<1x64xf32>
    %134 = vector.broadcast %133 : vector<1x64xf32> to vector<14x64xf32>
    %135 = arith.mulf %132, %134 : vector<14x64xf32>
    %136 = arith.addf %131, %135 : vector<14x64xf32>
    %c2_75 = arith.constant 2 : index
    %c0_76 = arith.constant 0 : index
    %137 = vector.load %arg14[%c2_75, %c0_76] : memref<20x64xf32, #tpu.memory_space<vmem>>, vector<14x64xf32>
    %138 = vector.extract_strided_slice %122 {offsets = [2, 0], sizes = [1, 64], strides = [1, 1]} : vector<7x64xf32> to vector<1x64xf32>
    %139 = vector.broadcast %138 : vector<1x64xf32> to vector<14x64xf32>
    %140 = arith.mulf %137, %139 : vector<14x64xf32>
    %141 = arith.addf %136, %140 : vector<14x64xf32>
    %c3_77 = arith.constant 3 : index
    %c0_78 = arith.constant 0 : index
    %142 = vector.load %arg14[%c3_77, %c0_78] : memref<20x64xf32, #tpu.memory_space<vmem>>, vector<14x64xf32>
    %143 = vector.extract_strided_slice %122 {offsets = [3, 0], sizes = [1, 64], strides = [1, 1]} : vector<7x64xf32> to vector<1x64xf32>
    %144 = vector.broadcast %143 : vector<1x64xf32> to vector<14x64xf32>
    %145 = arith.mulf %142, %144 : vector<14x64xf32>
    %146 = arith.addf %141, %145 : vector<14x64xf32>
    %c4_79 = arith.constant 4 : index
    %c0_80 = arith.constant 0 : index
    %147 = vector.load %arg14[%c4_79, %c0_80] : memref<20x64xf32, #tpu.memory_space<vmem>>, vector<14x64xf32>
    %148 = vector.extract_strided_slice %122 {offsets = [4, 0], sizes = [1, 64], strides = [1, 1]} : vector<7x64xf32> to vector<1x64xf32>
    %149 = vector.broadcast %148 : vector<1x64xf32> to vector<14x64xf32>
    %150 = arith.mulf %147, %149 : vector<14x64xf32>
    %151 = arith.addf %146, %150 : vector<14x64xf32>
    %c5_81 = arith.constant 5 : index
    %c0_82 = arith.constant 0 : index
    %152 = vector.load %arg14[%c5_81, %c0_82] : memref<20x64xf32, #tpu.memory_space<vmem>>, vector<14x64xf32>
    %153 = vector.extract_strided_slice %122 {offsets = [5, 0], sizes = [1, 64], strides = [1, 1]} : vector<7x64xf32> to vector<1x64xf32>
    %154 = vector.broadcast %153 : vector<1x64xf32> to vector<14x64xf32>
    %155 = arith.mulf %152, %154 : vector<14x64xf32>
    %156 = arith.addf %151, %155 : vector<14x64xf32>
    %c6_83 = arith.constant 6 : index
    %c0_84 = arith.constant 0 : index
    %157 = vector.load %arg14[%c6_83, %c0_84] : memref<20x64xf32, #tpu.memory_space<vmem>>, vector<14x64xf32>
    %158 = vector.extract_strided_slice %122 {offsets = [6, 0], sizes = [1, 64], strides = [1, 1]} : vector<7x64xf32> to vector<1x64xf32>
    %159 = vector.broadcast %158 : vector<1x64xf32> to vector<14x64xf32>
    %160 = arith.mulf %157, %159 : vector<14x64xf32>
    %161 = arith.addf %156, %160 : vector<14x64xf32>
    %cst_85 = arith.constant 0.000000e+00 : f32
    %162 = vector.broadcast %cst_85 : f32 to vector<14x64xf32>
    %163 = arith.maximumf %161, %162 : vector<14x64xf32>
    %164 = arith.addf %163, %119 : vector<14x64xf32>
    %165 = arith.truncf %164 : vector<14x64xf32> to vector<14x64xbf16>
    %c2_86 = arith.constant 2 : index
    %c0_87 = arith.constant 0 : index
    %c0_88 = arith.constant 0 : index
    %166 = vector.load %arg6[%c2_86, %c0_87, %c0_88] : memref<5x64x64xbf16, #tpu.memory_space<vmem>>, vector<1x64x64xbf16>
    %167 = vector.shape_cast %166 : vector<1x64x64xbf16> to vector<64x64xbf16>
    %cst_89 = arith.constant dense<0.000000e+00> : vector<14x64xf32>
    %168 = tpu.matmul %165, %167, %cst_89 {dimension_numbers = #tpu.dot_dimension_numbers<[1], [0], [0], [1], [0, 0, 1, 1], [], []>} : vector<14x64xbf16>, vector<64x64xbf16>, vector<14x64xf32> -> vector<14x64xf32>
    %c2_90 = arith.constant 2 : index
    %c0_91 = arith.constant 0 : index
    %169 = vector.load %arg7[%c2_90, %c0_91] : memref<5x64xf32, #tpu.memory_space<vmem>>, vector<1x64xf32>
    %170 = vector.broadcast %169 : vector<1x64xf32> to vector<14x64xf32>
    %171 = arith.addf %168, %170 : vector<14x64xf32>
    %cst_92 = arith.constant 0.000000e+00 : f32
    %172 = vector.broadcast %cst_92 : f32 to vector<14x64xf32>
    %173 = arith.maximumf %171, %172 : vector<14x64xf32>
    %c3_93 = arith.constant 3 : index
    %c0_94 = arith.constant 0 : index
    %174 = vector.load %arg14[%c3_93, %c0_94] : memref<20x64xf32, #tpu.memory_space<vmem>>, vector<14x64xf32>
    tpu.vector_store %arg14[%c3_93, %c0_94], %173 {strides = array<i32>} : memref<20x64xf32, #tpu.memory_space<vmem>>, vector<14x64xf32>,
    %c3_95 = arith.constant 3 : index
    %c0_96 = arith.constant 0 : index
    %c0_97 = arith.constant 0 : index
    %175 = vector.load %arg4[%c3_95, %c0_96, %c0_97] : memref<5x7x64xf32, #tpu.memory_space<vmem>>, vector<1x7x64xf32>
    %176 = vector.shape_cast %175 : vector<1x7x64xf32> to vector<7x64xf32>
    %cst_98 = arith.constant 0.000000e+00 : f32
    %177 = vector.broadcast %cst_98 : f32 to vector<14x64xf32>
    %c3_99 = arith.constant 3 : index
    %c0_100 = arith.constant 0 : index
    %178 = vector.load %arg5[%c3_99, %c0_100] : memref<5x64xf32, #tpu.memory_space<vmem>>, vector<1x64xf32>
    %179 = vector.broadcast %178 : vector<1x64xf32> to vector<14x64xf32>
    %180 = arith.addf %177, %179 : vector<14x64xf32>
    %c0_101 = arith.constant 0 : index
    %c0_102 = arith.constant 0 : index
    %181 = vector.load %arg14[%c0_101, %c0_102] : memref<20x64xf32, #tpu.memory_space<vmem>>, vector<14x64xf32>
    %182 = vector.extract_strided_slice %176 {offsets = [0, 0], sizes = [1, 64], strides = [1, 1]} : vector<7x64xf32> to vector<1x64xf32>
    %183 = vector.broadcast %182 : vector<1x64xf32> to vector<14x64xf32>
    %184 = arith.mulf %181, %183 : vector<14x64xf32>
    %185 = arith.addf %180, %184 : vector<14x64xf32>
    %c1_103 = arith.constant 1 : index
    %c0_104 = arith.constant 0 : index
    %186 = vector.load %arg14[%c1_103, %c0_104] : memref<20x64xf32, #tpu.memory_space<vmem>>, vector<14x64xf32>
    %187 = vector.extract_strided_slice %176 {offsets = [1, 0], sizes = [1, 64], strides = [1, 1]} : vector<7x64xf32> to vector<1x64xf32>
    %188 = vector.broadcast %187 : vector<1x64xf32> to vector<14x64xf32>
    %189 = arith.mulf %186, %188 : vector<14x64xf32>
    %190 = arith.addf %185, %189 : vector<14x64xf32>
    %c2_105 = arith.constant 2 : index
    %c0_106 = arith.constant 0 : index
    %191 = vector.load %arg14[%c2_105, %c0_106] : memref<20x64xf32, #tpu.memory_space<vmem>>, vector<14x64xf32>
    %192 = vector.extract_strided_slice %176 {offsets = [2, 0], sizes = [1, 64], strides = [1, 1]} : vector<7x64xf32> to vector<1x64xf32>
    %193 = vector.broadcast %192 : vector<1x64xf32> to vector<14x64xf32>
    %194 = arith.mulf %191, %193 : vector<14x64xf32>
    %195 = arith.addf %190, %194 : vector<14x64xf32>
    %c3_107 = arith.constant 3 : index
    %c0_108 = arith.constant 0 : index
    %196 = vector.load %arg14[%c3_107, %c0_108] : memref<20x64xf32, #tpu.memory_space<vmem>>, vector<14x64xf32>
    %197 = vector.extract_strided_slice %176 {offsets = [3, 0], sizes = [1, 64], strides = [1, 1]} : vector<7x64xf32> to vector<1x64xf32>
    %198 = vector.broadcast %197 : vector<1x64xf32> to vector<14x64xf32>
    %199 = arith.mulf %196, %198 : vector<14x64xf32>
    %200 = arith.addf %195, %199 : vector<14x64xf32>
    %c4_109 = arith.constant 4 : index
    %c0_110 = arith.constant 0 : index
    %201 = vector.load %arg14[%c4_109, %c0_110] : memref<20x64xf32, #tpu.memory_space<vmem>>, vector<14x64xf32>
    %202 = vector.extract_strided_slice %176 {offsets = [4, 0], sizes = [1, 64], strides = [1, 1]} : vector<7x64xf32> to vector<1x64xf32>
    %203 = vector.broadcast %202 : vector<1x64xf32> to vector<14x64xf32>
    %204 = arith.mulf %201, %203 : vector<14x64xf32>
    %205 = arith.addf %200, %204 : vector<14x64xf32>
    %c5_111 = arith.constant 5 : index
    %c0_112 = arith.constant 0 : index
    %206 = vector.load %arg14[%c5_111, %c0_112] : memref<20x64xf32, #tpu.memory_space<vmem>>, vector<14x64xf32>
    %207 = vector.extract_strided_slice %176 {offsets = [5, 0], sizes = [1, 64], strides = [1, 1]} : vector<7x64xf32> to vector<1x64xf32>
    %208 = vector.broadcast %207 : vector<1x64xf32> to vector<14x64xf32>
    %209 = arith.mulf %206, %208 : vector<14x64xf32>
    %210 = arith.addf %205, %209 : vector<14x64xf32>
    %c6_113 = arith.constant 6 : index
    %c0_114 = arith.constant 0 : index
    %211 = vector.load %arg14[%c6_113, %c0_114] : memref<20x64xf32, #tpu.memory_space<vmem>>, vector<14x64xf32>
    %212 = vector.extract_strided_slice %176 {offsets = [6, 0], sizes = [1, 64], strides = [1, 1]} : vector<7x64xf32> to vector<1x64xf32>
    %213 = vector.broadcast %212 : vector<1x64xf32> to vector<14x64xf32>
    %214 = arith.mulf %211, %213 : vector<14x64xf32>
    %215 = arith.addf %210, %214 : vector<14x64xf32>
    %cst_115 = arith.constant 0.000000e+00 : f32
    %216 = vector.broadcast %cst_115 : f32 to vector<14x64xf32>
    %217 = arith.maximumf %215, %216 : vector<14x64xf32>
    %218 = arith.addf %217, %173 : vector<14x64xf32>
    %219 = arith.truncf %218 : vector<14x64xf32> to vector<14x64xbf16>
    %c3_116 = arith.constant 3 : index
    %c0_117 = arith.constant 0 : index
    %c0_118 = arith.constant 0 : index
    %220 = vector.load %arg6[%c3_116, %c0_117, %c0_118] : memref<5x64x64xbf16, #tpu.memory_space<vmem>>, vector<1x64x64xbf16>
    %221 = vector.shape_cast %220 : vector<1x64x64xbf16> to vector<64x64xbf16>
    %cst_119 = arith.constant dense<0.000000e+00> : vector<14x64xf32>
    %222 = tpu.matmul %219, %221, %cst_119 {dimension_numbers = #tpu.dot_dimension_numbers<[1], [0], [0], [1], [0, 0, 1, 1], [], []>} : vector<14x64xbf16>, vector<64x64xbf16>, vector<14x64xf32> -> vector<14x64xf32>
    %c3_120 = arith.constant 3 : index
    %c0_121 = arith.constant 0 : index
    %223 = vector.load %arg7[%c3_120, %c0_121] : memref<5x64xf32, #tpu.memory_space<vmem>>, vector<1x64xf32>
    %224 = vector.broadcast %223 : vector<1x64xf32> to vector<14x64xf32>
    %225 = arith.addf %222, %224 : vector<14x64xf32>
    %cst_122 = arith.constant 0.000000e+00 : f32
    %226 = vector.broadcast %cst_122 : f32 to vector<14x64xf32>
    %227 = arith.maximumf %225, %226 : vector<14x64xf32>
    %c3_123 = arith.constant 3 : index
    %c0_124 = arith.constant 0 : index
    %228 = vector.load %arg14[%c3_123, %c0_124] : memref<20x64xf32, #tpu.memory_space<vmem>>, vector<14x64xf32>
    tpu.vector_store %arg14[%c3_123, %c0_124], %227 {strides = array<i32>} : memref<20x64xf32, #tpu.memory_space<vmem>>, vector<14x64xf32>,
    %c4_125 = arith.constant 4 : index
    %c0_126 = arith.constant 0 : index
    %c0_127 = arith.constant 0 : index
    %229 = vector.load %arg4[%c4_125, %c0_126, %c0_127] : memref<5x7x64xf32, #tpu.memory_space<vmem>>, vector<1x7x64xf32>
    %230 = vector.shape_cast %229 : vector<1x7x64xf32> to vector<7x64xf32>
    %cst_128 = arith.constant 0.000000e+00 : f32
    %231 = vector.broadcast %cst_128 : f32 to vector<14x64xf32>
    %c4_129 = arith.constant 4 : index
    %c0_130 = arith.constant 0 : index
    %232 = vector.load %arg5[%c4_129, %c0_130] : memref<5x64xf32, #tpu.memory_space<vmem>>, vector<1x64xf32>
    %233 = vector.broadcast %232 : vector<1x64xf32> to vector<14x64xf32>
    %234 = arith.addf %231, %233 : vector<14x64xf32>
    %c0_131 = arith.constant 0 : index
    %c0_132 = arith.constant 0 : index
    %235 = vector.load %arg14[%c0_131, %c0_132] : memref<20x64xf32, #tpu.memory_space<vmem>>, vector<14x64xf32>
    %236 = vector.extract_strided_slice %230 {offsets = [0, 0], sizes = [1, 64], strides = [1, 1]} : vector<7x64xf32> to vector<1x64xf32>
    %237 = vector.broadcast %236 : vector<1x64xf32> to vector<14x64xf32>
    %238 = arith.mulf %235, %237 : vector<14x64xf32>
    %239 = arith.addf %234, %238 : vector<14x64xf32>
    %c1_133 = arith.constant 1 : index
    %c0_134 = arith.constant 0 : index
    %240 = vector.load %arg14[%c1_133, %c0_134] : memref<20x64xf32, #tpu.memory_space<vmem>>, vector<14x64xf32>
    %241 = vector.extract_strided_slice %230 {offsets = [1, 0], sizes = [1, 64], strides = [1, 1]} : vector<7x64xf32> to vector<1x64xf32>
    %242 = vector.broadcast %241 : vector<1x64xf32> to vector<14x64xf32>
    %243 = arith.mulf %240, %242 : vector<14x64xf32>
    %244 = arith.addf %239, %243 : vector<14x64xf32>
    %c2_135 = arith.constant 2 : index
    %c0_136 = arith.constant 0 : index
    %245 = vector.load %arg14[%c2_135, %c0_136] : memref<20x64xf32, #tpu.memory_space<vmem>>, vector<14x64xf32>
    %246 = vector.extract_strided_slice %230 {offsets = [2, 0], sizes = [1, 64], strides = [1, 1]} : vector<7x64xf32> to vector<1x64xf32>
    %247 = vector.broadcast %246 : vector<1x64xf32> to vector<14x64xf32>
    %248 = arith.mulf %245, %247 : vector<14x64xf32>
    %249 = arith.addf %244, %248 : vector<14x64xf32>
    %c3_137 = arith.constant 3 : index
    %c0_138 = arith.constant 0 : index
    %250 = vector.load %arg14[%c3_137, %c0_138] : memref<20x64xf32, #tpu.memory_space<vmem>>, vector<14x64xf32>
    %251 = vector.extract_strided_slice %230 {offsets = [3, 0], sizes = [1, 64], strides = [1, 1]} : vector<7x64xf32> to vector<1x64xf32>
    %252 = vector.broadcast %251 : vector<1x64xf32> to vector<14x64xf32>
    %253 = arith.mulf %250, %252 : vector<14x64xf32>
    %254 = arith.addf %249, %253 : vector<14x64xf32>
    %c4_139 = arith.constant 4 : index
    %c0_140 = arith.constant 0 : index
    %255 = vector.load %arg14[%c4_139, %c0_140] : memref<20x64xf32, #tpu.memory_space<vmem>>, vector<14x64xf32>
    %256 = vector.extract_strided_slice %230 {offsets = [4, 0], sizes = [1, 64], strides = [1, 1]} : vector<7x64xf32> to vector<1x64xf32>
    %257 = vector.broadcast %256 : vector<1x64xf32> to vector<14x64xf32>
    %258 = arith.mulf %255, %257 : vector<14x64xf32>
    %259 = arith.addf %254, %258 : vector<14x64xf32>
    %c5_141 = arith.constant 5 : index
    %c0_142 = arith.constant 0 : index
    %260 = vector.load %arg14[%c5_141, %c0_142] : memref<20x64xf32, #tpu.memory_space<vmem>>, vector<14x64xf32>
    %261 = vector.extract_strided_slice %230 {offsets = [5, 0], sizes = [1, 64], strides = [1, 1]} : vector<7x64xf32> to vector<1x64xf32>
    %262 = vector.broadcast %261 : vector<1x64xf32> to vector<14x64xf32>
    %263 = arith.mulf %260, %262 : vector<14x64xf32>
    %264 = arith.addf %259, %263 : vector<14x64xf32>
    %c6_143 = arith.constant 6 : index
    %c0_144 = arith.constant 0 : index
    %265 = vector.load %arg14[%c6_143, %c0_144] : memref<20x64xf32, #tpu.memory_space<vmem>>, vector<14x64xf32>
    %266 = vector.extract_strided_slice %230 {offsets = [6, 0], sizes = [1, 64], strides = [1, 1]} : vector<7x64xf32> to vector<1x64xf32>
    %267 = vector.broadcast %266 : vector<1x64xf32> to vector<14x64xf32>
    %268 = arith.mulf %265, %267 : vector<14x64xf32>
    %269 = arith.addf %264, %268 : vector<14x64xf32>
    %cst_145 = arith.constant 0.000000e+00 : f32
    %270 = vector.broadcast %cst_145 : f32 to vector<14x64xf32>
    %271 = arith.maximumf %269, %270 : vector<14x64xf32>
    %272 = arith.addf %271, %227 : vector<14x64xf32>
    %273 = arith.truncf %272 : vector<14x64xf32> to vector<14x64xbf16>
    %c4_146 = arith.constant 4 : index
    %c0_147 = arith.constant 0 : index
    %c0_148 = arith.constant 0 : index
    %274 = vector.load %arg6[%c4_146, %c0_147, %c0_148] : memref<5x64x64xbf16, #tpu.memory_space<vmem>>, vector<1x64x64xbf16>
    %275 = vector.shape_cast %274 : vector<1x64x64xbf16> to vector<64x64xbf16>
    %cst_149 = arith.constant dense<0.000000e+00> : vector<14x64xf32>
    %276 = tpu.matmul %273, %275, %cst_149 {dimension_numbers = #tpu.dot_dimension_numbers<[1], [0], [0], [1], [0, 0, 1, 1], [], []>} : vector<14x64xbf16>, vector<64x64xbf16>, vector<14x64xf32> -> vector<14x64xf32>
    %c4_150 = arith.constant 4 : index
    %c0_151 = arith.constant 0 : index
    %277 = vector.load %arg7[%c4_150, %c0_151] : memref<5x64xf32, #tpu.memory_space<vmem>>, vector<1x64xf32>
    %278 = vector.broadcast %277 : vector<1x64xf32> to vector<14x64xf32>
    %279 = arith.addf %276, %278 : vector<14x64xf32>
    %cst_152 = arith.constant 0.000000e+00 : f32
    %280 = vector.broadcast %cst_152 : f32 to vector<14x64xf32>
    %281 = arith.maximumf %279, %280 : vector<14x64xf32>
    %c0_153 = arith.constant 0 : index
    %c0_154 = arith.constant 0 : index
    %282 = vector.load %arg8[%c0_153, %c0_154] : memref<7x14xf32, #tpu.memory_space<vmem>>, vector<7x14xf32>
    %cst_155 = arith.constant dense<0.000000e+00> : vector<7x64xf32>
    %283 = tpu.matmul %282, %281, %cst_155 {dimension_numbers = #tpu.dot_dimension_numbers<[1], [0], [0], [1], [0, 0, 1, 1], [], []>} : vector<7x14xf32>, vector<14x64xf32>, vector<7x64xf32> -> vector<7x64xf32>
    %cst_156 = arith.constant 0.000000e+00 : f32
    %284 = vector.broadcast %cst_156 : f32 to vector<1x1024xf32>
    %285 = vector.extract_strided_slice %283 {offsets = [0, 0], sizes = [1, 64], strides = [1, 1]} : vector<7x64xf32> to vector<1x64xf32>
    %286 = arith.truncf %285 : vector<1x64xf32> to vector<1x64xbf16>
    %c0_157 = arith.constant 0 : index
    %c0_158 = arith.constant 0 : index
    %c0_159 = arith.constant 0 : index
    %287 = vector.load %arg9[%c0_157, %c0_158, %c0_159] : memref<7x64x1024xbf16, #tpu.memory_space<vmem>>, vector<1x64x1024xbf16>
    %288 = vector.shape_cast %287 : vector<1x64x1024xbf16> to vector<64x1024xbf16>
    %cst_160 = arith.constant dense<0.000000e+00> : vector<1x1024xf32>
    %289 = tpu.matmul %286, %288, %cst_160 {dimension_numbers = #tpu.dot_dimension_numbers<[1], [0], [0], [1], [0, 0, 1, 1], [], []>} : vector<1x64xbf16>, vector<64x1024xbf16>, vector<1x1024xf32> -> vector<1x1024xf32>
    %290 = arith.addf %284, %289 : vector<1x1024xf32>
    %291 = vector.extract_strided_slice %283 {offsets = [1, 0], sizes = [1, 64], strides = [1, 1]} : vector<7x64xf32> to vector<1x64xf32>
    %292 = arith.truncf %291 : vector<1x64xf32> to vector<1x64xbf16>
    %c1_161 = arith.constant 1 : index
    %c0_162 = arith.constant 0 : index
    %c0_163 = arith.constant 0 : index
    %293 = vector.load %arg9[%c1_161, %c0_162, %c0_163] : memref<7x64x1024xbf16, #tpu.memory_space<vmem>>, vector<1x64x1024xbf16>
    %294 = vector.shape_cast %293 : vector<1x64x1024xbf16> to vector<64x1024xbf16>
    %cst_164 = arith.constant dense<0.000000e+00> : vector<1x1024xf32>
    %295 = tpu.matmul %292, %294, %cst_164 {dimension_numbers = #tpu.dot_dimension_numbers<[1], [0], [0], [1], [0, 0, 1, 1], [], []>} : vector<1x64xbf16>, vector<64x1024xbf16>, vector<1x1024xf32> -> vector<1x1024xf32>
    %296 = arith.addf %290, %295 : vector<1x1024xf32>
    %297 = vector.extract_strided_slice %283 {offsets = [2, 0], sizes = [1, 64], strides = [1, 1]} : vector<7x64xf32> to vector<1x64xf32>
    %298 = arith.truncf %297 : vector<1x64xf32> to vector<1x64xbf16>
    %c2_165 = arith.constant 2 : index
    %c0_166 = arith.constant 0 : index
    %c0_167 = arith.constant 0 : index
    %299 = vector.load %arg9[%c2_165, %c0_166, %c0_167] : memref<7x64x1024xbf16, #tpu.memory_space<vmem>>, vector<1x64x1024xbf16>
    %300 = vector.shape_cast %299 : vector<1x64x1024xbf16> to vector<64x1024xbf16>
    %cst_168 = arith.constant dense<0.000000e+00> : vector<1x1024xf32>
    %301 = tpu.matmul %298, %300, %cst_168 {dimension_numbers = #tpu.dot_dimension_numbers<[1], [0], [0], [1], [0, 0, 1, 1], [], []>} : vector<1x64xbf16>, vector<64x1024xbf16>, vector<1x1024xf32> -> vector<1x1024xf32>
    %302 = arith.addf %296, %301 : vector<1x1024xf32>
    %303 = vector.extract_strided_slice %283 {offsets = [3, 0], sizes = [1, 64], strides = [1, 1]} : vector<7x64xf32> to vector<1x64xf32>
    %304 = arith.truncf %303 : vector<1x64xf32> to vector<1x64xbf16>
    %c3_169 = arith.constant 3 : index
    %c0_170 = arith.constant 0 : index
    %c0_171 = arith.constant 0 : index
    %305 = vector.load %arg9[%c3_169, %c0_170, %c0_171] : memref<7x64x1024xbf16, #tpu.memory_space<vmem>>, vector<1x64x1024xbf16>
    %306 = vector.shape_cast %305 : vector<1x64x1024xbf16> to vector<64x1024xbf16>
    %cst_172 = arith.constant dense<0.000000e+00> : vector<1x1024xf32>
    %307 = tpu.matmul %304, %306, %cst_172 {dimension_numbers = #tpu.dot_dimension_numbers<[1], [0], [0], [1], [0, 0, 1, 1], [], []>} : vector<1x64xbf16>, vector<64x1024xbf16>, vector<1x1024xf32> -> vector<1x1024xf32>
    %308 = arith.addf %302, %307 : vector<1x1024xf32>
    %309 = vector.extract_strided_slice %283 {offsets = [4, 0], sizes = [1, 64], strides = [1, 1]} : vector<7x64xf32> to vector<1x64xf32>
    %310 = arith.truncf %309 : vector<1x64xf32> to vector<1x64xbf16>
    %c4_173 = arith.constant 4 : index
    %c0_174 = arith.constant 0 : index
    %c0_175 = arith.constant 0 : index
    %311 = vector.load %arg9[%c4_173, %c0_174, %c0_175] : memref<7x64x1024xbf16, #tpu.memory_space<vmem>>, vector<1x64x1024xbf16>
    %312 = vector.shape_cast %311 : vector<1x64x1024xbf16> to vector<64x1024xbf16>
    %cst_176 = arith.constant dense<0.000000e+00> : vector<1x1024xf32>
    %313 = tpu.matmul %310, %312, %cst_176 {dimension_numbers = #tpu.dot_dimension_numbers<[1], [0], [0], [1], [0, 0, 1, 1], [], []>} : vector<1x64xbf16>, vector<64x1024xbf16>, vector<1x1024xf32> -> vector<1x1024xf32>
    %314 = arith.addf %308, %313 : vector<1x1024xf32>
    %315 = vector.extract_strided_slice %283 {offsets = [5, 0], sizes = [1, 64], strides = [1, 1]} : vector<7x64xf32> to vector<1x64xf32>
    %316 = arith.truncf %315 : vector<1x64xf32> to vector<1x64xbf16>
    %c5_177 = arith.constant 5 : index
    %c0_178 = arith.constant 0 : index
    %c0_179 = arith.constant 0 : index
    %317 = vector.load %arg9[%c5_177, %c0_178, %c0_179] : memref<7x64x1024xbf16, #tpu.memory_space<vmem>>, vector<1x64x1024xbf16>
    %318 = vector.shape_cast %317 : vector<1x64x1024xbf16> to vector<64x1024xbf16>
    %cst_180 = arith.constant dense<0.000000e+00> : vector<1x1024xf32>
    %319 = tpu.matmul %316, %318, %cst_180 {dimension_numbers = #tpu.dot_dimension_numbers<[1], [0], [0], [1], [0, 0, 1, 1], [], []>} : vector<1x64xbf16>, vector<64x1024xbf16>, vector<1x1024xf32> -> vector<1x1024xf32>
    %320 = arith.addf %314, %319 : vector<1x1024xf32>
    %321 = vector.extract_strided_slice %283 {offsets = [6, 0], sizes = [1, 64], strides = [1, 1]} : vector<7x64xf32> to vector<1x64xf32>
    %322 = arith.truncf %321 : vector<1x64xf32> to vector<1x64xbf16>
    %c6_181 = arith.constant 6 : index
    %c0_182 = arith.constant 0 : index
    %c0_183 = arith.constant 0 : index
    %323 = vector.load %arg9[%c6_181, %c0_182, %c0_183] : memref<7x64x1024xbf16, #tpu.memory_space<vmem>>, vector<1x64x1024xbf16>
    %324 = vector.shape_cast %323 : vector<1x64x1024xbf16> to vector<64x1024xbf16>
    %cst_184 = arith.constant dense<0.000000e+00> : vector<1x1024xf32>
    %325 = tpu.matmul %322, %324, %cst_184 {dimension_numbers = #tpu.dot_dimension_numbers<[1], [0], [0], [1], [0, 0, 1, 1], [], []>} : vector<1x64xbf16>, vector<64x1024xbf16>, vector<1x1024xf32> -> vector<1x1024xf32>
    %326 = arith.addf %320, %325 : vector<1x1024xf32>
    %c0_185 = arith.constant 0 : index
    %c0_186 = arith.constant 0 : index
    %327 = vector.load %arg10[%c0_185, %c0_186] : memref<1x1024xf32, #tpu.memory_space<vmem>>, vector<1x1024xf32>
    %328 = arith.addf %326, %327 : vector<1x1024xf32>
    %cst_187 = arith.constant 0.000000e+00 : f32
    %329 = vector.broadcast %cst_187 : f32 to vector<1x1024xf32>
    %330 = arith.maximumf %328, %329 : vector<1x1024xf32>
    %331 = arith.truncf %330 : vector<1x1024xf32> to vector<1x1024xbf16>
    %c0_188 = arith.constant 0 : index
    %c0_189 = arith.constant 0 : index
    %332 = vector.load %arg11[%c0_188, %c0_189] : memref<1024x128xbf16, #tpu.memory_space<vmem>>, vector<1024x128xbf16>
    %cst_190 = arith.constant dense<0.000000e+00> : vector<1x128xf32>
    %333 = tpu.matmul %331, %332, %cst_190 {dimension_numbers = #tpu.dot_dimension_numbers<[1], [0], [0], [1], [0, 0, 1, 1], [], []>} : vector<1x1024xbf16>, vector<1024x128xbf16>, vector<1x128xf32> -> vector<1x128xf32>
    %c0_191 = arith.constant 0 : index
    %c0_192 = arith.constant 0 : index
    %334 = vector.load %arg12[%c0_191, %c0_192] : memref<1x128xf32, #tpu.memory_space<vmem>>, vector<1x128xf32>
    %335 = arith.addf %333, %334 : vector<1x128xf32>
    %336 = arith.negf %335 : vector<1x128xf32>
    %337 = math.exp %336 : vector<1x128xf32>
    %cst_193 = arith.constant 1.000000e+00 : f32
    %338 = vector.broadcast %cst_193 : f32 to vector<1x128xf32>
    %339 = arith.addf %338, %337 : vector<1x128xf32>
    %340 = arith.divf %338, %339 : vector<1x128xf32>
    %c0_194 = arith.constant 0 : index
    %c0_195 = arith.constant 0 : index
    %341 = vector.load %arg13[%c0_194, %c0_195] : memref<2x128xf32, #tpu.memory_space<vmem>>, vector<1x128xf32>
    tpu.vector_store %arg13[%c0_194, %c0_195], %340 {strides = array<i32>} : memref<2x128xf32, #tpu.memory_space<vmem>>, vector<1x128xf32>,
    %342 = vector.extract_strided_slice %10 {offsets = [14, 0], sizes = [14, 64], strides = [1, 1]} : vector<28x64xf32> to vector<14x64xf32>
    %c3_196 = arith.constant 3 : index
    %c0_197 = arith.constant 0 : index
    %343 = vector.load %arg14[%c3_196, %c0_197] : memref<20x64xf32, #tpu.memory_space<vmem>>, vector<14x64xf32>
    tpu.vector_store %arg14[%c3_196, %c0_197], %342 {strides = array<i32>} : memref<20x64xf32, #tpu.memory_space<vmem>>, vector<14x64xf32>,
    %c0_198 = arith.constant 0 : index
    %c0_199 = arith.constant 0 : index
    %c0_200 = arith.constant 0 : index
    %344 = vector.load %arg4[%c0_198, %c0_199, %c0_200] : memref<5x7x64xf32, #tpu.memory_space<vmem>>, vector<1x7x64xf32>
    %345 = vector.shape_cast %344 : vector<1x7x64xf32> to vector<7x64xf32>
    %cst_201 = arith.constant 0.000000e+00 : f32
    %346 = vector.broadcast %cst_201 : f32 to vector<14x64xf32>
    %c0_202 = arith.constant 0 : index
    %c0_203 = arith.constant 0 : index
    %347 = vector.load %arg5[%c0_202, %c0_203] : memref<5x64xf32, #tpu.memory_space<vmem>>, vector<1x64xf32>
    %348 = vector.broadcast %347 : vector<1x64xf32> to vector<14x64xf32>
    %349 = arith.addf %346, %348 : vector<14x64xf32>
    %c0_204 = arith.constant 0 : index
    %c0_205 = arith.constant 0 : index
    %350 = vector.load %arg14[%c0_204, %c0_205] : memref<20x64xf32, #tpu.memory_space<vmem>>, vector<14x64xf32>
    %351 = vector.extract_strided_slice %345 {offsets = [0, 0], sizes = [1, 64], strides = [1, 1]} : vector<7x64xf32> to vector<1x64xf32>
    %352 = vector.broadcast %351 : vector<1x64xf32> to vector<14x64xf32>
    %353 = arith.mulf %350, %352 : vector<14x64xf32>
    %354 = arith.addf %349, %353 : vector<14x64xf32>
    %c1_206 = arith.constant 1 : index
    %c0_207 = arith.constant 0 : index
    %355 = vector.load %arg14[%c1_206, %c0_207] : memref<20x64xf32, #tpu.memory_space<vmem>>, vector<14x64xf32>
    %356 = vector.extract_strided_slice %345 {offsets = [1, 0], sizes = [1, 64], strides = [1, 1]} : vector<7x64xf32> to vector<1x64xf32>
    %357 = vector.broadcast %356 : vector<1x64xf32> to vector<14x64xf32>
    %358 = arith.mulf %355, %357 : vector<14x64xf32>
    %359 = arith.addf %354, %358 : vector<14x64xf32>
    %c2_208 = arith.constant 2 : index
    %c0_209 = arith.constant 0 : index
    %360 = vector.load %arg14[%c2_208, %c0_209] : memref<20x64xf32, #tpu.memory_space<vmem>>, vector<14x64xf32>
    %361 = vector.extract_strided_slice %345 {offsets = [2, 0], sizes = [1, 64], strides = [1, 1]} : vector<7x64xf32> to vector<1x64xf32>
    %362 = vector.broadcast %361 : vector<1x64xf32> to vector<14x64xf32>
    %363 = arith.mulf %360, %362 : vector<14x64xf32>
    %364 = arith.addf %359, %363 : vector<14x64xf32>
    %c3_210 = arith.constant 3 : index
    %c0_211 = arith.constant 0 : index
    %365 = vector.load %arg14[%c3_210, %c0_211] : memref<20x64xf32, #tpu.memory_space<vmem>>, vector<14x64xf32>
    %366 = vector.extract_strided_slice %345 {offsets = [3, 0], sizes = [1, 64], strides = [1, 1]} : vector<7x64xf32> to vector<1x64xf32>
    %367 = vector.broadcast %366 : vector<1x64xf32> to vector<14x64xf32>
    %368 = arith.mulf %365, %367 : vector<14x64xf32>
    %369 = arith.addf %364, %368 : vector<14x64xf32>
    %c4_212 = arith.constant 4 : index
    %c0_213 = arith.constant 0 : index
    %370 = vector.load %arg14[%c4_212, %c0_213] : memref<20x64xf32, #tpu.memory_space<vmem>>, vector<14x64xf32>
    %371 = vector.extract_strided_slice %345 {offsets = [4, 0], sizes = [1, 64], strides = [1, 1]} : vector<7x64xf32> to vector<1x64xf32>
    %372 = vector.broadcast %371 : vector<1x64xf32> to vector<14x64xf32>
    %373 = arith.mulf %370, %372 : vector<14x64xf32>
    %374 = arith.addf %369, %373 : vector<14x64xf32>
    %c5_214 = arith.constant 5 : index
    %c0_215 = arith.constant 0 : index
    %375 = vector.load %arg14[%c5_214, %c0_215] : memref<20x64xf32, #tpu.memory_space<vmem>>, vector<14x64xf32>
    %376 = vector.extract_strided_slice %345 {offsets = [5, 0], sizes = [1, 64], strides = [1, 1]} : vector<7x64xf32> to vector<1x64xf32>
    %377 = vector.broadcast %376 : vector<1x64xf32> to vector<14x64xf32>
    %378 = arith.mulf %375, %377 : vector<14x64xf32>
    %379 = arith.addf %374, %378 : vector<14x64xf32>
    %c6_216 = arith.constant 6 : index
    %c0_217 = arith.constant 0 : index
    %380 = vector.load %arg14[%c6_216, %c0_217] : memref<20x64xf32, #tpu.memory_space<vmem>>, vector<14x64xf32>
    %381 = vector.extract_strided_slice %345 {offsets = [6, 0], sizes = [1, 64], strides = [1, 1]} : vector<7x64xf32> to vector<1x64xf32>
    %382 = vector.broadcast %381 : vector<1x64xf32> to vector<14x64xf32>
    %383 = arith.mulf %380, %382 : vector<14x64xf32>
    %384 = arith.addf %379, %383 : vector<14x64xf32>
    %cst_218 = arith.constant 0.000000e+00 : f32
    %385 = vector.broadcast %cst_218 : f32 to vector<14x64xf32>
    %386 = arith.maximumf %384, %385 : vector<14x64xf32>
    %387 = arith.addf %386, %342 : vector<14x64xf32>
    %388 = arith.truncf %387 : vector<14x64xf32> to vector<14x64xbf16>
    %c0_219 = arith.constant 0 : index
    %c0_220 = arith.constant 0 : index
    %c0_221 = arith.constant 0 : index
    %389 = vector.load %arg6[%c0_219, %c0_220, %c0_221] : memref<5x64x64xbf16, #tpu.memory_space<vmem>>, vector<1x64x64xbf16>
    %390 = vector.shape_cast %389 : vector<1x64x64xbf16> to vector<64x64xbf16>
    %cst_222 = arith.constant dense<0.000000e+00> : vector<14x64xf32>
    %391 = tpu.matmul %388, %390, %cst_222 {dimension_numbers = #tpu.dot_dimension_numbers<[1], [0], [0], [1], [0, 0, 1, 1], [], []>} : vector<14x64xbf16>, vector<64x64xbf16>, vector<14x64xf32> -> vector<14x64xf32>
    %c0_223 = arith.constant 0 : index
    %c0_224 = arith.constant 0 : index
    %392 = vector.load %arg7[%c0_223, %c0_224] : memref<5x64xf32, #tpu.memory_space<vmem>>, vector<1x64xf32>
    %393 = vector.broadcast %392 : vector<1x64xf32> to vector<14x64xf32>
    %394 = arith.addf %391, %393 : vector<14x64xf32>
    %cst_225 = arith.constant 0.000000e+00 : f32
    %395 = vector.broadcast %cst_225 : f32 to vector<14x64xf32>
    %396 = arith.maximumf %394, %395 : vector<14x64xf32>
    %c3_226 = arith.constant 3 : index
    %c0_227 = arith.constant 0 : index
    %397 = vector.load %arg14[%c3_226, %c0_227] : memref<20x64xf32, #tpu.memory_space<vmem>>, vector<14x64xf32>
    tpu.vector_store %arg14[%c3_226, %c0_227], %396 {strides = array<i32>} : memref<20x64xf32, #tpu.memory_space<vmem>>, vector<14x64xf32>,
    %c1_228 = arith.constant 1 : index
    %c0_229 = arith.constant 0 : index
    %c0_230 = arith.constant 0 : index
    %398 = vector.load %arg4[%c1_228, %c0_229, %c0_230] : memref<5x7x64xf32, #tpu.memory_space<vmem>>, vector<1x7x64xf32>
    %399 = vector.shape_cast %398 : vector<1x7x64xf32> to vector<7x64xf32>
    %cst_231 = arith.constant 0.000000e+00 : f32
    %400 = vector.broadcast %cst_231 : f32 to vector<14x64xf32>
    %c1_232 = arith.constant 1 : index
    %c0_233 = arith.constant 0 : index
    %401 = vector.load %arg5[%c1_232, %c0_233] : memref<5x64xf32, #tpu.memory_space<vmem>>, vector<1x64xf32>
    %402 = vector.broadcast %401 : vector<1x64xf32> to vector<14x64xf32>
    %403 = arith.addf %400, %402 : vector<14x64xf32>
    %c0_234 = arith.constant 0 : index
    %c0_235 = arith.constant 0 : index
    %404 = vector.load %arg14[%c0_234, %c0_235] : memref<20x64xf32, #tpu.memory_space<vmem>>, vector<14x64xf32>
    %405 = vector.extract_strided_slice %399 {offsets = [0, 0], sizes = [1, 64], strides = [1, 1]} : vector<7x64xf32> to vector<1x64xf32>
    %406 = vector.broadcast %405 : vector<1x64xf32> to vector<14x64xf32>
    %407 = arith.mulf %404, %406 : vector<14x64xf32>
    %408 = arith.addf %403, %407 : vector<14x64xf32>
    %c1_236 = arith.constant 1 : index
    %c0_237 = arith.constant 0 : index
    %409 = vector.load %arg14[%c1_236, %c0_237] : memref<20x64xf32, #tpu.memory_space<vmem>>, vector<14x64xf32>
    %410 = vector.extract_strided_slice %399 {offsets = [1, 0], sizes = [1, 64], strides = [1, 1]} : vector<7x64xf32> to vector<1x64xf32>
    %411 = vector.broadcast %410 : vector<1x64xf32> to vector<14x64xf32>
    %412 = arith.mulf %409, %411 : vector<14x64xf32>
    %413 = arith.addf %408, %412 : vector<14x64xf32>
    %c2_238 = arith.constant 2 : index
    %c0_239 = arith.constant 0 : index
    %414 = vector.load %arg14[%c2_238, %c0_239] : memref<20x64xf32, #tpu.memory_space<vmem>>, vector<14x64xf32>
    %415 = vector.extract_strided_slice %399 {offsets = [2, 0], sizes = [1, 64], strides = [1, 1]} : vector<7x64xf32> to vector<1x64xf32>
    %416 = vector.broadcast %415 : vector<1x64xf32> to vector<14x64xf32>
    %417 = arith.mulf %414, %416 : vector<14x64xf32>
    %418 = arith.addf %413, %417 : vector<14x64xf32>
    %c3_240 = arith.constant 3 : index
    %c0_241 = arith.constant 0 : index
    %419 = vector.load %arg14[%c3_240, %c0_241] : memref<20x64xf32, #tpu.memory_space<vmem>>, vector<14x64xf32>
    %420 = vector.extract_strided_slice %399 {offsets = [3, 0], sizes = [1, 64], strides = [1, 1]} : vector<7x64xf32> to vector<1x64xf32>
    %421 = vector.broadcast %420 : vector<1x64xf32> to vector<14x64xf32>
    %422 = arith.mulf %419, %421 : vector<14x64xf32>
    %423 = arith.addf %418, %422 : vector<14x64xf32>
    %c4_242 = arith.constant 4 : index
    %c0_243 = arith.constant 0 : index
    %424 = vector.load %arg14[%c4_242, %c0_243] : memref<20x64xf32, #tpu.memory_space<vmem>>, vector<14x64xf32>
    %425 = vector.extract_strided_slice %399 {offsets = [4, 0], sizes = [1, 64], strides = [1, 1]} : vector<7x64xf32> to vector<1x64xf32>
    %426 = vector.broadcast %425 : vector<1x64xf32> to vector<14x64xf32>
    %427 = arith.mulf %424, %426 : vector<14x64xf32>
    %428 = arith.addf %423, %427 : vector<14x64xf32>
    %c5_244 = arith.constant 5 : index
    %c0_245 = arith.constant 0 : index
    %429 = vector.load %arg14[%c5_244, %c0_245] : memref<20x64xf32, #tpu.memory_space<vmem>>, vector<14x64xf32>
    %430 = vector.extract_strided_slice %399 {offsets = [5, 0], sizes = [1, 64], strides = [1, 1]} : vector<7x64xf32> to vector<1x64xf32>
    %431 = vector.broadcast %430 : vector<1x64xf32> to vector<14x64xf32>
    %432 = arith.mulf %429, %431 : vector<14x64xf32>
    %433 = arith.addf %428, %432 : vector<14x64xf32>
    %c6_246 = arith.constant 6 : index
    %c0_247 = arith.constant 0 : index
    %434 = vector.load %arg14[%c6_246, %c0_247] : memref<20x64xf32, #tpu.memory_space<vmem>>, vector<14x64xf32>
    %435 = vector.extract_strided_slice %399 {offsets = [6, 0], sizes = [1, 64], strides = [1, 1]} : vector<7x64xf32> to vector<1x64xf32>
    %436 = vector.broadcast %435 : vector<1x64xf32> to vector<14x64xf32>
    %437 = arith.mulf %434, %436 : vector<14x64xf32>
    %438 = arith.addf %433, %437 : vector<14x64xf32>
    %cst_248 = arith.constant 0.000000e+00 : f32
    %439 = vector.broadcast %cst_248 : f32 to vector<14x64xf32>
    %440 = arith.maximumf %438, %439 : vector<14x64xf32>
    %441 = arith.addf %440, %396 : vector<14x64xf32>
    %442 = arith.truncf %441 : vector<14x64xf32> to vector<14x64xbf16>
    %c1_249 = arith.constant 1 : index
    %c0_250 = arith.constant 0 : index
    %c0_251 = arith.constant 0 : index
    %443 = vector.load %arg6[%c1_249, %c0_250, %c0_251] : memref<5x64x64xbf16, #tpu.memory_space<vmem>>, vector<1x64x64xbf16>
    %444 = vector.shape_cast %443 : vector<1x64x64xbf16> to vector<64x64xbf16>
    %cst_252 = arith.constant dense<0.000000e+00> : vector<14x64xf32>
    %445 = tpu.matmul %442, %444, %cst_252 {dimension_numbers = #tpu.dot_dimension_numbers<[1], [0], [0], [1], [0, 0, 1, 1], [], []>} : vector<14x64xbf16>, vector<64x64xbf16>, vector<14x64xf32> -> vector<14x64xf32>
    %c1_253 = arith.constant 1 : index
    %c0_254 = arith.constant 0 : index
    %446 = vector.load %arg7[%c1_253, %c0_254] : memref<5x64xf32, #tpu.memory_space<vmem>>, vector<1x64xf32>
    %447 = vector.broadcast %446 : vector<1x64xf32> to vector<14x64xf32>
    %448 = arith.addf %445, %447 : vector<14x64xf32>
    %cst_255 = arith.constant 0.000000e+00 : f32
    %449 = vector.broadcast %cst_255 : f32 to vector<14x64xf32>
    %450 = arith.maximumf %448, %449 : vector<14x64xf32>
    %c3_256 = arith.constant 3 : index
    %c0_257 = arith.constant 0 : index
    %451 = vector.load %arg14[%c3_256, %c0_257] : memref<20x64xf32, #tpu.memory_space<vmem>>, vector<14x64xf32>
    tpu.vector_store %arg14[%c3_256, %c0_257], %450 {strides = array<i32>} : memref<20x64xf32, #tpu.memory_space<vmem>>, vector<14x64xf32>,
    %c2_258 = arith.constant 2 : index
    %c0_259 = arith.constant 0 : index
    %c0_260 = arith.constant 0 : index
    %452 = vector.load %arg4[%c2_258, %c0_259, %c0_260] : memref<5x7x64xf32, #tpu.memory_space<vmem>>, vector<1x7x64xf32>
    %453 = vector.shape_cast %452 : vector<1x7x64xf32> to vector<7x64xf32>
    %cst_261 = arith.constant 0.000000e+00 : f32
    %454 = vector.broadcast %cst_261 : f32 to vector<14x64xf32>
    %c2_262 = arith.constant 2 : index
    %c0_263 = arith.constant 0 : index
    %455 = vector.load %arg5[%c2_262, %c0_263] : memref<5x64xf32, #tpu.memory_space<vmem>>, vector<1x64xf32>
    %456 = vector.broadcast %455 : vector<1x64xf32> to vector<14x64xf32>
    %457 = arith.addf %454, %456 : vector<14x64xf32>
    %c0_264 = arith.constant 0 : index
    %c0_265 = arith.constant 0 : index
    %458 = vector.load %arg14[%c0_264, %c0_265] : memref<20x64xf32, #tpu.memory_space<vmem>>, vector<14x64xf32>
    %459 = vector.extract_strided_slice %453 {offsets = [0, 0], sizes = [1, 64], strides = [1, 1]} : vector<7x64xf32> to vector<1x64xf32>
    %460 = vector.broadcast %459 : vector<1x64xf32> to vector<14x64xf32>
    %461 = arith.mulf %458, %460 : vector<14x64xf32>
    %462 = arith.addf %457, %461 : vector<14x64xf32>
    %c1_266 = arith.constant 1 : index
    %c0_267 = arith.constant 0 : index
    %463 = vector.load %arg14[%c1_266, %c0_267] : memref<20x64xf32, #tpu.memory_space<vmem>>, vector<14x64xf32>
    %464 = vector.extract_strided_slice %453 {offsets = [1, 0], sizes = [1, 64], strides = [1, 1]} : vector<7x64xf32> to vector<1x64xf32>
    %465 = vector.broadcast %464 : vector<1x64xf32> to vector<14x64xf32>
    %466 = arith.mulf %463, %465 : vector<14x64xf32>
    %467 = arith.addf %462, %466 : vector<14x64xf32>
    %c2_268 = arith.constant 2 : index
    %c0_269 = arith.constant 0 : index
    %468 = vector.load %arg14[%c2_268, %c0_269] : memref<20x64xf32, #tpu.memory_space<vmem>>, vector<14x64xf32>
    %469 = vector.extract_strided_slice %453 {offsets = [2, 0], sizes = [1, 64], strides = [1, 1]} : vector<7x64xf32> to vector<1x64xf32>
    %470 = vector.broadcast %469 : vector<1x64xf32> to vector<14x64xf32>
    %471 = arith.mulf %468, %470 : vector<14x64xf32>
    %472 = arith.addf %467, %471 : vector<14x64xf32>
    %c3_270 = arith.constant 3 : index
    %c0_271 = arith.constant 0 : index
    %473 = vector.load %arg14[%c3_270, %c0_271] : memref<20x64xf32, #tpu.memory_space<vmem>>, vector<14x64xf32>
    %474 = vector.extract_strided_slice %453 {offsets = [3, 0], sizes = [1, 64], strides = [1, 1]} : vector<7x64xf32> to vector<1x64xf32>
    %475 = vector.broadcast %474 : vector<1x64xf32> to vector<14x64xf32>
    %476 = arith.mulf %473, %475 : vector<14x64xf32>
    %477 = arith.addf %472, %476 : vector<14x64xf32>
    %c4_272 = arith.constant 4 : index
    %c0_273 = arith.constant 0 : index
    %478 = vector.load %arg14[%c4_272, %c0_273] : memref<20x64xf32, #tpu.memory_space<vmem>>, vector<14x64xf32>
    %479 = vector.extract_strided_slice %453 {offsets = [4, 0], sizes = [1, 64], strides = [1, 1]} : vector<7x64xf32> to vector<1x64xf32>
    %480 = vector.broadcast %479 : vector<1x64xf32> to vector<14x64xf32>
    %481 = arith.mulf %478, %480 : vector<14x64xf32>
    %482 = arith.addf %477, %481 : vector<14x64xf32>
    %c5_274 = arith.constant 5 : index
    %c0_275 = arith.constant 0 : index
    %483 = vector.load %arg14[%c5_274, %c0_275] : memref<20x64xf32, #tpu.memory_space<vmem>>, vector<14x64xf32>
    %484 = vector.extract_strided_slice %453 {offsets = [5, 0], sizes = [1, 64], strides = [1, 1]} : vector<7x64xf32> to vector<1x64xf32>
    %485 = vector.broadcast %484 : vector<1x64xf32> to vector<14x64xf32>
    %486 = arith.mulf %483, %485 : vector<14x64xf32>
    %487 = arith.addf %482, %486 : vector<14x64xf32>
    %c6_276 = arith.constant 6 : index
    %c0_277 = arith.constant 0 : index
    %488 = vector.load %arg14[%c6_276, %c0_277] : memref<20x64xf32, #tpu.memory_space<vmem>>, vector<14x64xf32>
    %489 = vector.extract_strided_slice %453 {offsets = [6, 0], sizes = [1, 64], strides = [1, 1]} : vector<7x64xf32> to vector<1x64xf32>
    %490 = vector.broadcast %489 : vector<1x64xf32> to vector<14x64xf32>
    %491 = arith.mulf %488, %490 : vector<14x64xf32>
    %492 = arith.addf %487, %491 : vector<14x64xf32>
    %cst_278 = arith.constant 0.000000e+00 : f32
    %493 = vector.broadcast %cst_278 : f32 to vector<14x64xf32>
    %494 = arith.maximumf %492, %493 : vector<14x64xf32>
    %495 = arith.addf %494, %450 : vector<14x64xf32>
    %496 = arith.truncf %495 : vector<14x64xf32> to vector<14x64xbf16>
    %c2_279 = arith.constant 2 : index
    %c0_280 = arith.constant 0 : index
    %c0_281 = arith.constant 0 : index
    %497 = vector.load %arg6[%c2_279, %c0_280, %c0_281] : memref<5x64x64xbf16, #tpu.memory_space<vmem>>, vector<1x64x64xbf16>
    %498 = vector.shape_cast %497 : vector<1x64x64xbf16> to vector<64x64xbf16>
    %cst_282 = arith.constant dense<0.000000e+00> : vector<14x64xf32>
    %499 = tpu.matmul %496, %498, %cst_282 {dimension_numbers = #tpu.dot_dimension_numbers<[1], [0], [0], [1], [0, 0, 1, 1], [], []>} : vector<14x64xbf16>, vector<64x64xbf16>, vector<14x64xf32> -> vector<14x64xf32>
    %c2_283 = arith.constant 2 : index
    %c0_284 = arith.constant 0 : index
    %500 = vector.load %arg7[%c2_283, %c0_284] : memref<5x64xf32, #tpu.memory_space<vmem>>, vector<1x64xf32>
    %501 = vector.broadcast %500 : vector<1x64xf32> to vector<14x64xf32>
    %502 = arith.addf %499, %501 : vector<14x64xf32>
    %cst_285 = arith.constant 0.000000e+00 : f32
    %503 = vector.broadcast %cst_285 : f32 to vector<14x64xf32>
    %504 = arith.maximumf %502, %503 : vector<14x64xf32>
    %c3_286 = arith.constant 3 : index
    %c0_287 = arith.constant 0 : index
    %505 = vector.load %arg14[%c3_286, %c0_287] : memref<20x64xf32, #tpu.memory_space<vmem>>, vector<14x64xf32>
    tpu.vector_store %arg14[%c3_286, %c0_287], %504 {strides = array<i32>} : memref<20x64xf32, #tpu.memory_space<vmem>>, vector<14x64xf32>,
    %c3_288 = arith.constant 3 : index
    %c0_289 = arith.constant 0 : index
    %c0_290 = arith.constant 0 : index
    %506 = vector.load %arg4[%c3_288, %c0_289, %c0_290] : memref<5x7x64xf32, #tpu.memory_space<vmem>>, vector<1x7x64xf32>
    %507 = vector.shape_cast %506 : vector<1x7x64xf32> to vector<7x64xf32>
    %cst_291 = arith.constant 0.000000e+00 : f32
    %508 = vector.broadcast %cst_291 : f32 to vector<14x64xf32>
    %c3_292 = arith.constant 3 : index
    %c0_293 = arith.constant 0 : index
    %509 = vector.load %arg5[%c3_292, %c0_293] : memref<5x64xf32, #tpu.memory_space<vmem>>, vector<1x64xf32>
    %510 = vector.broadcast %509 : vector<1x64xf32> to vector<14x64xf32>
    %511 = arith.addf %508, %510 : vector<14x64xf32>
    %c0_294 = arith.constant 0 : index
    %c0_295 = arith.constant 0 : index
    %512 = vector.load %arg14[%c0_294, %c0_295] : memref<20x64xf32, #tpu.memory_space<vmem>>, vector<14x64xf32>
    %513 = vector.extract_strided_slice %507 {offsets = [0, 0], sizes = [1, 64], strides = [1, 1]} : vector<7x64xf32> to vector<1x64xf32>
    %514 = vector.broadcast %513 : vector<1x64xf32> to vector<14x64xf32>
    %515 = arith.mulf %512, %514 : vector<14x64xf32>
    %516 = arith.addf %511, %515 : vector<14x64xf32>
    %c1_296 = arith.constant 1 : index
    %c0_297 = arith.constant 0 : index
    %517 = vector.load %arg14[%c1_296, %c0_297] : memref<20x64xf32, #tpu.memory_space<vmem>>, vector<14x64xf32>
    %518 = vector.extract_strided_slice %507 {offsets = [1, 0], sizes = [1, 64], strides = [1, 1]} : vector<7x64xf32> to vector<1x64xf32>
    %519 = vector.broadcast %518 : vector<1x64xf32> to vector<14x64xf32>
    %520 = arith.mulf %517, %519 : vector<14x64xf32>
    %521 = arith.addf %516, %520 : vector<14x64xf32>
    %c2_298 = arith.constant 2 : index
    %c0_299 = arith.constant 0 : index
    %522 = vector.load %arg14[%c2_298, %c0_299] : memref<20x64xf32, #tpu.memory_space<vmem>>, vector<14x64xf32>
    %523 = vector.extract_strided_slice %507 {offsets = [2, 0], sizes = [1, 64], strides = [1, 1]} : vector<7x64xf32> to vector<1x64xf32>
    %524 = vector.broadcast %523 : vector<1x64xf32> to vector<14x64xf32>
    %525 = arith.mulf %522, %524 : vector<14x64xf32>
    %526 = arith.addf %521, %525 : vector<14x64xf32>
    %c3_300 = arith.constant 3 : index
    %c0_301 = arith.constant 0 : index
    %527 = vector.load %arg14[%c3_300, %c0_301] : memref<20x64xf32, #tpu.memory_space<vmem>>, vector<14x64xf32>
    %528 = vector.extract_strided_slice %507 {offsets = [3, 0], sizes = [1, 64], strides = [1, 1]} : vector<7x64xf32> to vector<1x64xf32>
    %529 = vector.broadcast %528 : vector<1x64xf32> to vector<14x64xf32>
    %530 = arith.mulf %527, %529 : vector<14x64xf32>
    %531 = arith.addf %526, %530 : vector<14x64xf32>
    %c4_302 = arith.constant 4 : index
    %c0_303 = arith.constant 0 : index
    %532 = vector.load %arg14[%c4_302, %c0_303] : memref<20x64xf32, #tpu.memory_space<vmem>>, vector<14x64xf32>
    %533 = vector.extract_strided_slice %507 {offsets = [4, 0], sizes = [1, 64], strides = [1, 1]} : vector<7x64xf32> to vector<1x64xf32>
    %534 = vector.broadcast %533 : vector<1x64xf32> to vector<14x64xf32>
    %535 = arith.mulf %532, %534 : vector<14x64xf32>
    %536 = arith.addf %531, %535 : vector<14x64xf32>
    %c5_304 = arith.constant 5 : index
    %c0_305 = arith.constant 0 : index
    %537 = vector.load %arg14[%c5_304, %c0_305] : memref<20x64xf32, #tpu.memory_space<vmem>>, vector<14x64xf32>
    %538 = vector.extract_strided_slice %507 {offsets = [5, 0], sizes = [1, 64], strides = [1, 1]} : vector<7x64xf32> to vector<1x64xf32>
    %539 = vector.broadcast %538 : vector<1x64xf32> to vector<14x64xf32>
    %540 = arith.mulf %537, %539 : vector<14x64xf32>
    %541 = arith.addf %536, %540 : vector<14x64xf32>
    %c6_306 = arith.constant 6 : index
    %c0_307 = arith.constant 0 : index
    %542 = vector.load %arg14[%c6_306, %c0_307] : memref<20x64xf32, #tpu.memory_space<vmem>>, vector<14x64xf32>
    %543 = vector.extract_strided_slice %507 {offsets = [6, 0], sizes = [1, 64], strides = [1, 1]} : vector<7x64xf32> to vector<1x64xf32>
    %544 = vector.broadcast %543 : vector<1x64xf32> to vector<14x64xf32>
    %545 = arith.mulf %542, %544 : vector<14x64xf32>
    %546 = arith.addf %541, %545 : vector<14x64xf32>
    %cst_308 = arith.constant 0.000000e+00 : f32
    %547 = vector.broadcast %cst_308 : f32 to vector<14x64xf32>
    %548 = arith.maximumf %546, %547 : vector<14x64xf32>
    %549 = arith.addf %548, %504 : vector<14x64xf32>
    %550 = arith.truncf %549 : vector<14x64xf32> to vector<14x64xbf16>
    %c3_309 = arith.constant 3 : index
    %c0_310 = arith.constant 0 : index
    %c0_311 = arith.constant 0 : index
    %551 = vector.load %arg6[%c3_309, %c0_310, %c0_311] : memref<5x64x64xbf16, #tpu.memory_space<vmem>>, vector<1x64x64xbf16>
    %552 = vector.shape_cast %551 : vector<1x64x64xbf16> to vector<64x64xbf16>
    %cst_312 = arith.constant dense<0.000000e+00> : vector<14x64xf32>
    %553 = tpu.matmul %550, %552, %cst_312 {dimension_numbers = #tpu.dot_dimension_numbers<[1], [0], [0], [1], [0, 0, 1, 1], [], []>} : vector<14x64xbf16>, vector<64x64xbf16>, vector<14x64xf32> -> vector<14x64xf32>
    %c3_313 = arith.constant 3 : index
    %c0_314 = arith.constant 0 : index
    %554 = vector.load %arg7[%c3_313, %c0_314] : memref<5x64xf32, #tpu.memory_space<vmem>>, vector<1x64xf32>
    %555 = vector.broadcast %554 : vector<1x64xf32> to vector<14x64xf32>
    %556 = arith.addf %553, %555 : vector<14x64xf32>
    %cst_315 = arith.constant 0.000000e+00 : f32
    %557 = vector.broadcast %cst_315 : f32 to vector<14x64xf32>
    %558 = arith.maximumf %556, %557 : vector<14x64xf32>
    %c3_316 = arith.constant 3 : index
    %c0_317 = arith.constant 0 : index
    %559 = vector.load %arg14[%c3_316, %c0_317] : memref<20x64xf32, #tpu.memory_space<vmem>>, vector<14x64xf32>
    tpu.vector_store %arg14[%c3_316, %c0_317], %558 {strides = array<i32>} : memref<20x64xf32, #tpu.memory_space<vmem>>, vector<14x64xf32>,
    %c4_318 = arith.constant 4 : index
    %c0_319 = arith.constant 0 : index
    %c0_320 = arith.constant 0 : index
    %560 = vector.load %arg4[%c4_318, %c0_319, %c0_320] : memref<5x7x64xf32, #tpu.memory_space<vmem>>, vector<1x7x64xf32>
    %561 = vector.shape_cast %560 : vector<1x7x64xf32> to vector<7x64xf32>
    %cst_321 = arith.constant 0.000000e+00 : f32
    %562 = vector.broadcast %cst_321 : f32 to vector<14x64xf32>
    %c4_322 = arith.constant 4 : index
    %c0_323 = arith.constant 0 : index
    %563 = vector.load %arg5[%c4_322, %c0_323] : memref<5x64xf32, #tpu.memory_space<vmem>>, vector<1x64xf32>
    %564 = vector.broadcast %563 : vector<1x64xf32> to vector<14x64xf32>
    %565 = arith.addf %562, %564 : vector<14x64xf32>
    %c0_324 = arith.constant 0 : index
    %c0_325 = arith.constant 0 : index
    %566 = vector.load %arg14[%c0_324, %c0_325] : memref<20x64xf32, #tpu.memory_space<vmem>>, vector<14x64xf32>
    %567 = vector.extract_strided_slice %561 {offsets = [0, 0], sizes = [1, 64], strides = [1, 1]} : vector<7x64xf32> to vector<1x64xf32>
    %568 = vector.broadcast %567 : vector<1x64xf32> to vector<14x64xf32>
    %569 = arith.mulf %566, %568 : vector<14x64xf32>
    %570 = arith.addf %565, %569 : vector<14x64xf32>
    %c1_326 = arith.constant 1 : index
    %c0_327 = arith.constant 0 : index
    %571 = vector.load %arg14[%c1_326, %c0_327] : memref<20x64xf32, #tpu.memory_space<vmem>>, vector<14x64xf32>
    %572 = vector.extract_strided_slice %561 {offsets = [1, 0], sizes = [1, 64], strides = [1, 1]} : vector<7x64xf32> to vector<1x64xf32>
    %573 = vector.broadcast %572 : vector<1x64xf32> to vector<14x64xf32>
    %574 = arith.mulf %571, %573 : vector<14x64xf32>
    %575 = arith.addf %570, %574 : vector<14x64xf32>
    %c2_328 = arith.constant 2 : index
    %c0_329 = arith.constant 0 : index
    %576 = vector.load %arg14[%c2_328, %c0_329] : memref<20x64xf32, #tpu.memory_space<vmem>>, vector<14x64xf32>
    %577 = vector.extract_strided_slice %561 {offsets = [2, 0], sizes = [1, 64], strides = [1, 1]} : vector<7x64xf32> to vector<1x64xf32>
    %578 = vector.broadcast %577 : vector<1x64xf32> to vector<14x64xf32>
    %579 = arith.mulf %576, %578 : vector<14x64xf32>
    %580 = arith.addf %575, %579 : vector<14x64xf32>
    %c3_330 = arith.constant 3 : index
    %c0_331 = arith.constant 0 : index
    %581 = vector.load %arg14[%c3_330, %c0_331] : memref<20x64xf32, #tpu.memory_space<vmem>>, vector<14x64xf32>
    %582 = vector.extract_strided_slice %561 {offsets = [3, 0], sizes = [1, 64], strides = [1, 1]} : vector<7x64xf32> to vector<1x64xf32>
    %583 = vector.broadcast %582 : vector<1x64xf32> to vector<14x64xf32>
    %584 = arith.mulf %581, %583 : vector<14x64xf32>
    %585 = arith.addf %580, %584 : vector<14x64xf32>
    %c4_332 = arith.constant 4 : index
    %c0_333 = arith.constant 0 : index
    %586 = vector.load %arg14[%c4_332, %c0_333] : memref<20x64xf32, #tpu.memory_space<vmem>>, vector<14x64xf32>
    %587 = vector.extract_strided_slice %561 {offsets = [4, 0], sizes = [1, 64], strides = [1, 1]} : vector<7x64xf32> to vector<1x64xf32>
    %588 = vector.broadcast %587 : vector<1x64xf32> to vector<14x64xf32>
    %589 = arith.mulf %586, %588 : vector<14x64xf32>
    %590 = arith.addf %585, %589 : vector<14x64xf32>
    %c5_334 = arith.constant 5 : index
    %c0_335 = arith.constant 0 : index
    %591 = vector.load %arg14[%c5_334, %c0_335] : memref<20x64xf32, #tpu.memory_space<vmem>>, vector<14x64xf32>
    %592 = vector.extract_strided_slice %561 {offsets = [5, 0], sizes = [1, 64], strides = [1, 1]} : vector<7x64xf32> to vector<1x64xf32>
    %593 = vector.broadcast %592 : vector<1x64xf32> to vector<14x64xf32>
    %594 = arith.mulf %591, %593 : vector<14x64xf32>
    %595 = arith.addf %590, %594 : vector<14x64xf32>
    %c6_336 = arith.constant 6 : index
    %c0_337 = arith.constant 0 : index
    %596 = vector.load %arg14[%c6_336, %c0_337] : memref<20x64xf32, #tpu.memory_space<vmem>>, vector<14x64xf32>
    %597 = vector.extract_strided_slice %561 {offsets = [6, 0], sizes = [1, 64], strides = [1, 1]} : vector<7x64xf32> to vector<1x64xf32>
    %598 = vector.broadcast %597 : vector<1x64xf32> to vector<14x64xf32>
    %599 = arith.mulf %596, %598 : vector<14x64xf32>
    %600 = arith.addf %595, %599 : vector<14x64xf32>
    %cst_338 = arith.constant 0.000000e+00 : f32
    %601 = vector.broadcast %cst_338 : f32 to vector<14x64xf32>
    %602 = arith.maximumf %600, %601 : vector<14x64xf32>
    %603 = arith.addf %602, %558 : vector<14x64xf32>
    %604 = arith.truncf %603 : vector<14x64xf32> to vector<14x64xbf16>
    %c4_339 = arith.constant 4 : index
    %c0_340 = arith.constant 0 : index
    %c0_341 = arith.constant 0 : index
    %605 = vector.load %arg6[%c4_339, %c0_340, %c0_341] : memref<5x64x64xbf16, #tpu.memory_space<vmem>>, vector<1x64x64xbf16>
    %606 = vector.shape_cast %605 : vector<1x64x64xbf16> to vector<64x64xbf16>
    %cst_342 = arith.constant dense<0.000000e+00> : vector<14x64xf32>
    %607 = tpu.matmul %604, %606, %cst_342 {dimension_numbers = #tpu.dot_dimension_numbers<[1], [0], [0], [1], [0, 0, 1, 1], [], []>} : vector<14x64xbf16>, vector<64x64xbf16>, vector<14x64xf32> -> vector<14x64xf32>
    %c4_343 = arith.constant 4 : index
    %c0_344 = arith.constant 0 : index
    %608 = vector.load %arg7[%c4_343, %c0_344] : memref<5x64xf32, #tpu.memory_space<vmem>>, vector<1x64xf32>
    %609 = vector.broadcast %608 : vector<1x64xf32> to vector<14x64xf32>
    %610 = arith.addf %607, %609 : vector<14x64xf32>
    %cst_345 = arith.constant 0.000000e+00 : f32
    %611 = vector.broadcast %cst_345 : f32 to vector<14x64xf32>
    %612 = arith.maximumf %610, %611 : vector<14x64xf32>
    %c0_346 = arith.constant 0 : index
    %c0_347 = arith.constant 0 : index
    %613 = vector.load %arg8[%c0_346, %c0_347] : memref<7x14xf32, #tpu.memory_space<vmem>>, vector<7x14xf32>
    %cst_348 = arith.constant dense<0.000000e+00> : vector<7x64xf32>
    %614 = tpu.matmul %613, %612, %cst_348 {dimension_numbers = #tpu.dot_dimension_numbers<[1], [0], [0], [1], [0, 0, 1, 1], [], []>} : vector<7x14xf32>, vector<14x64xf32>, vector<7x64xf32> -> vector<7x64xf32>
    %cst_349 = arith.constant 0.000000e+00 : f32
    %615 = vector.broadcast %cst_349 : f32 to vector<1x1024xf32>
    %616 = vector.extract_strided_slice %614 {offsets = [0, 0], sizes = [1, 64], strides = [1, 1]} : vector<7x64xf32> to vector<1x64xf32>
    %617 = arith.truncf %616 : vector<1x64xf32> to vector<1x64xbf16>
    %c0_350 = arith.constant 0 : index
    %c0_351 = arith.constant 0 : index
    %c0_352 = arith.constant 0 : index
    %618 = vector.load %arg9[%c0_350, %c0_351, %c0_352] : memref<7x64x1024xbf16, #tpu.memory_space<vmem>>, vector<1x64x1024xbf16>
    %619 = vector.shape_cast %618 : vector<1x64x1024xbf16> to vector<64x1024xbf16>
    %cst_353 = arith.constant dense<0.000000e+00> : vector<1x1024xf32>
    %620 = tpu.matmul %617, %619, %cst_353 {dimension_numbers = #tpu.dot_dimension_numbers<[1], [0], [0], [1], [0, 0, 1, 1], [], []>} : vector<1x64xbf16>, vector<64x1024xbf16>, vector<1x1024xf32> -> vector<1x1024xf32>
    %621 = arith.addf %615, %620 : vector<1x1024xf32>
    %622 = vector.extract_strided_slice %614 {offsets = [1, 0], sizes = [1, 64], strides = [1, 1]} : vector<7x64xf32> to vector<1x64xf32>
    %623 = arith.truncf %622 : vector<1x64xf32> to vector<1x64xbf16>
    %c1_354 = arith.constant 1 : index
    %c0_355 = arith.constant 0 : index
    %c0_356 = arith.constant 0 : index
    %624 = vector.load %arg9[%c1_354, %c0_355, %c0_356] : memref<7x64x1024xbf16, #tpu.memory_space<vmem>>, vector<1x64x1024xbf16>
    %625 = vector.shape_cast %624 : vector<1x64x1024xbf16> to vector<64x1024xbf16>
    %cst_357 = arith.constant dense<0.000000e+00> : vector<1x1024xf32>
    %626 = tpu.matmul %623, %625, %cst_357 {dimension_numbers = #tpu.dot_dimension_numbers<[1], [0], [0], [1], [0, 0, 1, 1], [], []>} : vector<1x64xbf16>, vector<64x1024xbf16>, vector<1x1024xf32> -> vector<1x1024xf32>
    %627 = arith.addf %621, %626 : vector<1x1024xf32>
    %628 = vector.extract_strided_slice %614 {offsets = [2, 0], sizes = [1, 64], strides = [1, 1]} : vector<7x64xf32> to vector<1x64xf32>
    %629 = arith.truncf %628 : vector<1x64xf32> to vector<1x64xbf16>
    %c2_358 = arith.constant 2 : index
    %c0_359 = arith.constant 0 : index
    %c0_360 = arith.constant 0 : index
    %630 = vector.load %arg9[%c2_358, %c0_359, %c0_360] : memref<7x64x1024xbf16, #tpu.memory_space<vmem>>, vector<1x64x1024xbf16>
    %631 = vector.shape_cast %630 : vector<1x64x1024xbf16> to vector<64x1024xbf16>
    %cst_361 = arith.constant dense<0.000000e+00> : vector<1x1024xf32>
    %632 = tpu.matmul %629, %631, %cst_361 {dimension_numbers = #tpu.dot_dimension_numbers<[1], [0], [0], [1], [0, 0, 1, 1], [], []>} : vector<1x64xbf16>, vector<64x1024xbf16>, vector<1x1024xf32> -> vector<1x1024xf32>
    %633 = arith.addf %627, %632 : vector<1x1024xf32>
    %634 = vector.extract_strided_slice %614 {offsets = [3, 0], sizes = [1, 64], strides = [1, 1]} : vector<7x64xf32> to vector<1x64xf32>
    %635 = arith.truncf %634 : vector<1x64xf32> to vector<1x64xbf16>
    %c3_362 = arith.constant 3 : index
    %c0_363 = arith.constant 0 : index
    %c0_364 = arith.constant 0 : index
    %636 = vector.load %arg9[%c3_362, %c0_363, %c0_364] : memref<7x64x1024xbf16, #tpu.memory_space<vmem>>, vector<1x64x1024xbf16>
    %637 = vector.shape_cast %636 : vector<1x64x1024xbf16> to vector<64x1024xbf16>
    %cst_365 = arith.constant dense<0.000000e+00> : vector<1x1024xf32>
    %638 = tpu.matmul %635, %637, %cst_365 {dimension_numbers = #tpu.dot_dimension_numbers<[1], [0], [0], [1], [0, 0, 1, 1], [], []>} : vector<1x64xbf16>, vector<64x1024xbf16>, vector<1x1024xf32> -> vector<1x1024xf32>
    %639 = arith.addf %633, %638 : vector<1x1024xf32>
    %640 = vector.extract_strided_slice %614 {offsets = [4, 0], sizes = [1, 64], strides = [1, 1]} : vector<7x64xf32> to vector<1x64xf32>
    %641 = arith.truncf %640 : vector<1x64xf32> to vector<1x64xbf16>
    %c4_366 = arith.constant 4 : index
    %c0_367 = arith.constant 0 : index
    %c0_368 = arith.constant 0 : index
    %642 = vector.load %arg9[%c4_366, %c0_367, %c0_368] : memref<7x64x1024xbf16, #tpu.memory_space<vmem>>, vector<1x64x1024xbf16>
    %643 = vector.shape_cast %642 : vector<1x64x1024xbf16> to vector<64x1024xbf16>
    %cst_369 = arith.constant dense<0.000000e+00> : vector<1x1024xf32>
    %644 = tpu.matmul %641, %643, %cst_369 {dimension_numbers = #tpu.dot_dimension_numbers<[1], [0], [0], [1], [0, 0, 1, 1], [], []>} : vector<1x64xbf16>, vector<64x1024xbf16>, vector<1x1024xf32> -> vector<1x1024xf32>
    %645 = arith.addf %639, %644 : vector<1x1024xf32>
    %646 = vector.extract_strided_slice %614 {offsets = [5, 0], sizes = [1, 64], strides = [1, 1]} : vector<7x64xf32> to vector<1x64xf32>
    %647 = arith.truncf %646 : vector<1x64xf32> to vector<1x64xbf16>
    %c5_370 = arith.constant 5 : index
    %c0_371 = arith.constant 0 : index
    %c0_372 = arith.constant 0 : index
    %648 = vector.load %arg9[%c5_370, %c0_371, %c0_372] : memref<7x64x1024xbf16, #tpu.memory_space<vmem>>, vector<1x64x1024xbf16>
    %649 = vector.shape_cast %648 : vector<1x64x1024xbf16> to vector<64x1024xbf16>
    %cst_373 = arith.constant dense<0.000000e+00> : vector<1x1024xf32>
    %650 = tpu.matmul %647, %649, %cst_373 {dimension_numbers = #tpu.dot_dimension_numbers<[1], [0], [0], [1], [0, 0, 1, 1], [], []>} : vector<1x64xbf16>, vector<64x1024xbf16>, vector<1x1024xf32> -> vector<1x1024xf32>
    %651 = arith.addf %645, %650 : vector<1x1024xf32>
    %652 = vector.extract_strided_slice %614 {offsets = [6, 0], sizes = [1, 64], strides = [1, 1]} : vector<7x64xf32> to vector<1x64xf32>
    %653 = arith.truncf %652 : vector<1x64xf32> to vector<1x64xbf16>
    %c6_374 = arith.constant 6 : index
    %c0_375 = arith.constant 0 : index
    %c0_376 = arith.constant 0 : index
    %654 = vector.load %arg9[%c6_374, %c0_375, %c0_376] : memref<7x64x1024xbf16, #tpu.memory_space<vmem>>, vector<1x64x1024xbf16>
    %655 = vector.shape_cast %654 : vector<1x64x1024xbf16> to vector<64x1024xbf16>
    %cst_377 = arith.constant dense<0.000000e+00> : vector<1x1024xf32>
    %656 = tpu.matmul %653, %655, %cst_377 {dimension_numbers = #tpu.dot_dimension_numbers<[1], [0], [0], [1], [0, 0, 1, 1], [], []>} : vector<1x64xbf16>, vector<64x1024xbf16>, vector<1x1024xf32> -> vector<1x1024xf32>
    %657 = arith.addf %651, %656 : vector<1x1024xf32>
    %c0_378 = arith.constant 0 : index
    %c0_379 = arith.constant 0 : index
    %658 = vector.load %arg10[%c0_378, %c0_379] : memref<1x1024xf32, #tpu.memory_space<vmem>>, vector<1x1024xf32>
    %659 = arith.addf %657, %658 : vector<1x1024xf32>
    %cst_380 = arith.constant 0.000000e+00 : f32
    %660 = vector.broadcast %cst_380 : f32 to vector<1x1024xf32>
    %661 = arith.maximumf %659, %660 : vector<1x1024xf32>
    %662 = arith.truncf %661 : vector<1x1024xf32> to vector<1x1024xbf16>
    %c0_381 = arith.constant 0 : index
    %c0_382 = arith.constant 0 : index
    %663 = vector.load %arg11[%c0_381, %c0_382] : memref<1024x128xbf16, #tpu.memory_space<vmem>>, vector<1024x128xbf16>
    %cst_383 = arith.constant dense<0.000000e+00> : vector<1x128xf32>
    %664 = tpu.matmul %662, %663, %cst_383 {dimension_numbers = #tpu.dot_dimension_numbers<[1], [0], [0], [1], [0, 0, 1, 1], [], []>} : vector<1x1024xbf16>, vector<1024x128xbf16>, vector<1x128xf32> -> vector<1x128xf32>
    %c0_384 = arith.constant 0 : index
    %c0_385 = arith.constant 0 : index
    %665 = vector.load %arg12[%c0_384, %c0_385] : memref<1x128xf32, #tpu.memory_space<vmem>>, vector<1x128xf32>
    %666 = arith.addf %664, %665 : vector<1x128xf32>
    %667 = arith.negf %666 : vector<1x128xf32>
    %668 = math.exp %667 : vector<1x128xf32>
    %cst_386 = arith.constant 1.000000e+00 : f32
    %669 = vector.broadcast %cst_386 : f32 to vector<1x128xf32>
    %670 = arith.addf %669, %668 : vector<1x128xf32>
    %671 = arith.divf %669, %670 : vector<1x128xf32>
    %c1_387 = arith.constant 1 : index
    %c0_388 = arith.constant 0 : index
    %672 = vector.load %arg13[%c1_387, %c0_388] : memref<2x128xf32, #tpu.memory_space<vmem>>, vector<1x128xf32>
    tpu.vector_store %arg13[%c1_387, %c0_388], %671 {strides = array<i32>} : memref<2x128xf32, #tpu.memory_space<vmem>>, vector<1x128xf32>,
    return
  }
  func.func @transform_0(%arg0: i32) -> (i32, i32) {
    %c0_i32 = arith.constant 0 : i32
    %c0_i32_0 = arith.constant 0 : i32
    %c0_i32_1 = arith.constant 0 : i32
    return %c0_i32, %c0_i32_0 : i32, i32
  }
  func.func @transform_1(%arg0: i32) -> (i32, i32) {
    %c0_i32 = arith.constant 0 : i32
    %c0_i32_0 = arith.constant 0 : i32
    %c0_i32_1 = arith.constant 0 : i32
    return %c0_i32, %c0_i32_0 : i32, i32
  }
  func.func @transform_2(%arg0: i32) -> (i32, i32) {
    %c0_i32 = arith.constant 0 : i32
    %c0_i32_0 = arith.constant 0 : i32
    %c0_i32_1 = arith.constant 0 : i32
    return %c0_i32, %c0_i32_0 : i32, i32
  }
  func.func @transform_3(%arg0: i32) -> (i32, i32, i32) {
    %c0_i32 = arith.constant 0 : i32
    %c0_i32_0 = arith.constant 0 : i32
    %c0_i32_1 = arith.constant 0 : i32
    %c0_i32_2 = arith.constant 0 : i32
    return %c0_i32, %c0_i32_0, %c0_i32_1 : i32, i32, i32
  }
  func.func @transform_4(%arg0: i32) -> (i32, i32) {
    %c0_i32 = arith.constant 0 : i32
    %c0_i32_0 = arith.constant 0 : i32
    %c0_i32_1 = arith.constant 0 : i32
    return %c0_i32, %c0_i32_0 : i32, i32
  }
  func.func @transform_5(%arg0: i32) -> (i32, i32, i32) {
    %c0_i32 = arith.constant 0 : i32
    %c0_i32_0 = arith.constant 0 : i32
    %c0_i32_1 = arith.constant 0 : i32
    %c0_i32_2 = arith.constant 0 : i32
    return %c0_i32, %c0_i32_0, %c0_i32_1 : i32, i32, i32
  }
  func.func @transform_6(%arg0: i32) -> (i32, i32) {
    %c0_i32 = arith.constant 0 : i32
    %c0_i32_0 = arith.constant 0 : i32
    %c0_i32_1 = arith.constant 0 : i32
    return %c0_i32, %c0_i32_0 : i32, i32
  }
  func.func @transform_7(%arg0: i32) -> (i32, i32) {
    %c0_i32 = arith.constant 0 : i32
    %c0_i32_0 = arith.constant 0 : i32
    %c0_i32_1 = arith.constant 0 : i32
    return %c0_i32, %c0_i32_0 : i32, i32
  }
  func.func @transform_8(%arg0: i32) -> (i32, i32, i32) {
    %c0_i32 = arith.constant 0 : i32
    %c0_i32_0 = arith.constant 0 : i32
    %c0_i32_1 = arith.constant 0 : i32
    %c0_i32_2 = arith.constant 0 : i32
    return %c0_i32, %c0_i32_0, %c0_i32_1 : i32, i32, i32
  }
  func.func @transform_9(%arg0: i32) -> (i32, i32) {
    %c0_i32 = arith.constant 0 : i32
    %c0_i32_0 = arith.constant 0 : i32
    %c0_i32_1 = arith.constant 0 : i32
    return %c0_i32, %c0_i32_0 : i32, i32
  }
  func.func @transform_10(%arg0: i32) -> (i32, i32) {
    %c0_i32 = arith.constant 0 : i32
    %c0_i32_0 = arith.constant 0 : i32
    %c0_i32_1 = arith.constant 0 : i32
    return %c0_i32, %c0_i32_0 : i32, i32
  }
  func.func @transform_11(%arg0: i32) -> (i32, i32) {
    %c0_i32 = arith.constant 0 : i32
    %c0_i32_0 = arith.constant 0 : i32
    %c0_i32_1 = arith.constant 0 : i32
    return %c0_i32, %c0_i32_0 : i32, i32
  }
  func.func @transform_12(%arg0: i32) -> (i32, i32) {
    %c0_i32 = arith.constant 0 : i32
    %c0_i32_0 = arith.constant 0 : i32
    %c0_i32_1 = arith.constant 0 : i32
    return %c0_i32, %c0_i32_0 : i32, i32
  }
}

</mosaic_0001>

<llo_original>
// kernel: tpu_custom_call.1
$region0: #{tpu_custom_call.1}
  #allocation0 [shape = 'u32[]', space=smem, size = 0x4, offset = 0x4, fixed_abs, tag = 'smem constant byte address 0x4 - core index']
  #allocation1 [shape = 'u32[144,128]{1,0:T(1,128)}', space=vmem, size = 0x12000, scoped, tag = 'internal scratch']
  #allocation2 [shape = 'f32[20,64]{1,0:T(8,128)}', space=vmem, size = 0x3000, scoped, tag = 'scratch operand']
  %s0 = inlined_call_operand.hbm [shape: f32[28,28], index: 0, kind: input, shape index: {}]
  %s1 = inlined_call_operand.hbm [shape: bf16[28,64], index: 1, kind: input, shape index: {}]
  %s2 = inlined_call_operand.vmem [shape: f32[1,64], index: 2, kind: input, shape index: {}]
  %s3 = inlined_call_operand.hbm [shape: f32[5,7,64], index: 3, kind: input, shape index: {}]
  %s4 = inlined_call_operand.vmem [shape: f32[5,64], index: 4, kind: input, shape index: {}]
  %s5 = inlined_call_operand.hbm [shape: bf16[5,64,64], index: 5, kind: input, shape index: {}]
  %s6 = inlined_call_operand.vmem [shape: f32[5,64], index: 6, kind: input, shape index: {}]
  %s7 = inlined_call_operand.vmem [shape: f32[7,14], index: 7, kind: input, shape index: {}]
  %s8 = inlined_call_operand.hbm [shape: bf16[7,64,1024], index: 8, kind: input, shape index: {}]
  %s9 = inlined_call_operand.vmem [shape: f32[1,1024], index: 9, kind: input, shape index: {}]
  %s10 = inlined_call_operand.hbm [shape: bf16[1024,128], index: 10, kind: input, shape index: {}]
  %s11 = inlined_call_operand.vmem [shape: f32[1,128], index: 11, kind: input, shape index: {}]
  %s12 = inlined_call_operand.hbm [shape: f32[2,128], index: 12, kind: output, shape index: {}]
  %s13 = sld [smem:[#allocation0]]
  $region82: #{tpu_custom_call.1} parent=0
    _
  %s15 = ssub.s32 1, %s13
  %s16 = scalar_select 0, %s15, %s13
  $region1: #{tpu_custom_call.1} parent=0
    #allocation3 [shape = 'u8[16384]{0}', space=vmem, size = 0x4000, scoped, tag = 'input window, operand 0, single buffered']
    #allocation4 [shape = 's32[1]{0}', space=sflag, size = 0x4, scoped, tag = 'scoped memory for tpu_custom_call.1']
    #allocation5 [shape = 's32[1]{0}', space=sflag, size = 0x4, scoped, tag = 'scoped memory for tpu_custom_call.1']
    #allocation6 [shape = 'u8[8192]{0}', space=vmem, size = 0x2000, scoped, tag = 'input window, operand 1, single buffered']
    #allocation7 [shape = 's32[1]{0}', space=sflag, size = 0x4, scoped, tag = 'scoped memory for tpu_custom_call.1']
    #allocation8 [shape = 'u8[20480]{0}', space=vmem, size = 0x5000, scoped, tag = 'input window, operand 3, single buffered']
    #allocation9 [shape = 'u8[81920]{0}', space=vmem, size = 0x14000, scoped, tag = 'input window, operand 5, single buffered']
    #allocation10 [shape = 's32[1]{0}', space=sflag, size = 0x4, scoped, tag = 'scoped memory for tpu_custom_call.1']
    #allocation11 [shape = 'u8[917504]{0}', space=vmem, size = 0xe0000, scoped, tag = 'input window, operand 8, single buffered']
    #allocation12 [shape = 'u8[262144]{0}', space=vmem, size = 0x40000, scoped, tag = 'input window, operand 10, single buffered']
    #allocation13 [shape = 's32[1]{0}', space=sflag, size = 0x4, scoped, tag = 'scoped memory for tpu_custom_call.1']
    #allocation14 [shape = 'u8[1024]{0}', space=vmem, size = 0x400, scoped, tag = 'output window, operand 0, single buffered']
    %17 = vsyncpa [#allocation4], 0
    %18 = vsyncpa [#allocation7], 0
    %19 = vsyncpa [#allocation10], 0
    %20 = vsyncpa [#allocation13], 0
    %21 = vsyncpa [#allocation5], 0
    // Predicated region
    $region2: #{tpu_custom_call.1} parent=1 // pred_check
      _
    $region3: #{tpu_custom_call.1} parent=1 // pred_check_branch
      %23 = sbr.rel (0) target = $region5
    $region4: #{tpu_custom_call.1} parent=1 // pred_region
      %s25 = ssub.s32 512, 512
      %26 = vsyncadd [#allocation4], %s25
      %s27 = sshll.u32 [#allocation3], 4
      %s28 = int_to_ptr.vmem [resolvable:$true] %s27
      %33 = dma.hbm_to_vmem [thread:$0]  %s0, 512, %s28, [#allocation4], 128, 128, 8
    $region5: #{tpu_custom_call.1} parent=1 // pred_fallthru
      _
    // Predicated region
    $region6: #{tpu_custom_call.1} parent=1 // pred_check
      _
    $region7: #{tpu_custom_call.1} parent=1 // pred_check_branch
      %35 = sbr.rel (0) target = $region9
    $region8: #{tpu_custom_call.1} parent=1 // pred_region
      %s37 = ssub.s32 256, 256
      %38 = vsyncadd [#allocation7], %s37
      %s39 = sshll.u32 [#allocation6], 4
      %s40 = int_to_ptr.vmem [resolvable:$true] %s39
      %45 = dma.hbm_to_vmem [thread:$0]  %s1, 256, %s40, [#allocation7], 64, 64, 4
    $region9: #{tpu_custom_call.1} parent=1 // pred_fallthru
      _
    // Predicated region
    $region10: #{tpu_custom_call.1} parent=1 // pred_check
      _
    $region11: #{tpu_custom_call.1} parent=1 // pred_check_branch
      %47 = sbr.rel (0) target = $region13
    $region12: #{tpu_custom_call.1} parent=1 // pred_region
      _
    $region13: #{tpu_custom_call.1} parent=1 // pred_fallthru
      _
    // Predicated region
    $region14: #{tpu_custom_call.1} parent=1 // pred_check
      _
    $region15: #{tpu_custom_call.1} parent=1 // pred_check_branch
      %49 = sbr.rel (0) target = $region17
    $region16: #{tpu_custom_call.1} parent=1 // pred_region
      %s51 = ssub.s32 640, 640
      %52 = vsyncadd [#allocation7], %s51
      %s53 = sshll.u32 [#allocation8], 4
      %s54 = int_to_ptr.vmem [resolvable:$true] %s53
      %59 = dma.hbm_to_vmem [thread:$0]  %s3, 640, %s54, [#allocation7], 128, 128, 8
    $region17: #{tpu_custom_call.1} parent=1 // pred_fallthru
      _
    // Predicated region
    $region18: #{tpu_custom_call.1} parent=1 // pred_check
      _
    $region19: #{tpu_custom_call.1} parent=1 // pred_check_branch
      %61 = sbr.rel (0) target = $region21
    $region20: #{tpu_custom_call.1} parent=1 // pred_region
      _
    $region21: #{tpu_custom_call.1} parent=1 // pred_fallthru
      _
    // Predicated region
    $region22: #{tpu_custom_call.1} parent=1 // pred_check
      _
    $region23: #{tpu_custom_call.1} parent=1 // pred_check_branch
      %63 = sbr.rel (0) target = $region25
    $region24: #{tpu_custom_call.1} parent=1 // pred_region
      %s65 = ssub.s32 2560, 2560
      %66 = vsyncadd [#allocation10], %s65
      %s67 = sshll.u32 [#allocation9], 4
      %s68 = int_to_ptr.vmem [resolvable:$true] %s67
      %73 = dma.hbm_to_vmem [thread:$0]  %s5, 2560, %s68, [#allocation10], 64, 64, 4
    $region25: #{tpu_custom_call.1} parent=1 // pred_fallthru
      _
    // Predicated region
    $region26: #{tpu_custom_call.1} parent=1 // pred_check
      _
    $region27: #{tpu_custom_call.1} parent=1 // pred_check_branch
      %75 = sbr.rel (0) target = $region29
    $region28: #{tpu_custom_call.1} parent=1 // pred_region
      _
    $region29: #{tpu_custom_call.1} parent=1 // pred_fallthru
      _
    // Predicated region
    $region30: #{tpu_custom_call.1} parent=1 // pred_check
      _
    $region31: #{tpu_custom_call.1} parent=1 // pred_check_branch
      %77 = sbr.rel (0) target = $region33
    $region32: #{tpu_custom_call.1} parent=1 // pred_region
      _
    $region33: #{tpu_custom_call.1} parent=1 // pred_fallthru
      _
    // Predicated region
    $region34: #{tpu_custom_call.1} parent=1 // pred_check
      _
    $region35: #{tpu_custom_call.1} parent=1 // pred_check_branch
      %79 = sbr.rel (0) target = $region37
    $region36: #{tpu_custom_call.1} parent=1 // pred_region
      %s81 = ssub.s32 28672, 28672
      %82 = vsyncadd [#allocation10], %s81
      %s83 = sshll.u32 [#allocation11], 4
      %s84 = int_to_ptr.vmem [resolvable:$true] %s83
      %89 = dma.hbm_to_vmem [thread:$0]  %s8, 28672, %s84, [#allocation10], 512, 512, 32
    $region37: #{tpu_custom_call.1} parent=1 // pred_fallthru
      _
    // Predicated region
    $region38: #{tpu_custom_call.1} parent=1 // pred_check
      _
    $region39: #{tpu_custom_call.1} parent=1 // pred_check_branch
      %91 = sbr.rel (0) target = $region41
    $region40: #{tpu_custom_call.1} parent=1 // pred_region
      _
    $region41: #{tpu_custom_call.1} parent=1 // pred_fallthru
      _
    // Predicated region
    $region42: #{tpu_custom_call.1} parent=1 // pred_check
      _
    $region43: #{tpu_custom_call.1} parent=1 // pred_check_branch
      %93 = sbr.rel (0) target = $region45
    $region44: #{tpu_custom_call.1} parent=1 // pred_region
      %s95 = ssub.s32 8192, 8192
      %96 = vsyncadd [#allocation13], %s95
      %s97 = sshll.u32 [#allocation12], 4
      %s98 = int_to_ptr.vmem [resolvable:$true] %s97
      %103 = dma.hbm_to_vmem [thread:$0]  %s10, 8192, %s98, [#allocation13], 64, 64, 4
    $region45: #{tpu_custom_call.1} parent=1 // pred_fallthru
      _
    // Predicated region
    $region46: #{tpu_custom_call.1} parent=1 // pred_check
      _
    $region47: #{tpu_custom_call.1} parent=1 // pred_check_branch
      %105 = sbr.rel (0) target = $region49
    $region48: #{tpu_custom_call.1} parent=1 // pred_region
      _
    $region49: #{tpu_custom_call.1} parent=1 // pred_fallthru
      _
    // Predicated region
    $region50: #{tpu_custom_call.1} parent=1 // pred_check
      _
    $region51: #{tpu_custom_call.1} parent=1 // pred_check_branch
      %107 = sbr.rel (0) target = $region53
    $region52: #{tpu_custom_call.1} parent=1 // pred_region
      %108 = dma.done [#allocation4], 512
    $region53: #{tpu_custom_call.1} parent=1 // pred_fallthru
      _
    // Predicated region
    $region54: #{tpu_custom_call.1} parent=1 // pred_check
      _
    $region55: #{tpu_custom_call.1} parent=1 // pred_check_branch
      %110 = sbr.rel (0) target = $region57
    $region56: #{tpu_custom_call.1} parent=1 // pred_region
      %111 = dma.done [#allocation7], 256
    $region57: #{tpu_custom_call.1} parent=1 // pred_fallthru
      _
    // Predicated region
    $region58: #{tpu_custom_call.1} parent=1 // pred_check
      _
    $region59: #{tpu_custom_call.1} parent=1 // pred_check_branch
      %113 = sbr.rel (0) target = $region61
    $region60: #{tpu_custom_call.1} parent=1 // pred_region
      %114 = dma.done [#allocation7], 640
    $region61: #{tpu_custom_call.1} parent=1 // pred_fallthru
      _
    // Predicated region
    $region62: #{tpu_custom_call.1} parent=1 // pred_check
      _
    $region63: #{tpu_custom_call.1} parent=1 // pred_check_branch
      %116 = sbr.rel (0) target = $region65
    $region64: #{tpu_custom_call.1} parent=1 // pred_region
      %117 = dma.done [#allocation10], 2560
    $region65: #{tpu_custom_call.1} parent=1 // pred_fallthru
      _
    // Predicated region
    $region66: #{tpu_custom_call.1} parent=1 // pred_check
      _
    $region67: #{tpu_custom_call.1} parent=1 // pred_check_branch
      %119 = sbr.rel (0) target = $region69
    $region68: #{tpu_custom_call.1} parent=1 // pred_region
      %120 = dma.done [#allocation10], 28672
    $region69: #{tpu_custom_call.1} parent=1 // pred_fallthru
      _
    // Predicated region
    $region70: #{tpu_custom_call.1} parent=1 // pred_check
      _
    $region71: #{tpu_custom_call.1} parent=1 // pred_check_branch
      %122 = sbr.rel (0) target = $region73
    $region72: #{tpu_custom_call.1} parent=1 // pred_region
      %123 = dma.done [#allocation13], 8192
    $region73: #{tpu_custom_call.1} parent=1 // pred_fallthru
      _
    %vm125 = vcmask 523264
    %126 = vst.msk [vmem:[#allocation2] sm:$0xff] %vm125, 0.0
    %127 = vst.msk [vmem:[#allocation2 + $0x8] sm:$0xff] %vm125, 0.0
    %vm128 = vcmask 519168
    %129 = vst.msk [vmem:[#allocation2 + $0x10] sm:$0xf] %vm128, 0.0
    %v130 = vld [vmem:[#allocation3] sm:$0xff]
    %v131 = vld [vmem:[#allocation3 + $0x8] sm:$0xff]
    %v132 = vld [vmem:[#allocation3 + $0x10] sm:$0xff]
    %v133 = vld [vmem:[#allocation3 + $0x18] sm:$0xf]
    %v134 = vpack.c.bf16 %v131, %v130
    %v135 = vpack.c.bf16 %v133, %v132
    %v136 = vld [vmem:[#allocation6] sm:$0xf]
    %v137 = vld [vmem:[#allocation6 + $0x4] sm:$0xf]
    %v138 = vld [vmem:[#allocation6 + $0x8] sm:$0xf]
    %v139 = vld [vmem:[#allocation6 + $0xc] sm:$0x3]
    %v140 = vld [vmem:[%s2] sm:$0x1]
    %v142 = vlaneseq
    %v143 = vshrl.u32 %v142, 7
    %v144 = vsub.s32 0, %v143
    %v145 = vrot.slane %v140, %v144
    %v151 = vunpack.c.l.b16 %v136
    %v152 = vunpack.c.l.b16 %v137
    %v153 = vunpack.c.l.b16 %v138
    %v154 = vunpack.c.l.b16 %v139
    %v155 = vpack.c.b16 %v152, %v151
    %v156 = vpack.c.b16 %v154, %v153
    %vm158 = vcmask 228352
    %v160 = vsel %vm158, %v134, 0
    %v163 = vsel %vm158, %v135, 0
    %vm165 = vcmask 1045504
    %v167 = vsel %vm165, %v156, 0
    %169 = vmatprep.subr.bf16.mxu0 0
    %170 = vmatpush1.bf16.msra.mxu0 %v155
    %171 = vmatprep.subr.bf16.mxu0 0
    %172 = vmatpush1.bf16.msra.mxu0 %v167
    %173 = vmatprep.subr.bf16.mxu0 0
    %174 = vmatpush1.bf16.msra.mxu0 0
    %175 = vmatprep.subr.bf16.mxu0 0
    %176 = vmatpush1.bf16.msra.mxu0 0
    %177 = vmatprep.subr.bf16.mxu0 0
    %178 = vmatpush1.bf16.msra.mxu0 0
    %179 = vmatprep.subr.bf16.mxu0 0
    %180 = vmatpush1.bf16.msra.mxu0 0
    %181 = vmatprep.subr.bf16.mxu0 0
    %182 = vmatpush1.bf16.msra.mxu0 0
    %183 = vmatprep.subr.bf16.mxu0 0
    %184 = vmatpush1.bf16.msra.mxu0 0
    %185 = vmatprep.subr.bf16.mxu0 0
    %186 = vmatpush1.bf16.msra.mxu0 0
    %187 = vmatprep.subr.bf16.mxu0 0
    %188 = vmatpush1.bf16.msra.mxu0 0
    %189 = vmatprep.subr.bf16.mxu0 0
    %190 = vmatpush1.bf16.msra.mxu0 0
    %191 = vmatprep.subr.bf16.mxu0 0
    %192 = vmatpush1.bf16.msra.mxu0 0
    %193 = vmatprep.subr.bf16.mxu0 0
    %194 = vmatpush1.bf16.msra.mxu0 0
    %195 = vmatprep.subr.bf16.mxu0 0
    %196 = vmatpush1.bf16.msra.mxu0 0
    %197 = vmatprep.subr.bf16.mxu0 0
    %198 = vmatpush1.bf16.msra.mxu0 0
    %199 = vmatprep.subr.bf16.mxu0 0
    %200 = vmatpush1.bf16.msra.mxu0 0
    %201 = vmatprep.mubr.bf16.mxu0 0
    %202 = vmatmul.mubr.bf16.gmra.mrb[0].mxu0 %v160
    %v203 = vpop.f32.mrb[0].mxu0
    %v204 = vadd.f32 %v145, %v203
    %v205 = vpop.f32.mrb[0].mxu0
    %v206 = vpop.f32.mrb[0].mxu0
    %v207 = vadd.f32 %v145, %v206
    %v208 = vpop.f32.mrb[0].mxu0
    %209 = vmatprep.mubr.bf16.mxu0 0
    %210 = vmatmul.mubr.bf16.gmra.mrb[0].mxu0 %v163
    %v211 = vpop.f32.mrb[0].mxu0
    %v212 = vadd.f32 %v145, %v211
    %v213 = vpop.f32.mrb[0].mxu0
    %v214 = vpop.f32.mrb[0].mxu0
    %v215 = vadd.f32 %v145, %v214
    %v216 = vpop.f32.mrb[0].mxu0
    %217 = vdwg.mxu0
    %v218 = vmax.f32 %v204, 0.0
    %v219 = vmax.f32 %v207, 0.0
    %v220 = vmax.f32 %v212, 0.0
    %v221 = vmax.f32 %v215, 0.0
    %222 = vst.msk [vmem:[#allocation2 + $0x3] sm:$0xff] %vm125, %v218
    %vm223 = vcmask 521216
    %224 = vst.msk [vmem:[#allocation2 + $0xb] sm:$0x3f] %vm223, %v219
    %v225 = vld [vmem:[#allocation8] sm:$0x7f]
    %v226 = vld [vmem:[%s4] sm:$0x1]
    %v227 = vlaneseq
    %v228 = vshrl.u32 %v227, 7
    %v229 = vsub.s32 0, %v228
    %v230 = vrot.slane %v226, %v229
    %v231 = vadd.f32 %v230, 0.0
    %v232 = vld [vmem:[#allocation2] sm:$0xff]
    %v233 = vld [vmem:[#allocation2 + $0x8] sm:$0x3f]
    %v234 = vlaneseq
    %v235 = vshrl.u32 %v234, 7
    %v236 = vsub.s32 0, %v235
    %v237 = vrot.slane %v225, %v236
    %v238 = vmul.f32 %v232, %v237
    %v239 = vmul.f32 %v233, %v237
    %v240 = vadd.f32 %v231, %v238
    %v241 = vadd.f32 %v231, %v239
    %v242 = vld [vmem:[#allocation2 + $0x1] sm:$0xff]
    %v243 = vld [vmem:[#allocation2 + $0x9] sm:$0x3f]
    %v244 = vlaneseq
    %v245 = vshrl.u32 %v244, 7
    %v246 = vsub.s32 1, %v245
    %v247 = vrot.slane %v225, %v246
    %v248 = vmul.f32 %v242, %v247
    %v249 = vmul.f32 %v243, %v247
    %v250 = vadd.f32 %v240, %v248
    %v251 = vadd.f32 %v241, %v249
    %v252 = vld [vmem:[#allocation2 + $0x2] sm:$0xff]
    %v253 = vld [vmem:[#allocation2 + $0xa] sm:$0x3f]
    %v254 = vlaneseq
    %v255 = vshrl.u32 %v254, 7
    %v256 = vsub.s32 2, %v255
    %v257 = vrot.slane %v225, %v256
    %v258 = vmul.f32 %v252, %v257
    %v259 = vmul.f32 %v253, %v257
    %v260 = vadd.f32 %v250, %v258
    %v261 = vadd.f32 %v251, %v259
    %v262 = vld [vmem:[#allocation2 + $0x3] sm:$0xff]
    %v263 = vld [vmem:[#allocation2 + $0xb] sm:$0x3f]
    %v264 = vlaneseq
    %v265 = vshrl.u32 %v264, 7
    %v266 = vsub.s32 3, %v265
    %v267 = vrot.slane %v225, %v266
    %v268 = vmul.f32 %v262, %v267
    %v269 = vmul.f32 %v263, %v267
    %v270 = vadd.f32 %v260, %v268
    %v271 = vadd.f32 %v261, %v269
    %v272 = vld [vmem:[#allocation2 + $0x4] sm:$0xff]
    %v273 = vld [vmem:[#allocation2 + $0xc] sm:$0x3f]
    %v274 = vlaneseq
    %v275 = vshrl.u32 %v274, 7
    %v276 = vsub.s32 4, %v275
    %v277 = vrot.slane %v225, %v276
    %v278 = vmul.f32 %v272, %v277
    %v279 = vmul.f32 %v273, %v277
    %v280 = vadd.f32 %v270, %v278
    %v281 = vadd.f32 %v271, %v279
    %v282 = vld [vmem:[#allocation2 + $0x5] sm:$0xff]
    %v283 = vld [vmem:[#allocation2 + $0xd] sm:$0x3f]
    %v284 = vlaneseq
    %v285 = vshrl.u32 %v284, 7
    %v286 = vsub.s32 5, %v285
    %v287 = vrot.slane %v225, %v286
    %v288 = vmul.f32 %v282, %v287
    %v289 = vmul.f32 %v283, %v287
    %v290 = vadd.f32 %v280, %v288
    %v291 = vadd.f32 %v281, %v289
    %v292 = vld [vmem:[#allocation2 + $0x6] sm:$0xff]
    %v293 = vld [vmem:[#allocation2 + $0xe] sm:$0x3f]
    %v294 = vlaneseq
    %v295 = vshrl.u32 %v294, 7
    %v296 = vsub.s32 6, %v295
    %v297 = vrot.slane %v225, %v296
    %v298 = vmul.f32 %v292, %v297
    %v299 = vmul.f32 %v293, %v297
    %v300 = vadd.f32 %v290, %v298
    %v301 = vadd.f32 %v291, %v299
    %v302 = vmax.f32 %v300, 0.0
    %v303 = vmax.f32 %v301, 0.0
    %v304 = vadd.f32 %v302, %v218
    %v305 = vadd.f32 %v303, %v219
    %v306 = vpack.c.bf16 %v305, %v304
    %v307 = vld [vmem:[#allocation9] sm:$0xf]
    %v308 = vld [vmem:[#allocation9 + $0x4] sm:$0xf]
    %v309 = vld [vmem:[#allocation9 + $0x8] sm:$0xf]
    %v310 = vld [vmem:[#allocation9 + $0xc] sm:$0xf]
    %v311 = vld [vmem:[#allocation9 + $0x10] sm:$0xf]
    %v312 = vld [vmem:[#allocation9 + $0x14] sm:$0xf]
    %v313 = vld [vmem:[#allocation9 + $0x18] sm:$0xf]
    %v314 = vld [vmem:[#allocation9 + $0x1c] sm:$0xf]
    %v315 = vld [vmem:[%s6] sm:$0x1]
    %v316 = vlaneseq
    %v317 = vshrl.u32 %v316, 7
    %v318 = vsub.s32 0, %v317
    %v319 = vrot.slane %v315, %v318
    %v328 = vunpack.c.l.b16 %v307
    %v329 = vunpack.c.l.b16 %v308
    %v330 = vunpack.c.l.b16 %v309
    %v331 = vunpack.c.l.b16 %v310
    %v332 = vunpack.c.l.b16 %v311
    %v333 = vunpack.c.l.b16 %v312
    %v334 = vunpack.c.l.b16 %v313
    %v335 = vunpack.c.l.b16 %v314
    %v336 = vpack.c.b16 %v329, %v328
    %v337 = vpack.c.b16 %v331, %v330
    %v338 = vpack.c.b16 %v333, %v332
    %v339 = vpack.c.b16 %v335, %v334
    %v345 = vsel %vm125, %v306, 0
    %347 = vmatprep.subr.bf16.mxu0 0
    %348 = vmatpush1.bf16.msra.mxu0 %v336
    %349 = vmatprep.subr.bf16.mxu0 0
    %350 = vmatpush1.bf16.msra.mxu0 %v337
    %351 = vmatprep.subr.bf16.mxu0 0
    %352 = vmatpush1.bf16.msra.mxu0 %v338
    %353 = vmatprep.subr.bf16.mxu0 0
    %354 = vmatpush1.bf16.msra.mxu0 %v339
    %355 = vmatprep.subr.bf16.mxu0 0
    %356 = vmatpush1.bf16.msra.mxu0 0
    %357 = vmatprep.subr.bf16.mxu0 0
    %358 = vmatpush1.bf16.msra.mxu0 0
    %359 = vmatprep.subr.bf16.mxu0 0
    %360 = vmatpush1.bf16.msra.mxu0 0
    %361 = vmatprep.subr.bf16.mxu0 0
    %362 = vmatpush1.bf16.msra.mxu0 0
    %363 = vmatprep.subr.bf16.mxu0 0
    %364 = vmatpush1.bf16.msra.mxu0 0
    %365 = vmatprep.subr.bf16.mxu0 0
    %366 = vmatpush1.bf16.msra.mxu0 0
    %367 = vmatprep.subr.bf16.mxu0 0
    %368 = vmatpush1.bf16.msra.mxu0 0
    %369 = vmatprep.subr.bf16.mxu0 0
    %370 = vmatpush1.bf16.msra.mxu0 0
    %371 = vmatprep.subr.bf16.mxu0 0
    %372 = vmatpush1.bf16.msra.mxu0 0
    %373 = vmatprep.subr.bf16.mxu0 0
    %374 = vmatpush1.bf16.msra.mxu0 0
    %375 = vmatprep.subr.bf16.mxu0 0
    %376 = vmatpush1.bf16.msra.mxu0 0
    %377 = vmatprep.subr.bf16.mxu0 0
    %378 = vmatpush1.bf16.msra.mxu0 0
    %379 = vmatprep.mubr.bf16.mxu0 0
    %380 = vmatmul.mubr.bf16.gmra.mrb[0].mxu0 %v345
    %v381 = vpop.f32.mrb[0].mxu0
    %v382 = vadd.f32 %v319, %v381
    %v383 = vpop.f32.mrb[0].mxu0
    %v384 = vpop.f32.mrb[0].mxu0
    %v385 = vadd.f32 %v319, %v384
    %v386 = vpop.f32.mrb[0].mxu0
    %387 = vdwg.mxu0
    %v388 = vmax.f32 %v382, 0.0
    %v389 = vmax.f32 %v385, 0.0
    %390 = vst.msk [vmem:[#allocation2 + $0x3] sm:$0xff] %vm125, %v388
    %391 = vst.msk [vmem:[#allocation2 + $0xb] sm:$0x3f] %vm223, %v389
    %s392 = scalar_lea.vmem [#allocation8], 8
    %v393 = vld [vmem:[%s392] sm:$0x7f]
    %v394 = vld [vmem:[%s4 + $0x1] sm:$0x1]
    %v395 = vlaneseq
    %v396 = vshrl.u32 %v395, 7
    %v397 = vsub.s32 0, %v396
    %v398 = vrot.slane %v394, %v397
    %v399 = vadd.f32 %v398, 0.0
    %v400 = vld [vmem:[#allocation2] sm:$0xff]
    %v401 = vld [vmem:[#allocation2 + $0x8] sm:$0x3f]
    %v402 = vlaneseq
    %v403 = vshrl.u32 %v402, 7
    %v404 = vsub.s32 0, %v403
    %v405 = vrot.slane %v393, %v404
    %v406 = vmul.f32 %v400, %v405
    %v407 = vmul.f32 %v401, %v405
    %v408 = vadd.f32 %v399, %v406
    %v409 = vadd.f32 %v399, %v407
    %v410 = vld [vmem:[#allocation2 + $0x1] sm:$0xff]
    %v411 = vld [vmem:[#allocation2 + $0x9] sm:$0x3f]
    %v412 = vlaneseq
    %v413 = vshrl.u32 %v412, 7
    %v414 = vsub.s32 1, %v413
    %v415 = vrot.slane %v393, %v414
    %v416 = vmul.f32 %v410, %v415
    %v417 = vmul.f32 %v411, %v415
    %v418 = vadd.f32 %v408, %v416
    %v419 = vadd.f32 %v409, %v417
    %v420 = vld [vmem:[#allocation2 + $0x2] sm:$0xff]
    %v421 = vld [vmem:[#allocation2 + $0xa] sm:$0x3f]
    %v422 = vlaneseq
    %v423 = vshrl.u32 %v422, 7
    %v424 = vsub.s32 2, %v423
    %v425 = vrot.slane %v393, %v424
    %v426 = vmul.f32 %v420, %v425
    %v427 = vmul.f32 %v421, %v425
    %v428 = vadd.f32 %v418, %v426
    %v429 = vadd.f32 %v419, %v427
    %v430 = vld [vmem:[#allocation2 + $0x3] sm:$0xff]
    %v431 = vld [vmem:[#allocation2 + $0xb] sm:$0x3f]
    %v432 = vlaneseq
    %v433 = vshrl.u32 %v432, 7
    %v434 = vsub.s32 3, %v433
    %v435 = vrot.slane %v393, %v434
    %v436 = vmul.f32 %v430, %v435
    %v437 = vmul.f32 %v431, %v435
    %v438 = vadd.f32 %v428, %v436
    %v439 = vadd.f32 %v429, %v437
    %v440 = vld [vmem:[#allocation2 + $0x4] sm:$0xff]
    %v441 = vld [vmem:[#allocation2 + $0xc] sm:$0x3f]
    %v442 = vlaneseq
    %v443 = vshrl.u32 %v442, 7
    %v444 = vsub.s32 4, %v443
    %v445 = vrot.slane %v393, %v444
    %v446 = vmul.f32 %v440, %v445
    %v447 = vmul.f32 %v441, %v445
    %v448 = vadd.f32 %v438, %v446
    %v449 = vadd.f32 %v439, %v447
    %v450 = vld [vmem:[#allocation2 + $0x5] sm:$0xff]
    %v451 = vld [vmem:[#allocation2 + $0xd] sm:$0x3f]
    %v452 = vlaneseq
    %v453 = vshrl.u32 %v452, 7
    %v454 = vsub.s32 5, %v453
    %v455 = vrot.slane %v393, %v454
    %v456 = vmul.f32 %v450, %v455
    %v457 = vmul.f32 %v451, %v455
    %v458 = vadd.f32 %v448, %v456
    %v459 = vadd.f32 %v449, %v457
    %v460 = vld [vmem:[#allocation2 + $0x6] sm:$0xff]
    %v461 = vld [vmem:[#allocation2 + $0xe] sm:$0x3f]
    %v462 = vlaneseq
    %v463 = vshrl.u32 %v462, 7
    %v464 = vsub.s32 6, %v463
    %v465 = vrot.slane %v393, %v464
    %v466 = vmul.f32 %v460, %v465
    %v467 = vmul.f32 %v461, %v465
    %v468 = vadd.f32 %v458, %v466
    %v469 = vadd.f32 %v459, %v467
    %v470 = vmax.f32 %v468, 0.0
    %v471 = vmax.f32 %v469, 0.0
    %v472 = vadd.f32 %v470, %v388
    %v473 = vadd.f32 %v471, %v389
    %v474 = vpack.c.bf16 %v473, %v472
    %s475 = scalar_lea.vmem [#allocation9], 32
    %v476 = vld [vmem:[%s475] sm:$0xf]
    %v477 = vld [vmem:[%s475 + $0x4] sm:$0xf]
    %v478 = vld [vmem:[%s475 + $0x8] sm:$0xf]
    %v479 = vld [vmem:[%s475 + $0xc] sm:$0xf]
    %v480 = vld [vmem:[%s475 + $0x10] sm:$0xf]
    %v481 = vld [vmem:[%s475 + $0x14] sm:$0xf]
    %v482 = vld [vmem:[%s475 + $0x18] sm:$0xf]
    %v483 = vld [vmem:[%s475 + $0x1c] sm:$0xf]
    %v484 = vld [vmem:[%s6 + $0x1] sm:$0x1]
    %v485 = vlaneseq
    %v486 = vshrl.u32 %v485, 7
    %v487 = vsub.s32 0, %v486
    %v488 = vrot.slane %v484, %v487
    %v497 = vunpack.c.l.b16 %v476
    %v498 = vunpack.c.l.b16 %v477
    %v499 = vunpack.c.l.b16 %v478
    %v500 = vunpack.c.l.b16 %v479
    %v501 = vunpack.c.l.b16 %v480
    %v502 = vunpack.c.l.b16 %v481
    %v503 = vunpack.c.l.b16 %v482
    %v504 = vunpack.c.l.b16 %v483
    %v505 = vpack.c.b16 %v498, %v497
    %v506 = vpack.c.b16 %v500, %v499
    %v507 = vpack.c.b16 %v502, %v501
    %v508 = vpack.c.b16 %v504, %v503
    %v514 = vsel %vm125, %v474, 0
    %516 = vmatprep.subr.bf16.mxu0 0
    %517 = vmatpush1.bf16.msra.mxu0 %v505
    %518 = vmatprep.subr.bf16.mxu0 0
    %519 = vmatpush1.bf16.msra.mxu0 %v506
    %520 = vmatprep.subr.bf16.mxu0 0
    %521 = vmatpush1.bf16.msra.mxu0 %v507
    %522 = vmatprep.subr.bf16.mxu0 0
    %523 = vmatpush1.bf16.msra.mxu0 %v508
    %524 = vmatprep.subr.bf16.mxu0 0
    %525 = vmatpush1.bf16.msra.mxu0 0
    %526 = vmatprep.subr.bf16.mxu0 0
    %527 = vmatpush1.bf16.msra.mxu0 0
    %528 = vmatprep.subr.bf16.mxu0 0
    %529 = vmatpush1.bf16.msra.mxu0 0
    %530 = vmatprep.subr.bf16.mxu0 0
    %531 = vmatpush1.bf16.msra.mxu0 0
    %532 = vmatprep.subr.bf16.mxu0 0
    %533 = vmatpush1.bf16.msra.mxu0 0
    %534 = vmatprep.subr.bf16.mxu0 0
    %535 = vmatpush1.bf16.msra.mxu0 0
    %536 = vmatprep.subr.bf16.mxu0 0
    %537 = vmatpush1.bf16.msra.mxu0 0
    %538 = vmatprep.subr.bf16.mxu0 0
    %539 = vmatpush1.bf16.msra.mxu0 0
    %540 = vmatprep.subr.bf16.mxu0 0
    %541 = vmatpush1.bf16.msra.mxu0 0
    %542 = vmatprep.subr.bf16.mxu0 0
    %543 = vmatpush1.bf16.msra.mxu0 0
    %544 = vmatprep.subr.bf16.mxu0 0
    %545 = vmatpush1.bf16.msra.mxu0 0
    %546 = vmatprep.subr.bf16.mxu0 0
    %547 = vmatpush1.bf16.msra.mxu0 0
    %548 = vmatprep.mubr.bf16.mxu0 0
    %549 = vmatmul.mubr.bf16.gmra.mrb[0].mxu0 %v514
    %v550 = vpop.f32.mrb[0].mxu0
    %v551 = vadd.f32 %v488, %v550
    %v552 = vpop.f32.mrb[0].mxu0
    %v553 = vpop.f32.mrb[0].mxu0
    %v554 = vadd.f32 %v488, %v553
    %v555 = vpop.f32.mrb[0].mxu0
    %556 = vdwg.mxu0
    %v557 = vmax.f32 %v551, 0.0
    %v558 = vmax.f32 %v554, 0.0
    %559 = vst.msk [vmem:[#allocation2 + $0x3] sm:$0xff] %vm125, %v557
    %560 = vst.msk [vmem:[#allocation2 + $0xb] sm:$0x3f] %vm223, %v558
    %s561 = scalar_lea.vmem [#allocation8], 16
    %v562 = vld [vmem:[%s561] sm:$0x7f]
    %v563 = vld [vmem:[%s4 + $0x2] sm:$0x1]
    %v564 = vlaneseq
    %v565 = vshrl.u32 %v564, 7
    %v566 = vsub.s32 0, %v565
    %v567 = vrot.slane %v563, %v566
    %v568 = vadd.f32 %v567, 0.0
    %v569 = vld [vmem:[#allocation2] sm:$0xff]
    %v570 = vld [vmem:[#allocation2 + $0x8] sm:$0x3f]
    %v571 = vlaneseq
    %v572 = vshrl.u32 %v571, 7
    %v573 = vsub.s32 0, %v572
    %v574 = vrot.slane %v562, %v573
    %v575 = vmul.f32 %v569, %v574
    %v576 = vmul.f32 %v570, %v574
    %v577 = vadd.f32 %v568, %v575
    %v578 = vadd.f32 %v568, %v576
    %v579 = vld [vmem:[#allocation2 + $0x1] sm:$0xff]
    %v580 = vld [vmem:[#allocation2 + $0x9] sm:$0x3f]
    %v581 = vlaneseq
    %v582 = vshrl.u32 %v581, 7
    %v583 = vsub.s32 1, %v582
    %v584 = vrot.slane %v562, %v583
    %v585 = vmul.f32 %v579, %v584
    %v586 = vmul.f32 %v580, %v584
    %v587 = vadd.f32 %v577, %v585
    %v588 = vadd.f32 %v578, %v586
    %v589 = vld [vmem:[#allocation2 + $0x2] sm:$0xff]
    %v590 = vld [vmem:[#allocation2 + $0xa] sm:$0x3f]
    %v591 = vlaneseq
    %v592 = vshrl.u32 %v591, 7
    %v593 = vsub.s32 2, %v592
    %v594 = vrot.slane %v562, %v593
    %v595 = vmul.f32 %v589, %v594
    %v596 = vmul.f32 %v590, %v594
    %v597 = vadd.f32 %v587, %v595
    %v598 = vadd.f32 %v588, %v596
    %v599 = vld [vmem:[#allocation2 + $0x3] sm:$0xff]
    %v600 = vld [vmem:[#allocation2 + $0xb] sm:$0x3f]
    %v601 = vlaneseq
    %v602 = vshrl.u32 %v601, 7
    %v603 = vsub.s32 3, %v602
    %v604 = vrot.slane %v562, %v603
    %v605 = vmul.f32 %v599, %v604
    %v606 = vmul.f32 %v600, %v604
    %v607 = vadd.f32 %v597, %v605
    %v608 = vadd.f32 %v598, %v606
    %v609 = vld [vmem:[#allocation2 + $0x4] sm:$0xff]
    %v610 = vld [vmem:[#allocation2 + $0xc] sm:$0x3f]
    %v611 = vlaneseq
    %v612 = vshrl.u32 %v611, 7
    %v613 = vsub.s32 4, %v612
    %v614 = vrot.slane %v562, %v613
    %v615 = vmul.f32 %v609, %v614
    %v616 = vmul.f32 %v610, %v614
    %v617 = vadd.f32 %v607, %v615
    %v618 = vadd.f32 %v608, %v616
    %v619 = vld [vmem:[#allocation2 + $0x5] sm:$0xff]
    %v620 = vld [vmem:[#allocation2 + $0xd] sm:$0x3f]
    %v621 = vlaneseq
    %v622 = vshrl.u32 %v621, 7
    %v623 = vsub.s32 5, %v622
    %v624 = vrot.slane %v562, %v623
    %v625 = vmul.f32 %v619, %v624
    %v626 = vmul.f32 %v620, %v624
    %v627 = vadd.f32 %v617, %v625
    %v628 = vadd.f32 %v618, %v626
    %v629 = vld [vmem:[#allocation2 + $0x6] sm:$0xff]
    %v630 = vld [vmem:[#allocation2 + $0xe] sm:$0x3f]
    %v631 = vlaneseq
    %v632 = vshrl.u32 %v631, 7
    %v633 = vsub.s32 6, %v632
    %v634 = vrot.slane %v562, %v633
    %v635 = vmul.f32 %v629, %v634
    %v636 = vmul.f32 %v630, %v634
    %v637 = vadd.f32 %v627, %v635
    %v638 = vadd.f32 %v628, %v636
    %v639 = vmax.f32 %v637, 0.0
    %v640 = vmax.f32 %v638, 0.0
    %v641 = vadd.f32 %v639, %v557
    %v642 = vadd.f32 %v640, %v558
    %v643 = vpack.c.bf16 %v642, %v641
    %s644 = scalar_lea.vmem [#allocation9], 64
    %v645 = vld [vmem:[%s644] sm:$0xf]
    %v646 = vld [vmem:[%s644 + $0x4] sm:$0xf]
    %v647 = vld [vmem:[%s644 + $0x8] sm:$0xf]
    %v648 = vld [vmem:[%s644 + $0xc] sm:$0xf]
    %v649 = vld [vmem:[%s644 + $0x10] sm:$0xf]
    %v650 = vld [vmem:[%s644 + $0x14] sm:$0xf]
    %v651 = vld [vmem:[%s644 + $0x18] sm:$0xf]
    %v652 = vld [vmem:[%s644 + $0x1c] sm:$0xf]
    %v653 = vld [vmem:[%s6 + $0x2] sm:$0x1]
    %v654 = vlaneseq
    %v655 = vshrl.u32 %v654, 7
    %v656 = vsub.s32 0, %v655
    %v657 = vrot.slane %v653, %v656
    %v666 = vunpack.c.l.b16 %v645
    %v667 = vunpack.c.l.b16 %v646
    %v668 = vunpack.c.l.b16 %v647
    %v669 = vunpack.c.l.b16 %v648
    %v670 = vunpack.c.l.b16 %v649
    %v671 = vunpack.c.l.b16 %v650
    %v672 = vunpack.c.l.b16 %v651
    %v673 = vunpack.c.l.b16 %v652
    %v674 = vpack.c.b16 %v667, %v666
    %v675 = vpack.c.b16 %v669, %v668
    %v676 = vpack.c.b16 %v671, %v670
    %v677 = vpack.c.b16 %v673, %v672
    %v683 = vsel %vm125, %v643, 0
    %685 = vmatprep.subr.bf16.mxu0 0
    %686 = vmatpush1.bf16.msra.mxu0 %v674
    %687 = vmatprep.subr.bf16.mxu0 0
    %688 = vmatpush1.bf16.msra.mxu0 %v675
    %689 = vmatprep.subr.bf16.mxu0 0
    %690 = vmatpush1.bf16.msra.mxu0 %v676
    %691 = vmatprep.subr.bf16.mxu0 0
    %692 = vmatpush1.bf16.msra.mxu0 %v677
    %693 = vmatprep.subr.bf16.mxu0 0
    %694 = vmatpush1.bf16.msra.mxu0 0
    %695 = vmatprep.subr.bf16.mxu0 0
    %696 = vmatpush1.bf16.msra.mxu0 0
    %697 = vmatprep.subr.bf16.mxu0 0
    %698 = vmatpush1.bf16.msra.mxu0 0
    %699 = vmatprep.subr.bf16.mxu0 0
    %700 = vmatpush1.bf16.msra.mxu0 0
    %701 = vmatprep.subr.bf16.mxu0 0
    %702 = vmatpush1.bf16.msra.mxu0 0
    %703 = vmatprep.subr.bf16.mxu0 0
    %704 = vmatpush1.bf16.msra.mxu0 0
    %705 = vmatprep.subr.bf16.mxu0 0
    %706 = vmatpush1.bf16.msra.mxu0 0
    %707 = vmatprep.subr.bf16.mxu0 0
    %708 = vmatpush1.bf16.msra.mxu0 0
    %709 = vmatprep.subr.bf16.mxu0 0
    %710 = vmatpush1.bf16.msra.mxu0 0
    %711 = vmatprep.subr.bf16.mxu0 0
    %712 = vmatpush1.bf16.msra.mxu0 0
    %713 = vmatprep.subr.bf16.mxu0 0
    %714 = vmatpush1.bf16.msra.mxu0 0
    %715 = vmatprep.subr.bf16.mxu0 0
    %716 = vmatpush1.bf16.msra.mxu0 0
    %717 = vmatprep.mubr.bf16.mxu0 0
    %718 = vmatmul.mubr.bf16.gmra.mrb[0].mxu0 %v683
    %v719 = vpop.f32.mrb[0].mxu0
    %v720 = vadd.f32 %v657, %v719
    %v721 = vpop.f32.mrb[0].mxu0
    %v722 = vpop.f32.mrb[0].mxu0
    %v723 = vadd.f32 %v657, %v722
    %v724 = vpop.f32.mrb[0].mxu0
    %725 = vdwg.mxu0
    %v726 = vmax.f32 %v720, 0.0
    %v727 = vmax.f32 %v723, 0.0
    %728 = vst.msk [vmem:[#allocation2 + $0x3] sm:$0xff] %vm125, %v726
    %729 = vst.msk [vmem:[#allocation2 + $0xb] sm:$0x3f] %vm223, %v727
    %s730 = scalar_lea.vmem [#allocation8], 24
    %v731 = vld [vmem:[%s730] sm:$0x7f]
    %v732 = vld [vmem:[%s4 + $0x3] sm:$0x1]
    %v733 = vlaneseq
    %v734 = vshrl.u32 %v733, 7
    %v735 = vsub.s32 0, %v734
    %v736 = vrot.slane %v732, %v735
    %v737 = vadd.f32 %v736, 0.0
    %v738 = vld [vmem:[#allocation2] sm:$0xff]
    %v739 = vld [vmem:[#allocation2 + $0x8] sm:$0x3f]
    %v740 = vlaneseq
    %v741 = vshrl.u32 %v740, 7
    %v742 = vsub.s32 0, %v741
    %v743 = vrot.slane %v731, %v742
    %v744 = vmul.f32 %v738, %v743
    %v745 = vmul.f32 %v739, %v743
    %v746 = vadd.f32 %v737, %v744
    %v747 = vadd.f32 %v737, %v745
    %v748 = vld [vmem:[#allocation2 + $0x1] sm:$0xff]
    %v749 = vld [vmem:[#allocation2 + $0x9] sm:$0x3f]
    %v750 = vlaneseq
    %v751 = vshrl.u32 %v750, 7
    %v752 = vsub.s32 1, %v751
    %v753 = vrot.slane %v731, %v752
    %v754 = vmul.f32 %v748, %v753
    %v755 = vmul.f32 %v749, %v753
    %v756 = vadd.f32 %v746, %v754
    %v757 = vadd.f32 %v747, %v755
    %v758 = vld [vmem:[#allocation2 + $0x2] sm:$0xff]
    %v759 = vld [vmem:[#allocation2 + $0xa] sm:$0x3f]
    %v760 = vlaneseq
    %v761 = vshrl.u32 %v760, 7
    %v762 = vsub.s32 2, %v761
    %v763 = vrot.slane %v731, %v762
    %v764 = vmul.f32 %v758, %v763
    %v765 = vmul.f32 %v759, %v763
    %v766 = vadd.f32 %v756, %v764
    %v767 = vadd.f32 %v757, %v765
    %v768 = vld [vmem:[#allocation2 + $0x3] sm:$0xff]
    %v769 = vld [vmem:[#allocation2 + $0xb] sm:$0x3f]
    %v770 = vlaneseq
    %v771 = vshrl.u32 %v770, 7
    %v772 = vsub.s32 3, %v771
    %v773 = vrot.slane %v731, %v772
    %v774 = vmul.f32 %v768, %v773
    %v775 = vmul.f32 %v769, %v773
    %v776 = vadd.f32 %v766, %v774
    %v777 = vadd.f32 %v767, %v775
    %v778 = vld [vmem:[#allocation2 + $0x4] sm:$0xff]
    %v779 = vld [vmem:[#allocation2 + $0xc] sm:$0x3f]
    %v780 = vlaneseq
    %v781 = vshrl.u32 %v780, 7
    %v782 = vsub.s32 4, %v781
    %v783 = vrot.slane %v731, %v782
    %v784 = vmul.f32 %v778, %v783
    %v785 = vmul.f32 %v779, %v783
    %v786 = vadd.f32 %v776, %v784
    %v787 = vadd.f32 %v777, %v785
    %v788 = vld [vmem:[#allocation2 + $0x5] sm:$0xff]
    %v789 = vld [vmem:[#allocation2 + $0xd] sm:$0x3f]
    %v790 = vlaneseq
    %v791 = vshrl.u32 %v790, 7
    %v792 = vsub.s32 5, %v791
    %v793 = vrot.slane %v731, %v792
    %v794 = vmul.f32 %v788, %v793
    %v795 = vmul.f32 %v789, %v793
    %v796 = vadd.f32 %v786, %v794
    %v797 = vadd.f32 %v787, %v795
    %v798 = vld [vmem:[#allocation2 + $0x6] sm:$0xff]
    %v799 = vld [vmem:[#allocation2 + $0xe] sm:$0x3f]
    %v800 = vlaneseq
    %v801 = vshrl.u32 %v800, 7
    %v802 = vsub.s32 6, %v801
    %v803 = vrot.slane %v731, %v802
    %v804 = vmul.f32 %v798, %v803
    %v805 = vmul.f32 %v799, %v803
    %v806 = vadd.f32 %v796, %v804
    %v807 = vadd.f32 %v797, %v805
    %v808 = vmax.f32 %v806, 0.0
    %v809 = vmax.f32 %v807, 0.0
    %v810 = vadd.f32 %v808, %v726
    %v811 = vadd.f32 %v809, %v727
    %v812 = vpack.c.bf16 %v811, %v810
    %s813 = scalar_lea.vmem [#allocation9], 96
    %v814 = vld [vmem:[%s813] sm:$0xf]
    %v815 = vld [vmem:[%s813 + $0x4] sm:$0xf]
    %v816 = vld [vmem:[%s813 + $0x8] sm:$0xf]
    %v817 = vld [vmem:[%s813 + $0xc] sm:$0xf]
    %v818 = vld [vmem:[%s813 + $0x10] sm:$0xf]
    %v819 = vld [vmem:[%s813 + $0x14] sm:$0xf]
    %v820 = vld [vmem:[%s813 + $0x18] sm:$0xf]
    %v821 = vld [vmem:[%s813 + $0x1c] sm:$0xf]
    %v822 = vld [vmem:[%s6 + $0x3] sm:$0x1]
    %v823 = vlaneseq
    %v824 = vshrl.u32 %v823, 7
    %v825 = vsub.s32 0, %v824
    %v826 = vrot.slane %v822, %v825
    %v835 = vunpack.c.l.b16 %v814
    %v836 = vunpack.c.l.b16 %v815
    %v837 = vunpack.c.l.b16 %v816
    %v838 = vunpack.c.l.b16 %v817
    %v839 = vunpack.c.l.b16 %v818
    %v840 = vunpack.c.l.b16 %v819
    %v841 = vunpack.c.l.b16 %v820
    %v842 = vunpack.c.l.b16 %v821
    %v843 = vpack.c.b16 %v836, %v835
    %v844 = vpack.c.b16 %v838, %v837
    %v845 = vpack.c.b16 %v840, %v839
    %v846 = vpack.c.b16 %v842, %v841
    %v852 = vsel %vm125, %v812, 0
    %854 = vmatprep.subr.bf16.mxu0 0
    %855 = vmatpush1.bf16.msra.mxu0 %v843
    %856 = vmatprep.subr.bf16.mxu0 0
    %857 = vmatpush1.bf16.msra.mxu0 %v844
    %858 = vmatprep.subr.bf16.mxu0 0
    %859 = vmatpush1.bf16.msra.mxu0 %v845
    %860 = vmatprep.subr.bf16.mxu0 0
    %861 = vmatpush1.bf16.msra.mxu0 %v846
    %862 = vmatprep.subr.bf16.mxu0 0
    %863 = vmatpush1.bf16.msra.mxu0 0
    %864 = vmatprep.subr.bf16.mxu0 0
    %865 = vmatpush1.bf16.msra.mxu0 0
    %866 = vmatprep.subr.bf16.mxu0 0
    %867 = vmatpush1.bf16.msra.mxu0 0
    %868 = vmatprep.subr.bf16.mxu0 0
    %869 = vmatpush1.bf16.msra.mxu0 0
    %870 = vmatprep.subr.bf16.mxu0 0
    %871 = vmatpush1.bf16.msra.mxu0 0
    %872 = vmatprep.subr.bf16.mxu0 0
    %873 = vmatpush1.bf16.msra.mxu0 0
    %874 = vmatprep.subr.bf16.mxu0 0
    %875 = vmatpush1.bf16.msra.mxu0 0
    %876 = vmatprep.subr.bf16.mxu0 0
    %877 = vmatpush1.bf16.msra.mxu0 0
    %878 = vmatprep.subr.bf16.mxu0 0
    %879 = vmatpush1.bf16.msra.mxu0 0
    %880 = vmatprep.subr.bf16.mxu0 0
    %881 = vmatpush1.bf16.msra.mxu0 0
    %882 = vmatprep.subr.bf16.mxu0 0
    %883 = vmatpush1.bf16.msra.mxu0 0
    %884 = vmatprep.subr.bf16.mxu0 0
    %885 = vmatpush1.bf16.msra.mxu0 0
    %886 = vmatprep.mubr.bf16.mxu0 0
    %887 = vmatmul.mubr.bf16.gmra.mrb[0].mxu0 %v852
    %v888 = vpop.f32.mrb[0].mxu0
    %v889 = vadd.f32 %v826, %v888
    %v890 = vpop.f32.mrb[0].mxu0
    %v891 = vpop.f32.mrb[0].mxu0
    %v892 = vadd.f32 %v826, %v891
    %v893 = vpop.f32.mrb[0].mxu0
    %894 = vdwg.mxu0
    %v895 = vmax.f32 %v889, 0.0
    %v896 = vmax.f32 %v892, 0.0
    %897 = vst.msk [vmem:[#allocation2 + $0x3] sm:$0xff] %vm125, %v895
    %898 = vst.msk [vmem:[#allocation2 + $0xb] sm:$0x3f] %vm223, %v896
    %s899 = scalar_lea.vmem [#allocation8], 32
    %v900 = vld [vmem:[%s899] sm:$0x7f]
    %v901 = vld [vmem:[%s4 + $0x4] sm:$0x1]
    %v902 = vlaneseq
    %v903 = vshrl.u32 %v902, 7
    %v904 = vsub.s32 0, %v903
    %v905 = vrot.slane %v901, %v904
    %v906 = vadd.f32 %v905, 0.0
    %v907 = vld [vmem:[#allocation2] sm:$0xff]
    %v908 = vld [vmem:[#allocation2 + $0x8] sm:$0x3f]
    %v909 = vlaneseq
    %v910 = vshrl.u32 %v909, 7
    %v911 = vsub.s32 0, %v910
    %v912 = vrot.slane %v900, %v911
    %v913 = vmul.f32 %v907, %v912
    %v914 = vmul.f32 %v908, %v912
    %v915 = vadd.f32 %v906, %v913
    %v916 = vadd.f32 %v906, %v914
    %v917 = vld [vmem:[#allocation2 + $0x1] sm:$0xff]
    %v918 = vld [vmem:[#allocation2 + $0x9] sm:$0x3f]
    %v919 = vlaneseq
    %v920 = vshrl.u32 %v919, 7
    %v921 = vsub.s32 1, %v920
    %v922 = vrot.slane %v900, %v921
    %v923 = vmul.f32 %v917, %v922
    %v924 = vmul.f32 %v918, %v922
    %v925 = vadd.f32 %v915, %v923
    %v926 = vadd.f32 %v916, %v924
    %v927 = vld [vmem:[#allocation2 + $0x2] sm:$0xff]
    %v928 = vld [vmem:[#allocation2 + $0xa] sm:$0x3f]
    %v929 = vlaneseq
    %v930 = vshrl.u32 %v929, 7
    %v931 = vsub.s32 2, %v930
    %v932 = vrot.slane %v900, %v931
    %v933 = vmul.f32 %v927, %v932
    %v934 = vmul.f32 %v928, %v932
    %v935 = vadd.f32 %v925, %v933
    %v936 = vadd.f32 %v926, %v934
    %v937 = vld [vmem:[#allocation2 + $0x3] sm:$0xff]
    %v938 = vld [vmem:[#allocation2 + $0xb] sm:$0x3f]
    %v939 = vlaneseq
    %v940 = vshrl.u32 %v939, 7
    %v941 = vsub.s32 3, %v940
    %v942 = vrot.slane %v900, %v941
    %v943 = vmul.f32 %v937, %v942
    %v944 = vmul.f32 %v938, %v942
    %v945 = vadd.f32 %v935, %v943
    %v946 = vadd.f32 %v936, %v944
    %v947 = vld [vmem:[#allocation2 + $0x4] sm:$0xff]
    %v948 = vld [vmem:[#allocation2 + $0xc] sm:$0x3f]
    %v949 = vlaneseq
    %v950 = vshrl.u32 %v949, 7
    %v951 = vsub.s32 4, %v950
    %v952 = vrot.slane %v900, %v951
    %v953 = vmul.f32 %v947, %v952
    %v954 = vmul.f32 %v948, %v952
    %v955 = vadd.f32 %v945, %v953
    %v956 = vadd.f32 %v946, %v954
    %v957 = vld [vmem:[#allocation2 + $0x5] sm:$0xff]
    %v958 = vld [vmem:[#allocation2 + $0xd] sm:$0x3f]
    %v959 = vlaneseq
    %v960 = vshrl.u32 %v959, 7
    %v961 = vsub.s32 5, %v960
    %v962 = vrot.slane %v900, %v961
    %v963 = vmul.f32 %v957, %v962
    %v964 = vmul.f32 %v958, %v962
    %v965 = vadd.f32 %v955, %v963
    %v966 = vadd.f32 %v956, %v964
    %v967 = vld [vmem:[#allocation2 + $0x6] sm:$0xff]
    %v968 = vld [vmem:[#allocation2 + $0xe] sm:$0x3f]
    %v969 = vlaneseq
    %v970 = vshrl.u32 %v969, 7
    %v971 = vsub.s32 6, %v970
    %v972 = vrot.slane %v900, %v971
    %v973 = vmul.f32 %v967, %v972
    %v974 = vmul.f32 %v968, %v972
    %v975 = vadd.f32 %v965, %v973
    %v976 = vadd.f32 %v966, %v974
    %v977 = vmax.f32 %v975, 0.0
    %v978 = vmax.f32 %v976, 0.0
    %v979 = vadd.f32 %v977, %v895
    %v980 = vadd.f32 %v978, %v896
    %v981 = vpack.c.bf16 %v980, %v979
    %s982 = scalar_lea.vmem [#allocation9], 128
    %v983 = vld [vmem:[%s982] sm:$0xf]
    %v984 = vld [vmem:[%s982 + $0x4] sm:$0xf]
    %v985 = vld [vmem:[%s982 + $0x8] sm:$0xf]
    %v986 = vld [vmem:[%s982 + $0xc] sm:$0xf]
    %v987 = vld [vmem:[%s982 + $0x10] sm:$0xf]
    %v988 = vld [vmem:[%s982 + $0x14] sm:$0xf]
    %v989 = vld [vmem:[%s982 + $0x18] sm:$0xf]
    %v990 = vld [vmem:[%s982 + $0x1c] sm:$0xf]
    %v991 = vld [vmem:[%s6 + $0x4] sm:$0x1]
    %v992 = vlaneseq
    %v993 = vshrl.u32 %v992, 7
    %v994 = vsub.s32 0, %v993
    %v995 = vrot.slane %v991, %v994
    %v1004 = vunpack.c.l.b16 %v983
    %v1005 = vunpack.c.l.b16 %v984
    %v1006 = vunpack.c.l.b16 %v985
    %v1007 = vunpack.c.l.b16 %v986
    %v1008 = vunpack.c.l.b16 %v987
    %v1009 = vunpack.c.l.b16 %v988
    %v1010 = vunpack.c.l.b16 %v989
    %v1011 = vunpack.c.l.b16 %v990
    %v1012 = vpack.c.b16 %v1005, %v1004
    %v1013 = vpack.c.b16 %v1007, %v1006
    %v1014 = vpack.c.b16 %v1009, %v1008
    %v1015 = vpack.c.b16 %v1011, %v1010
    %v1021 = vsel %vm125, %v981, 0
    %1023 = vmatprep.subr.bf16.mxu0 0
    %1024 = vmatpush1.bf16.msra.mxu0 %v1012
    %1025 = vmatprep.subr.bf16.mxu0 0
    %1026 = vmatpush1.bf16.msra.mxu0 %v1013
    %1027 = vmatprep.subr.bf16.mxu0 0
    %1028 = vmatpush1.bf16.msra.mxu0 %v1014
    %1029 = vmatprep.subr.bf16.mxu0 0
    %1030 = vmatpush1.bf16.msra.mxu0 %v1015
    %1031 = vmatprep.subr.bf16.mxu0 0
    %1032 = vmatpush1.bf16.msra.mxu0 0
    %1033 = vmatprep.subr.bf16.mxu0 0
    %1034 = vmatpush1.bf16.msra.mxu0 0
    %1035 = vmatprep.subr.bf16.mxu0 0
    %1036 = vmatpush1.bf16.msra.mxu0 0
    %1037 = vmatprep.subr.bf16.mxu0 0
    %1038 = vmatpush1.bf16.msra.mxu0 0
    %1039 = vmatprep.subr.bf16.mxu0 0
    %1040 = vmatpush1.bf16.msra.mxu0 0
    %1041 = vmatprep.subr.bf16.mxu0 0
    %1042 = vmatpush1.bf16.msra.mxu0 0
    %1043 = vmatprep.subr.bf16.mxu0 0
    %1044 = vmatpush1.bf16.msra.mxu0 0
    %1045 = vmatprep.subr.bf16.mxu0 0
    %1046 = vmatpush1.bf16.msra.mxu0 0
    %1047 = vmatprep.subr.bf16.mxu0 0
    %1048 = vmatpush1.bf16.msra.mxu0 0
    %1049 = vmatprep.subr.bf16.mxu0 0
    %1050 = vmatpush1.bf16.msra.mxu0 0
    %1051 = vmatprep.subr.bf16.mxu0 0
    %1052 = vmatpush1.bf16.msra.mxu0 0
    %1053 = vmatprep.subr.bf16.mxu0 0
    %1054 = vmatpush1.bf16.msra.mxu0 0
    %1055 = vmatprep.mubr.bf16.mxu0 0
    %1056 = vmatmul.mubr.bf16.gmra.mrb[0].mxu0 %v1021
    %v1057 = vpop.f32.mrb[0].mxu0
    %v1058 = vadd.f32 %v995, %v1057
    %v1059 = vpop.f32.mrb[0].mxu0
    %v1060 = vpop.f32.mrb[0].mxu0
    %v1061 = vadd.f32 %v995, %v1060
    %v1062 = vpop.f32.mrb[0].mxu0
    %1063 = vdwg.mxu0
    %v1064 = vmax.f32 %v1058, 0.0
    %v1065 = vmax.f32 %v1061, 0.0
    %v1066 = vld [vmem:[%s7] sm:$0x7f]
    %vm1067 = vcmask 113664
    %v1069 = vsel %vm1067, %v1066, 0
    %v1072 = vsel %vm165, %v1065, 0
    %1074 = vmatprep.subr.mxu0 0.0
    %1075 = vmatpush1.msra.mxu0 %v1064
    %1076 = vmatprep.subr.mxu0 0.0
    %1077 = vmatpush1.msra.mxu0 %v1072
    %1078 = vmatprep.subr.mxu0 0.0
    %1079 = vmatpush1.msra.mxu0 0.0
    %1080 = vmatprep.subr.mxu0 0.0
    %1081 = vmatpush1.msra.mxu0 0.0
    %1082 = vmatprep.subr.mxu0 0.0
    %1083 = vmatpush1.msra.mxu0 0.0
    %1084 = vmatprep.subr.mxu0 0.0
    %1085 = vmatpush1.msra.mxu0 0.0
    %1086 = vmatprep.subr.mxu0 0.0
    %1087 = vmatpush1.msra.mxu0 0.0
    %1088 = vmatprep.subr.mxu0 0.0
    %1089 = vmatpush1.msra.mxu0 0.0
    %1090 = vmatprep.subr.mxu0 0.0
    %1091 = vmatpush1.msra.mxu0 0.0
    %1092 = vmatprep.subr.mxu0 0.0
    %1093 = vmatpush1.msra.mxu0 0.0
    %1094 = vmatprep.subr.mxu0 0.0
    %1095 = vmatpush1.msra.mxu0 0.0
    %1096 = vmatprep.subr.mxu0 0.0
    %1097 = vmatpush1.msra.mxu0 0.0
    %1098 = vmatprep.subr.mxu0 0.0
    %1099 = vmatpush1.msra.mxu0 0.0
    %1100 = vmatprep.subr.mxu0 0.0
    %1101 = vmatpush1.msra.mxu0 0.0
    %1102 = vmatprep.subr.mxu0 0.0
    %1103 = vmatpush1.msra.mxu0 0.0
    %1104 = vmatprep.subr.mxu0 0.0
    %1105 = vmatpush1.msra.mxu0 0.0
    %1106 = vmatprep.subr.mxu0 0.0
    %1107 = vmatpush1.msra.mxu0 0.0
    %1108 = vmatprep.subr.mxu0 0.0
    %1109 = vmatpush1.msra.mxu0 0.0
    %1110 = vmatprep.subr.mxu0 0.0
    %1111 = vmatpush1.msra.mxu0 0.0
    %1112 = vmatprep.subr.mxu0 0.0
    %1113 = vmatpush1.msra.mxu0 0.0
    %1114 = vmatprep.subr.mxu0 0.0
    %1115 = vmatpush1.msra.mxu0 0.0
    %1116 = vmatprep.subr.mxu0 0.0
    %1117 = vmatpush1.msra.mxu0 0.0
    %1118 = vmatprep.subr.mxu0 0.0
    %1119 = vmatpush1.msra.mxu0 0.0
    %1120 = vmatprep.subr.mxu0 0.0
    %1121 = vmatpush1.msra.mxu0 0.0
    %1122 = vmatprep.subr.mxu0 0.0
    %1123 = vmatpush1.msra.mxu0 0.0
    %1124 = vmatprep.subr.mxu0 0.0
    %1125 = vmatpush1.msra.mxu0 0.0
    %1126 = vmatprep.subr.mxu0 0.0
    %1127 = vmatpush1.msra.mxu0 0.0
    %1128 = vmatprep.subr.mxu0 0.0
    %1129 = vmatpush1.msra.mxu0 0.0
    %1130 = vmatprep.subr.mxu0 0.0
    %1131 = vmatpush1.msra.mxu0 0.0
    %1132 = vmatprep.subr.mxu0 0.0
    %1133 = vmatpush1.msra.mxu0 0.0
    %1134 = vmatprep.subr.mxu0 0.0
    %1135 = vmatpush1.msra.mxu0 0.0
    %1136 = vmatprep.subr.mxu0 0.0
    %1137 = vmatpush1.msra.mxu0 0.0
    %1138 = vmatprep.mubr.f32.mxu0 0.0
    %1139 = vmatmul.mubr.f32.gmra.mrb[0].mxu0 %v1069
    %v1140 = vpop.f32.mrb[0].mxu0
    %v1141 = vadd.f32 0.0, %v1140
    %v1142 = vpop.f32.mrb[0].mxu0
    %1143 = vdwg.mxu0
    %v1144 = vpack.c.bf16 %v1141, %v1141
    %v1145 = vld [vmem:[#allocation11] sm:$0xff]
    %v1146 = vld [vmem:[#allocation11 + $0x8] sm:$0xff]
    %v1147 = vld [vmem:[#allocation11 + $0x10] sm:$0xff]
    %v1148 = vld [vmem:[#allocation11 + $0x18] sm:$0xff]
    %v1149 = vld [vmem:[#allocation11 + $0x20] sm:$0xff]
    %v1150 = vld [vmem:[#allocation11 + $0x28] sm:$0xff]
    %v1151 = vld [vmem:[#allocation11 + $0x30] sm:$0xff]
    %v1152 = vld [vmem:[#allocation11 + $0x38] sm:$0xff]
    %v1153 = vld [vmem:[#allocation11 + $0x40] sm:$0xff]
    %v1154 = vld [vmem:[#allocation11 + $0x48] sm:$0xff]
    %v1155 = vld [vmem:[#allocation11 + $0x50] sm:$0xff]
    %v1156 = vld [vmem:[#allocation11 + $0x58] sm:$0xff]
    %v1157 = vld [vmem:[#allocation11 + $0x60] sm:$0xff]
    %v1158 = vld [vmem:[#allocation11 + $0x68] sm:$0xff]
    %v1159 = vld [vmem:[#allocation11 + $0x70] sm:$0xff]
    %v1160 = vld [vmem:[#allocation11 + $0x78] sm:$0xff]
    %v1161 = vld [vmem:[#allocation11 + $0x80] sm:$0xff]
    %v1162 = vld [vmem:[#allocation11 + $0x88] sm:$0xff]
    %v1163 = vld [vmem:[#allocation11 + $0x90] sm:$0xff]
    %v1164 = vld [vmem:[#allocation11 + $0x98] sm:$0xff]
    %v1165 = vld [vmem:[#allocation11 + $0xa0] sm:$0xff]
    %v1166 = vld [vmem:[#allocation11 + $0xa8] sm:$0xff]
    %v1167 = vld [vmem:[#allocation11 + $0xb0] sm:$0xff]
    %v1168 = vld [vmem:[#allocation11 + $0xb8] sm:$0xff]
    %v1169 = vld [vmem:[#allocation11 + $0xc0] sm:$0xff]
    %v1170 = vld [vmem:[#allocation11 + $0xc8] sm:$0xff]
    %v1171 = vld [vmem:[#allocation11 + $0xd0] sm:$0xff]
    %v1172 = vld [vmem:[#allocation11 + $0xd8] sm:$0xff]
    %v1173 = vld [vmem:[#allocation11 + $0xe0] sm:$0xff]
    %v1174 = vld [vmem:[#allocation11 + $0xe8] sm:$0xff]
    %v1175 = vld [vmem:[#allocation11 + $0xf0] sm:$0xff]
    %v1176 = vld [vmem:[#allocation11 + $0xf8] sm:$0xff]
    %s1177 = scalar_lea.vmem [#allocation11], 256
    %v1178 = vld [vmem:[%s1177] sm:$0xff]
    %v1179 = vld [vmem:[%s1177 + $0x8] sm:$0xff]
    %v1180 = vld [vmem:[%s1177 + $0x10] sm:$0xff]
    %v1181 = vld [vmem:[%s1177 + $0x18] sm:$0xff]
    %v1182 = vld [vmem:[%s1177 + $0x20] sm:$0xff]
    %v1183 = vld [vmem:[%s1177 + $0x28] sm:$0xff]
    %v1184 = vld [vmem:[%s1177 + $0x30] sm:$0xff]
    %v1185 = vld [vmem:[%s1177 + $0x38] sm:$0xff]
    %v1186 = vld [vmem:[%s1177 + $0x40] sm:$0xff]
    %v1187 = vld [vmem:[%s1177 + $0x48] sm:$0xff]
    %v1188 = vld [vmem:[%s1177 + $0x50] sm:$0xff]
    %v1189 = vld [vmem:[%s1177 + $0x58] sm:$0xff]
    %v1190 = vld [vmem:[%s1177 + $0x60] sm:$0xff]
    %v1191 = vld [vmem:[%s1177 + $0x68] sm:$0xff]
    %v1192 = vld [vmem:[%s1177 + $0x70] sm:$0xff]
    %v1193 = vld [vmem:[%s1177 + $0x78] sm:$0xff]
    %v1194 = vld [vmem:[%s1177 + $0x80] sm:$0xff]
    %v1195 = vld [vmem:[%s1177 + $0x88] sm:$0xff]
    %v1196 = vld [vmem:[%s1177 + $0x90] sm:$0xff]
    %v1197 = vld [vmem:[%s1177 + $0x98] sm:$0xff]
    %v1198 = vld [vmem:[%s1177 + $0xa0] sm:$0xff]
    %v1199 = vld [vmem:[%s1177 + $0xa8] sm:$0xff]
    %v1200 = vld [vmem:[%s1177 + $0xb0] sm:$0xff]
    %v1201 = vld [vmem:[%s1177 + $0xb8] sm:$0xff]
    %v1202 = vld [vmem:[%s1177 + $0xc0] sm:$0xff]
    %v1203 = vld [vmem:[%s1177 + $0xc8] sm:$0xff]
    %v1204 = vld [vmem:[%s1177 + $0xd0] sm:$0xff]
    %v1205 = vld [vmem:[%s1177 + $0xd8] sm:$0xff]
    %v1206 = vld [vmem:[%s1177 + $0xe0] sm:$0xff]
    %v1207 = vld [vmem:[%s1177 + $0xe8] sm:$0xff]
    %v1208 = vld [vmem:[%s1177 + $0xf0] sm:$0xff]
    %v1209 = vld [vmem:[%s1177 + $0xf8] sm:$0xff]
    %v1211 = vshrl.u32 %v1144, 16
    %v1245 = vunpack.c.l.b16 %v1178
    %v1246 = vunpack.c.h.b16 %v1178
    %v1247 = vunpack.c.l.b16 %v1179
    %v1248 = vunpack.c.h.b16 %v1179
    %v1249 = vunpack.c.l.b16 %v1180
    %v1250 = vunpack.c.h.b16 %v1180
    %v1251 = vunpack.c.l.b16 %v1181
    %v1252 = vunpack.c.h.b16 %v1181
    %v1253 = vunpack.c.l.b16 %v1182
    %v1254 = vunpack.c.h.b16 %v1182
    %v1255 = vunpack.c.l.b16 %v1183
    %v1256 = vunpack.c.h.b16 %v1183
    %v1257 = vunpack.c.l.b16 %v1184
    %v1258 = vunpack.c.h.b16 %v1184
    %v1259 = vunpack.c.l.b16 %v1185
    %v1260 = vunpack.c.h.b16 %v1185
    %v1261 = vunpack.c.l.b16 %v1186
    %v1262 = vunpack.c.h.b16 %v1186
    %v1263 = vunpack.c.l.b16 %v1187
    %v1264 = vunpack.c.h.b16 %v1187
    %v1265 = vunpack.c.l.b16 %v1188
    %v1266 = vunpack.c.h.b16 %v1188
    %v1267 = vunpack.c.l.b16 %v1189
    %v1268 = vunpack.c.h.b16 %v1189
    %v1269 = vunpack.c.l.b16 %v1190
    %v1270 = vunpack.c.h.b16 %v1190
    %v1271 = vunpack.c.l.b16 %v1191
    %v1272 = vunpack.c.h.b16 %v1191
    %v1273 = vunpack.c.l.b16 %v1192
    %v1274 = vunpack.c.h.b16 %v1192
    %v1275 = vunpack.c.l.b16 %v1193
    %v1276 = vunpack.c.h.b16 %v1193
    %v1277 = vunpack.c.l.b16 %v1194
    %v1278 = vunpack.c.h.b16 %v1194
    %v1279 = vunpack.c.l.b16 %v1195
    %v1280 = vunpack.c.h.b16 %v1195
    %v1281 = vunpack.c.l.b16 %v1196
    %v1282 = vunpack.c.h.b16 %v1196
    %v1283 = vunpack.c.l.b16 %v1197
    %v1284 = vunpack.c.h.b16 %v1197
    %v1285 = vunpack.c.l.b16 %v1198
    %v1286 = vunpack.c.h.b16 %v1198
    %v1287 = vunpack.c.l.b16 %v1199
    %v1288 = vunpack.c.h.b16 %v1199
    %v1289 = vunpack.c.l.b16 %v1200
    %v1290 = vunpack.c.h.b16 %v1200
    %v1291 = vunpack.c.l.b16 %v1201
    %v1292 = vunpack.c.h.b16 %v1201
    %v1293 = vunpack.c.l.b16 %v1202
    %v1294 = vunpack.c.h.b16 %v1202
    %v1295 = vunpack.c.l.b16 %v1203
    %v1296 = vunpack.c.h.b16 %v1203
    %v1297 = vunpack.c.l.b16 %v1204
    %v1298 = vunpack.c.h.b16 %v1204
    %v1299 = vunpack.c.l.b16 %v1205
    %v1300 = vunpack.c.h.b16 %v1205
    %v1301 = vunpack.c.l.b16 %v1206
    %v1302 = vunpack.c.h.b16 %v1206
    %v1303 = vunpack.c.l.b16 %v1207
    %v1304 = vunpack.c.h.b16 %v1207
    %v1305 = vunpack.c.l.b16 %v1208
    %v1306 = vunpack.c.h.b16 %v1208
    %v1307 = vunpack.c.l.b16 %v1209
    %v1308 = vunpack.c.h.b16 %v1209
    %v1309 = vpack.c.b16 %v1253, %v1245
    %v1310 = vpack.c.b16 %v1254, %v1246
    %v1311 = vpack.c.b16 %v1255, %v1247
    %v1312 = vpack.c.b16 %v1256, %v1248
    %v1313 = vpack.c.b16 %v1257, %v1249
    %v1314 = vpack.c.b16 %v1258, %v1250
    %v1315 = vpack.c.b16 %v1259, %v1251
    %v1316 = vpack.c.b16 %v1260, %v1252
    %v1317 = vpack.c.b16 %v1269, %v1261
    %v1318 = vpack.c.b16 %v1270, %v1262
    %v1319 = vpack.c.b16 %v1271, %v1263
    %v1320 = vpack.c.b16 %v1272, %v1264
    %v1321 = vpack.c.b16 %v1273, %v1265
    %v1322 = vpack.c.b16 %v1274, %v1266
    %v1323 = vpack.c.b16 %v1275, %v1267
    %v1324 = vpack.c.b16 %v1276, %v1268
    %v1325 = vpack.c.b16 %v1285, %v1277
    %v1326 = vpack.c.b16 %v1286, %v1278
    %v1327 = vpack.c.b16 %v1287, %v1279
    %v1328 = vpack.c.b16 %v1288, %v1280
    %v1329 = vpack.c.b16 %v1289, %v1281
    %v1330 = vpack.c.b16 %v1290, %v1282
    %v1331 = vpack.c.b16 %v1291, %v1283
    %v1332 = vpack.c.b16 %v1292, %v1284
    %v1333 = vpack.c.b16 %v1301, %v1293
    %v1334 = vpack.c.b16 %v1302, %v1294
    %v1335 = vpack.c.b16 %v1303, %v1295
    %v1336 = vpack.c.b16 %v1304, %v1296
    %v1337 = vpack.c.b16 %v1305, %v1297
    %v1338 = vpack.c.b16 %v1306, %v1298
    %v1339 = vpack.c.b16 %v1307, %v1299
    %v1340 = vpack.c.b16 %v1308, %v1300
    %v1374 = vsel %vm125, %v1211, 0
    %1376 = vmatprep.subr.bf16.mxu0 %v1310
    %1377 = vmatpush1.bf16.msra.mxu0 %v1309
    %1378 = vmatprep.subr.bf16.mxu0 %v1318
    %1379 = vmatpush1.bf16.msra.mxu0 %v1317
    %1380 = vmatprep.subr.bf16.mxu0 %v1326
    %1381 = vmatpush1.bf16.msra.mxu0 %v1325
    %1382 = vmatprep.subr.bf16.mxu0 %v1334
    %1383 = vmatpush1.bf16.msra.mxu0 %v1333
    %1384 = vmatprep.subr.bf16.mxu0 0
    %1385 = vmatpush1.bf16.msra.mxu0 0
    %1386 = vmatprep.subr.bf16.mxu0 0
    %1387 = vmatpush1.bf16.msra.mxu0 0
    %1388 = vmatprep.subr.bf16.mxu0 0
    %1389 = vmatpush1.bf16.msra.mxu0 0
    %1390 = vmatprep.subr.bf16.mxu0 0
    %1391 = vmatpush1.bf16.msra.mxu0 0
    %1392 = vmatprep.subr.bf16.mxu0 0
    %1393 = vmatpush1.bf16.msra.mxu0 0
    %1394 = vmatprep.subr.bf16.mxu0 0
    %1395 = vmatpush1.bf16.msra.mxu0 0
    %1396 = vmatprep.subr.bf16.mxu0 0
    %1397 = vmatpush1.bf16.msra.mxu0 0
    %1398 = vmatprep.subr.bf16.mxu0 0
    %1399 = vmatpush1.bf16.msra.mxu0 0
    %1400 = vmatprep.subr.bf16.mxu0 0
    %1401 = vmatpush1.bf16.msra.mxu0 0
    %1402 = vmatprep.subr.bf16.mxu0 0
    %1403 = vmatpush1.bf16.msra.mxu0 0
    %1404 = vmatprep.subr.bf16.mxu0 0
    %1405 = vmatpush1.bf16.msra.mxu0 0
    %1406 = vmatprep.subr.bf16.mxu0 0
    %1407 = vmatpush1.bf16.msra.mxu0 0
    %1408 = vmatprep.mubr.bf16.mxu0 0
    %1409 = vmatmul.mubr.bf16.gmra.mrb[0].mxu0 %v1374
    %v1410 = vpop.f32.mrb[0].mxu0
    %v1411 = vadd.f32 0.0, %v1410
    %v1412 = vpop.f32.mrb[0].mxu0
    %v1413 = vadd.f32 0.0, %v1412
    %v1414 = vpop.f32.mrb[0].mxu0
    %v1415 = vpop.f32.mrb[0].mxu0
    %1416 = vdwg.mxu0
    %1417 = vmatprep.subr.bf16.mxu0 %v1312
    %1418 = vmatpush1.bf16.msra.mxu0 %v1311
    %1419 = vmatprep.subr.bf16.mxu0 %v1320
    %1420 = vmatpush1.bf16.msra.mxu0 %v1319
    %1421 = vmatprep.subr.bf16.mxu0 %v1328
    %1422 = vmatpush1.bf16.msra.mxu0 %v1327
    %1423 = vmatprep.subr.bf16.mxu0 %v1336
    %1424 = vmatpush1.bf16.msra.mxu0 %v1335
    %1425 = vmatprep.subr.bf16.mxu0 0
    %1426 = vmatpush1.bf16.msra.mxu0 0
    %1427 = vmatprep.subr.bf16.mxu0 0
    %1428 = vmatpush1.bf16.msra.mxu0 0
    %1429 = vmatprep.subr.bf16.mxu0 0
    %1430 = vmatpush1.bf16.msra.mxu0 0
    %1431 = vmatprep.subr.bf16.mxu0 0
    %1432 = vmatpush1.bf16.msra.mxu0 0
    %1433 = vmatprep.subr.bf16.mxu0 0
    %1434 = vmatpush1.bf16.msra.mxu0 0
    %1435 = vmatprep.subr.bf16.mxu0 0
    %1436 = vmatpush1.bf16.msra.mxu0 0
    %1437 = vmatprep.subr.bf16.mxu0 0
    %1438 = vmatpush1.bf16.msra.mxu0 0
    %1439 = vmatprep.subr.bf16.mxu0 0
    %1440 = vmatpush1.bf16.msra.mxu0 0
    %1441 = vmatprep.subr.bf16.mxu0 0
    %1442 = vmatpush1.bf16.msra.mxu0 0
    %1443 = vmatprep.subr.bf16.mxu0 0
    %1444 = vmatpush1.bf16.msra.mxu0 0
    %1445 = vmatprep.subr.bf16.mxu0 0
    %1446 = vmatpush1.bf16.msra.mxu0 0
    %1447 = vmatprep.subr.bf16.mxu0 0
    %1448 = vmatpush1.bf16.msra.mxu0 0
    %1449 = vmatprep.mubr.bf16.mxu0 0
    %1450 = vmatmul.mubr.bf16.gmra.mrb[0].mxu0 %v1374
    %v1451 = vpop.f32.mrb[0].mxu0
    %v1452 = vadd.f32 0.0, %v1451
    %v1453 = vpop.f32.mrb[0].mxu0
    %v1454 = vadd.f32 0.0, %v1453
    %v1455 = vpop.f32.mrb[0].mxu0
    %v1456 = vpop.f32.mrb[0].mxu0
    %1457 = vdwg.mxu0
    %1458 = vmatprep.subr.bf16.mxu0 %v1314
    %1459 = vmatpush1.bf16.msra.mxu0 %v1313
    %1460 = vmatprep.subr.bf16.mxu0 %v1322
    %1461 = vmatpush1.bf16.msra.mxu0 %v1321
    %1462 = vmatprep.subr.bf16.mxu0 %v1330
    %1463 = vmatpush1.bf16.msra.mxu0 %v1329
    %1464 = vmatprep.subr.bf16.mxu0 %v1338
    %1465 = vmatpush1.bf16.msra.mxu0 %v1337
    %1466 = vmatprep.subr.bf16.mxu0 0
    %1467 = vmatpush1.bf16.msra.mxu0 0
    %1468 = vmatprep.subr.bf16.mxu0 0
    %1469 = vmatpush1.bf16.msra.mxu0 0
    %1470 = vmatprep.subr.bf16.mxu0 0
    %1471 = vmatpush1.bf16.msra.mxu0 0
    %1472 = vmatprep.subr.bf16.mxu0 0
    %1473 = vmatpush1.bf16.msra.mxu0 0
    %1474 = vmatprep.subr.bf16.mxu0 0
    %1475 = vmatpush1.bf16.msra.mxu0 0
    %1476 = vmatprep.subr.bf16.mxu0 0
    %1477 = vmatpush1.bf16.msra.mxu0 0
    %1478 = vmatprep.subr.bf16.mxu0 0
    %1479 = vmatpush1.bf16.msra.mxu0 0
    %1480 = vmatprep.subr.bf16.mxu0 0
    %1481 = vmatpush1.bf16.msra.mxu0 0
    %1482 = vmatprep.subr.bf16.mxu0 0
    %1483 = vmatpush1.bf16.msra.mxu0 0
    %1484 = vmatprep.subr.bf16.mxu0 0
    %1485 = vmatpush1.bf16.msra.mxu0 0
    %1486 = vmatprep.subr.bf16.mxu0 0
    %1487 = vmatpush1.bf16.msra.mxu0 0
    %1488 = vmatprep.subr.bf16.mxu0 0
    %1489 = vmatpush1.bf16.msra.mxu0 0
    %1490 = vmatprep.mubr.bf16.mxu0 0
    %1491 = vmatmul.mubr.bf16.gmra.mrb[0].mxu0 %v1374
    %v1492 = vpop.f32.mrb[0].mxu0
    %v1493 = vadd.f32 0.0, %v1492
    %v1494 = vpop.f32.mrb[0].mxu0
    %v1495 = vadd.f32 0.0, %v1494
    %v1496 = vpop.f32.mrb[0].mxu0
    %v1497 = vpop.f32.mrb[0].mxu0
    %1498 = vdwg.mxu0
    %1499 = vmatprep.subr.bf16.mxu0 %v1316
    %1500 = vmatpush1.bf16.msra.mxu0 %v1315
    %1501 = vmatprep.subr.bf16.mxu0 %v1324
    %1502 = vmatpush1.bf16.msra.mxu0 %v1323
    %1503 = vmatprep.subr.bf16.mxu0 %v1332
    %1504 = vmatpush1.bf16.msra.mxu0 %v1331
    %1505 = vmatprep.subr.bf16.mxu0 %v1340
    %1506 = vmatpush1.bf16.msra.mxu0 %v1339
    %1507 = vmatprep.subr.bf16.mxu0 0
    %1508 = vmatpush1.bf16.msra.mxu0 0
    %1509 = vmatprep.subr.bf16.mxu0 0
    %1510 = vmatpush1.bf16.msra.mxu0 0
    %1511 = vmatprep.subr.bf16.mxu0 0
    %1512 = vmatpush1.bf16.msra.mxu0 0
    %1513 = vmatprep.subr.bf16.mxu0 0
    %1514 = vmatpush1.bf16.msra.mxu0 0
    %1515 = vmatprep.subr.bf16.mxu0 0
    %1516 = vmatpush1.bf16.msra.mxu0 0
    %1517 = vmatprep.subr.bf16.mxu0 0
    %1518 = vmatpush1.bf16.msra.mxu0 0
    %1519 = vmatprep.subr.bf16.mxu0 0
    %1520 = vmatpush1.bf16.msra.mxu0 0
    %1521 = vmatprep.subr.bf16.mxu0 0
    %1522 = vmatpush1.bf16.msra.mxu0 0
    %1523 = vmatprep.subr.bf16.mxu0 0
    %1524 = vmatpush1.bf16.msra.mxu0 0
    %1525 = vmatprep.subr.bf16.mxu0 0
    %1526 = vmatpush1.bf16.msra.mxu0 0
    %1527 = vmatprep.subr.bf16.mxu0 0
    %1528 = vmatpush1.bf16.msra.mxu0 0
    %1529 = vmatprep.subr.bf16.mxu0 0
    %1530 = vmatpush1.bf16.msra.mxu0 0
    %1531 = vmatprep.mubr.bf16.mxu0 0
    %1532 = vmatmul.mubr.bf16.gmra.mrb[0].mxu0 %v1374
    %v1533 = vpop.f32.mrb[0].mxu0
    %v1534 = vadd.f32 0.0, %v1533
    %v1535 = vpop.f32.mrb[0].mxu0
    %v1536 = vadd.f32 0.0, %v1535
    %v1537 = vpop.f32.mrb[0].mxu0
    %v1538 = vpop.f32.mrb[0].mxu0
    %1539 = vdwg.mxu0
    %v1572 = vunpack.c.l.b16 %v1145
    %v1573 = vunpack.c.h.b16 %v1145
    %v1574 = vunpack.c.l.b16 %v1146
    %v1575 = vunpack.c.h.b16 %v1146
    %v1576 = vunpack.c.l.b16 %v1147
    %v1577 = vunpack.c.h.b16 %v1147
    %v1578 = vunpack.c.l.b16 %v1148
    %v1579 = vunpack.c.h.b16 %v1148
    %v1580 = vunpack.c.l.b16 %v1149
    %v1581 = vunpack.c.h.b16 %v1149
    %v1582 = vunpack.c.l.b16 %v1150
    %v1583 = vunpack.c.h.b16 %v1150
    %v1584 = vunpack.c.l.b16 %v1151
    %v1585 = vunpack.c.h.b16 %v1151
    %v1586 = vunpack.c.l.b16 %v1152
    %v1587 = vunpack.c.h.b16 %v1152
    %v1588 = vunpack.c.l.b16 %v1153
    %v1589 = vunpack.c.h.b16 %v1153
    %v1590 = vunpack.c.l.b16 %v1154
    %v1591 = vunpack.c.h.b16 %v1154
    %v1592 = vunpack.c.l.b16 %v1155
    %v1593 = vunpack.c.h.b16 %v1155
    %v1594 = vunpack.c.l.b16 %v1156
    %v1595 = vunpack.c.h.b16 %v1156
    %v1596 = vunpack.c.l.b16 %v1157
    %v1597 = vunpack.c.h.b16 %v1157
    %v1598 = vunpack.c.l.b16 %v1158
    %v1599 = vunpack.c.h.b16 %v1158
    %v1600 = vunpack.c.l.b16 %v1159
    %v1601 = vunpack.c.h.b16 %v1159
    %v1602 = vunpack.c.l.b16 %v1160
    %v1603 = vunpack.c.h.b16 %v1160
    %v1604 = vunpack.c.l.b16 %v1161
    %v1605 = vunpack.c.h.b16 %v1161
    %v1606 = vunpack.c.l.b16 %v1162
    %v1607 = vunpack.c.h.b16 %v1162
    %v1608 = vunpack.c.l.b16 %v1163
    %v1609 = vunpack.c.h.b16 %v1163
    %v1610 = vunpack.c.l.b16 %v1164
    %v1611 = vunpack.c.h.b16 %v1164
    %v1612 = vunpack.c.l.b16 %v1165
    %v1613 = vunpack.c.h.b16 %v1165
    %v1614 = vunpack.c.l.b16 %v1166
    %v1615 = vunpack.c.h.b16 %v1166
    %v1616 = vunpack.c.l.b16 %v1167
    %v1617 = vunpack.c.h.b16 %v1167
    %v1618 = vunpack.c.l.b16 %v1168
    %v1619 = vunpack.c.h.b16 %v1168
    %v1620 = vunpack.c.l.b16 %v1169
    %v1621 = vunpack.c.h.b16 %v1169
    %v1622 = vunpack.c.l.b16 %v1170
    %v1623 = vunpack.c.h.b16 %v1170
    %v1624 = vunpack.c.l.b16 %v1171
    %v1625 = vunpack.c.h.b16 %v1171
    %v1626 = vunpack.c.l.b16 %v1172
    %v1627 = vunpack.c.h.b16 %v1172
    %v1628 = vunpack.c.l.b16 %v1173
    %v1629 = vunpack.c.h.b16 %v1173
    %v1630 = vunpack.c.l.b16 %v1174
    %v1631 = vunpack.c.h.b16 %v1174
    %v1632 = vunpack.c.l.b16 %v1175
    %v1633 = vunpack.c.h.b16 %v1175
    %v1634 = vunpack.c.l.b16 %v1176
    %v1635 = vunpack.c.h.b16 %v1176
    %v1636 = vpack.c.b16 %v1580, %v1572
    %v1637 = vpack.c.b16 %v1581, %v1573
    %v1638 = vpack.c.b16 %v1582, %v1574
    %v1639 = vpack.c.b16 %v1583, %v1575
    %v1640 = vpack.c.b16 %v1584, %v1576
    %v1641 = vpack.c.b16 %v1585, %v1577
    %v1642 = vpack.c.b16 %v1586, %v1578
    %v1643 = vpack.c.b16 %v1587, %v1579
    %v1644 = vpack.c.b16 %v1596, %v1588
    %v1645 = vpack.c.b16 %v1597, %v1589
    %v1646 = vpack.c.b16 %v1598, %v1590
    %v1647 = vpack.c.b16 %v1599, %v1591
    %v1648 = vpack.c.b16 %v1600, %v1592
    %v1649 = vpack.c.b16 %v1601, %v1593
    %v1650 = vpack.c.b16 %v1602, %v1594
    %v1651 = vpack.c.b16 %v1603, %v1595
    %v1652 = vpack.c.b16 %v1612, %v1604
    %v1653 = vpack.c.b16 %v1613, %v1605
    %v1654 = vpack.c.b16 %v1614, %v1606
    %v1655 = vpack.c.b16 %v1615, %v1607
    %v1656 = vpack.c.b16 %v1616, %v1608
    %v1657 = vpack.c.b16 %v1617, %v1609
    %v1658 = vpack.c.b16 %v1618, %v1610
    %v1659 = vpack.c.b16 %v1619, %v1611
    %v1660 = vpack.c.b16 %v1628, %v1620
    %v1661 = vpack.c.b16 %v1629, %v1621
    %v1662 = vpack.c.b16 %v1630, %v1622
    %v1663 = vpack.c.b16 %v1631, %v1623
    %v1664 = vpack.c.b16 %v1632, %v1624
    %v1665 = vpack.c.b16 %v1633, %v1625
    %v1666 = vpack.c.b16 %v1634, %v1626
    %v1667 = vpack.c.b16 %v1635, %v1627
    %v1700 = vsel %vm125, %v1144, 0
    %1702 = vmatprep.subr.bf16.mxu0 %v1637
    %1703 = vmatpush1.bf16.msra.mxu0 %v1636
    %1704 = vmatprep.subr.bf16.mxu0 %v1645
    %1705 = vmatpush1.bf16.msra.mxu0 %v1644
    %1706 = vmatprep.subr.bf16.mxu0 %v1653
    %1707 = vmatpush1.bf16.msra.mxu0 %v1652
    %1708 = vmatprep.subr.bf16.mxu0 %v1661
    %1709 = vmatpush1.bf16.msra.mxu0 %v1660
    %1710 = vmatprep.subr.bf16.mxu0 0
    %1711 = vmatpush1.bf16.msra.mxu0 0
    %1712 = vmatprep.subr.bf16.mxu0 0
    %1713 = vmatpush1.bf16.msra.mxu0 0
    %1714 = vmatprep.subr.bf16.mxu0 0
    %1715 = vmatpush1.bf16.msra.mxu0 0
    %1716 = vmatprep.subr.bf16.mxu0 0
    %1717 = vmatpush1.bf16.msra.mxu0 0
    %1718 = vmatprep.subr.bf16.mxu0 0
    %1719 = vmatpush1.bf16.msra.mxu0 0
    %1720 = vmatprep.subr.bf16.mxu0 0
    %1721 = vmatpush1.bf16.msra.mxu0 0
    %1722 = vmatprep.subr.bf16.mxu0 0
    %1723 = vmatpush1.bf16.msra.mxu0 0
    %1724 = vmatprep.subr.bf16.mxu0 0
    %1725 = vmatpush1.bf16.msra.mxu0 0
    %1726 = vmatprep.subr.bf16.mxu0 0
    %1727 = vmatpush1.bf16.msra.mxu0 0
    %1728 = vmatprep.subr.bf16.mxu0 0
    %1729 = vmatpush1.bf16.msra.mxu0 0
    %1730 = vmatprep.subr.bf16.mxu0 0
    %1731 = vmatpush1.bf16.msra.mxu0 0
    %1732 = vmatprep.subr.bf16.mxu0 0
    %1733 = vmatpush1.bf16.msra.mxu0 0
    %1734 = vmatprep.mubr.bf16.mxu0 0
    %1735 = vmatmul.mubr.bf16.gmra.mrb[0].mxu0 %v1700
    %v1736 = vpop.f32.mrb[0].mxu0
    %v1737 = vadd.f32 %v1411, %v1736
    %v1738 = vpop.f32.mrb[0].mxu0
    %v1739 = vadd.f32 %v1413, %v1738
    %v1740 = vpop.f32.mrb[0].mxu0
    %v1741 = vpop.f32.mrb[0].mxu0
    %1742 = vdwg.mxu0
    %1743 = vmatprep.subr.bf16.mxu0 %v1639
    %1744 = vmatpush1.bf16.msra.mxu0 %v1638
    %1745 = vmatprep.subr.bf16.mxu0 %v1647
    %1746 = vmatpush1.bf16.msra.mxu0 %v1646
    %1747 = vmatprep.subr.bf16.mxu0 %v1655
    %1748 = vmatpush1.bf16.msra.mxu0 %v1654
    %1749 = vmatprep.subr.bf16.mxu0 %v1663
    %1750 = vmatpush1.bf16.msra.mxu0 %v1662
    %1751 = vmatprep.subr.bf16.mxu0 0
    %1752 = vmatpush1.bf16.msra.mxu0 0
    %1753 = vmatprep.subr.bf16.mxu0 0
    %1754 = vmatpush1.bf16.msra.mxu0 0
    %1755 = vmatprep.subr.bf16.mxu0 0
    %1756 = vmatpush1.bf16.msra.mxu0 0
    %1757 = vmatprep.subr.bf16.mxu0 0
    %1758 = vmatpush1.bf16.msra.mxu0 0
    %1759 = vmatprep.subr.bf16.mxu0 0
    %1760 = vmatpush1.bf16.msra.mxu0 0
    %1761 = vmatprep.subr.bf16.mxu0 0
    %1762 = vmatpush1.bf16.msra.mxu0 0
    %1763 = vmatprep.subr.bf16.mxu0 0
    %1764 = vmatpush1.bf16.msra.mxu0 0
    %1765 = vmatprep.subr.bf16.mxu0 0
    %1766 = vmatpush1.bf16.msra.mxu0 0
    %1767 = vmatprep.subr.bf16.mxu0 0
    %1768 = vmatpush1.bf16.msra.mxu0 0
    %1769 = vmatprep.subr.bf16.mxu0 0
    %1770 = vmatpush1.bf16.msra.mxu0 0
    %1771 = vmatprep.subr.bf16.mxu0 0
    %1772 = vmatpush1.bf16.msra.mxu0 0
    %1773 = vmatprep.subr.bf16.mxu0 0
    %1774 = vmatpush1.bf16.msra.mxu0 0
    %1775 = vmatprep.mubr.bf16.mxu0 0
    %1776 = vmatmul.mubr.bf16.gmra.mrb[0].mxu0 %v1700
    %v1777 = vpop.f32.mrb[0].mxu0
    %v1778 = vadd.f32 %v1452, %v1777
    %v1779 = vpop.f32.mrb[0].mxu0
    %v1780 = vadd.f32 %v1454, %v1779
    %v1781 = vpop.f32.mrb[0].mxu0
    %v1782 = vpop.f32.mrb[0].mxu0
    %1783 = vdwg.mxu0
    %1784 = vmatprep.subr.bf16.mxu0 %v1641
    %1785 = vmatpush1.bf16.msra.mxu0 %v1640
    %1786 = vmatprep.subr.bf16.mxu0 %v1649
    %1787 = vmatpush1.bf16.msra.mxu0 %v1648
    %1788 = vmatprep.subr.bf16.mxu0 %v1657
    %1789 = vmatpush1.bf16.msra.mxu0 %v1656
    %1790 = vmatprep.subr.bf16.mxu0 %v1665
    %1791 = vmatpush1.bf16.msra.mxu0 %v1664
    %1792 = vmatprep.subr.bf16.mxu0 0
    %1793 = vmatpush1.bf16.msra.mxu0 0
    %1794 = vmatprep.subr.bf16.mxu0 0
    %1795 = vmatpush1.bf16.msra.mxu0 0
    %1796 = vmatprep.subr.bf16.mxu0 0
    %1797 = vmatpush1.bf16.msra.mxu0 0
    %1798 = vmatprep.subr.bf16.mxu0 0
    %1799 = vmatpush1.bf16.msra.mxu0 0
    %1800 = vmatprep.subr.bf16.mxu0 0
    %1801 = vmatpush1.bf16.msra.mxu0 0
    %1802 = vmatprep.subr.bf16.mxu0 0
    %1803 = vmatpush1.bf16.msra.mxu0 0
    %1804 = vmatprep.subr.bf16.mxu0 0
    %1805 = vmatpush1.bf16.msra.mxu0 0
    %1806 = vmatprep.subr.bf16.mxu0 0
    %1807 = vmatpush1.bf16.msra.mxu0 0
    %1808 = vmatprep.subr.bf16.mxu0 0
    %1809 = vmatpush1.bf16.msra.mxu0 0
    %1810 = vmatprep.subr.bf16.mxu0 0
    %1811 = vmatpush1.bf16.msra.mxu0 0
    %1812 = vmatprep.subr.bf16.mxu0 0
    %1813 = vmatpush1.bf16.msra.mxu0 0
    %1814 = vmatprep.subr.bf16.mxu0 0
    %1815 = vmatpush1.bf16.msra.mxu0 0
    %1816 = vmatprep.mubr.bf16.mxu0 0
    %1817 = vmatmul.mubr.bf16.gmra.mrb[0].mxu0 %v1700
    %v1818 = vpop.f32.mrb[0].mxu0
    %v1819 = vadd.f32 %v1493, %v1818
    %v1820 = vpop.f32.mrb[0].mxu0
    %v1821 = vadd.f32 %v1495, %v1820
    %v1822 = vpop.f32.mrb[0].mxu0
    %v1823 = vpop.f32.mrb[0].mxu0
    %1824 = vdwg.mxu0
    %1825 = vmatprep.subr.bf16.mxu0 %v1643
    %1826 = vmatpush1.bf16.msra.mxu0 %v1642
    %1827 = vmatprep.subr.bf16.mxu0 %v1651
    %1828 = vmatpush1.bf16.msra.mxu0 %v1650
    %1829 = vmatprep.subr.bf16.mxu0 %v1659
    %1830 = vmatpush1.bf16.msra.mxu0 %v1658
    %1831 = vmatprep.subr.bf16.mxu0 %v1667
    %1832 = vmatpush1.bf16.msra.mxu0 %v1666
    %1833 = vmatprep.subr.bf16.mxu0 0
    %1834 = vmatpush1.bf16.msra.mxu0 0
    %1835 = vmatprep.subr.bf16.mxu0 0
    %1836 = vmatpush1.bf16.msra.mxu0 0
    %1837 = vmatprep.subr.bf16.mxu0 0
    %1838 = vmatpush1.bf16.msra.mxu0 0
    %1839 = vmatprep.subr.bf16.mxu0 0
    %1840 = vmatpush1.bf16.msra.mxu0 0
    %1841 = vmatprep.subr.bf16.mxu0 0
    %1842 = vmatpush1.bf16.msra.mxu0 0
    %1843 = vmatprep.subr.bf16.mxu0 0
    %1844 = vmatpush1.bf16.msra.mxu0 0
    %1845 = vmatprep.subr.bf16.mxu0 0
    %1846 = vmatpush1.bf16.msra.mxu0 0
    %1847 = vmatprep.subr.bf16.mxu0 0
    %1848 = vmatpush1.bf16.msra.mxu0 0
    %1849 = vmatprep.subr.bf16.mxu0 0
    %1850 = vmatpush1.bf16.msra.mxu0 0
    %1851 = vmatprep.subr.bf16.mxu0 0
    %1852 = vmatpush1.bf16.msra.mxu0 0
    %1853 = vmatprep.subr.bf16.mxu0 0
    %1854 = vmatpush1.bf16.msra.mxu0 0
    %1855 = vmatprep.subr.bf16.mxu0 0
    %1856 = vmatpush1.bf16.msra.mxu0 0
    %1857 = vmatprep.mubr.bf16.mxu0 0
    %1858 = vmatmul.mubr.bf16.gmra.mrb[0].mxu0 %v1700
    %v1859 = vpop.f32.mrb[0].mxu0
    %v1860 = vadd.f32 %v1534, %v1859
    %v1861 = vpop.f32.mrb[0].mxu0
    %v1862 = vadd.f32 %v1536, %v1861
    %v1863 = vpop.f32.mrb[0].mxu0
    %v1864 = vpop.f32.mrb[0].mxu0
    %1865 = vdwg.mxu0
    %s1866 = scalar_lea.vmem [#allocation11], 512
    %v1867 = vld [vmem:[%s1866] sm:$0xff]
    %v1868 = vld [vmem:[%s1866 + $0x8] sm:$0xff]
    %v1869 = vld [vmem:[%s1866 + $0x10] sm:$0xff]
    %v1870 = vld [vmem:[%s1866 + $0x18] sm:$0xff]
    %v1871 = vld [vmem:[%s1866 + $0x20] sm:$0xff]
    %v1872 = vld [vmem:[%s1866 + $0x28] sm:$0xff]
    %v1873 = vld [vmem:[%s1866 + $0x30] sm:$0xff]
    %v1874 = vld [vmem:[%s1866 + $0x38] sm:$0xff]
    %v1875 = vld [vmem:[%s1866 + $0x40] sm:$0xff]
    %v1876 = vld [vmem:[%s1866 + $0x48] sm:$0xff]
    %v1877 = vld [vmem:[%s1866 + $0x50] sm:$0xff]
    %v1878 = vld [vmem:[%s1866 + $0x58] sm:$0xff]
    %v1879 = vld [vmem:[%s1866 + $0x60] sm:$0xff]
    %v1880 = vld [vmem:[%s1866 + $0x68] sm:$0xff]
    %v1881 = vld [vmem:[%s1866 + $0x70] sm:$0xff]
    %v1882 = vld [vmem:[%s1866 + $0x78] sm:$0xff]
    %v1883 = vld [vmem:[%s1866 + $0x80] sm:$0xff]
    %v1884 = vld [vmem:[%s1866 + $0x88] sm:$0xff]
    %v1885 = vld [vmem:[%s1866 + $0x90] sm:$0xff]
    %v1886 = vld [vmem:[%s1866 + $0x98] sm:$0xff]
    %v1887 = vld [vmem:[%s1866 + $0xa0] sm:$0xff]
    %v1888 = vld [vmem:[%s1866 + $0xa8] sm:$0xff]
    %v1889 = vld [vmem:[%s1866 + $0xb0] sm:$0xff]
    %v1890 = vld [vmem:[%s1866 + $0xb8] sm:$0xff]
    %v1891 = vld [vmem:[%s1866 + $0xc0] sm:$0xff]
    %v1892 = vld [vmem:[%s1866 + $0xc8] sm:$0xff]
    %v1893 = vld [vmem:[%s1866 + $0xd0] sm:$0xff]
    %v1894 = vld [vmem:[%s1866 + $0xd8] sm:$0xff]
    %v1895 = vld [vmem:[%s1866 + $0xe0] sm:$0xff]
    %v1896 = vld [vmem:[%s1866 + $0xe8] sm:$0xff]
    %v1897 = vld [vmem:[%s1866 + $0xf0] sm:$0xff]
    %v1898 = vld [vmem:[%s1866 + $0xf8] sm:$0xff]
    %v1900 = vrot.slane %v1144, 1
    %v1933 = vunpack.c.l.b16 %v1867
    %v1934 = vunpack.c.h.b16 %v1867
    %v1935 = vunpack.c.l.b16 %v1868
    %v1936 = vunpack.c.h.b16 %v1868
    %v1937 = vunpack.c.l.b16 %v1869
    %v1938 = vunpack.c.h.b16 %v1869
    %v1939 = vunpack.c.l.b16 %v1870
    %v1940 = vunpack.c.h.b16 %v1870
    %v1941 = vunpack.c.l.b16 %v1871
    %v1942 = vunpack.c.h.b16 %v1871
    %v1943 = vunpack.c.l.b16 %v1872
    %v1944 = vunpack.c.h.b16 %v1872
    %v1945 = vunpack.c.l.b16 %v1873
    %v1946 = vunpack.c.h.b16 %v1873
    %v1947 = vunpack.c.l.b16 %v1874
    %v1948 = vunpack.c.h.b16 %v1874
    %v1949 = vunpack.c.l.b16 %v1875
    %v1950 = vunpack.c.h.b16 %v1875
    %v1951 = vunpack.c.l.b16 %v1876
    %v1952 = vunpack.c.h.b16 %v1876
    %v1953 = vunpack.c.l.b16 %v1877
    %v1954 = vunpack.c.h.b16 %v1877
    %v1955 = vunpack.c.l.b16 %v1878
    %v1956 = vunpack.c.h.b16 %v1878
    %v1957 = vunpack.c.l.b16 %v1879
    %v1958 = vunpack.c.h.b16 %v1879
    %v1959 = vunpack.c.l.b16 %v1880
    %v1960 = vunpack.c.h.b16 %v1880
    %v1961 = vunpack.c.l.b16 %v1881
    %v1962 = vunpack.c.h.b16 %v1881
    %v1963 = vunpack.c.l.b16 %v1882
    %v1964 = vunpack.c.h.b16 %v1882
    %v1965 = vunpack.c.l.b16 %v1883
    %v1966 = vunpack.c.h.b16 %v1883
    %v1967 = vunpack.c.l.b16 %v1884
    %v1968 = vunpack.c.h.b16 %v1884
    %v1969 = vunpack.c.l.b16 %v1885
    %v1970 = vunpack.c.h.b16 %v1885
    %v1971 = vunpack.c.l.b16 %v1886
    %v1972 = vunpack.c.h.b16 %v1886
    %v1973 = vunpack.c.l.b16 %v1887
    %v1974 = vunpack.c.h.b16 %v1887
    %v1975 = vunpack.c.l.b16 %v1888
    %v1976 = vunpack.c.h.b16 %v1888
    %v1977 = vunpack.c.l.b16 %v1889
    %v1978 = vunpack.c.h.b16 %v1889
    %v1979 = vunpack.c.l.b16 %v1890
    %v1980 = vunpack.c.h.b16 %v1890
    %v1981 = vunpack.c.l.b16 %v1891
    %v1982 = vunpack.c.h.b16 %v1891
    %v1983 = vunpack.c.l.b16 %v1892
    %v1984 = vunpack.c.h.b16 %v1892
    %v1985 = vunpack.c.l.b16 %v1893
    %v1986 = vunpack.c.h.b16 %v1893
    %v1987 = vunpack.c.l.b16 %v1894
    %v1988 = vunpack.c.h.b16 %v1894
    %v1989 = vunpack.c.l.b16 %v1895
    %v1990 = vunpack.c.h.b16 %v1895
    %v1991 = vunpack.c.l.b16 %v1896
    %v1992 = vunpack.c.h.b16 %v1896
    %v1993 = vunpack.c.l.b16 %v1897
    %v1994 = vunpack.c.h.b16 %v1897
    %v1995 = vunpack.c.l.b16 %v1898
    %v1996 = vunpack.c.h.b16 %v1898
    %v1997 = vpack.c.b16 %v1941, %v1933
    %v1998 = vpack.c.b16 %v1942, %v1934
    %v1999 = vpack.c.b16 %v1943, %v1935
    %v2000 = vpack.c.b16 %v1944, %v1936
    %v2001 = vpack.c.b16 %v1945, %v1937
    %v2002 = vpack.c.b16 %v1946, %v1938
    %v2003 = vpack.c.b16 %v1947, %v1939
    %v2004 = vpack.c.b16 %v1948, %v1940
    %v2005 = vpack.c.b16 %v1957, %v1949
    %v2006 = vpack.c.b16 %v1958, %v1950
    %v2007 = vpack.c.b16 %v1959, %v1951
    %v2008 = vpack.c.b16 %v1960, %v1952
    %v2009 = vpack.c.b16 %v1961, %v1953
    %v2010 = vpack.c.b16 %v1962, %v1954
    %v2011 = vpack.c.b16 %v1963, %v1955
    %v2012 = vpack.c.b16 %v1964, %v1956
    %v2013 = vpack.c.b16 %v1973, %v1965
    %v2014 = vpack.c.b16 %v1974, %v1966
    %v2015 = vpack.c.b16 %v1975, %v1967
    %v2016 = vpack.c.b16 %v1976, %v1968
    %v2017 = vpack.c.b16 %v1977, %v1969
    %v2018 = vpack.c.b16 %v1978, %v1970
    %v2019 = vpack.c.b16 %v1979, %v1971
    %v2020 = vpack.c.b16 %v1980, %v1972
    %v2021 = vpack.c.b16 %v1989, %v1981
    %v2022 = vpack.c.b16 %v1990, %v1982
    %v2023 = vpack.c.b16 %v1991, %v1983
    %v2024 = vpack.c.b16 %v1992, %v1984
    %v2025 = vpack.c.b16 %v1993, %v1985
    %v2026 = vpack.c.b16 %v1994, %v1986
    %v2027 = vpack.c.b16 %v1995, %v1987
    %v2028 = vpack.c.b16 %v1996, %v1988
    %v2062 = vsel %vm125, %v1900, 0
    %2064 = vmatprep.subr.bf16.mxu0 %v1998
    %2065 = vmatpush1.bf16.msra.mxu0 %v1997
    %2066 = vmatprep.subr.bf16.mxu0 %v2006
    %2067 = vmatpush1.bf16.msra.mxu0 %v2005
    %2068 = vmatprep.subr.bf16.mxu0 %v2014
    %2069 = vmatpush1.bf16.msra.mxu0 %v2013
    %2070 = vmatprep.subr.bf16.mxu0 %v2022
    %2071 = vmatpush1.bf16.msra.mxu0 %v2021
    %2072 = vmatprep.subr.bf16.mxu0 0
    %2073 = vmatpush1.bf16.msra.mxu0 0
    %2074 = vmatprep.subr.bf16.mxu0 0
    %2075 = vmatpush1.bf16.msra.mxu0 0
    %2076 = vmatprep.subr.bf16.mxu0 0
    %2077 = vmatpush1.bf16.msra.mxu0 0
    %2078 = vmatprep.subr.bf16.mxu0 0
    %2079 = vmatpush1.bf16.msra.mxu0 0
    %2080 = vmatprep.subr.bf16.mxu0 0
    %2081 = vmatpush1.bf16.msra.mxu0 0
    %2082 = vmatprep.subr.bf16.mxu0 0
    %2083 = vmatpush1.bf16.msra.mxu0 0
    %2084 = vmatprep.subr.bf16.mxu0 0
    %2085 = vmatpush1.bf16.msra.mxu0 0
    %2086 = vmatprep.subr.bf16.mxu0 0
    %2087 = vmatpush1.bf16.msra.mxu0 0
    %2088 = vmatprep.subr.bf16.mxu0 0
    %2089 = vmatpush1.bf16.msra.mxu0 0
    %2090 = vmatprep.subr.bf16.mxu0 0
    %2091 = vmatpush1.bf16.msra.mxu0 0
    %2092 = vmatprep.subr.bf16.mxu0 0
    %2093 = vmatpush1.bf16.msra.mxu0 0
    %2094 = vmatprep.subr.bf16.mxu0 0
    %2095 = vmatpush1.bf16.msra.mxu0 0
    %2096 = vmatprep.mubr.bf16.mxu0 0
    %2097 = vmatmul.mubr.bf16.gmra.mrb[0].mxu0 %v2062
    %v2098 = vpop.f32.mrb[0].mxu0
    %v2099 = vadd.f32 0.0, %v2098
    %v2100 = vpop.f32.mrb[0].mxu0
    %v2101 = vadd.f32 0.0, %v2100
    %v2102 = vpop.f32.mrb[0].mxu0
    %v2103 = vpop.f32.mrb[0].mxu0
    %2104 = vdwg.mxu0
    %2105 = vmatprep.subr.bf16.mxu0 %v2000
    %2106 = vmatpush1.bf16.msra.mxu0 %v1999
    %2107 = vmatprep.subr.bf16.mxu0 %v2008
    %2108 = vmatpush1.bf16.msra.mxu0 %v2007
    %2109 = vmatprep.subr.bf16.mxu0 %v2016
    %2110 = vmatpush1.bf16.msra.mxu0 %v2015
    %2111 = vmatprep.subr.bf16.mxu0 %v2024
    %2112 = vmatpush1.bf16.msra.mxu0 %v2023
    %2113 = vmatprep.subr.bf16.mxu0 0
    %2114 = vmatpush1.bf16.msra.mxu0 0
    %2115 = vmatprep.subr.bf16.mxu0 0
    %2116 = vmatpush1.bf16.msra.mxu0 0
    %2117 = vmatprep.subr.bf16.mxu0 0
    %2118 = vmatpush1.bf16.msra.mxu0 0
    %2119 = vmatprep.subr.bf16.mxu0 0
    %2120 = vmatpush1.bf16.msra.mxu0 0
    %2121 = vmatprep.subr.bf16.mxu0 0
    %2122 = vmatpush1.bf16.msra.mxu0 0
    %2123 = vmatprep.subr.bf16.mxu0 0
    %2124 = vmatpush1.bf16.msra.mxu0 0
    %2125 = vmatprep.subr.bf16.mxu0 0
    %2126 = vmatpush1.bf16.msra.mxu0 0
    %2127 = vmatprep.subr.bf16.mxu0 0
    %2128 = vmatpush1.bf16.msra.mxu0 0
    %2129 = vmatprep.subr.bf16.mxu0 0
    %2130 = vmatpush1.bf16.msra.mxu0 0
    %2131 = vmatprep.subr.bf16.mxu0 0
    %2132 = vmatpush1.bf16.msra.mxu0 0
    %2133 = vmatprep.subr.bf16.mxu0 0
    %2134 = vmatpush1.bf16.msra.mxu0 0
    %2135 = vmatprep.subr.bf16.mxu0 0
    %2136 = vmatpush1.bf16.msra.mxu0 0
    %2137 = vmatprep.mubr.bf16.mxu0 0
    %2138 = vmatmul.mubr.bf16.gmra.mrb[0].mxu0 %v2062
    %v2139 = vpop.f32.mrb[0].mxu0
    %v2140 = vadd.f32 0.0, %v2139
    %v2141 = vpop.f32.mrb[0].mxu0
    %v2142 = vadd.f32 0.0, %v2141
    %v2143 = vpop.f32.mrb[0].mxu0
    %v2144 = vpop.f32.mrb[0].mxu0
    %2145 = vdwg.mxu0
    %2146 = vmatprep.subr.bf16.mxu0 %v2002
    %2147 = vmatpush1.bf16.msra.mxu0 %v2001
    %2148 = vmatprep.subr.bf16.mxu0 %v2010
    %2149 = vmatpush1.bf16.msra.mxu0 %v2009
    %2150 = vmatprep.subr.bf16.mxu0 %v2018
    %2151 = vmatpush1.bf16.msra.mxu0 %v2017
    %2152 = vmatprep.subr.bf16.mxu0 %v2026
    %2153 = vmatpush1.bf16.msra.mxu0 %v2025
    %2154 = vmatprep.subr.bf16.mxu0 0
    %2155 = vmatpush1.bf16.msra.mxu0 0
    %2156 = vmatprep.subr.bf16.mxu0 0
    %2157 = vmatpush1.bf16.msra.mxu0 0
    %2158 = vmatprep.subr.bf16.mxu0 0
    %2159 = vmatpush1.bf16.msra.mxu0 0
    %2160 = vmatprep.subr.bf16.mxu0 0
    %2161 = vmatpush1.bf16.msra.mxu0 0
    %2162 = vmatprep.subr.bf16.mxu0 0
    %2163 = vmatpush1.bf16.msra.mxu0 0
    %2164 = vmatprep.subr.bf16.mxu0 0
    %2165 = vmatpush1.bf16.msra.mxu0 0
    %2166 = vmatprep.subr.bf16.mxu0 0
    %2167 = vmatpush1.bf16.msra.mxu0 0
    %2168 = vmatprep.subr.bf16.mxu0 0
    %2169 = vmatpush1.bf16.msra.mxu0 0
    %2170 = vmatprep.subr.bf16.mxu0 0
    %2171 = vmatpush1.bf16.msra.mxu0 0
    %2172 = vmatprep.subr.bf16.mxu0 0
    %2173 = vmatpush1.bf16.msra.mxu0 0
    %2174 = vmatprep.subr.bf16.mxu0 0
    %2175 = vmatpush1.bf16.msra.mxu0 0
    %2176 = vmatprep.subr.bf16.mxu0 0
    %2177 = vmatpush1.bf16.msra.mxu0 0
    %2178 = vmatprep.mubr.bf16.mxu0 0
    %2179 = vmatmul.mubr.bf16.gmra.mrb[0].mxu0 %v2062
    %v2180 = vpop.f32.mrb[0].mxu0
    %v2181 = vadd.f32 0.0, %v2180
    %v2182 = vpop.f32.mrb[0].mxu0
    %v2183 = vadd.f32 0.0, %v2182
    %v2184 = vpop.f32.mrb[0].mxu0
    %v2185 = vpop.f32.mrb[0].mxu0
    %2186 = vdwg.mxu0
    %2187 = vmatprep.subr.bf16.mxu0 %v2004
    %2188 = vmatpush1.bf16.msra.mxu0 %v2003
    %2189 = vmatprep.subr.bf16.mxu0 %v2012
    %2190 = vmatpush1.bf16.msra.mxu0 %v2011
    %2191 = vmatprep.subr.bf16.mxu0 %v2020
    %2192 = vmatpush1.bf16.msra.mxu0 %v2019
    %2193 = vmatprep.subr.bf16.mxu0 %v2028
    %2194 = vmatpush1.bf16.msra.mxu0 %v2027
    %2195 = vmatprep.subr.bf16.mxu0 0
    %2196 = vmatpush1.bf16.msra.mxu0 0
    %2197 = vmatprep.subr.bf16.mxu0 0
    %2198 = vmatpush1.bf16.msra.mxu0 0
    %2199 = vmatprep.subr.bf16.mxu0 0
    %2200 = vmatpush1.bf16.msra.mxu0 0
    %2201 = vmatprep.subr.bf16.mxu0 0
    %2202 = vmatpush1.bf16.msra.mxu0 0
    %2203 = vmatprep.subr.bf16.mxu0 0
    %2204 = vmatpush1.bf16.msra.mxu0 0
    %2205 = vmatprep.subr.bf16.mxu0 0
    %2206 = vmatpush1.bf16.msra.mxu0 0
    %2207 = vmatprep.subr.bf16.mxu0 0
    %2208 = vmatpush1.bf16.msra.mxu0 0
    %2209 = vmatprep.subr.bf16.mxu0 0
    %2210 = vmatpush1.bf16.msra.mxu0 0
    %2211 = vmatprep.subr.bf16.mxu0 0
    %2212 = vmatpush1.bf16.msra.mxu0 0
    %2213 = vmatprep.subr.bf16.mxu0 0
    %2214 = vmatpush1.bf16.msra.mxu0 0
    %2215 = vmatprep.subr.bf16.mxu0 0
    %2216 = vmatpush1.bf16.msra.mxu0 0
    %2217 = vmatprep.subr.bf16.mxu0 0
    %2218 = vmatpush1.bf16.msra.mxu0 0
    %2219 = vmatprep.mubr.bf16.mxu0 0
    %2220 = vmatmul.mubr.bf16.gmra.mrb[0].mxu0 %v2062
    %v2221 = vpop.f32.mrb[0].mxu0
    %v2222 = vadd.f32 0.0, %v2221
    %v2223 = vpop.f32.mrb[0].mxu0
    %v2224 = vadd.f32 0.0, %v2223
    %v2225 = vpop.f32.mrb[0].mxu0
    %v2226 = vpop.f32.mrb[0].mxu0
    %2227 = vdwg.mxu0
    %v2228 = vadd.f32 %v1737, %v2099
    %v2229 = vadd.f32 %v1739, %v2101
    %v2230 = vadd.f32 %v1778, %v2140
    %v2231 = vadd.f32 %v1780, %v2142
    %v2232 = vadd.f32 %v1819, %v2181
    %v2233 = vadd.f32 %v1821, %v2183
    %v2234 = vadd.f32 %v1860, %v2222
    %v2235 = vadd.f32 %v1862, %v2224
    %s2236 = scalar_lea.vmem [#allocation11], 768
    %v2237 = vld [vmem:[%s2236] sm:$0xff]
    %v2238 = vld [vmem:[%s2236 + $0x8] sm:$0xff]
    %v2239 = vld [vmem:[%s2236 + $0x10] sm:$0xff]
    %v2240 = vld [vmem:[%s2236 + $0x18] sm:$0xff]
    %v2241 = vld [vmem:[%s2236 + $0x20] sm:$0xff]
    %v2242 = vld [vmem:[%s2236 + $0x28] sm:$0xff]
    %v2243 = vld [vmem:[%s2236 + $0x30] sm:$0xff]
    %v2244 = vld [vmem:[%s2236 + $0x38] sm:$0xff]
    %v2245 = vld [vmem:[%s2236 + $0x40] sm:$0xff]
    %v2246 = vld [vmem:[%s2236 + $0x48] sm:$0xff]
    %v2247 = vld [vmem:[%s2236 + $0x50] sm:$0xff]
    %v2248 = vld [vmem:[%s2236 + $0x58] sm:$0xff]
    %v2249 = vld [vmem:[%s2236 + $0x60] sm:$0xff]
    %v2250 = vld [vmem:[%s2236 + $0x68] sm:$0xff]
    %v2251 = vld [vmem:[%s2236 + $0x70] sm:$0xff]
    %v2252 = vld [vmem:[%s2236 + $0x78] sm:$0xff]
    %v2253 = vld [vmem:[%s2236 + $0x80] sm:$0xff]
    %v2254 = vld [vmem:[%s2236 + $0x88] sm:$0xff]
    %v2255 = vld [vmem:[%s2236 + $0x90] sm:$0xff]
    %v2256 = vld [vmem:[%s2236 + $0x98] sm:$0xff]
    %v2257 = vld [vmem:[%s2236 + $0xa0] sm:$0xff]
    %v2258 = vld [vmem:[%s2236 + $0xa8] sm:$0xff]
    %v2259 = vld [vmem:[%s2236 + $0xb0] sm:$0xff]
    %v2260 = vld [vmem:[%s2236 + $0xb8] sm:$0xff]
    %v2261 = vld [vmem:[%s2236 + $0xc0] sm:$0xff]
    %v2262 = vld [vmem:[%s2236 + $0xc8] sm:$0xff]
    %v2263 = vld [vmem:[%s2236 + $0xd0] sm:$0xff]
    %v2264 = vld [vmem:[%s2236 + $0xd8] sm:$0xff]
    %v2265 = vld [vmem:[%s2236 + $0xe0] sm:$0xff]
    %v2266 = vld [vmem:[%s2236 + $0xe8] sm:$0xff]
    %v2267 = vld [vmem:[%s2236 + $0xf0] sm:$0xff]
    %v2268 = vld [vmem:[%s2236 + $0xf8] sm:$0xff]
    %v2269 = vrot.slane %v1211, 1
    %v2302 = vunpack.c.l.b16 %v2237
    %v2303 = vunpack.c.h.b16 %v2237
    %v2304 = vunpack.c.l.b16 %v2238
    %v2305 = vunpack.c.h.b16 %v2238
    %v2306 = vunpack.c.l.b16 %v2239
    %v2307 = vunpack.c.h.b16 %v2239
    %v2308 = vunpack.c.l.b16 %v2240
    %v2309 = vunpack.c.h.b16 %v2240
    %v2310 = vunpack.c.l.b16 %v2241
    %v2311 = vunpack.c.h.b16 %v2241
    %v2312 = vunpack.c.l.b16 %v2242
    %v2313 = vunpack.c.h.b16 %v2242
    %v2314 = vunpack.c.l.b16 %v2243
    %v2315 = vunpack.c.h.b16 %v2243
    %v2316 = vunpack.c.l.b16 %v2244
    %v2317 = vunpack.c.h.b16 %v2244
    %v2318 = vunpack.c.l.b16 %v2245
    %v2319 = vunpack.c.h.b16 %v2245
    %v2320 = vunpack.c.l.b16 %v2246
    %v2321 = vunpack.c.h.b16 %v2246
    %v2322 = vunpack.c.l.b16 %v2247
    %v2323 = vunpack.c.h.b16 %v2247
    %v2324 = vunpack.c.l.b16 %v2248
    %v2325 = vunpack.c.h.b16 %v2248
    %v2326 = vunpack.c.l.b16 %v2249
    %v2327 = vunpack.c.h.b16 %v2249
    %v2328 = vunpack.c.l.b16 %v2250
    %v2329 = vunpack.c.h.b16 %v2250
    %v2330 = vunpack.c.l.b16 %v2251
    %v2331 = vunpack.c.h.b16 %v2251
    %v2332 = vunpack.c.l.b16 %v2252
    %v2333 = vunpack.c.h.b16 %v2252
    %v2334 = vunpack.c.l.b16 %v2253
    %v2335 = vunpack.c.h.b16 %v2253
    %v2336 = vunpack.c.l.b16 %v2254
    %v2337 = vunpack.c.h.b16 %v2254
    %v2338 = vunpack.c.l.b16 %v2255
    %v2339 = vunpack.c.h.b16 %v2255
    %v2340 = vunpack.c.l.b16 %v2256
    %v2341 = vunpack.c.h.b16 %v2256
    %v2342 = vunpack.c.l.b16 %v2257
    %v2343 = vunpack.c.h.b16 %v2257
    %v2344 = vunpack.c.l.b16 %v2258
    %v2345 = vunpack.c.h.b16 %v2258
    %v2346 = vunpack.c.l.b16 %v2259
    %v2347 = vunpack.c.h.b16 %v2259
    %v2348 = vunpack.c.l.b16 %v2260
    %v2349 = vunpack.c.h.b16 %v2260
    %v2350 = vunpack.c.l.b16 %v2261
    %v2351 = vunpack.c.h.b16 %v2261
    %v2352 = vunpack.c.l.b16 %v2262
    %v2353 = vunpack.c.h.b16 %v2262
    %v2354 = vunpack.c.l.b16 %v2263
    %v2355 = vunpack.c.h.b16 %v2263
    %v2356 = vunpack.c.l.b16 %v2264
    %v2357 = vunpack.c.h.b16 %v2264
    %v2358 = vunpack.c.l.b16 %v2265
    %v2359 = vunpack.c.h.b16 %v2265
    %v2360 = vunpack.c.l.b16 %v2266
    %v2361 = vunpack.c.h.b16 %v2266
    %v2362 = vunpack.c.l.b16 %v2267
    %v2363 = vunpack.c.h.b16 %v2267
    %v2364 = vunpack.c.l.b16 %v2268
    %v2365 = vunpack.c.h.b16 %v2268
    %v2366 = vpack.c.b16 %v2310, %v2302
    %v2367 = vpack.c.b16 %v2311, %v2303
    %v2368 = vpack.c.b16 %v2312, %v2304
    %v2369 = vpack.c.b16 %v2313, %v2305
    %v2370 = vpack.c.b16 %v2314, %v2306
    %v2371 = vpack.c.b16 %v2315, %v2307
    %v2372 = vpack.c.b16 %v2316, %v2308
    %v2373 = vpack.c.b16 %v2317, %v2309
    %v2374 = vpack.c.b16 %v2326, %v2318
    %v2375 = vpack.c.b16 %v2327, %v2319
    %v2376 = vpack.c.b16 %v2328, %v2320
    %v2377 = vpack.c.b16 %v2329, %v2321
    %v2378 = vpack.c.b16 %v2330, %v2322
    %v2379 = vpack.c.b16 %v2331, %v2323
    %v2380 = vpack.c.b16 %v2332, %v2324
    %v2381 = vpack.c.b16 %v2333, %v2325
    %v2382 = vpack.c.b16 %v2342, %v2334
    %v2383 = vpack.c.b16 %v2343, %v2335
    %v2384 = vpack.c.b16 %v2344, %v2336
    %v2385 = vpack.c.b16 %v2345, %v2337
    %v2386 = vpack.c.b16 %v2346, %v2338
    %v2387 = vpack.c.b16 %v2347, %v2339
    %v2388 = vpack.c.b16 %v2348, %v2340
    %v2389 = vpack.c.b16 %v2349, %v2341
    %v2390 = vpack.c.b16 %v2358, %v2350
    %v2391 = vpack.c.b16 %v2359, %v2351
    %v2392 = vpack.c.b16 %v2360, %v2352
    %v2393 = vpack.c.b16 %v2361, %v2353
    %v2394 = vpack.c.b16 %v2362, %v2354
    %v2395 = vpack.c.b16 %v2363, %v2355
    %v2396 = vpack.c.b16 %v2364, %v2356
    %v2397 = vpack.c.b16 %v2365, %v2357
    %v2431 = vsel %vm125, %v2269, 0
    %2433 = vmatprep.subr.bf16.mxu0 %v2367
    %2434 = vmatpush1.bf16.msra.mxu0 %v2366
    %2435 = vmatprep.subr.bf16.mxu0 %v2375
    %2436 = vmatpush1.bf16.msra.mxu0 %v2374
    %2437 = vmatprep.subr.bf16.mxu0 %v2383
    %2438 = vmatpush1.bf16.msra.mxu0 %v2382
    %2439 = vmatprep.subr.bf16.mxu0 %v2391
    %2440 = vmatpush1.bf16.msra.mxu0 %v2390
    %2441 = vmatprep.subr.bf16.mxu0 0
    %2442 = vmatpush1.bf16.msra.mxu0 0
    %2443 = vmatprep.subr.bf16.mxu0 0
    %2444 = vmatpush1.bf16.msra.mxu0 0
    %2445 = vmatprep.subr.bf16.mxu0 0
    %2446 = vmatpush1.bf16.msra.mxu0 0
    %2447 = vmatprep.subr.bf16.mxu0 0
    %2448 = vmatpush1.bf16.msra.mxu0 0
    %2449 = vmatprep.subr.bf16.mxu0 0
    %2450 = vmatpush1.bf16.msra.mxu0 0
    %2451 = vmatprep.subr.bf16.mxu0 0
    %2452 = vmatpush1.bf16.msra.mxu0 0
    %2453 = vmatprep.subr.bf16.mxu0 0
    %2454 = vmatpush1.bf16.msra.mxu0 0
    %2455 = vmatprep.subr.bf16.mxu0 0
    %2456 = vmatpush1.bf16.msra.mxu0 0
    %2457 = vmatprep.subr.bf16.mxu0 0
    %2458 = vmatpush1.bf16.msra.mxu0 0
    %2459 = vmatprep.subr.bf16.mxu0 0
    %2460 = vmatpush1.bf16.msra.mxu0 0
    %2461 = vmatprep.subr.bf16.mxu0 0
    %2462 = vmatpush1.bf16.msra.mxu0 0
    %2463 = vmatprep.subr.bf16.mxu0 0
    %2464 = vmatpush1.bf16.msra.mxu0 0
    %2465 = vmatprep.mubr.bf16.mxu0 0
    %2466 = vmatmul.mubr.bf16.gmra.mrb[0].mxu0 %v2431
    %v2467 = vpop.f32.mrb[0].mxu0
    %v2468 = vadd.f32 0.0, %v2467
    %v2469 = vpop.f32.mrb[0].mxu0
    %v2470 = vadd.f32 0.0, %v2469
    %v2471 = vpop.f32.mrb[0].mxu0
    %v2472 = vpop.f32.mrb[0].mxu0
    %2473 = vdwg.mxu0
    %2474 = vmatprep.subr.bf16.mxu0 %v2369
    %2475 = vmatpush1.bf16.msra.mxu0 %v2368
    %2476 = vmatprep.subr.bf16.mxu0 %v2377
    %2477 = vmatpush1.bf16.msra.mxu0 %v2376
    %2478 = vmatprep.subr.bf16.mxu0 %v2385
    %2479 = vmatpush1.bf16.msra.mxu0 %v2384
    %2480 = vmatprep.subr.bf16.mxu0 %v2393
    %2481 = vmatpush1.bf16.msra.mxu0 %v2392
    %2482 = vmatprep.subr.bf16.mxu0 0
    %2483 = vmatpush1.bf16.msra.mxu0 0
    %2484 = vmatprep.subr.bf16.mxu0 0
    %2485 = vmatpush1.bf16.msra.mxu0 0
    %2486 = vmatprep.subr.bf16.mxu0 0
    %2487 = vmatpush1.bf16.msra.mxu0 0
    %2488 = vmatprep.subr.bf16.mxu0 0
    %2489 = vmatpush1.bf16.msra.mxu0 0
    %2490 = vmatprep.subr.bf16.mxu0 0
    %2491 = vmatpush1.bf16.msra.mxu0 0
    %2492 = vmatprep.subr.bf16.mxu0 0
    %2493 = vmatpush1.bf16.msra.mxu0 0
    %2494 = vmatprep.subr.bf16.mxu0 0
    %2495 = vmatpush1.bf16.msra.mxu0 0
    %2496 = vmatprep.subr.bf16.mxu0 0
    %2497 = vmatpush1.bf16.msra.mxu0 0
    %2498 = vmatprep.subr.bf16.mxu0 0
    %2499 = vmatpush1.bf16.msra.mxu0 0
    %2500 = vmatprep.subr.bf16.mxu0 0
    %2501 = vmatpush1.bf16.msra.mxu0 0
    %2502 = vmatprep.subr.bf16.mxu0 0
    %2503 = vmatpush1.bf16.msra.mxu0 0
    %2504 = vmatprep.subr.bf16.mxu0 0
    %2505 = vmatpush1.bf16.msra.mxu0 0
    %2506 = vmatprep.mubr.bf16.mxu0 0
    %2507 = vmatmul.mubr.bf16.gmra.mrb[0].mxu0 %v2431
    %v2508 = vpop.f32.mrb[0].mxu0
    %v2509 = vadd.f32 0.0, %v2508
    %v2510 = vpop.f32.mrb[0].mxu0
    %v2511 = vadd.f32 0.0, %v2510
    %v2512 = vpop.f32.mrb[0].mxu0
    %v2513 = vpop.f32.mrb[0].mxu0
    %2514 = vdwg.mxu0
    %2515 = vmatprep.subr.bf16.mxu0 %v2371
    %2516 = vmatpush1.bf16.msra.mxu0 %v2370
    %2517 = vmatprep.subr.bf16.mxu0 %v2379
    %2518 = vmatpush1.bf16.msra.mxu0 %v2378
    %2519 = vmatprep.subr.bf16.mxu0 %v2387
    %2520 = vmatpush1.bf16.msra.mxu0 %v2386
    %2521 = vmatprep.subr.bf16.mxu0 %v2395
    %2522 = vmatpush1.bf16.msra.mxu0 %v2394
    %2523 = vmatprep.subr.bf16.mxu0 0
    %2524 = vmatpush1.bf16.msra.mxu0 0
    %2525 = vmatprep.subr.bf16.mxu0 0
    %2526 = vmatpush1.bf16.msra.mxu0 0
    %2527 = vmatprep.subr.bf16.mxu0 0
    %2528 = vmatpush1.bf16.msra.mxu0 0
    %2529 = vmatprep.subr.bf16.mxu0 0
    %2530 = vmatpush1.bf16.msra.mxu0 0
    %2531 = vmatprep.subr.bf16.mxu0 0
    %2532 = vmatpush1.bf16.msra.mxu0 0
    %2533 = vmatprep.subr.bf16.mxu0 0
    %2534 = vmatpush1.bf16.msra.mxu0 0
    %2535 = vmatprep.subr.bf16.mxu0 0
    %2536 = vmatpush1.bf16.msra.mxu0 0
    %2537 = vmatprep.subr.bf16.mxu0 0
    %2538 = vmatpush1.bf16.msra.mxu0 0
    %2539 = vmatprep.subr.bf16.mxu0 0
    %2540 = vmatpush1.bf16.msra.mxu0 0
    %2541 = vmatprep.subr.bf16.mxu0 0
    %2542 = vmatpush1.bf16.msra.mxu0 0
    %2543 = vmatprep.subr.bf16.mxu0 0
    %2544 = vmatpush1.bf16.msra.mxu0 0
    %2545 = vmatprep.subr.bf16.mxu0 0
    %2546 = vmatpush1.bf16.msra.mxu0 0
    %2547 = vmatprep.mubr.bf16.mxu0 0
    %2548 = vmatmul.mubr.bf16.gmra.mrb[0].mxu0 %v2431
    %v2549 = vpop.f32.mrb[0].mxu0
    %v2550 = vadd.f32 0.0, %v2549
    %v2551 = vpop.f32.mrb[0].mxu0
    %v2552 = vadd.f32 0.0, %v2551
    %v2553 = vpop.f32.mrb[0].mxu0
    %v2554 = vpop.f32.mrb[0].mxu0
    %2555 = vdwg.mxu0
    %2556 = vmatprep.subr.bf16.mxu0 %v2373
    %2557 = vmatpush1.bf16.msra.mxu0 %v2372
    %2558 = vmatprep.subr.bf16.mxu0 %v2381
    %2559 = vmatpush1.bf16.msra.mxu0 %v2380
    %2560 = vmatprep.subr.bf16.mxu0 %v2389
    %2561 = vmatpush1.bf16.msra.mxu0 %v2388
    %2562 = vmatprep.subr.bf16.mxu0 %v2397
    %2563 = vmatpush1.bf16.msra.mxu0 %v2396
    %2564 = vmatprep.subr.bf16.mxu0 0
    %2565 = vmatpush1.bf16.msra.mxu0 0
    %2566 = vmatprep.subr.bf16.mxu0 0
    %2567 = vmatpush1.bf16.msra.mxu0 0
    %2568 = vmatprep.subr.bf16.mxu0 0
    %2569 = vmatpush1.bf16.msra.mxu0 0
    %2570 = vmatprep.subr.bf16.mxu0 0
    %2571 = vmatpush1.bf16.msra.mxu0 0
    %2572 = vmatprep.subr.bf16.mxu0 0
    %2573 = vmatpush1.bf16.msra.mxu0 0
    %2574 = vmatprep.subr.bf16.mxu0 0
    %2575 = vmatpush1.bf16.msra.mxu0 0
    %2576 = vmatprep.subr.bf16.mxu0 0
    %2577 = vmatpush1.bf16.msra.mxu0 0
    %2578 = vmatprep.subr.bf16.mxu0 0
    %2579 = vmatpush1.bf16.msra.mxu0 0
    %2580 = vmatprep.subr.bf16.mxu0 0
    %2581 = vmatpush1.bf16.msra.mxu0 0
    %2582 = vmatprep.subr.bf16.mxu0 0
    %2583 = vmatpush1.bf16.msra.mxu0 0
    %2584 = vmatprep.subr.bf16.mxu0 0
    %2585 = vmatpush1.bf16.msra.mxu0 0
    %2586 = vmatprep.subr.bf16.mxu0 0
    %2587 = vmatpush1.bf16.msra.mxu0 0
    %2588 = vmatprep.mubr.bf16.mxu0 0
    %2589 = vmatmul.mubr.bf16.gmra.mrb[0].mxu0 %v2431
    %v2590 = vpop.f32.mrb[0].mxu0
    %v2591 = vadd.f32 0.0, %v2590
    %v2592 = vpop.f32.mrb[0].mxu0
    %v2593 = vadd.f32 0.0, %v2592
    %v2594 = vpop.f32.mrb[0].mxu0
    %v2595 = vpop.f32.mrb[0].mxu0
    %2596 = vdwg.mxu0
    %v2597 = vadd.f32 %v2228, %v2468
    %v2598 = vadd.f32 %v2229, %v2470
    %v2599 = vadd.f32 %v2230, %v2509
    %v2600 = vadd.f32 %v2231, %v2511
    %v2601 = vadd.f32 %v2232, %v2550
    %v2602 = vadd.f32 %v2233, %v2552
    %v2603 = vadd.f32 %v2234, %v2591
    %v2604 = vadd.f32 %v2235, %v2593
    %s2605 = scalar_lea.vmem [#allocation11], 1024
    %v2606 = vld [vmem:[%s2605] sm:$0xff]
    %v2607 = vld [vmem:[%s2605 + $0x8] sm:$0xff]
    %v2608 = vld [vmem:[%s2605 + $0x10] sm:$0xff]
    %v2609 = vld [vmem:[%s2605 + $0x18] sm:$0xff]
    %v2610 = vld [vmem:[%s2605 + $0x20] sm:$0xff]
    %v2611 = vld [vmem:[%s2605 + $0x28] sm:$0xff]
    %v2612 = vld [vmem:[%s2605 + $0x30] sm:$0xff]
    %v2613 = vld [vmem:[%s2605 + $0x38] sm:$0xff]
    %v2614 = vld [vmem:[%s2605 + $0x40] sm:$0xff]
    %v2615 = vld [vmem:[%s2605 + $0x48] sm:$0xff]
    %v2616 = vld [vmem:[%s2605 + $0x50] sm:$0xff]
    %v2617 = vld [vmem:[%s2605 + $0x58] sm:$0xff]
    %v2618 = vld [vmem:[%s2605 + $0x60] sm:$0xff]
    %v2619 = vld [vmem:[%s2605 + $0x68] sm:$0xff]
    %v2620 = vld [vmem:[%s2605 + $0x70] sm:$0xff]
    %v2621 = vld [vmem:[%s2605 + $0x78] sm:$0xff]
    %v2622 = vld [vmem:[%s2605 + $0x80] sm:$0xff]
    %v2623 = vld [vmem:[%s2605 + $0x88] sm:$0xff]
    %v2624 = vld [vmem:[%s2605 + $0x90] sm:$0xff]
    %v2625 = vld [vmem:[%s2605 + $0x98] sm:$0xff]
    %v2626 = vld [vmem:[%s2605 + $0xa0] sm:$0xff]
    %v2627 = vld [vmem:[%s2605 + $0xa8] sm:$0xff]
    %v2628 = vld [vmem:[%s2605 + $0xb0] sm:$0xff]
    %v2629 = vld [vmem:[%s2605 + $0xb8] sm:$0xff]
    %v2630 = vld [vmem:[%s2605 + $0xc0] sm:$0xff]
    %v2631 = vld [vmem:[%s2605 + $0xc8] sm:$0xff]
    %v2632 = vld [vmem:[%s2605 + $0xd0] sm:$0xff]
    %v2633 = vld [vmem:[%s2605 + $0xd8] sm:$0xff]
    %v2634 = vld [vmem:[%s2605 + $0xe0] sm:$0xff]
    %v2635 = vld [vmem:[%s2605 + $0xe8] sm:$0xff]
    %v2636 = vld [vmem:[%s2605 + $0xf0] sm:$0xff]
    %v2637 = vld [vmem:[%s2605 + $0xf8] sm:$0xff]
    %v2638 = vrot.slane %v1144, 2
    %v2671 = vunpack.c.l.b16 %v2606
    %v2672 = vunpack.c.h.b16 %v2606
    %v2673 = vunpack.c.l.b16 %v2607
    %v2674 = vunpack.c.h.b16 %v2607
    %v2675 = vunpack.c.l.b16 %v2608
    %v2676 = vunpack.c.h.b16 %v2608
    %v2677 = vunpack.c.l.b16 %v2609
    %v2678 = vunpack.c.h.b16 %v2609
    %v2679 = vunpack.c.l.b16 %v2610
    %v2680 = vunpack.c.h.b16 %v2610
    %v2681 = vunpack.c.l.b16 %v2611
    %v2682 = vunpack.c.h.b16 %v2611
    %v2683 = vunpack.c.l.b16 %v2612
    %v2684 = vunpack.c.h.b16 %v2612
    %v2685 = vunpack.c.l.b16 %v2613
    %v2686 = vunpack.c.h.b16 %v2613
    %v2687 = vunpack.c.l.b16 %v2614
    %v2688 = vunpack.c.h.b16 %v2614
    %v2689 = vunpack.c.l.b16 %v2615
    %v2690 = vunpack.c.h.b16 %v2615
    %v2691 = vunpack.c.l.b16 %v2616
    %v2692 = vunpack.c.h.b16 %v2616
    %v2693 = vunpack.c.l.b16 %v2617
    %v2694 = vunpack.c.h.b16 %v2617
    %v2695 = vunpack.c.l.b16 %v2618
    %v2696 = vunpack.c.h.b16 %v2618
    %v2697 = vunpack.c.l.b16 %v2619
    %v2698 = vunpack.c.h.b16 %v2619
    %v2699 = vunpack.c.l.b16 %v2620
    %v2700 = vunpack.c.h.b16 %v2620
    %v2701 = vunpack.c.l.b16 %v2621
    %v2702 = vunpack.c.h.b16 %v2621
    %v2703 = vunpack.c.l.b16 %v2622
    %v2704 = vunpack.c.h.b16 %v2622
    %v2705 = vunpack.c.l.b16 %v2623
    %v2706 = vunpack.c.h.b16 %v2623
    %v2707 = vunpack.c.l.b16 %v2624
    %v2708 = vunpack.c.h.b16 %v2624
    %v2709 = vunpack.c.l.b16 %v2625
    %v2710 = vunpack.c.h.b16 %v2625
    %v2711 = vunpack.c.l.b16 %v2626
    %v2712 = vunpack.c.h.b16 %v2626
    %v2713 = vunpack.c.l.b16 %v2627
    %v2714 = vunpack.c.h.b16 %v2627
    %v2715 = vunpack.c.l.b16 %v2628
    %v2716 = vunpack.c.h.b16 %v2628
    %v2717 = vunpack.c.l.b16 %v2629
    %v2718 = vunpack.c.h.b16 %v2629
    %v2719 = vunpack.c.l.b16 %v2630
    %v2720 = vunpack.c.h.b16 %v2630
    %v2721 = vunpack.c.l.b16 %v2631
    %v2722 = vunpack.c.h.b16 %v2631
    %v2723 = vunpack.c.l.b16 %v2632
    %v2724 = vunpack.c.h.b16 %v2632
    %v2725 = vunpack.c.l.b16 %v2633
    %v2726 = vunpack.c.h.b16 %v2633
    %v2727 = vunpack.c.l.b16 %v2634
    %v2728 = vunpack.c.h.b16 %v2634
    %v2729 = vunpack.c.l.b16 %v2635
    %v2730 = vunpack.c.h.b16 %v2635
    %v2731 = vunpack.c.l.b16 %v2636
    %v2732 = vunpack.c.h.b16 %v2636
    %v2733 = vunpack.c.l.b16 %v2637
    %v2734 = vunpack.c.h.b16 %v2637
    %v2735 = vpack.c.b16 %v2679, %v2671
    %v2736 = vpack.c.b16 %v2680, %v2672
    %v2737 = vpack.c.b16 %v2681, %v2673
    %v2738 = vpack.c.b16 %v2682, %v2674
    %v2739 = vpack.c.b16 %v2683, %v2675
    %v2740 = vpack.c.b16 %v2684, %v2676
    %v2741 = vpack.c.b16 %v2685, %v2677
    %v2742 = vpack.c.b16 %v2686, %v2678
    %v2743 = vpack.c.b16 %v2695, %v2687
    %v2744 = vpack.c.b16 %v2696, %v2688
    %v2745 = vpack.c.b16 %v2697, %v2689
    %v2746 = vpack.c.b16 %v2698, %v2690
    %v2747 = vpack.c.b16 %v2699, %v2691
    %v2748 = vpack.c.b16 %v2700, %v2692
    %v2749 = vpack.c.b16 %v2701, %v2693
    %v2750 = vpack.c.b16 %v2702, %v2694
    %v2751 = vpack.c.b16 %v2711, %v2703
    %v2752 = vpack.c.b16 %v2712, %v2704
    %v2753 = vpack.c.b16 %v2713, %v2705
    %v2754 = vpack.c.b16 %v2714, %v2706
    %v2755 = vpack.c.b16 %v2715, %v2707
    %v2756 = vpack.c.b16 %v2716, %v2708
    %v2757 = vpack.c.b16 %v2717, %v2709
    %v2758 = vpack.c.b16 %v2718, %v2710
    %v2759 = vpack.c.b16 %v2727, %v2719
    %v2760 = vpack.c.b16 %v2728, %v2720
    %v2761 = vpack.c.b16 %v2729, %v2721
    %v2762 = vpack.c.b16 %v2730, %v2722
    %v2763 = vpack.c.b16 %v2731, %v2723
    %v2764 = vpack.c.b16 %v2732, %v2724
    %v2765 = vpack.c.b16 %v2733, %v2725
    %v2766 = vpack.c.b16 %v2734, %v2726
    %v2800 = vsel %vm125, %v2638, 0
    %2802 = vmatprep.subr.bf16.mxu0 %v2736
    %2803 = vmatpush1.bf16.msra.mxu0 %v2735
    %2804 = vmatprep.subr.bf16.mxu0 %v2744
    %2805 = vmatpush1.bf16.msra.mxu0 %v2743
    %2806 = vmatprep.subr.bf16.mxu0 %v2752
    %2807 = vmatpush1.bf16.msra.mxu0 %v2751
    %2808 = vmatprep.subr.bf16.mxu0 %v2760
    %2809 = vmatpush1.bf16.msra.mxu0 %v2759
    %2810 = vmatprep.subr.bf16.mxu0 0
    %2811 = vmatpush1.bf16.msra.mxu0 0
    %2812 = vmatprep.subr.bf16.mxu0 0
    %2813 = vmatpush1.bf16.msra.mxu0 0
    %2814 = vmatprep.subr.bf16.mxu0 0
    %2815 = vmatpush1.bf16.msra.mxu0 0
    %2816 = vmatprep.subr.bf16.mxu0 0
    %2817 = vmatpush1.bf16.msra.mxu0 0
    %2818 = vmatprep.subr.bf16.mxu0 0
    %2819 = vmatpush1.bf16.msra.mxu0 0
    %2820 = vmatprep.subr.bf16.mxu0 0
    %2821 = vmatpush1.bf16.msra.mxu0 0
    %2822 = vmatprep.subr.bf16.mxu0 0
    %2823 = vmatpush1.bf16.msra.mxu0 0
    %2824 = vmatprep.subr.bf16.mxu0 0
    %2825 = vmatpush1.bf16.msra.mxu0 0
    %2826 = vmatprep.subr.bf16.mxu0 0
    %2827 = vmatpush1.bf16.msra.mxu0 0
    %2828 = vmatprep.subr.bf16.mxu0 0
    %2829 = vmatpush1.bf16.msra.mxu0 0
    %2830 = vmatprep.subr.bf16.mxu0 0
    %2831 = vmatpush1.bf16.msra.mxu0 0
    %2832 = vmatprep.subr.bf16.mxu0 0
    %2833 = vmatpush1.bf16.msra.mxu0 0
    %2834 = vmatprep.mubr.bf16.mxu0 0
    %2835 = vmatmul.mubr.bf16.gmra.mrb[0].mxu0 %v2800
    %v2836 = vpop.f32.mrb[0].mxu0
    %v2837 = vadd.f32 0.0, %v2836
    %v2838 = vpop.f32.mrb[0].mxu0
    %v2839 = vadd.f32 0.0, %v2838
    %v2840 = vpop.f32.mrb[0].mxu0
    %v2841 = vpop.f32.mrb[0].mxu0
    %2842 = vdwg.mxu0
    %2843 = vmatprep.subr.bf16.mxu0 %v2738
    %2844 = vmatpush1.bf16.msra.mxu0 %v2737
    %2845 = vmatprep.subr.bf16.mxu0 %v2746
    %2846 = vmatpush1.bf16.msra.mxu0 %v2745
    %2847 = vmatprep.subr.bf16.mxu0 %v2754
    %2848 = vmatpush1.bf16.msra.mxu0 %v2753
    %2849 = vmatprep.subr.bf16.mxu0 %v2762
    %2850 = vmatpush1.bf16.msra.mxu0 %v2761
    %2851 = vmatprep.subr.bf16.mxu0 0
    %2852 = vmatpush1.bf16.msra.mxu0 0
    %2853 = vmatprep.subr.bf16.mxu0 0
    %2854 = vmatpush1.bf16.msra.mxu0 0
    %2855 = vmatprep.subr.bf16.mxu0 0
    %2856 = vmatpush1.bf16.msra.mxu0 0
    %2857 = vmatprep.subr.bf16.mxu0 0
    %2858 = vmatpush1.bf16.msra.mxu0 0
    %2859 = vmatprep.subr.bf16.mxu0 0
    %2860 = vmatpush1.bf16.msra.mxu0 0
    %2861 = vmatprep.subr.bf16.mxu0 0
    %2862 = vmatpush1.bf16.msra.mxu0 0
    %2863 = vmatprep.subr.bf16.mxu0 0
    %2864 = vmatpush1.bf16.msra.mxu0 0
    %2865 = vmatprep.subr.bf16.mxu0 0
    %2866 = vmatpush1.bf16.msra.mxu0 0
    %2867 = vmatprep.subr.bf16.mxu0 0
    %2868 = vmatpush1.bf16.msra.mxu0 0
    %2869 = vmatprep.subr.bf16.mxu0 0
    %2870 = vmatpush1.bf16.msra.mxu0 0
    %2871 = vmatprep.subr.bf16.mxu0 0
    %2872 = vmatpush1.bf16.msra.mxu0 0
    %2873 = vmatprep.subr.bf16.mxu0 0
    %2874 = vmatpush1.bf16.msra.mxu0 0
    %2875 = vmatprep.mubr.bf16.mxu0 0
    %2876 = vmatmul.mubr.bf16.gmra.mrb[0].mxu0 %v2800
    %v2877 = vpop.f32.mrb[0].mxu0
    %v2878 = vadd.f32 0.0, %v2877
    %v2879 = vpop.f32.mrb[0].mxu0
    %v2880 = vadd.f32 0.0, %v2879
    %v2881 = vpop.f32.mrb[0].mxu0
    %v2882 = vpop.f32.mrb[0].mxu0
    %2883 = vdwg.mxu0
    %2884 = vmatprep.subr.bf16.mxu0 %v2740
    %2885 = vmatpush1.bf16.msra.mxu0 %v2739
    %2886 = vmatprep.subr.bf16.mxu0 %v2748
    %2887 = vmatpush1.bf16.msra.mxu0 %v2747
    %2888 = vmatprep.subr.bf16.mxu0 %v2756
    %2889 = vmatpush1.bf16.msra.mxu0 %v2755
    %2890 = vmatprep.subr.bf16.mxu0 %v2764
    %2891 = vmatpush1.bf16.msra.mxu0 %v2763
    %2892 = vmatprep.subr.bf16.mxu0 0
    %2893 = vmatpush1.bf16.msra.mxu0 0
    %2894 = vmatprep.subr.bf16.mxu0 0
    %2895 = vmatpush1.bf16.msra.mxu0 0
    %2896 = vmatprep.subr.bf16.mxu0 0
    %2897 = vmatpush1.bf16.msra.mxu0 0
    %2898 = vmatprep.subr.bf16.mxu0 0
    %2899 = vmatpush1.bf16.msra.mxu0 0
    %2900 = vmatprep.subr.bf16.mxu0 0
    %2901 = vmatpush1.bf16.msra.mxu0 0
    %2902 = vmatprep.subr.bf16.mxu0 0
    %2903 = vmatpush1.bf16.msra.mxu0 0
    %2904 = vmatprep.subr.bf16.mxu0 0
    %2905 = vmatpush1.bf16.msra.mxu0 0
    %2906 = vmatprep.subr.bf16.mxu0 0
    %2907 = vmatpush1.bf16.msra.mxu0 0
    %2908 = vmatprep.subr.bf16.mxu0 0
    %2909 = vmatpush1.bf16.msra.mxu0 0
    %2910 = vmatprep.subr.bf16.mxu0 0
    %2911 = vmatpush1.bf16.msra.mxu0 0
    %2912 = vmatprep.subr.bf16.mxu0 0
    %2913 = vmatpush1.bf16.msra.mxu0 0
    %2914 = vmatprep.subr.bf16.mxu0 0
    %2915 = vmatpush1.bf16.msra.mxu0 0
    %2916 = vmatprep.mubr.bf16.mxu0 0
    %2917 = vmatmul.mubr.bf16.gmra.mrb[0].mxu0 %v2800
    %v2918 = vpop.f32.mrb[0].mxu0
    %v2919 = vadd.f32 0.0, %v2918
    %v2920 = vpop.f32.mrb[0].mxu0
    %v2921 = vadd.f32 0.0, %v2920
    %v2922 = vpop.f32.mrb[0].mxu0
    %v2923 = vpop.f32.mrb[0].mxu0
    %2924 = vdwg.mxu0
    %2925 = vmatprep.subr.bf16.mxu0 %v2742
    %2926 = vmatpush1.bf16.msra.mxu0 %v2741
    %2927 = vmatprep.subr.bf16.mxu0 %v2750
    %2928 = vmatpush1.bf16.msra.mxu0 %v2749
    %2929 = vmatprep.subr.bf16.mxu0 %v2758
    %2930 = vmatpush1.bf16.msra.mxu0 %v2757
    %2931 = vmatprep.subr.bf16.mxu0 %v2766
    %2932 = vmatpush1.bf16.msra.mxu0 %v2765
    %2933 = vmatprep.subr.bf16.mxu0 0
    %2934 = vmatpush1.bf16.msra.mxu0 0
    %2935 = vmatprep.subr.bf16.mxu0 0
    %2936 = vmatpush1.bf16.msra.mxu0 0
    %2937 = vmatprep.subr.bf16.mxu0 0
    %2938 = vmatpush1.bf16.msra.mxu0 0
    %2939 = vmatprep.subr.bf16.mxu0 0
    %2940 = vmatpush1.bf16.msra.mxu0 0
    %2941 = vmatprep.subr.bf16.mxu0 0
    %2942 = vmatpush1.bf16.msra.mxu0 0
    %2943 = vmatprep.subr.bf16.mxu0 0
    %2944 = vmatpush1.bf16.msra.mxu0 0
    %2945 = vmatprep.subr.bf16.mxu0 0
    %2946 = vmatpush1.bf16.msra.mxu0 0
    %2947 = vmatprep.subr.bf16.mxu0 0
    %2948 = vmatpush1.bf16.msra.mxu0 0
    %2949 = vmatprep.subr.bf16.mxu0 0
    %2950 = vmatpush1.bf16.msra.mxu0 0
    %2951 = vmatprep.subr.bf16.mxu0 0
    %2952 = vmatpush1.bf16.msra.mxu0 0
    %2953 = vmatprep.subr.bf16.mxu0 0
    %2954 = vmatpush1.bf16.msra.mxu0 0
    %2955 = vmatprep.subr.bf16.mxu0 0
    %2956 = vmatpush1.bf16.msra.mxu0 0
    %2957 = vmatprep.mubr.bf16.mxu0 0
    %2958 = vmatmul.mubr.bf16.gmra.mrb[0].mxu0 %v2800
    %v2959 = vpop.f32.mrb[0].mxu0
    %v2960 = vadd.f32 0.0, %v2959
    %v2961 = vpop.f32.mrb[0].mxu0
    %v2962 = vadd.f32 0.0, %v2961
    %v2963 = vpop.f32.mrb[0].mxu0
    %v2964 = vpop.f32.mrb[0].mxu0
    %2965 = vdwg.mxu0
    %v2966 = vadd.f32 %v2597, %v2837
    %v2967 = vadd.f32 %v2598, %v2839
    %v2968 = vadd.f32 %v2599, %v2878
    %v2969 = vadd.f32 %v2600, %v2880
    %v2970 = vadd.f32 %v2601, %v2919
    %v2971 = vadd.f32 %v2602, %v2921
    %v2972 = vadd.f32 %v2603, %v2960
    %v2973 = vadd.f32 %v2604, %v2962
    %s2974 = scalar_lea.vmem [#allocation11], 1280
    %v2975 = vld [vmem:[%s2974] sm:$0xff]
    %v2976 = vld [vmem:[%s2974 + $0x8] sm:$0xff]
    %v2977 = vld [vmem:[%s2974 + $0x10] sm:$0xff]
    %v2978 = vld [vmem:[%s2974 + $0x18] sm:$0xff]
    %v2979 = vld [vmem:[%s2974 + $0x20] sm:$0xff]
    %v2980 = vld [vmem:[%s2974 + $0x28] sm:$0xff]
    %v2981 = vld [vmem:[%s2974 + $0x30] sm:$0xff]
    %v2982 = vld [vmem:[%s2974 + $0x38] sm:$0xff]
    %v2983 = vld [vmem:[%s2974 + $0x40] sm:$0xff]
    %v2984 = vld [vmem:[%s2974 + $0x48] sm:$0xff]
    %v2985 = vld [vmem:[%s2974 + $0x50] sm:$0xff]
    %v2986 = vld [vmem:[%s2974 + $0x58] sm:$0xff]
    %v2987 = vld [vmem:[%s2974 + $0x60] sm:$0xff]
    %v2988 = vld [vmem:[%s2974 + $0x68] sm:$0xff]
    %v2989 = vld [vmem:[%s2974 + $0x70] sm:$0xff]
    %v2990 = vld [vmem:[%s2974 + $0x78] sm:$0xff]
    %v2991 = vld [vmem:[%s2974 + $0x80] sm:$0xff]
    %v2992 = vld [vmem:[%s2974 + $0x88] sm:$0xff]
    %v2993 = vld [vmem:[%s2974 + $0x90] sm:$0xff]
    %v2994 = vld [vmem:[%s2974 + $0x98] sm:$0xff]
    %v2995 = vld [vmem:[%s2974 + $0xa0] sm:$0xff]
    %v2996 = vld [vmem:[%s2974 + $0xa8] sm:$0xff]
    %v2997 = vld [vmem:[%s2974 + $0xb0] sm:$0xff]
    %v2998 = vld [vmem:[%s2974 + $0xb8] sm:$0xff]
    %v2999 = vld [vmem:[%s2974 + $0xc0] sm:$0xff]
    %v3000 = vld [vmem:[%s2974 + $0xc8] sm:$0xff]
    %v3001 = vld [vmem:[%s2974 + $0xd0] sm:$0xff]
    %v3002 = vld [vmem:[%s2974 + $0xd8] sm:$0xff]
    %v3003 = vld [vmem:[%s2974 + $0xe0] sm:$0xff]
    %v3004 = vld [vmem:[%s2974 + $0xe8] sm:$0xff]
    %v3005 = vld [vmem:[%s2974 + $0xf0] sm:$0xff]
    %v3006 = vld [vmem:[%s2974 + $0xf8] sm:$0xff]
    %v3007 = vrot.slane %v1211, 2
    %v3040 = vunpack.c.l.b16 %v2975
    %v3041 = vunpack.c.h.b16 %v2975
    %v3042 = vunpack.c.l.b16 %v2976
    %v3043 = vunpack.c.h.b16 %v2976
    %v3044 = vunpack.c.l.b16 %v2977
    %v3045 = vunpack.c.h.b16 %v2977
    %v3046 = vunpack.c.l.b16 %v2978
    %v3047 = vunpack.c.h.b16 %v2978
    %v3048 = vunpack.c.l.b16 %v2979
    %v3049 = vunpack.c.h.b16 %v2979
    %v3050 = vunpack.c.l.b16 %v2980
    %v3051 = vunpack.c.h.b16 %v2980
    %v3052 = vunpack.c.l.b16 %v2981
    %v3053 = vunpack.c.h.b16 %v2981
    %v3054 = vunpack.c.l.b16 %v2982
    %v3055 = vunpack.c.h.b16 %v2982
    %v3056 = vunpack.c.l.b16 %v2983
    %v3057 = vunpack.c.h.b16 %v2983
    %v3058 = vunpack.c.l.b16 %v2984
    %v3059 = vunpack.c.h.b16 %v2984
    %v3060 = vunpack.c.l.b16 %v2985
    %v3061 = vunpack.c.h.b16 %v2985
    %v3062 = vunpack.c.l.b16 %v2986
    %v3063 = vunpack.c.h.b16 %v2986
    %v3064 = vunpack.c.l.b16 %v2987
    %v3065 = vunpack.c.h.b16 %v2987
    %v3066 = vunpack.c.l.b16 %v2988
    %v3067 = vunpack.c.h.b16 %v2988
    %v3068 = vunpack.c.l.b16 %v2989
    %v3069 = vunpack.c.h.b16 %v2989
    %v3070 = vunpack.c.l.b16 %v2990
    %v3071 = vunpack.c.h.b16 %v2990
    %v3072 = vunpack.c.l.b16 %v2991
    %v3073 = vunpack.c.h.b16 %v2991
    %v3074 = vunpack.c.l.b16 %v2992
    %v3075 = vunpack.c.h.b16 %v2992
    %v3076 = vunpack.c.l.b16 %v2993
    %v3077 = vunpack.c.h.b16 %v2993
    %v3078 = vunpack.c.l.b16 %v2994
    %v3079 = vunpack.c.h.b16 %v2994
    %v3080 = vunpack.c.l.b16 %v2995
    %v3081 = vunpack.c.h.b16 %v2995
    %v3082 = vunpack.c.l.b16 %v2996
    %v3083 = vunpack.c.h.b16 %v2996
    %v3084 = vunpack.c.l.b16 %v2997
    %v3085 = vunpack.c.h.b16 %v2997
    %v3086 = vunpack.c.l.b16 %v2998
    %v3087 = vunpack.c.h.b16 %v2998
    %v3088 = vunpack.c.l.b16 %v2999
    %v3089 = vunpack.c.h.b16 %v2999
    %v3090 = vunpack.c.l.b16 %v3000
    %v3091 = vunpack.c.h.b16 %v3000
    %v3092 = vunpack.c.l.b16 %v3001
    %v3093 = vunpack.c.h.b16 %v3001
    %v3094 = vunpack.c.l.b16 %v3002
    %v3095 = vunpack.c.h.b16 %v3002
    %v3096 = vunpack.c.l.b16 %v3003
    %v3097 = vunpack.c.h.b16 %v3003
    %v3098 = vunpack.c.l.b16 %v3004
    %v3099 = vunpack.c.h.b16 %v3004
    %v3100 = vunpack.c.l.b16 %v3005
    %v3101 = vunpack.c.h.b16 %v3005
    %v3102 = vunpack.c.l.b16 %v3006
    %v3103 = vunpack.c.h.b16 %v3006
    %v3104 = vpack.c.b16 %v3048, %v3040
    %v3105 = vpack.c.b16 %v3049, %v3041
    %v3106 = vpack.c.b16 %v3050, %v3042
    %v3107 = vpack.c.b16 %v3051, %v3043
    %v3108 = vpack.c.b16 %v3052, %v3044
    %v3109 = vpack.c.b16 %v3053, %v3045
    %v3110 = vpack.c.b16 %v3054, %v3046
    %v3111 = vpack.c.b16 %v3055, %v3047
    %v3112 = vpack.c.b16 %v3064, %v3056
    %v3113 = vpack.c.b16 %v3065, %v3057
    %v3114 = vpack.c.b16 %v3066, %v3058
    %v3115 = vpack.c.b16 %v3067, %v3059
    %v3116 = vpack.c.b16 %v3068, %v3060
    %v3117 = vpack.c.b16 %v3069, %v3061
    %v3118 = vpack.c.b16 %v3070, %v3062
    %v3119 = vpack.c.b16 %v3071, %v3063
    %v3120 = vpack.c.b16 %v3080, %v3072
    %v3121 = vpack.c.b16 %v3081, %v3073
    %v3122 = vpack.c.b16 %v3082, %v3074
    %v3123 = vpack.c.b16 %v3083, %v3075
    %v3124 = vpack.c.b16 %v3084, %v3076
    %v3125 = vpack.c.b16 %v3085, %v3077
    %v3126 = vpack.c.b16 %v3086, %v3078
    %v3127 = vpack.c.b16 %v3087, %v3079
    %v3128 = vpack.c.b16 %v3096, %v3088
    %v3129 = vpack.c.b16 %v3097, %v3089
    %v3130 = vpack.c.b16 %v3098, %v3090
    %v3131 = vpack.c.b16 %v3099, %v3091
    %v3132 = vpack.c.b16 %v3100, %v3092
    %v3133 = vpack.c.b16 %v3101, %v3093
    %v3134 = vpack.c.b16 %v3102, %v3094
    %v3135 = vpack.c.b16 %v3103, %v3095
    %v3169 = vsel %vm125, %v3007, 0
    %3171 = vmatprep.subr.bf16.mxu0 %v3105
    %3172 = vmatpush1.bf16.msra.mxu0 %v3104
    %3173 = vmatprep.subr.bf16.mxu0 %v3113
    %3174 = vmatpush1.bf16.msra.mxu0 %v3112
    %3175 = vmatprep.subr.bf16.mxu0 %v3121
    %3176 = vmatpush1.bf16.msra.mxu0 %v3120
    %3177 = vmatprep.subr.bf16.mxu0 %v3129
    %3178 = vmatpush1.bf16.msra.mxu0 %v3128
    %3179 = vmatprep.subr.bf16.mxu0 0
    %3180 = vmatpush1.bf16.msra.mxu0 0
    %3181 = vmatprep.subr.bf16.mxu0 0
    %3182 = vmatpush1.bf16.msra.mxu0 0
    %3183 = vmatprep.subr.bf16.mxu0 0
    %3184 = vmatpush1.bf16.msra.mxu0 0
    %3185 = vmatprep.subr.bf16.mxu0 0
    %3186 = vmatpush1.bf16.msra.mxu0 0
    %3187 = vmatprep.subr.bf16.mxu0 0
    %3188 = vmatpush1.bf16.msra.mxu0 0
    %3189 = vmatprep.subr.bf16.mxu0 0
    %3190 = vmatpush1.bf16.msra.mxu0 0
    %3191 = vmatprep.subr.bf16.mxu0 0
    %3192 = vmatpush1.bf16.msra.mxu0 0
    %3193 = vmatprep.subr.bf16.mxu0 0
    %3194 = vmatpush1.bf16.msra.mxu0 0
    %3195 = vmatprep.subr.bf16.mxu0 0
    %3196 = vmatpush1.bf16.msra.mxu0 0
    %3197 = vmatprep.subr.bf16.mxu0 0
    %3198 = vmatpush1.bf16.msra.mxu0 0
    %3199 = vmatprep.subr.bf16.mxu0 0
    %3200 = vmatpush1.bf16.msra.mxu0 0
    %3201 = vmatprep.subr.bf16.mxu0 0
    %3202 = vmatpush1.bf16.msra.mxu0 0
    %3203 = vmatprep.mubr.bf16.mxu0 0
    %3204 = vmatmul.mubr.bf16.gmra.mrb[0].mxu0 %v3169
    %v3205 = vpop.f32.mrb[0].mxu0
    %v3206 = vadd.f32 0.0, %v3205
    %v3207 = vpop.f32.mrb[0].mxu0
    %v3208 = vadd.f32 0.0, %v3207
    %v3209 = vpop.f32.mrb[0].mxu0
    %v3210 = vpop.f32.mrb[0].mxu0
    %3211 = vdwg.mxu0
    %3212 = vmatprep.subr.bf16.mxu0 %v3107
    %3213 = vmatpush1.bf16.msra.mxu0 %v3106
    %3214 = vmatprep.subr.bf16.mxu0 %v3115
    %3215 = vmatpush1.bf16.msra.mxu0 %v3114
    %3216 = vmatprep.subr.bf16.mxu0 %v3123
    %3217 = vmatpush1.bf16.msra.mxu0 %v3122
    %3218 = vmatprep.subr.bf16.mxu0 %v3131
    %3219 = vmatpush1.bf16.msra.mxu0 %v3130
    %3220 = vmatprep.subr.bf16.mxu0 0
    %3221 = vmatpush1.bf16.msra.mxu0 0
    %3222 = vmatprep.subr.bf16.mxu0 0
    %3223 = vmatpush1.bf16.msra.mxu0 0
    %3224 = vmatprep.subr.bf16.mxu0 0
    %3225 = vmatpush1.bf16.msra.mxu0 0
    %3226 = vmatprep.subr.bf16.mxu0 0
    %3227 = vmatpush1.bf16.msra.mxu0 0
    %3228 = vmatprep.subr.bf16.mxu0 0
    %3229 = vmatpush1.bf16.msra.mxu0 0
    %3230 = vmatprep.subr.bf16.mxu0 0
    %3231 = vmatpush1.bf16.msra.mxu0 0
    %3232 = vmatprep.subr.bf16.mxu0 0
    %3233 = vmatpush1.bf16.msra.mxu0 0
    %3234 = vmatprep.subr.bf16.mxu0 0
    %3235 = vmatpush1.bf16.msra.mxu0 0
    %3236 = vmatprep.subr.bf16.mxu0 0
    %3237 = vmatpush1.bf16.msra.mxu0 0
    %3238 = vmatprep.subr.bf16.mxu0 0
    %3239 = vmatpush1.bf16.msra.mxu0 0
    %3240 = vmatprep.subr.bf16.mxu0 0
    %3241 = vmatpush1.bf16.msra.mxu0 0
    %3242 = vmatprep.subr.bf16.mxu0 0
    %3243 = vmatpush1.bf16.msra.mxu0 0
    %3244 = vmatprep.mubr.bf16.mxu0 0
    %3245 = vmatmul.mubr.bf16.gmra.mrb[0].mxu0 %v3169
    %v3246 = vpop.f32.mrb[0].mxu0
    %v3247 = vadd.f32 0.0, %v3246
    %v3248 = vpop.f32.mrb[0].mxu0
    %v3249 = vadd.f32 0.0, %v3248
    %v3250 = vpop.f32.mrb[0].mxu0
    %v3251 = vpop.f32.mrb[0].mxu0
    %3252 = vdwg.mxu0
    %3253 = vmatprep.subr.bf16.mxu0 %v3109
    %3254 = vmatpush1.bf16.msra.mxu0 %v3108
    %3255 = vmatprep.subr.bf16.mxu0 %v3117
    %3256 = vmatpush1.bf16.msra.mxu0 %v3116
    %3257 = vmatprep.subr.bf16.mxu0 %v3125
    %3258 = vmatpush1.bf16.msra.mxu0 %v3124
    %3259 = vmatprep.subr.bf16.mxu0 %v3133
    %3260 = vmatpush1.bf16.msra.mxu0 %v3132
    %3261 = vmatprep.subr.bf16.mxu0 0
    %3262 = vmatpush1.bf16.msra.mxu0 0
    %3263 = vmatprep.subr.bf16.mxu0 0
    %3264 = vmatpush1.bf16.msra.mxu0 0
    %3265 = vmatprep.subr.bf16.mxu0 0
    %3266 = vmatpush1.bf16.msra.mxu0 0
    %3267 = vmatprep.subr.bf16.mxu0 0
    %3268 = vmatpush1.bf16.msra.mxu0 0
    %3269 = vmatprep.subr.bf16.mxu0 0
    %3270 = vmatpush1.bf16.msra.mxu0 0
    %3271 = vmatprep.subr.bf16.mxu0 0
    %3272 = vmatpush1.bf16.msra.mxu0 0
    %3273 = vmatprep.subr.bf16.mxu0 0
    %3274 = vmatpush1.bf16.msra.mxu0 0
    %3275 = vmatprep.subr.bf16.mxu0 0
    %3276 = vmatpush1.bf16.msra.mxu0 0
    %3277 = vmatprep.subr.bf16.mxu0 0
    %3278 = vmatpush1.bf16.msra.mxu0 0
    %3279 = vmatprep.subr.bf16.mxu0 0
    %3280 = vmatpush1.bf16.msra.mxu0 0
    %3281 = vmatprep.subr.bf16.mxu0 0
    %3282 = vmatpush1.bf16.msra.mxu0 0
    %3283 = vmatprep.subr.bf16.mxu0 0
    %3284 = vmatpush1.bf16.msra.mxu0 0
    %3285 = vmatprep.mubr.bf16.mxu0 0
    %3286 = vmatmul.mubr.bf16.gmra.mrb[0].mxu0 %v3169
    %v3287 = vpop.f32.mrb[0].mxu0
    %v3288 = vadd.f32 0.0, %v3287
    %v3289 = vpop.f32.mrb[0].mxu0
    %v3290 = vadd.f32 0.0, %v3289
    %v3291 = vpop.f32.mrb[0].mxu0
    %v3292 = vpop.f32.mrb[0].mxu0
    %3293 = vdwg.mxu0
    %3294 = vmatprep.subr.bf16.mxu0 %v3111
    %3295 = vmatpush1.bf16.msra.mxu0 %v3110
    %3296 = vmatprep.subr.bf16.mxu0 %v3119
    %3297 = vmatpush1.bf16.msra.mxu0 %v3118
    %3298 = vmatprep.subr.bf16.mxu0 %v3127
    %3299 = vmatpush1.bf16.msra.mxu0 %v3126
    %3300 = vmatprep.subr.bf16.mxu0 %v3135
    %3301 = vmatpush1.bf16.msra.mxu0 %v3134
    %3302 = vmatprep.subr.bf16.mxu0 0
    %3303 = vmatpush1.bf16.msra.mxu0 0
    %3304 = vmatprep.subr.bf16.mxu0 0
    %3305 = vmatpush1.bf16.msra.mxu0 0
    %3306 = vmatprep.subr.bf16.mxu0 0
    %3307 = vmatpush1.bf16.msra.mxu0 0
    %3308 = vmatprep.subr.bf16.mxu0 0
    %3309 = vmatpush1.bf16.msra.mxu0 0
    %3310 = vmatprep.subr.bf16.mxu0 0
    %3311 = vmatpush1.bf16.msra.mxu0 0
    %3312 = vmatprep.subr.bf16.mxu0 0
    %3313 = vmatpush1.bf16.msra.mxu0 0
    %3314 = vmatprep.subr.bf16.mxu0 0
    %3315 = vmatpush1.bf16.msra.mxu0 0
    %3316 = vmatprep.subr.bf16.mxu0 0
    %3317 = vmatpush1.bf16.msra.mxu0 0
    %3318 = vmatprep.subr.bf16.mxu0 0
    %3319 = vmatpush1.bf16.msra.mxu0 0
    %3320 = vmatprep.subr.bf16.mxu0 0
    %3321 = vmatpush1.bf16.msra.mxu0 0
    %3322 = vmatprep.subr.bf16.mxu0 0
    %3323 = vmatpush1.bf16.msra.mxu0 0
    %3324 = vmatprep.subr.bf16.mxu0 0
    %3325 = vmatpush1.bf16.msra.mxu0 0
    %3326 = vmatprep.mubr.bf16.mxu0 0
    %3327 = vmatmul.mubr.bf16.gmra.mrb[0].mxu0 %v3169
    %v3328 = vpop.f32.mrb[0].mxu0
    %v3329 = vadd.f32 0.0, %v3328
    %v3330 = vpop.f32.mrb[0].mxu0
    %v3331 = vadd.f32 0.0, %v3330
    %v3332 = vpop.f32.mrb[0].mxu0
    %v3333 = vpop.f32.mrb[0].mxu0
    %3334 = vdwg.mxu0
    %v3335 = vadd.f32 %v2966, %v3206
    %v3336 = vadd.f32 %v2967, %v3208
    %v3337 = vadd.f32 %v2968, %v3247
    %v3338 = vadd.f32 %v2969, %v3249
    %v3339 = vadd.f32 %v2970, %v3288
    %v3340 = vadd.f32 %v2971, %v3290
    %v3341 = vadd.f32 %v2972, %v3329
    %v3342 = vadd.f32 %v2973, %v3331
    %s3343 = scalar_lea.vmem [#allocation11], 1536
    %v3344 = vld [vmem:[%s3343] sm:$0xff]
    %v3345 = vld [vmem:[%s3343 + $0x8] sm:$0xff]
    %v3346 = vld [vmem:[%s3343 + $0x10] sm:$0xff]
    %v3347 = vld [vmem:[%s3343 + $0x18] sm:$0xff]
    %v3348 = vld [vmem:[%s3343 + $0x20] sm:$0xff]
    %v3349 = vld [vmem:[%s3343 + $0x28] sm:$0xff]
    %v3350 = vld [vmem:[%s3343 + $0x30] sm:$0xff]
    %v3351 = vld [vmem:[%s3343 + $0x38] sm:$0xff]
    %v3352 = vld [vmem:[%s3343 + $0x40] sm:$0xff]
    %v3353 = vld [vmem:[%s3343 + $0x48] sm:$0xff]
    %v3354 = vld [vmem:[%s3343 + $0x50] sm:$0xff]
    %v3355 = vld [vmem:[%s3343 + $0x58] sm:$0xff]
    %v3356 = vld [vmem:[%s3343 + $0x60] sm:$0xff]
    %v3357 = vld [vmem:[%s3343 + $0x68] sm:$0xff]
    %v3358 = vld [vmem:[%s3343 + $0x70] sm:$0xff]
    %v3359 = vld [vmem:[%s3343 + $0x78] sm:$0xff]
    %v3360 = vld [vmem:[%s3343 + $0x80] sm:$0xff]
    %v3361 = vld [vmem:[%s3343 + $0x88] sm:$0xff]
    %v3362 = vld [vmem:[%s3343 + $0x90] sm:$0xff]
    %v3363 = vld [vmem:[%s3343 + $0x98] sm:$0xff]
    %v3364 = vld [vmem:[%s3343 + $0xa0] sm:$0xff]
    %v3365 = vld [vmem:[%s3343 + $0xa8] sm:$0xff]
    %v3366 = vld [vmem:[%s3343 + $0xb0] sm:$0xff]
    %v3367 = vld [vmem:[%s3343 + $0xb8] sm:$0xff]
    %v3368 = vld [vmem:[%s3343 + $0xc0] sm:$0xff]
    %v3369 = vld [vmem:[%s3343 + $0xc8] sm:$0xff]
    %v3370 = vld [vmem:[%s3343 + $0xd0] sm:$0xff]
    %v3371 = vld [vmem:[%s3343 + $0xd8] sm:$0xff]
    %v3372 = vld [vmem:[%s3343 + $0xe0] sm:$0xff]
    %v3373 = vld [vmem:[%s3343 + $0xe8] sm:$0xff]
    %v3374 = vld [vmem:[%s3343 + $0xf0] sm:$0xff]
    %v3375 = vld [vmem:[%s3343 + $0xf8] sm:$0xff]
    %v3376 = vrot.slane %v1144, 3
    %v3409 = vunpack.c.l.b16 %v3344
    %v3410 = vunpack.c.h.b16 %v3344
    %v3411 = vunpack.c.l.b16 %v3345
    %v3412 = vunpack.c.h.b16 %v3345
    %v3413 = vunpack.c.l.b16 %v3346
    %v3414 = vunpack.c.h.b16 %v3346
    %v3415 = vunpack.c.l.b16 %v3347
    %v3416 = vunpack.c.h.b16 %v3347
    %v3417 = vunpack.c.l.b16 %v3348
    %v3418 = vunpack.c.h.b16 %v3348
    %v3419 = vunpack.c.l.b16 %v3349
    %v3420 = vunpack.c.h.b16 %v3349
    %v3421 = vunpack.c.l.b16 %v3350
    %v3422 = vunpack.c.h.b16 %v3350
    %v3423 = vunpack.c.l.b16 %v3351
    %v3424 = vunpack.c.h.b16 %v3351
    %v3425 = vunpack.c.l.b16 %v3352
    %v3426 = vunpack.c.h.b16 %v3352
    %v3427 = vunpack.c.l.b16 %v3353
    %v3428 = vunpack.c.h.b16 %v3353
    %v3429 = vunpack.c.l.b16 %v3354
    %v3430 = vunpack.c.h.b16 %v3354
    %v3431 = vunpack.c.l.b16 %v3355
    %v3432 = vunpack.c.h.b16 %v3355
    %v3433 = vunpack.c.l.b16 %v3356
    %v3434 = vunpack.c.h.b16 %v3356
    %v3435 = vunpack.c.l.b16 %v3357
    %v3436 = vunpack.c.h.b16 %v3357
    %v3437 = vunpack.c.l.b16 %v3358
    %v3438 = vunpack.c.h.b16 %v3358
    %v3439 = vunpack.c.l.b16 %v3359
    %v3440 = vunpack.c.h.b16 %v3359
    %v3441 = vunpack.c.l.b16 %v3360
    %v3442 = vunpack.c.h.b16 %v3360
    %v3443 = vunpack.c.l.b16 %v3361
    %v3444 = vunpack.c.h.b16 %v3361
    %v3445 = vunpack.c.l.b16 %v3362
    %v3446 = vunpack.c.h.b16 %v3362
    %v3447 = vunpack.c.l.b16 %v3363
    %v3448 = vunpack.c.h.b16 %v3363
    %v3449 = vunpack.c.l.b16 %v3364
    %v3450 = vunpack.c.h.b16 %v3364
    %v3451 = vunpack.c.l.b16 %v3365
    %v3452 = vunpack.c.h.b16 %v3365
    %v3453 = vunpack.c.l.b16 %v3366
    %v3454 = vunpack.c.h.b16 %v3366
    %v3455 = vunpack.c.l.b16 %v3367
    %v3456 = vunpack.c.h.b16 %v3367
    %v3457 = vunpack.c.l.b16 %v3368
    %v3458 = vunpack.c.h.b16 %v3368
    %v3459 = vunpack.c.l.b16 %v3369
    %v3460 = vunpack.c.h.b16 %v3369
    %v3461 = vunpack.c.l.b16 %v3370
    %v3462 = vunpack.c.h.b16 %v3370
    %v3463 = vunpack.c.l.b16 %v3371
    %v3464 = vunpack.c.h.b16 %v3371
    %v3465 = vunpack.c.l.b16 %v3372
    %v3466 = vunpack.c.h.b16 %v3372
    %v3467 = vunpack.c.l.b16 %v3373
    %v3468 = vunpack.c.h.b16 %v3373
    %v3469 = vunpack.c.l.b16 %v3374
    %v3470 = vunpack.c.h.b16 %v3374
    %v3471 = vunpack.c.l.b16 %v3375
    %v3472 = vunpack.c.h.b16 %v3375
    %v3473 = vpack.c.b16 %v3417, %v3409
    %v3474 = vpack.c.b16 %v3418, %v3410
    %v3475 = vpack.c.b16 %v3419, %v3411
    %v3476 = vpack.c.b16 %v3420, %v3412
    %v3477 = vpack.c.b16 %v3421, %v3413
    %v3478 = vpack.c.b16 %v3422, %v3414
    %v3479 = vpack.c.b16 %v3423, %v3415
    %v3480 = vpack.c.b16 %v3424, %v3416
    %v3481 = vpack.c.b16 %v3433, %v3425
    %v3482 = vpack.c.b16 %v3434, %v3426
    %v3483 = vpack.c.b16 %v3435, %v3427
    %v3484 = vpack.c.b16 %v3436, %v3428
    %v3485 = vpack.c.b16 %v3437, %v3429
    %v3486 = vpack.c.b16 %v3438, %v3430
    %v3487 = vpack.c.b16 %v3439, %v3431
    %v3488 = vpack.c.b16 %v3440, %v3432
    %v3489 = vpack.c.b16 %v3449, %v3441
    %v3490 = vpack.c.b16 %v3450, %v3442
    %v3491 = vpack.c.b16 %v3451, %v3443
    %v3492 = vpack.c.b16 %v3452, %v3444
    %v3493 = vpack.c.b16 %v3453, %v3445
    %v3494 = vpack.c.b16 %v3454, %v3446
    %v3495 = vpack.c.b16 %v3455, %v3447
    %v3496 = vpack.c.b16 %v3456, %v3448
    %v3497 = vpack.c.b16 %v3465, %v3457
    %v3498 = vpack.c.b16 %v3466, %v3458
    %v3499 = vpack.c.b16 %v3467, %v3459
    %v3500 = vpack.c.b16 %v3468, %v3460
    %v3501 = vpack.c.b16 %v3469, %v3461
    %v3502 = vpack.c.b16 %v3470, %v3462
    %v3503 = vpack.c.b16 %v3471, %v3463
    %v3504 = vpack.c.b16 %v3472, %v3464
    %v3538 = vsel %vm125, %v3376, 0
    %3540 = vmatprep.subr.bf16.mxu0 %v3474
    %3541 = vmatpush1.bf16.msra.mxu0 %v3473
    %3542 = vmatprep.subr.bf16.mxu0 %v3482
    %3543 = vmatpush1.bf16.msra.mxu0 %v3481
    %3544 = vmatprep.subr.bf16.mxu0 %v3490
    %3545 = vmatpush1.bf16.msra.mxu0 %v3489
    %3546 = vmatprep.subr.bf16.mxu0 %v3498
    %3547 = vmatpush1.bf16.msra.mxu0 %v3497
    %3548 = vmatprep.subr.bf16.mxu0 0
    %3549 = vmatpush1.bf16.msra.mxu0 0
    %3550 = vmatprep.subr.bf16.mxu0 0
    %3551 = vmatpush1.bf16.msra.mxu0 0
    %3552 = vmatprep.subr.bf16.mxu0 0
    %3553 = vmatpush1.bf16.msra.mxu0 0
    %3554 = vmatprep.subr.bf16.mxu0 0
    %3555 = vmatpush1.bf16.msra.mxu0 0
    %3556 = vmatprep.subr.bf16.mxu0 0
    %3557 = vmatpush1.bf16.msra.mxu0 0
    %3558 = vmatprep.subr.bf16.mxu0 0
    %3559 = vmatpush1.bf16.msra.mxu0 0
    %3560 = vmatprep.subr.bf16.mxu0 0
    %3561 = vmatpush1.bf16.msra.mxu0 0
    %3562 = vmatprep.subr.bf16.mxu0 0
    %3563 = vmatpush1.bf16.msra.mxu0 0
    %3564 = vmatprep.subr.bf16.mxu0 0
    %3565 = vmatpush1.bf16.msra.mxu0 0
    %3566 = vmatprep.subr.bf16.mxu0 0
    %3567 = vmatpush1.bf16.msra.mxu0 0
    %3568 = vmatprep.subr.bf16.mxu0 0
    %3569 = vmatpush1.bf16.msra.mxu0 0
    %3570 = vmatprep.subr.bf16.mxu0 0
    %3571 = vmatpush1.bf16.msra.mxu0 0
    %3572 = vmatprep.mubr.bf16.mxu0 0
    %3573 = vmatmul.mubr.bf16.gmra.mrb[0].mxu0 %v3538
    %v3574 = vpop.f32.mrb[0].mxu0
    %v3575 = vadd.f32 0.0, %v3574
    %v3576 = vpop.f32.mrb[0].mxu0
    %v3577 = vadd.f32 0.0, %v3576
    %v3578 = vpop.f32.mrb[0].mxu0
    %v3579 = vpop.f32.mrb[0].mxu0
    %3580 = vdwg.mxu0
    %3581 = vmatprep.subr.bf16.mxu0 %v3476
    %3582 = vmatpush1.bf16.msra.mxu0 %v3475
    %3583 = vmatprep.subr.bf16.mxu0 %v3484
    %3584 = vmatpush1.bf16.msra.mxu0 %v3483
    %3585 = vmatprep.subr.bf16.mxu0 %v3492
    %3586 = vmatpush1.bf16.msra.mxu0 %v3491
    %3587 = vmatprep.subr.bf16.mxu0 %v3500
    %3588 = vmatpush1.bf16.msra.mxu0 %v3499
    %3589 = vmatprep.subr.bf16.mxu0 0
    %3590 = vmatpush1.bf16.msra.mxu0 0
    %3591 = vmatprep.subr.bf16.mxu0 0
    %3592 = vmatpush1.bf16.msra.mxu0 0
    %3593 = vmatprep.subr.bf16.mxu0 0
    %3594 = vmatpush1.bf16.msra.mxu0 0
    %3595 = vmatprep.subr.bf16.mxu0 0
    %3596 = vmatpush1.bf16.msra.mxu0 0
    %3597 = vmatprep.subr.bf16.mxu0 0
    %3598 = vmatpush1.bf16.msra.mxu0 0
    %3599 = vmatprep.subr.bf16.mxu0 0
    %3600 = vmatpush1.bf16.msra.mxu0 0
    %3601 = vmatprep.subr.bf16.mxu0 0
    %3602 = vmatpush1.bf16.msra.mxu0 0
    %3603 = vmatprep.subr.bf16.mxu0 0
    %3604 = vmatpush1.bf16.msra.mxu0 0
    %3605 = vmatprep.subr.bf16.mxu0 0
    %3606 = vmatpush1.bf16.msra.mxu0 0
    %3607 = vmatprep.subr.bf16.mxu0 0
    %3608 = vmatpush1.bf16.msra.mxu0 0
    %3609 = vmatprep.subr.bf16.mxu0 0
    %3610 = vmatpush1.bf16.msra.mxu0 0
    %3611 = vmatprep.subr.bf16.mxu0 0
    %3612 = vmatpush1.bf16.msra.mxu0 0
    %3613 = vmatprep.mubr.bf16.mxu0 0
    %3614 = vmatmul.mubr.bf16.gmra.mrb[0].mxu0 %v3538
    %v3615 = vpop.f32.mrb[0].mxu0
    %v3616 = vadd.f32 0.0, %v3615
    %v3617 = vpop.f32.mrb[0].mxu0
    %v3618 = vadd.f32 0.0, %v3617
    %v3619 = vpop.f32.mrb[0].mxu0
    %v3620 = vpop.f32.mrb[0].mxu0
    %3621 = vdwg.mxu0
    %3622 = vmatprep.subr.bf16.mxu0 %v3478
    %3623 = vmatpush1.bf16.msra.mxu0 %v3477
    %3624 = vmatprep.subr.bf16.mxu0 %v3486
    %3625 = vmatpush1.bf16.msra.mxu0 %v3485
    %3626 = vmatprep.subr.bf16.mxu0 %v3494
    %3627 = vmatpush1.bf16.msra.mxu0 %v3493
    %3628 = vmatprep.subr.bf16.mxu0 %v3502
    %3629 = vmatpush1.bf16.msra.mxu0 %v3501
    %3630 = vmatprep.subr.bf16.mxu0 0
    %3631 = vmatpush1.bf16.msra.mxu0 0
    %3632 = vmatprep.subr.bf16.mxu0 0
    %3633 = vmatpush1.bf16.msra.mxu0 0
    %3634 = vmatprep.subr.bf16.mxu0 0
    %3635 = vmatpush1.bf16.msra.mxu0 0
    %3636 = vmatprep.subr.bf16.mxu0 0
    %3637 = vmatpush1.bf16.msra.mxu0 0
    %3638 = vmatprep.subr.bf16.mxu0 0
    %3639 = vmatpush1.bf16.msra.mxu0 0
    %3640 = vmatprep.subr.bf16.mxu0 0
    %3641 = vmatpush1.bf16.msra.mxu0 0
    %3642 = vmatprep.subr.bf16.mxu0 0
    %3643 = vmatpush1.bf16.msra.mxu0 0
    %3644 = vmatprep.subr.bf16.mxu0 0
    %3645 = vmatpush1.bf16.msra.mxu0 0
    %3646 = vmatprep.subr.bf16.mxu0 0
    %3647 = vmatpush1.bf16.msra.mxu0 0
    %3648 = vmatprep.subr.bf16.mxu0 0
    %3649 = vmatpush1.bf16.msra.mxu0 0
    %3650 = vmatprep.subr.bf16.mxu0 0
    %3651 = vmatpush1.bf16.msra.mxu0 0
    %3652 = vmatprep.subr.bf16.mxu0 0
    %3653 = vmatpush1.bf16.msra.mxu0 0
    %3654 = vmatprep.mubr.bf16.mxu0 0
    %3655 = vmatmul.mubr.bf16.gmra.mrb[0].mxu0 %v3538
    %v3656 = vpop.f32.mrb[0].mxu0
    %v3657 = vadd.f32 0.0, %v3656
    %v3658 = vpop.f32.mrb[0].mxu0
    %v3659 = vadd.f32 0.0, %v3658
    %v3660 = vpop.f32.mrb[0].mxu0
    %v3661 = vpop.f32.mrb[0].mxu0
    %3662 = vdwg.mxu0
    %3663 = vmatprep.subr.bf16.mxu0 %v3480
    %3664 = vmatpush1.bf16.msra.mxu0 %v3479
    %3665 = vmatprep.subr.bf16.mxu0 %v3488
    %3666 = vmatpush1.bf16.msra.mxu0 %v3487
    %3667 = vmatprep.subr.bf16.mxu0 %v3496
    %3668 = vmatpush1.bf16.msra.mxu0 %v3495
    %3669 = vmatprep.subr.bf16.mxu0 %v3504
    %3670 = vmatpush1.bf16.msra.mxu0 %v3503
    %3671 = vmatprep.subr.bf16.mxu0 0
    %3672 = vmatpush1.bf16.msra.mxu0 0
    %3673 = vmatprep.subr.bf16.mxu0 0
    %3674 = vmatpush1.bf16.msra.mxu0 0
    %3675 = vmatprep.subr.bf16.mxu0 0
    %3676 = vmatpush1.bf16.msra.mxu0 0
    %3677 = vmatprep.subr.bf16.mxu0 0
    %3678 = vmatpush1.bf16.msra.mxu0 0
    %3679 = vmatprep.subr.bf16.mxu0 0
    %3680 = vmatpush1.bf16.msra.mxu0 0
    %3681 = vmatprep.subr.bf16.mxu0 0
    %3682 = vmatpush1.bf16.msra.mxu0 0
    %3683 = vmatprep.subr.bf16.mxu0 0
    %3684 = vmatpush1.bf16.msra.mxu0 0
    %3685 = vmatprep.subr.bf16.mxu0 0
    %3686 = vmatpush1.bf16.msra.mxu0 0
    %3687 = vmatprep.subr.bf16.mxu0 0
    %3688 = vmatpush1.bf16.msra.mxu0 0
    %3689 = vmatprep.subr.bf16.mxu0 0
    %3690 = vmatpush1.bf16.msra.mxu0 0
    %3691 = vmatprep.subr.bf16.mxu0 0
    %3692 = vmatpush1.bf16.msra.mxu0 0
    %3693 = vmatprep.subr.bf16.mxu0 0
    %3694 = vmatpush1.bf16.msra.mxu0 0
    %3695 = vmatprep.mubr.bf16.mxu0 0
    %3696 = vmatmul.mubr.bf16.gmra.mrb[0].mxu0 %v3538
    %v3697 = vpop.f32.mrb[0].mxu0
    %v3698 = vadd.f32 0.0, %v3697
    %v3699 = vpop.f32.mrb[0].mxu0
    %v3700 = vadd.f32 0.0, %v3699
    %v3701 = vpop.f32.mrb[0].mxu0
    %v3702 = vpop.f32.mrb[0].mxu0
    %3703 = vdwg.mxu0
    %v3704 = vadd.f32 %v3335, %v3575
    %v3705 = vadd.f32 %v3336, %v3577
    %v3706 = vadd.f32 %v3337, %v3616
    %v3707 = vadd.f32 %v3338, %v3618
    %v3708 = vadd.f32 %v3339, %v3657
    %v3709 = vadd.f32 %v3340, %v3659
    %v3710 = vadd.f32 %v3341, %v3698
    %v3711 = vadd.f32 %v3342, %v3700
    %v3712 = vld [vmem:[%s9] sm:$0xff]
    %v3714 = vlaneseq
    %v3715 = vshrl.u32 %v3714, 7
    %v3716 = vsub.s32 0, %v3715
    %v3717 = vrot.slane %v3712, %v3716
    %v3718 = vlaneseq
    %v3719 = vshrl.u32 %v3718, 7
    %v3720 = vsub.s32 1, %v3719
    %v3721 = vrot.slane %v3712, %v3720
    %v3722 = vlaneseq
    %v3723 = vshrl.u32 %v3722, 7
    %v3724 = vsub.s32 2, %v3723
    %v3725 = vrot.slane %v3712, %v3724
    %v3726 = vlaneseq
    %v3727 = vshrl.u32 %v3726, 7
    %v3728 = vsub.s32 3, %v3727
    %v3729 = vrot.slane %v3712, %v3728
    %v3730 = vlaneseq
    %v3731 = vshrl.u32 %v3730, 7
    %v3732 = vsub.s32 4, %v3731
    %v3733 = vrot.slane %v3712, %v3732
    %v3734 = vlaneseq
    %v3735 = vshrl.u32 %v3734, 7
    %v3736 = vsub.s32 5, %v3735
    %v3737 = vrot.slane %v3712, %v3736
    %v3738 = vlaneseq
    %v3739 = vshrl.u32 %v3738, 7
    %v3740 = vsub.s32 6, %v3739
    %v3741 = vrot.slane %v3712, %v3740
    %v3742 = vlaneseq
    %v3743 = vshrl.u32 %v3742, 7
    %v3744 = vsub.s32 7, %v3743
    %v3745 = vrot.slane %v3712, %v3744
    %v3754 = vadd.f32 %v3704, %v3717
    %v3755 = vadd.f32 %v3705, %v3721
    %v3756 = vadd.f32 %v3706, %v3725
    %v3757 = vadd.f32 %v3707, %v3729
    %v3758 = vadd.f32 %v3708, %v3733
    %v3759 = vadd.f32 %v3709, %v3737
    %v3760 = vadd.f32 %v3710, %v3741
    %v3761 = vadd.f32 %v3711, %v3745
    %v3762 = vmax.f32 %v3754, 0.0
    %v3763 = vmax.f32 %v3755, 0.0
    %v3764 = vmax.f32 %v3756, 0.0
    %v3765 = vmax.f32 %v3757, 0.0
    %v3766 = vmax.f32 %v3758, 0.0
    %v3767 = vmax.f32 %v3759, 0.0
    %v3768 = vmax.f32 %v3760, 0.0
    %v3769 = vmax.f32 %v3761, 0.0
    %v3770 = vpack.c.bf16 %v3762, %v3762
    %v3771 = vpack.c.bf16 %v3763, %v3763
    %v3772 = vpack.c.bf16 %v3764, %v3764
    %v3773 = vpack.c.bf16 %v3765, %v3765
    %v3774 = vpack.c.bf16 %v3766, %v3766
    %v3775 = vpack.c.bf16 %v3767, %v3767
    %v3776 = vpack.c.bf16 %v3768, %v3768
    %v3777 = vpack.c.bf16 %v3769, %v3769
    %v3778 = vld [vmem:[#allocation12] sm:$0xf]
    %v3779 = vld [vmem:[#allocation12 + $0x4] sm:$0xf]
    %v3780 = vld [vmem:[#allocation12 + $0x8] sm:$0xf]
    %v3781 = vld [vmem:[#allocation12 + $0xc] sm:$0xf]
    %v3782 = vld [vmem:[#allocation12 + $0x10] sm:$0xf]
    %v3783 = vld [vmem:[#allocation12 + $0x14] sm:$0xf]
    %v3784 = vld [vmem:[#allocation12 + $0x18] sm:$0xf]
    %v3785 = vld [vmem:[#allocation12 + $0x1c] sm:$0xf]
    %v3786 = vld [vmem:[#allocation12 + $0x20] sm:$0xf]
    %v3787 = vld [vmem:[#allocation12 + $0x24] sm:$0xf]
    %v3788 = vld [vmem:[#allocation12 + $0x28] sm:$0xf]
    %v3789 = vld [vmem:[#allocation12 + $0x2c] sm:$0xf]
    %v3790 = vld [vmem:[#allocation12 + $0x30] sm:$0xf]
    %v3791 = vld [vmem:[#allocation12 + $0x34] sm:$0xf]
    %v3792 = vld [vmem:[#allocation12 + $0x38] sm:$0xf]
    %v3793 = vld [vmem:[#allocation12 + $0x3c] sm:$0xf]
    %v3794 = vld [vmem:[#allocation12 + $0x40] sm:$0xf]
    %v3795 = vld [vmem:[#allocation12 + $0x44] sm:$0xf]
    %v3796 = vld [vmem:[#allocation12 + $0x48] sm:$0xf]
    %v3797 = vld [vmem:[#allocation12 + $0x4c] sm:$0xf]
    %v3798 = vld [vmem:[#allocation12 + $0x50] sm:$0xf]
    %v3799 = vld [vmem:[#allocation12 + $0x54] sm:$0xf]
    %v3800 = vld [vmem:[#allocation12 + $0x58] sm:$0xf]
    %v3801 = vld [vmem:[#allocation12 + $0x5c] sm:$0xf]
    %v3802 = vld [vmem:[#allocation12 + $0x60] sm:$0xf]
    %v3803 = vld [vmem:[#allocation12 + $0x64] sm:$0xf]
    %v3804 = vld [vmem:[#allocation12 + $0x68] sm:$0xf]
    %v3805 = vld [vmem:[#allocation12 + $0x6c] sm:$0xf]
    %v3806 = vld [vmem:[#allocation12 + $0x70] sm:$0xf]
    %v3807 = vld [vmem:[#allocation12 + $0x74] sm:$0xf]
    %v3808 = vld [vmem:[#allocation12 + $0x78] sm:$0xf]
    %v3809 = vld [vmem:[#allocation12 + $0x7c] sm:$0xf]
    %v3810 = vld [vmem:[#allocation12 + $0x80] sm:$0xf]
    %v3811 = vld [vmem:[#allocation12 + $0x84] sm:$0xf]
    %v3812 = vld [vmem:[#allocation12 + $0x88] sm:$0xf]
    %v3813 = vld [vmem:[#allocation12 + $0x8c] sm:$0xf]
    %v3814 = vld [vmem:[#allocation12 + $0x90] sm:$0xf]
    %v3815 = vld [vmem:[#allocation12 + $0x94] sm:$0xf]
    %v3816 = vld [vmem:[#allocation12 + $0x98] sm:$0xf]
    %v3817 = vld [vmem:[#allocation12 + $0x9c] sm:$0xf]
    %v3818 = vld [vmem:[#allocation12 + $0xa0] sm:$0xf]
    %v3819 = vld [vmem:[#allocation12 + $0xa4] sm:$0xf]
    %v3820 = vld [vmem:[#allocation12 + $0xa8] sm:$0xf]
    %v3821 = vld [vmem:[#allocation12 + $0xac] sm:$0xf]
    %v3822 = vld [vmem:[#allocation12 + $0xb0] sm:$0xf]
    %v3823 = vld [vmem:[#allocation12 + $0xb4] sm:$0xf]
    %v3824 = vld [vmem:[#allocation12 + $0xb8] sm:$0xf]
    %v3825 = vld [vmem:[#allocation12 + $0xbc] sm:$0xf]
    %v3826 = vld [vmem:[#allocation12 + $0xc0] sm:$0xf]
    %v3827 = vld [vmem:[#allocation12 + $0xc4] sm:$0xf]
    %v3828 = vld [vmem:[#allocation12 + $0xc8] sm:$0xf]
    %v3829 = vld [vmem:[#allocation12 + $0xcc] sm:$0xf]
    %v3830 = vld [vmem:[#allocation12 + $0xd0] sm:$0xf]
    %v3831 = vld [vmem:[#allocation12 + $0xd4] sm:$0xf]
    %v3832 = vld [vmem:[#allocation12 + $0xd8] sm:$0xf]
    %v3833 = vld [vmem:[#allocation12 + $0xdc] sm:$0xf]
    %v3834 = vld [vmem:[#allocation12 + $0xe0] sm:$0xf]
    %v3835 = vld [vmem:[#allocation12 + $0xe4] sm:$0xf]
    %v3836 = vld [vmem:[#allocation12 + $0xe8] sm:$0xf]
    %v3837 = vld [vmem:[#allocation12 + $0xec] sm:$0xf]
    %v3838 = vld [vmem:[#allocation12 + $0xf0] sm:$0xf]
    %v3839 = vld [vmem:[#allocation12 + $0xf4] sm:$0xf]
    %v3840 = vld [vmem:[#allocation12 + $0xf8] sm:$0xf]
    %v3841 = vld [vmem:[#allocation12 + $0xfc] sm:$0xf]
    %v3842 = vld [vmem:[#allocation12 + $0x100] sm:$0xf]
    %v3843 = vld [vmem:[#allocation12 + $0x104] sm:$0xf]
    %v3844 = vld [vmem:[#allocation12 + $0x108] sm:$0xf]
    %v3845 = vld [vmem:[#allocation12 + $0x10c] sm:$0xf]
    %v3846 = vld [vmem:[#allocation12 + $0x110] sm:$0xf]
    %v3847 = vld [vmem:[#allocation12 + $0x114] sm:$0xf]
    %v3848 = vld [vmem:[#allocation12 + $0x118] sm:$0xf]
    %v3849 = vld [vmem:[#allocation12 + $0x11c] sm:$0xf]
    %v3850 = vld [vmem:[#allocation12 + $0x120] sm:$0xf]
    %v3851 = vld [vmem:[#allocation12 + $0x124] sm:$0xf]
    %v3852 = vld [vmem:[#allocation12 + $0x128] sm:$0xf]
    %v3853 = vld [vmem:[#allocation12 + $0x12c] sm:$0xf]
    %v3854 = vld [vmem:[#allocation12 + $0x130] sm:$0xf]
    %v3855 = vld [vmem:[#allocation12 + $0x134] sm:$0xf]
    %v3856 = vld [vmem:[#allocation12 + $0x138] sm:$0xf]
    %v3857 = vld [vmem:[#allocation12 + $0x13c] sm:$0xf]
    %v3858 = vld [vmem:[#allocation12 + $0x140] sm:$0xf]
    %v3859 = vld [vmem:[#allocation12 + $0x144] sm:$0xf]
    %v3860 = vld [vmem:[#allocation12 + $0x148] sm:$0xf]
    %v3861 = vld [vmem:[#allocation12 + $0x14c] sm:$0xf]
    %v3862 = vld [vmem:[#allocation12 + $0x150] sm:$0xf]
    %v3863 = vld [vmem:[#allocation12 + $0x154] sm:$0xf]
    %v3864 = vld [vmem:[#allocation12 + $0x158] sm:$0xf]
    %v3865 = vld [vmem:[#allocation12 + $0x15c] sm:$0xf]
    %v3866 = vld [vmem:[#allocation12 + $0x160] sm:$0xf]
    %v3867 = vld [vmem:[#allocation12 + $0x164] sm:$0xf]
    %v3868 = vld [vmem:[#allocation12 + $0x168] sm:$0xf]
    %v3869 = vld [vmem:[#allocation12 + $0x16c] sm:$0xf]
    %v3870 = vld [vmem:[#allocation12 + $0x170] sm:$0xf]
    %v3871 = vld [vmem:[#allocation12 + $0x174] sm:$0xf]
    %v3872 = vld [vmem:[#allocation12 + $0x178] sm:$0xf]
    %v3873 = vld [vmem:[#allocation12 + $0x17c] sm:$0xf]
    %v3874 = vld [vmem:[#allocation12 + $0x180] sm:$0xf]
    %v3875 = vld [vmem:[#allocation12 + $0x184] sm:$0xf]
    %v3876 = vld [vmem:[#allocation12 + $0x188] sm:$0xf]
    %v3877 = vld [vmem:[#allocation12 + $0x18c] sm:$0xf]
    %v3878 = vld [vmem:[#allocation12 + $0x190] sm:$0xf]
    %v3879 = vld [vmem:[#allocation12 + $0x194] sm:$0xf]
    %v3880 = vld [vmem:[#allocation12 + $0x198] sm:$0xf]
    %v3881 = vld [vmem:[#allocation12 + $0x19c] sm:$0xf]
    %v3882 = vld [vmem:[#allocation12 + $0x1a0] sm:$0xf]
    %v3883 = vld [vmem:[#allocation12 + $0x1a4] sm:$0xf]
    %v3884 = vld [vmem:[#allocation12 + $0x1a8] sm:$0xf]
    %v3885 = vld [vmem:[#allocation12 + $0x1ac] sm:$0xf]
    %v3886 = vld [vmem:[#allocation12 + $0x1b0] sm:$0xf]
    %v3887 = vld [vmem:[#allocation12 + $0x1b4] sm:$0xf]
    %v3888 = vld [vmem:[#allocation12 + $0x1b8] sm:$0xf]
    %v3889 = vld [vmem:[#allocation12 + $0x1bc] sm:$0xf]
    %v3890 = vld [vmem:[#allocation12 + $0x1c0] sm:$0xf]
    %v3891 = vld [vmem:[#allocation12 + $0x1c4] sm:$0xf]
    %v3892 = vld [vmem:[#allocation12 + $0x1c8] sm:$0xf]
    %v3893 = vld [vmem:[#allocation12 + $0x1cc] sm:$0xf]
    %v3894 = vld [vmem:[#allocation12 + $0x1d0] sm:$0xf]
    %v3895 = vld [vmem:[#allocation12 + $0x1d4] sm:$0xf]
    %v3896 = vld [vmem:[#allocation12 + $0x1d8] sm:$0xf]
    %v3897 = vld [vmem:[#allocation12 + $0x1dc] sm:$0xf]
    %v3898 = vld [vmem:[#allocation12 + $0x1e0] sm:$0xf]
    %v3899 = vld [vmem:[#allocation12 + $0x1e4] sm:$0xf]
    %v3900 = vld [vmem:[#allocation12 + $0x1e8] sm:$0xf]
    %v3901 = vld [vmem:[#allocation12 + $0x1ec] sm:$0xf]
    %v3902 = vld [vmem:[#allocation12 + $0x1f0] sm:$0xf]
    %v3903 = vld [vmem:[#allocation12 + $0x1f4] sm:$0xf]
    %v3904 = vld [vmem:[#allocation12 + $0x1f8] sm:$0xf]
    %v3905 = vld [vmem:[#allocation12 + $0x1fc] sm:$0xf]
    %v3906 = vld [vmem:[%s11] sm:$0x1]
    %v4035 = vunpack.c.l.b16 %v3778
    %v4036 = vunpack.c.l.b16 %v3779
    %v4037 = vunpack.c.l.b16 %v3780
    %v4038 = vunpack.c.l.b16 %v3781
    %v4039 = vunpack.c.l.b16 %v3782
    %v4040 = vunpack.c.l.b16 %v3783
    %v4041 = vunpack.c.l.b16 %v3784
    %v4042 = vunpack.c.l.b16 %v3785
    %v4043 = vunpack.c.l.b16 %v3786
    %v4044 = vunpack.c.l.b16 %v3787
    %v4045 = vunpack.c.l.b16 %v3788
    %v4046 = vunpack.c.l.b16 %v3789
    %v4047 = vunpack.c.l.b16 %v3790
    %v4048 = vunpack.c.l.b16 %v3791
    %v4049 = vunpack.c.l.b16 %v3792
    %v4050 = vunpack.c.l.b16 %v3793
    %v4051 = vunpack.c.l.b16 %v3794
    %v4052 = vunpack.c.l.b16 %v3795
    %v4053 = vunpack.c.l.b16 %v3796
    %v4054 = vunpack.c.l.b16 %v3797
    %v4055 = vunpack.c.l.b16 %v3798
    %v4056 = vunpack.c.l.b16 %v3799
    %v4057 = vunpack.c.l.b16 %v3800
    %v4058 = vunpack.c.l.b16 %v3801
    %v4059 = vunpack.c.l.b16 %v3802
    %v4060 = vunpack.c.l.b16 %v3803
    %v4061 = vunpack.c.l.b16 %v3804
    %v4062 = vunpack.c.l.b16 %v3805
    %v4063 = vunpack.c.l.b16 %v3806
    %v4064 = vunpack.c.l.b16 %v3807
    %v4065 = vunpack.c.l.b16 %v3808
    %v4066 = vunpack.c.l.b16 %v3809
    %v4067 = vunpack.c.l.b16 %v3810
    %v4068 = vunpack.c.l.b16 %v3811
    %v4069 = vunpack.c.l.b16 %v3812
    %v4070 = vunpack.c.l.b16 %v3813
    %v4071 = vunpack.c.l.b16 %v3814
    %v4072 = vunpack.c.l.b16 %v3815
    %v4073 = vunpack.c.l.b16 %v3816
    %v4074 = vunpack.c.l.b16 %v3817
    %v4075 = vunpack.c.l.b16 %v3818
    %v4076 = vunpack.c.l.b16 %v3819
    %v4077 = vunpack.c.l.b16 %v3820
    %v4078 = vunpack.c.l.b16 %v3821
    %v4079 = vunpack.c.l.b16 %v3822
    %v4080 = vunpack.c.l.b16 %v3823
    %v4081 = vunpack.c.l.b16 %v3824
    %v4082 = vunpack.c.l.b16 %v3825
    %v4083 = vunpack.c.l.b16 %v3826
    %v4084 = vunpack.c.l.b16 %v3827
    %v4085 = vunpack.c.l.b16 %v3828
    %v4086 = vunpack.c.l.b16 %v3829
    %v4087 = vunpack.c.l.b16 %v3830
    %v4088 = vunpack.c.l.b16 %v3831
    %v4089 = vunpack.c.l.b16 %v3832
    %v4090 = vunpack.c.l.b16 %v3833
    %v4091 = vunpack.c.l.b16 %v3834
    %v4092 = vunpack.c.l.b16 %v3835
    %v4093 = vunpack.c.l.b16 %v3836
    %v4094 = vunpack.c.l.b16 %v3837
    %v4095 = vunpack.c.l.b16 %v3838
    %v4096 = vunpack.c.l.b16 %v3839
    %v4097 = vunpack.c.l.b16 %v3840
    %v4098 = vunpack.c.l.b16 %v3841
    %v4099 = vunpack.c.l.b16 %v3842
    %v4100 = vunpack.c.l.b16 %v3843
    %v4101 = vunpack.c.l.b16 %v3844
    %v4102 = vunpack.c.l.b16 %v3845
    %v4103 = vunpack.c.l.b16 %v3846
    %v4104 = vunpack.c.l.b16 %v3847
    %v4105 = vunpack.c.l.b16 %v3848
    %v4106 = vunpack.c.l.b16 %v3849
    %v4107 = vunpack.c.l.b16 %v3850
    %v4108 = vunpack.c.l.b16 %v3851
    %v4109 = vunpack.c.l.b16 %v3852
    %v4110 = vunpack.c.l.b16 %v3853
    %v4111 = vunpack.c.l.b16 %v3854
    %v4112 = vunpack.c.l.b16 %v3855
    %v4113 = vunpack.c.l.b16 %v3856
    %v4114 = vunpack.c.l.b16 %v3857
    %v4115 = vunpack.c.l.b16 %v3858
    %v4116 = vunpack.c.l.b16 %v3859
    %v4117 = vunpack.c.l.b16 %v3860
    %v4118 = vunpack.c.l.b16 %v3861
    %v4119 = vunpack.c.l.b16 %v3862
    %v4120 = vunpack.c.l.b16 %v3863
    %v4121 = vunpack.c.l.b16 %v3864
    %v4122 = vunpack.c.l.b16 %v3865
    %v4123 = vunpack.c.l.b16 %v3866
    %v4124 = vunpack.c.l.b16 %v3867
    %v4125 = vunpack.c.l.b16 %v3868
    %v4126 = vunpack.c.l.b16 %v3869
    %v4127 = vunpack.c.l.b16 %v3870
    %v4128 = vunpack.c.l.b16 %v3871
    %v4129 = vunpack.c.l.b16 %v3872
    %v4130 = vunpack.c.l.b16 %v3873
    %v4131 = vunpack.c.l.b16 %v3874
    %v4132 = vunpack.c.l.b16 %v3875
    %v4133 = vunpack.c.l.b16 %v3876
    %v4134 = vunpack.c.l.b16 %v3877
    %v4135 = vunpack.c.l.b16 %v3878
    %v4136 = vunpack.c.l.b16 %v3879
    %v4137 = vunpack.c.l.b16 %v3880
    %v4138 = vunpack.c.l.b16 %v3881
    %v4139 = vunpack.c.l.b16 %v3882
    %v4140 = vunpack.c.l.b16 %v3883
    %v4141 = vunpack.c.l.b16 %v3884
    %v4142 = vunpack.c.l.b16 %v3885
    %v4143 = vunpack.c.l.b16 %v3886
    %v4144 = vunpack.c.l.b16 %v3887
    %v4145 = vunpack.c.l.b16 %v3888
    %v4146 = vunpack.c.l.b16 %v3889
    %v4147 = vunpack.c.l.b16 %v3890
    %v4148 = vunpack.c.l.b16 %v3891
    %v4149 = vunpack.c.l.b16 %v3892
    %v4150 = vunpack.c.l.b16 %v3893
    %v4151 = vunpack.c.l.b16 %v3894
    %v4152 = vunpack.c.l.b16 %v3895
    %v4153 = vunpack.c.l.b16 %v3896
    %v4154 = vunpack.c.l.b16 %v3897
    %v4155 = vunpack.c.l.b16 %v3898
    %v4156 = vunpack.c.l.b16 %v3899
    %v4157 = vunpack.c.l.b16 %v3900
    %v4158 = vunpack.c.l.b16 %v3901
    %v4159 = vunpack.c.l.b16 %v3902
    %v4160 = vunpack.c.l.b16 %v3903
    %v4161 = vunpack.c.l.b16 %v3904
    %v4162 = vunpack.c.l.b16 %v3905
    %v4163 = vpack.c.b16 %v4036, %v4035
    %v4164 = vpack.c.b16 %v4038, %v4037
    %v4165 = vpack.c.b16 %v4040, %v4039
    %v4166 = vpack.c.b16 %v4042, %v4041
    %v4167 = vpack.c.b16 %v4044, %v4043
    %v4168 = vpack.c.b16 %v4046, %v4045
    %v4169 = vpack.c.b16 %v4048, %v4047
    %v4170 = vpack.c.b16 %v4050, %v4049
    %v4171 = vpack.c.b16 %v4052, %v4051
    %v4172 = vpack.c.b16 %v4054, %v4053
    %v4173 = vpack.c.b16 %v4056, %v4055
    %v4174 = vpack.c.b16 %v4058, %v4057
    %v4175 = vpack.c.b16 %v4060, %v4059
    %v4176 = vpack.c.b16 %v4062, %v4061
    %v4177 = vpack.c.b16 %v4064, %v4063
    %v4178 = vpack.c.b16 %v4066, %v4065
    %v4179 = vpack.c.b16 %v4068, %v4067
    %v4180 = vpack.c.b16 %v4070, %v4069
    %v4181 = vpack.c.b16 %v4072, %v4071
    %v4182 = vpack.c.b16 %v4074, %v4073
    %v4183 = vpack.c.b16 %v4076, %v4075
    %v4184 = vpack.c.b16 %v4078, %v4077
    %v4185 = vpack.c.b16 %v4080, %v4079
    %v4186 = vpack.c.b16 %v4082, %v4081
    %v4187 = vpack.c.b16 %v4084, %v4083
    %v4188 = vpack.c.b16 %v4086, %v4085
    %v4189 = vpack.c.b16 %v4088, %v4087
    %v4190 = vpack.c.b16 %v4090, %v4089
    %v4191 = vpack.c.b16 %v4092, %v4091
    %v4192 = vpack.c.b16 %v4094, %v4093
    %v4193 = vpack.c.b16 %v4096, %v4095
    %v4194 = vpack.c.b16 %v4098, %v4097
    %v4195 = vpack.c.b16 %v4100, %v4099
    %v4196 = vpack.c.b16 %v4102, %v4101
    %v4197 = vpack.c.b16 %v4104, %v4103
    %v4198 = vpack.c.b16 %v4106, %v4105
    %v4199 = vpack.c.b16 %v4108, %v4107
    %v4200 = vpack.c.b16 %v4110, %v4109
    %v4201 = vpack.c.b16 %v4112, %v4111
    %v4202 = vpack.c.b16 %v4114, %v4113
    %v4203 = vpack.c.b16 %v4116, %v4115
    %v4204 = vpack.c.b16 %v4118, %v4117
    %v4205 = vpack.c.b16 %v4120, %v4119
    %v4206 = vpack.c.b16 %v4122, %v4121
    %v4207 = vpack.c.b16 %v4124, %v4123
    %v4208 = vpack.c.b16 %v4126, %v4125
    %v4209 = vpack.c.b16 %v4128, %v4127
    %v4210 = vpack.c.b16 %v4130, %v4129
    %v4211 = vpack.c.b16 %v4132, %v4131
    %v4212 = vpack.c.b16 %v4134, %v4133
    %v4213 = vpack.c.b16 %v4136, %v4135
    %v4214 = vpack.c.b16 %v4138, %v4137
    %v4215 = vpack.c.b16 %v4140, %v4139
    %v4216 = vpack.c.b16 %v4142, %v4141
    %v4217 = vpack.c.b16 %v4144, %v4143
    %v4218 = vpack.c.b16 %v4146, %v4145
    %v4219 = vpack.c.b16 %v4148, %v4147
    %v4220 = vpack.c.b16 %v4150, %v4149
    %v4221 = vpack.c.b16 %v4152, %v4151
    %v4222 = vpack.c.b16 %v4154, %v4153
    %v4223 = vpack.c.b16 %v4156, %v4155
    %v4224 = vpack.c.b16 %v4158, %v4157
    %v4225 = vpack.c.b16 %v4160, %v4159
    %v4226 = vpack.c.b16 %v4162, %v4161
    %4291 = vmatprep.subr.bf16.mxu0 0
    %4292 = vmatpush1.bf16.msra.mxu0 %v4163
    %4293 = vmatprep.subr.bf16.mxu0 0
    %4294 = vmatpush1.bf16.msra.mxu0 %v4164
    %4295 = vmatprep.subr.bf16.mxu0 0
    %4296 = vmatpush1.bf16.msra.mxu0 %v4165
    %4297 = vmatprep.subr.bf16.mxu0 0
    %4298 = vmatpush1.bf16.msra.mxu0 %v4166
    %4299 = vmatprep.subr.bf16.mxu0 0
    %4300 = vmatpush1.bf16.msra.mxu0 %v4167
    %4301 = vmatprep.subr.bf16.mxu0 0
    %4302 = vmatpush1.bf16.msra.mxu0 %v4168
    %4303 = vmatprep.subr.bf16.mxu0 0
    %4304 = vmatpush1.bf16.msra.mxu0 %v4169
    %4305 = vmatprep.subr.bf16.mxu0 0
    %4306 = vmatpush1.bf16.msra.mxu0 %v4170
    %4307 = vmatprep.subr.bf16.mxu0 0
    %4308 = vmatpush1.bf16.msra.mxu0 %v4171
    %4309 = vmatprep.subr.bf16.mxu0 0
    %4310 = vmatpush1.bf16.msra.mxu0 %v4172
    %4311 = vmatprep.subr.bf16.mxu0 0
    %4312 = vmatpush1.bf16.msra.mxu0 %v4173
    %4313 = vmatprep.subr.bf16.mxu0 0
    %4314 = vmatpush1.bf16.msra.mxu0 %v4174
    %4315 = vmatprep.subr.bf16.mxu0 0
    %4316 = vmatpush1.bf16.msra.mxu0 %v4175
    %4317 = vmatprep.subr.bf16.mxu0 0
    %4318 = vmatpush1.bf16.msra.mxu0 %v4176
    %4319 = vmatprep.subr.bf16.mxu0 0
    %4320 = vmatpush1.bf16.msra.mxu0 %v4177
    %4321 = vmatprep.subr.bf16.mxu0 0
    %4322 = vmatpush1.bf16.msra.mxu0 %v4178
    %4323 = vmatprep.mubr.bf16.mxu0 %v3771
    %4324 = vmatmul.mubr.bf16.gmra.mrb[0].mxu0 %v3770
    %v4325 = vpop.f32.mrb[0].mxu0
    %v4326 = vadd.f32 %v3906, %v4325
    %v4327 = vpop.f32.mrb[0].mxu0
    %v4328 = vpop.f32.mrb[0].mxu0
    %v4329 = vpop.f32.mrb[0].mxu0
    %4330 = vdwg.mxu0
    %4331 = vmatprep.subr.bf16.mxu0 0
    %4332 = vmatpush1.bf16.msra.mxu0 %v4179
    %4333 = vmatprep.subr.bf16.mxu0 0
    %4334 = vmatpush1.bf16.msra.mxu0 %v4180
    %4335 = vmatprep.subr.bf16.mxu0 0
    %4336 = vmatpush1.bf16.msra.mxu0 %v4181
    %4337 = vmatprep.subr.bf16.mxu0 0
    %4338 = vmatpush1.bf16.msra.mxu0 %v4182
    %4339 = vmatprep.subr.bf16.mxu0 0
    %4340 = vmatpush1.bf16.msra.mxu0 %v4183
    %4341 = vmatprep.subr.bf16.mxu0 0
    %4342 = vmatpush1.bf16.msra.mxu0 %v4184
    %4343 = vmatprep.subr.bf16.mxu0 0
    %4344 = vmatpush1.bf16.msra.mxu0 %v4185
    %4345 = vmatprep.subr.bf16.mxu0 0
    %4346 = vmatpush1.bf16.msra.mxu0 %v4186
    %4347 = vmatprep.subr.bf16.mxu0 0
    %4348 = vmatpush1.bf16.msra.mxu0 %v4187
    %4349 = vmatprep.subr.bf16.mxu0 0
    %4350 = vmatpush1.bf16.msra.mxu0 %v4188
    %4351 = vmatprep.subr.bf16.mxu0 0
    %4352 = vmatpush1.bf16.msra.mxu0 %v4189
    %4353 = vmatprep.subr.bf16.mxu0 0
    %4354 = vmatpush1.bf16.msra.mxu0 %v4190
    %4355 = vmatprep.subr.bf16.mxu0 0
    %4356 = vmatpush1.bf16.msra.mxu0 %v4191
    %4357 = vmatprep.subr.bf16.mxu0 0
    %4358 = vmatpush1.bf16.msra.mxu0 %v4192
    %4359 = vmatprep.subr.bf16.mxu0 0
    %4360 = vmatpush1.bf16.msra.mxu0 %v4193
    %4361 = vmatprep.subr.bf16.mxu0 0
    %4362 = vmatpush1.bf16.msra.mxu0 %v4194
    %4363 = vmatprep.mubr.bf16.mxu0 %v3773
    %4364 = vmatmul.mubr.bf16.gmra.mrb[0].mxu0 %v3772
    %v4365 = vpop.f32.mrb[0].mxu0
    %v4366 = vadd.f32 %v4326, %v4365
    %v4367 = vpop.f32.mrb[0].mxu0
    %v4368 = vpop.f32.mrb[0].mxu0
    %v4369 = vpop.f32.mrb[0].mxu0
    %4370 = vdwg.mxu0
    %4371 = vmatprep.subr.bf16.mxu0 0
    %4372 = vmatpush1.bf16.msra.mxu0 %v4195
    %4373 = vmatprep.subr.bf16.mxu0 0
    %4374 = vmatpush1.bf16.msra.mxu0 %v4196
    %4375 = vmatprep.subr.bf16.mxu0 0
    %4376 = vmatpush1.bf16.msra.mxu0 %v4197
    %4377 = vmatprep.subr.bf16.mxu0 0
    %4378 = vmatpush1.bf16.msra.mxu0 %v4198
    %4379 = vmatprep.subr.bf16.mxu0 0
    %4380 = vmatpush1.bf16.msra.mxu0 %v4199
    %4381 = vmatprep.subr.bf16.mxu0 0
    %4382 = vmatpush1.bf16.msra.mxu0 %v4200
    %4383 = vmatprep.subr.bf16.mxu0 0
    %4384 = vmatpush1.bf16.msra.mxu0 %v4201
    %4385 = vmatprep.subr.bf16.mxu0 0
    %4386 = vmatpush1.bf16.msra.mxu0 %v4202
    %4387 = vmatprep.subr.bf16.mxu0 0
    %4388 = vmatpush1.bf16.msra.mxu0 %v4203
    %4389 = vmatprep.subr.bf16.mxu0 0
    %4390 = vmatpush1.bf16.msra.mxu0 %v4204
    %4391 = vmatprep.subr.bf16.mxu0 0
    %4392 = vmatpush1.bf16.msra.mxu0 %v4205
    %4393 = vmatprep.subr.bf16.mxu0 0
    %4394 = vmatpush1.bf16.msra.mxu0 %v4206
    %4395 = vmatprep.subr.bf16.mxu0 0
    %4396 = vmatpush1.bf16.msra.mxu0 %v4207
    %4397 = vmatprep.subr.bf16.mxu0 0
    %4398 = vmatpush1.bf16.msra.mxu0 %v4208
    %4399 = vmatprep.subr.bf16.mxu0 0
    %4400 = vmatpush1.bf16.msra.mxu0 %v4209
    %4401 = vmatprep.subr.bf16.mxu0 0
    %4402 = vmatpush1.bf16.msra.mxu0 %v4210
    %4403 = vmatprep.mubr.bf16.mxu0 %v3775
    %4404 = vmatmul.mubr.bf16.gmra.mrb[0].mxu0 %v3774
    %v4405 = vpop.f32.mrb[0].mxu0
    %v4406 = vadd.f32 %v4366, %v4405
    %v4407 = vpop.f32.mrb[0].mxu0
    %v4408 = vpop.f32.mrb[0].mxu0
    %v4409 = vpop.f32.mrb[0].mxu0
    %4410 = vdwg.mxu0
    %4411 = vmatprep.subr.bf16.mxu0 0
    %4412 = vmatpush1.bf16.msra.mxu0 %v4211
    %4413 = vmatprep.subr.bf16.mxu0 0
    %4414 = vmatpush1.bf16.msra.mxu0 %v4212
    %4415 = vmatprep.subr.bf16.mxu0 0
    %4416 = vmatpush1.bf16.msra.mxu0 %v4213
    %4417 = vmatprep.subr.bf16.mxu0 0
    %4418 = vmatpush1.bf16.msra.mxu0 %v4214
    %4419 = vmatprep.subr.bf16.mxu0 0
    %4420 = vmatpush1.bf16.msra.mxu0 %v4215
    %4421 = vmatprep.subr.bf16.mxu0 0
    %4422 = vmatpush1.bf16.msra.mxu0 %v4216
    %4423 = vmatprep.subr.bf16.mxu0 0
    %4424 = vmatpush1.bf16.msra.mxu0 %v4217
    %4425 = vmatprep.subr.bf16.mxu0 0
    %4426 = vmatpush1.bf16.msra.mxu0 %v4218
    %4427 = vmatprep.subr.bf16.mxu0 0
    %4428 = vmatpush1.bf16.msra.mxu0 %v4219
    %4429 = vmatprep.subr.bf16.mxu0 0
    %4430 = vmatpush1.bf16.msra.mxu0 %v4220
    %4431 = vmatprep.subr.bf16.mxu0 0
    %4432 = vmatpush1.bf16.msra.mxu0 %v4221
    %4433 = vmatprep.subr.bf16.mxu0 0
    %4434 = vmatpush1.bf16.msra.mxu0 %v4222
    %4435 = vmatprep.subr.bf16.mxu0 0
    %4436 = vmatpush1.bf16.msra.mxu0 %v4223
    %4437 = vmatprep.subr.bf16.mxu0 0
    %4438 = vmatpush1.bf16.msra.mxu0 %v4224
    %4439 = vmatprep.subr.bf16.mxu0 0
    %4440 = vmatpush1.bf16.msra.mxu0 %v4225
    %4441 = vmatprep.subr.bf16.mxu0 0
    %4442 = vmatpush1.bf16.msra.mxu0 %v4226
    %4443 = vmatprep.mubr.bf16.mxu0 %v3777
    %4444 = vmatmul.mubr.bf16.gmra.mrb[0].mxu0 %v3776
    %v4445 = vpop.f32.mrb[0].mxu0
    %v4446 = vadd.f32 %v4406, %v4445
    %v4447 = vpop.f32.mrb[0].mxu0
    %v4448 = vpop.f32.mrb[0].mxu0
    %v4449 = vpop.f32.mrb[0].mxu0
    %4450 = vdwg.mxu0
    %v4451 = vxor.u32 %v4446, 2147483648
    %v4452 = vmul.f32 %v4451, 1.442695
    %v4453 = vpow.pop %v4452
    %v4454 = vadd.f32 %v4453, 1.0
    %v4455 = vrcp.pop %v4454
    %v4456 = vmul.f32 1.0, %v4455
    %4457 = vst [vmem:[#allocation14] sm:$0x1] %v4456
    %vm4458 = vcmask 523270
    %4459 = vst.msk [vmem:[#allocation2 - $0x3] sm:$0xc0] %vm4458, %v219
    %4460 = vst.msk [vmem:[#allocation2 + $0x5] sm:$0xff] %vm125, %v220
    %4461 = vst.msk [vmem:[#allocation2 + $0xd] sm:$0xf] %vm128, %v221
    %v4462 = vld [vmem:[#allocation8] sm:$0x7f]
    %v4463 = vld [vmem:[%s4] sm:$0x1]
    %v4464 = vlaneseq
    %v4465 = vshrl.u32 %v4464, 7
    %v4466 = vsub.s32 0, %v4465
    %v4467 = vrot.slane %v4463, %v4466
    %v4468 = vadd.f32 %v4467, 0.0
    %v4469 = vld [vmem:[#allocation2] sm:$0xff]
    %v4470 = vld [vmem:[#allocation2 + $0x8] sm:$0x3f]
    %v4471 = vlaneseq
    %v4472 = vshrl.u32 %v4471, 7
    %v4473 = vsub.s32 0, %v4472
    %v4474 = vrot.slane %v4462, %v4473
    %v4475 = vmul.f32 %v4469, %v4474
    %v4476 = vmul.f32 %v4470, %v4474
    %v4477 = vadd.f32 %v4468, %v4475
    %v4478 = vadd.f32 %v4468, %v4476
    %v4479 = vld [vmem:[#allocation2 + $0x1] sm:$0xff]
    %v4480 = vld [vmem:[#allocation2 + $0x9] sm:$0x3f]
    %v4481 = vlaneseq
    %v4482 = vshrl.u32 %v4481, 7
    %v4483 = vsub.s32 1, %v4482
    %v4484 = vrot.slane %v4462, %v4483
    %v4485 = vmul.f32 %v4479, %v4484
    %v4486 = vmul.f32 %v4480, %v4484
    %v4487 = vadd.f32 %v4477, %v4485
    %v4488 = vadd.f32 %v4478, %v4486
    %v4489 = vld [vmem:[#allocation2 + $0x2] sm:$0xff]
    %v4490 = vld [vmem:[#allocation2 + $0xa] sm:$0x3f]
    %v4491 = vlaneseq
    %v4492 = vshrl.u32 %v4491, 7
    %v4493 = vsub.s32 2, %v4492
    %v4494 = vrot.slane %v4462, %v4493
    %v4495 = vmul.f32 %v4489, %v4494
    %v4496 = vmul.f32 %v4490, %v4494
    %v4497 = vadd.f32 %v4487, %v4495
    %v4498 = vadd.f32 %v4488, %v4496
    %v4499 = vld [vmem:[#allocation2 + $0x3] sm:$0xff]
    %v4500 = vld [vmem:[#allocation2 + $0xb] sm:$0x3f]
    %v4501 = vlaneseq
    %v4502 = vshrl.u32 %v4501, 7
    %v4503 = vsub.s32 3, %v4502
    %v4504 = vrot.slane %v4462, %v4503
    %v4505 = vmul.f32 %v4499, %v4504
    %v4506 = vmul.f32 %v4500, %v4504
    %v4507 = vadd.f32 %v4497, %v4505
    %v4508 = vadd.f32 %v4498, %v4506
    %v4509 = vld [vmem:[#allocation2 + $0x4] sm:$0xff]
    %v4510 = vld [vmem:[#allocation2 + $0xc] sm:$0x3f]
    %v4511 = vlaneseq
    %v4512 = vshrl.u32 %v4511, 7
    %v4513 = vsub.s32 4, %v4512
    %v4514 = vrot.slane %v4462, %v4513
    %v4515 = vmul.f32 %v4509, %v4514
    %v4516 = vmul.f32 %v4510, %v4514
    %v4517 = vadd.f32 %v4507, %v4515
    %v4518 = vadd.f32 %v4508, %v4516
    %v4519 = vld [vmem:[#allocation2 + $0x5] sm:$0xff]
    %v4520 = vld [vmem:[#allocation2 + $0xd] sm:$0x3f]
    %v4521 = vlaneseq
    %v4522 = vshrl.u32 %v4521, 7
    %v4523 = vsub.s32 5, %v4522
    %v4524 = vrot.slane %v4462, %v4523
    %v4525 = vmul.f32 %v4519, %v4524
    %v4526 = vmul.f32 %v4520, %v4524
    %v4527 = vadd.f32 %v4517, %v4525
    %v4528 = vadd.f32 %v4518, %v4526
    %v4529 = vld [vmem:[#allocation2 + $0x6] sm:$0xff]
    %v4530 = vld [vmem:[#allocation2 + $0xe] sm:$0x3f]
    %v4531 = vlaneseq
    %v4532 = vshrl.u32 %v4531, 7
    %v4533 = vsub.s32 6, %v4532
    %v4534 = vrot.slane %v4462, %v4533
    %v4535 = vmul.f32 %v4529, %v4534
    %v4536 = vmul.f32 %v4530, %v4534
    %v4537 = vadd.f32 %v4527, %v4535
    %v4538 = vadd.f32 %v4528, %v4536
    %v4539 = vmax.f32 %v4537, 0.0
    %v4540 = vmax.f32 %v4538, 0.0
    %vm4544 = vcmask 1041408
    %v4545 = vrot.slane %v219, 6
    %v4546 = vrot.slane %v220, 6
    %v4547 = vsel %vm4544, %v4545, %v4546
    %v4548 = vrot.slane %v221, 6
    %v4549 = vsel %vm4544, %v4546, %v4548
    %v4552 = vadd.f32 %v4539, %v4547
    %v4553 = vadd.f32 %v4540, %v4549
    %v4554 = vpack.c.bf16 %v4553, %v4552
    %v4555 = vld [vmem:[#allocation9] sm:$0xf]
    %v4556 = vld [vmem:[#allocation9 + $0x4] sm:$0xf]
    %v4557 = vld [vmem:[#allocation9 + $0x8] sm:$0xf]
    %v4558 = vld [vmem:[#allocation9 + $0xc] sm:$0xf]
    %v4559 = vld [vmem:[#allocation9 + $0x10] sm:$0xf]
    %v4560 = vld [vmem:[#allocation9 + $0x14] sm:$0xf]
    %v4561 = vld [vmem:[#allocation9 + $0x18] sm:$0xf]
    %v4562 = vld [vmem:[#allocation9 + $0x1c] sm:$0xf]
    %v4563 = vld [vmem:[%s6] sm:$0x1]
    %v4564 = vlaneseq
    %v4565 = vshrl.u32 %v4564, 7
    %v4566 = vsub.s32 0, %v4565
    %v4567 = vrot.slane %v4563, %v4566
    %v4576 = vunpack.c.l.b16 %v4555
    %v4577 = vunpack.c.l.b16 %v4556
    %v4578 = vunpack.c.l.b16 %v4557
    %v4579 = vunpack.c.l.b16 %v4558
    %v4580 = vunpack.c.l.b16 %v4559
    %v4581 = vunpack.c.l.b16 %v4560
    %v4582 = vunpack.c.l.b16 %v4561
    %v4583 = vunpack.c.l.b16 %v4562
    %v4584 = vpack.c.b16 %v4577, %v4576
    %v4585 = vpack.c.b16 %v4579, %v4578
    %v4586 = vpack.c.b16 %v4581, %v4580
    %v4587 = vpack.c.b16 %v4583, %v4582
    %v4593 = vsel %vm125, %v4554, 0
    %4595 = vmatprep.subr.bf16.mxu0 0
    %4596 = vmatpush1.bf16.msra.mxu0 %v4584
    %4597 = vmatprep.subr.bf16.mxu0 0
    %4598 = vmatpush1.bf16.msra.mxu0 %v4585
    %4599 = vmatprep.subr.bf16.mxu0 0
    %4600 = vmatpush1.bf16.msra.mxu0 %v4586
    %4601 = vmatprep.subr.bf16.mxu0 0
    %4602 = vmatpush1.bf16.msra.mxu0 %v4587
    %4603 = vmatprep.subr.bf16.mxu0 0
    %4604 = vmatpush1.bf16.msra.mxu0 0
    %4605 = vmatprep.subr.bf16.mxu0 0
    %4606 = vmatpush1.bf16.msra.mxu0 0
    %4607 = vmatprep.subr.bf16.mxu0 0
    %4608 = vmatpush1.bf16.msra.mxu0 0
    %4609 = vmatprep.subr.bf16.mxu0 0
    %4610 = vmatpush1.bf16.msra.mxu0 0
    %4611 = vmatprep.subr.bf16.mxu0 0
    %4612 = vmatpush1.bf16.msra.mxu0 0
    %4613 = vmatprep.subr.bf16.mxu0 0
    %4614 = vmatpush1.bf16.msra.mxu0 0
    %4615 = vmatprep.subr.bf16.mxu0 0
    %4616 = vmatpush1.bf16.msra.mxu0 0
    %4617 = vmatprep.subr.bf16.mxu0 0
    %4618 = vmatpush1.bf16.msra.mxu0 0
    %4619 = vmatprep.subr.bf16.mxu0 0
    %4620 = vmatpush1.bf16.msra.mxu0 0
    %4621 = vmatprep.subr.bf16.mxu0 0
    %4622 = vmatpush1.bf16.msra.mxu0 0
    %4623 = vmatprep.subr.bf16.mxu0 0
    %4624 = vmatpush1.bf16.msra.mxu0 0
    %4625 = vmatprep.subr.bf16.mxu0 0
    %4626 = vmatpush1.bf16.msra.mxu0 0
    %4627 = vmatprep.mubr.bf16.mxu0 0
    %4628 = vmatmul.mubr.bf16.gmra.mrb[0].mxu0 %v4593
    %v4629 = vpop.f32.mrb[0].mxu0
    %v4630 = vadd.f32 %v4567, %v4629
    %v4631 = vpop.f32.mrb[0].mxu0
    %v4632 = vpop.f32.mrb[0].mxu0
    %v4633 = vadd.f32 %v4567, %v4632
    %v4634 = vpop.f32.mrb[0].mxu0
    %4635 = vdwg.mxu0
    %v4636 = vmax.f32 %v4630, 0.0
    %v4637 = vmax.f32 %v4633, 0.0
    %4638 = vst.msk [vmem:[#allocation2 + $0x3] sm:$0xff] %vm125, %v4636
    %4639 = vst.msk [vmem:[#allocation2 + $0xb] sm:$0x3f] %vm223, %v4637
    %v4640 = vld [vmem:[%s392] sm:$0x7f]
    %v4641 = vld [vmem:[%s4 + $0x1] sm:$0x1]
    %v4642 = vlaneseq
    %v4643 = vshrl.u32 %v4642, 7
    %v4644 = vsub.s32 0, %v4643
    %v4645 = vrot.slane %v4641, %v4644
    %v4646 = vadd.f32 %v4645, 0.0
    %v4647 = vld [vmem:[#allocation2] sm:$0xff]
    %v4648 = vld [vmem:[#allocation2 + $0x8] sm:$0x3f]
    %v4649 = vlaneseq
    %v4650 = vshrl.u32 %v4649, 7
    %v4651 = vsub.s32 0, %v4650
    %v4652 = vrot.slane %v4640, %v4651
    %v4653 = vmul.f32 %v4647, %v4652
    %v4654 = vmul.f32 %v4648, %v4652
    %v4655 = vadd.f32 %v4646, %v4653
    %v4656 = vadd.f32 %v4646, %v4654
    %v4657 = vld [vmem:[#allocation2 + $0x1] sm:$0xff]
    %v4658 = vld [vmem:[#allocation2 + $0x9] sm:$0x3f]
    %v4659 = vlaneseq
    %v4660 = vshrl.u32 %v4659, 7
    %v4661 = vsub.s32 1, %v4660
    %v4662 = vrot.slane %v4640, %v4661
    %v4663 = vmul.f32 %v4657, %v4662
    %v4664 = vmul.f32 %v4658, %v4662
    %v4665 = vadd.f32 %v4655, %v4663
    %v4666 = vadd.f32 %v4656, %v4664
    %v4667 = vld [vmem:[#allocation2 + $0x2] sm:$0xff]
    %v4668 = vld [vmem:[#allocation2 + $0xa] sm:$0x3f]
    %v4669 = vlaneseq
    %v4670 = vshrl.u32 %v4669, 7
    %v4671 = vsub.s32 2, %v4670
    %v4672 = vrot.slane %v4640, %v4671
    %v4673 = vmul.f32 %v4667, %v4672
    %v4674 = vmul.f32 %v4668, %v4672
    %v4675 = vadd.f32 %v4665, %v4673
    %v4676 = vadd.f32 %v4666, %v4674
    %v4677 = vld [vmem:[#allocation2 + $0x3] sm:$0xff]
    %v4678 = vld [vmem:[#allocation2 + $0xb] sm:$0x3f]
    %v4679 = vlaneseq
    %v4680 = vshrl.u32 %v4679, 7
    %v4681 = vsub.s32 3, %v4680
    %v4682 = vrot.slane %v4640, %v4681
    %v4683 = vmul.f32 %v4677, %v4682
    %v4684 = vmul.f32 %v4678, %v4682
    %v4685 = vadd.f32 %v4675, %v4683
    %v4686 = vadd.f32 %v4676, %v4684
    %v4687 = vld [vmem:[#allocation2 + $0x4] sm:$0xff]
    %v4688 = vld [vmem:[#allocation2 + $0xc] sm:$0x3f]
    %v4689 = vlaneseq
    %v4690 = vshrl.u32 %v4689, 7
    %v4691 = vsub.s32 4, %v4690
    %v4692 = vrot.slane %v4640, %v4691
    %v4693 = vmul.f32 %v4687, %v4692
    %v4694 = vmul.f32 %v4688, %v4692
    %v4695 = vadd.f32 %v4685, %v4693
    %v4696 = vadd.f32 %v4686, %v4694
    %v4697 = vld [vmem:[#allocation2 + $0x5] sm:$0xff]
    %v4698 = vld [vmem:[#allocation2 + $0xd] sm:$0x3f]
    %v4699 = vlaneseq
    %v4700 = vshrl.u32 %v4699, 7
    %v4701 = vsub.s32 5, %v4700
    %v4702 = vrot.slane %v4640, %v4701
    %v4703 = vmul.f32 %v4697, %v4702
    %v4704 = vmul.f32 %v4698, %v4702
    %v4705 = vadd.f32 %v4695, %v4703
    %v4706 = vadd.f32 %v4696, %v4704
    %v4707 = vld [vmem:[#allocation2 + $0x6] sm:$0xff]
    %v4708 = vld [vmem:[#allocation2 + $0xe] sm:$0x3f]
    %v4709 = vlaneseq
    %v4710 = vshrl.u32 %v4709, 7
    %v4711 = vsub.s32 6, %v4710
    %v4712 = vrot.slane %v4640, %v4711
    %v4713 = vmul.f32 %v4707, %v4712
    %v4714 = vmul.f32 %v4708, %v4712
    %v4715 = vadd.f32 %v4705, %v4713
    %v4716 = vadd.f32 %v4706, %v4714
    %v4717 = vmax.f32 %v4715, 0.0
    %v4718 = vmax.f32 %v4716, 0.0
    %v4719 = vadd.f32 %v4717, %v4636
    %v4720 = vadd.f32 %v4718, %v4637
    %v4721 = vpack.c.bf16 %v4720, %v4719
    %v4722 = vld [vmem:[%s475] sm:$0xf]
    %v4723 = vld [vmem:[%s475 + $0x4] sm:$0xf]
    %v4724 = vld [vmem:[%s475 + $0x8] sm:$0xf]
    %v4725 = vld [vmem:[%s475 + $0xc] sm:$0xf]
    %v4726 = vld [vmem:[%s475 + $0x10] sm:$0xf]
    %v4727 = vld [vmem:[%s475 + $0x14] sm:$0xf]
    %v4728 = vld [vmem:[%s475 + $0x18] sm:$0xf]
    %v4729 = vld [vmem:[%s475 + $0x1c] sm:$0xf]
    %v4730 = vld [vmem:[%s6 + $0x1] sm:$0x1]
    %v4731 = vlaneseq
    %v4732 = vshrl.u32 %v4731, 7
    %v4733 = vsub.s32 0, %v4732
    %v4734 = vrot.slane %v4730, %v4733
    %v4743 = vunpack.c.l.b16 %v4722
    %v4744 = vunpack.c.l.b16 %v4723
    %v4745 = vunpack.c.l.b16 %v4724
    %v4746 = vunpack.c.l.b16 %v4725
    %v4747 = vunpack.c.l.b16 %v4726
    %v4748 = vunpack.c.l.b16 %v4727
    %v4749 = vunpack.c.l.b16 %v4728
    %v4750 = vunpack.c.l.b16 %v4729
    %v4751 = vpack.c.b16 %v4744, %v4743
    %v4752 = vpack.c.b16 %v4746, %v4745
    %v4753 = vpack.c.b16 %v4748, %v4747
    %v4754 = vpack.c.b16 %v4750, %v4749
    %v4760 = vsel %vm125, %v4721, 0
    %4762 = vmatprep.subr.bf16.mxu0 0
    %4763 = vmatpush1.bf16.msra.mxu0 %v4751
    %4764 = vmatprep.subr.bf16.mxu0 0
    %4765 = vmatpush1.bf16.msra.mxu0 %v4752
    %4766 = vmatprep.subr.bf16.mxu0 0
    %4767 = vmatpush1.bf16.msra.mxu0 %v4753
    %4768 = vmatprep.subr.bf16.mxu0 0
    %4769 = vmatpush1.bf16.msra.mxu0 %v4754
    %4770 = vmatprep.subr.bf16.mxu0 0
    %4771 = vmatpush1.bf16.msra.mxu0 0
    %4772 = vmatprep.subr.bf16.mxu0 0
    %4773 = vmatpush1.bf16.msra.mxu0 0
    %4774 = vmatprep.subr.bf16.mxu0 0
    %4775 = vmatpush1.bf16.msra.mxu0 0
    %4776 = vmatprep.subr.bf16.mxu0 0
    %4777 = vmatpush1.bf16.msra.mxu0 0
    %4778 = vmatprep.subr.bf16.mxu0 0
    %4779 = vmatpush1.bf16.msra.mxu0 0
    %4780 = vmatprep.subr.bf16.mxu0 0
    %4781 = vmatpush1.bf16.msra.mxu0 0
    %4782 = vmatprep.subr.bf16.mxu0 0
    %4783 = vmatpush1.bf16.msra.mxu0 0
    %4784 = vmatprep.subr.bf16.mxu0 0
    %4785 = vmatpush1.bf16.msra.mxu0 0
    %4786 = vmatprep.subr.bf16.mxu0 0
    %4787 = vmatpush1.bf16.msra.mxu0 0
    %4788 = vmatprep.subr.bf16.mxu0 0
    %4789 = vmatpush1.bf16.msra.mxu0 0
    %4790 = vmatprep.subr.bf16.mxu0 0
    %4791 = vmatpush1.bf16.msra.mxu0 0
    %4792 = vmatprep.subr.bf16.mxu0 0
    %4793 = vmatpush1.bf16.msra.mxu0 0
    %4794 = vmatprep.mubr.bf16.mxu0 0
    %4795 = vmatmul.mubr.bf16.gmra.mrb[0].mxu0 %v4760
    %v4796 = vpop.f32.mrb[0].mxu0
    %v4797 = vadd.f32 %v4734, %v4796
    %v4798 = vpop.f32.mrb[0].mxu0
    %v4799 = vpop.f32.mrb[0].mxu0
    %v4800 = vadd.f32 %v4734, %v4799
    %v4801 = vpop.f32.mrb[0].mxu0
    %4802 = vdwg.mxu0
    %v4803 = vmax.f32 %v4797, 0.0
    %v4804 = vmax.f32 %v4800, 0.0
    %4805 = vst.msk [vmem:[#allocation2 + $0x3] sm:$0xff] %vm125, %v4803
    %4806 = vst.msk [vmem:[#allocation2 + $0xb] sm:$0x3f] %vm223, %v4804
    %v4807 = vld [vmem:[%s561] sm:$0x7f]
    %v4808 = vld [vmem:[%s4 + $0x2] sm:$0x1]
    %v4809 = vlaneseq
    %v4810 = vshrl.u32 %v4809, 7
    %v4811 = vsub.s32 0, %v4810
    %v4812 = vrot.slane %v4808, %v4811
    %v4813 = vadd.f32 %v4812, 0.0
    %v4814 = vld [vmem:[#allocation2] sm:$0xff]
    %v4815 = vld [vmem:[#allocation2 + $0x8] sm:$0x3f]
    %v4816 = vlaneseq
    %v4817 = vshrl.u32 %v4816, 7
    %v4818 = vsub.s32 0, %v4817
    %v4819 = vrot.slane %v4807, %v4818
    %v4820 = vmul.f32 %v4814, %v4819
    %v4821 = vmul.f32 %v4815, %v4819
    %v4822 = vadd.f32 %v4813, %v4820
    %v4823 = vadd.f32 %v4813, %v4821
    %v4824 = vld [vmem:[#allocation2 + $0x1] sm:$0xff]
    %v4825 = vld [vmem:[#allocation2 + $0x9] sm:$0x3f]
    %v4826 = vlaneseq
    %v4827 = vshrl.u32 %v4826, 7
    %v4828 = vsub.s32 1, %v4827
    %v4829 = vrot.slane %v4807, %v4828
    %v4830 = vmul.f32 %v4824, %v4829
    %v4831 = vmul.f32 %v4825, %v4829
    %v4832 = vadd.f32 %v4822, %v4830
    %v4833 = vadd.f32 %v4823, %v4831
    %v4834 = vld [vmem:[#allocation2 + $0x2] sm:$0xff]
    %v4835 = vld [vmem:[#allocation2 + $0xa] sm:$0x3f]
    %v4836 = vlaneseq
    %v4837 = vshrl.u32 %v4836, 7
    %v4838 = vsub.s32 2, %v4837
    %v4839 = vrot.slane %v4807, %v4838
    %v4840 = vmul.f32 %v4834, %v4839
    %v4841 = vmul.f32 %v4835, %v4839
    %v4842 = vadd.f32 %v4832, %v4840
    %v4843 = vadd.f32 %v4833, %v4841
    %v4844 = vld [vmem:[#allocation2 + $0x3] sm:$0xff]
    %v4845 = vld [vmem:[#allocation2 + $0xb] sm:$0x3f]
    %v4846 = vlaneseq
    %v4847 = vshrl.u32 %v4846, 7
    %v4848 = vsub.s32 3, %v4847
    %v4849 = vrot.slane %v4807, %v4848
    %v4850 = vmul.f32 %v4844, %v4849
    %v4851 = vmul.f32 %v4845, %v4849
    %v4852 = vadd.f32 %v4842, %v4850
    %v4853 = vadd.f32 %v4843, %v4851
    %v4854 = vld [vmem:[#allocation2 + $0x4] sm:$0xff]
    %v4855 = vld [vmem:[#allocation2 + $0xc] sm:$0x3f]
    %v4856 = vlaneseq
    %v4857 = vshrl.u32 %v4856, 7
    %v4858 = vsub.s32 4, %v4857
    %v4859 = vrot.slane %v4807, %v4858
    %v4860 = vmul.f32 %v4854, %v4859
    %v4861 = vmul.f32 %v4855, %v4859
    %v4862 = vadd.f32 %v4852, %v4860
    %v4863 = vadd.f32 %v4853, %v4861
    %v4864 = vld [vmem:[#allocation2 + $0x5] sm:$0xff]
    %v4865 = vld [vmem:[#allocation2 + $0xd] sm:$0x3f]
    %v4866 = vlaneseq
    %v4867 = vshrl.u32 %v4866, 7
    %v4868 = vsub.s32 5, %v4867
    %v4869 = vrot.slane %v4807, %v4868
    %v4870 = vmul.f32 %v4864, %v4869
    %v4871 = vmul.f32 %v4865, %v4869
    %v4872 = vadd.f32 %v4862, %v4870
    %v4873 = vadd.f32 %v4863, %v4871
    %v4874 = vld [vmem:[#allocation2 + $0x6] sm:$0xff]
    %v4875 = vld [vmem:[#allocation2 + $0xe] sm:$0x3f]
    %v4876 = vlaneseq
    %v4877 = vshrl.u32 %v4876, 7
    %v4878 = vsub.s32 6, %v4877
    %v4879 = vrot.slane %v4807, %v4878
    %v4880 = vmul.f32 %v4874, %v4879
    %v4881 = vmul.f32 %v4875, %v4879
    %v4882 = vadd.f32 %v4872, %v4880
    %v4883 = vadd.f32 %v4873, %v4881
    %v4884 = vmax.f32 %v4882, 0.0
    %v4885 = vmax.f32 %v4883, 0.0
    %v4886 = vadd.f32 %v4884, %v4803
    %v4887 = vadd.f32 %v4885, %v4804
    %v4888 = vpack.c.bf16 %v4887, %v4886
    %v4889 = vld [vmem:[%s644] sm:$0xf]
    %v4890 = vld [vmem:[%s644 + $0x4] sm:$0xf]
    %v4891 = vld [vmem:[%s644 + $0x8] sm:$0xf]
    %v4892 = vld [vmem:[%s644 + $0xc] sm:$0xf]
    %v4893 = vld [vmem:[%s644 + $0x10] sm:$0xf]
    %v4894 = vld [vmem:[%s644 + $0x14] sm:$0xf]
    %v4895 = vld [vmem:[%s644 + $0x18] sm:$0xf]
    %v4896 = vld [vmem:[%s644 + $0x1c] sm:$0xf]
    %v4897 = vld [vmem:[%s6 + $0x2] sm:$0x1]
    %v4898 = vlaneseq
    %v4899 = vshrl.u32 %v4898, 7
    %v4900 = vsub.s32 0, %v4899
    %v4901 = vrot.slane %v4897, %v4900
    %v4910 = vunpack.c.l.b16 %v4889
    %v4911 = vunpack.c.l.b16 %v4890
    %v4912 = vunpack.c.l.b16 %v4891
    %v4913 = vunpack.c.l.b16 %v4892
    %v4914 = vunpack.c.l.b16 %v4893
    %v4915 = vunpack.c.l.b16 %v4894
    %v4916 = vunpack.c.l.b16 %v4895
    %v4917 = vunpack.c.l.b16 %v4896
    %v4918 = vpack.c.b16 %v4911, %v4910
    %v4919 = vpack.c.b16 %v4913, %v4912
    %v4920 = vpack.c.b16 %v4915, %v4914
    %v4921 = vpack.c.b16 %v4917, %v4916
    %v4927 = vsel %vm125, %v4888, 0
    %4929 = vmatprep.subr.bf16.mxu0 0
    %4930 = vmatpush1.bf16.msra.mxu0 %v4918
    %4931 = vmatprep.subr.bf16.mxu0 0
    %4932 = vmatpush1.bf16.msra.mxu0 %v4919
    %4933 = vmatprep.subr.bf16.mxu0 0
    %4934 = vmatpush1.bf16.msra.mxu0 %v4920
    %4935 = vmatprep.subr.bf16.mxu0 0
    %4936 = vmatpush1.bf16.msra.mxu0 %v4921
    %4937 = vmatprep.subr.bf16.mxu0 0
    %4938 = vmatpush1.bf16.msra.mxu0 0
    %4939 = vmatprep.subr.bf16.mxu0 0
    %4940 = vmatpush1.bf16.msra.mxu0 0
    %4941 = vmatprep.subr.bf16.mxu0 0
    %4942 = vmatpush1.bf16.msra.mxu0 0
    %4943 = vmatprep.subr.bf16.mxu0 0
    %4944 = vmatpush1.bf16.msra.mxu0 0
    %4945 = vmatprep.subr.bf16.mxu0 0
    %4946 = vmatpush1.bf16.msra.mxu0 0
    %4947 = vmatprep.subr.bf16.mxu0 0
    %4948 = vmatpush1.bf16.msra.mxu0 0
    %4949 = vmatprep.subr.bf16.mxu0 0
    %4950 = vmatpush1.bf16.msra.mxu0 0
    %4951 = vmatprep.subr.bf16.mxu0 0
    %4952 = vmatpush1.bf16.msra.mxu0 0
    %4953 = vmatprep.subr.bf16.mxu0 0
    %4954 = vmatpush1.bf16.msra.mxu0 0
    %4955 = vmatprep.subr.bf16.mxu0 0
    %4956 = vmatpush1.bf16.msra.mxu0 0
    %4957 = vmatprep.subr.bf16.mxu0 0
    %4958 = vmatpush1.bf16.msra.mxu0 0
    %4959 = vmatprep.subr.bf16.mxu0 0
    %4960 = vmatpush1.bf16.msra.mxu0 0
    %4961 = vmatprep.mubr.bf16.mxu0 0
    %4962 = vmatmul.mubr.bf16.gmra.mrb[0].mxu0 %v4927
    %v4963 = vpop.f32.mrb[0].mxu0
    %v4964 = vadd.f32 %v4901, %v4963
    %v4965 = vpop.f32.mrb[0].mxu0
    %v4966 = vpop.f32.mrb[0].mxu0
    %v4967 = vadd.f32 %v4901, %v4966
    %v4968 = vpop.f32.mrb[0].mxu0
    %4969 = vdwg.mxu0
    %v4970 = vmax.f32 %v4964, 0.0
    %v4971 = vmax.f32 %v4967, 0.0
    %4972 = vst.msk [vmem:[#allocation2 + $0x3] sm:$0xff] %vm125, %v4970
    %4973 = vst.msk [vmem:[#allocation2 + $0xb] sm:$0x3f] %vm223, %v4971
    %v4974 = vld [vmem:[%s730] sm:$0x7f]
    %v4975 = vld [vmem:[%s4 + $0x3] sm:$0x1]
    %v4976 = vlaneseq
    %v4977 = vshrl.u32 %v4976, 7
    %v4978 = vsub.s32 0, %v4977
    %v4979 = vrot.slane %v4975, %v4978
    %v4980 = vadd.f32 %v4979, 0.0
    %v4981 = vld [vmem:[#allocation2] sm:$0xff]
    %v4982 = vld [vmem:[#allocation2 + $0x8] sm:$0x3f]
    %v4983 = vlaneseq
    %v4984 = vshrl.u32 %v4983, 7
    %v4985 = vsub.s32 0, %v4984
    %v4986 = vrot.slane %v4974, %v4985
    %v4987 = vmul.f32 %v4981, %v4986
    %v4988 = vmul.f32 %v4982, %v4986
    %v4989 = vadd.f32 %v4980, %v4987
    %v4990 = vadd.f32 %v4980, %v4988
    %v4991 = vld [vmem:[#allocation2 + $0x1] sm:$0xff]
    %v4992 = vld [vmem:[#allocation2 + $0x9] sm:$0x3f]
    %v4993 = vlaneseq
    %v4994 = vshrl.u32 %v4993, 7
    %v4995 = vsub.s32 1, %v4994
    %v4996 = vrot.slane %v4974, %v4995
    %v4997 = vmul.f32 %v4991, %v4996
    %v4998 = vmul.f32 %v4992, %v4996
    %v4999 = vadd.f32 %v4989, %v4997
    %v5000 = vadd.f32 %v4990, %v4998
    %v5001 = vld [vmem:[#allocation2 + $0x2] sm:$0xff]
    %v5002 = vld [vmem:[#allocation2 + $0xa] sm:$0x3f]
    %v5003 = vlaneseq
    %v5004 = vshrl.u32 %v5003, 7
    %v5005 = vsub.s32 2, %v5004
    %v5006 = vrot.slane %v4974, %v5005
    %v5007 = vmul.f32 %v5001, %v5006
    %v5008 = vmul.f32 %v5002, %v5006
    %v5009 = vadd.f32 %v4999, %v5007
    %v5010 = vadd.f32 %v5000, %v5008
    %v5011 = vld [vmem:[#allocation2 + $0x3] sm:$0xff]
    %v5012 = vld [vmem:[#allocation2 + $0xb] sm:$0x3f]
    %v5013 = vlaneseq
    %v5014 = vshrl.u32 %v5013, 7
    %v5015 = vsub.s32 3, %v5014
    %v5016 = vrot.slane %v4974, %v5015
    %v5017 = vmul.f32 %v5011, %v5016
    %v5018 = vmul.f32 %v5012, %v5016
    %v5019 = vadd.f32 %v5009, %v5017
    %v5020 = vadd.f32 %v5010, %v5018
    %v5021 = vld [vmem:[#allocation2 + $0x4] sm:$0xff]
    %v5022 = vld [vmem:[#allocation2 + $0xc] sm:$0x3f]
    %v5023 = vlaneseq
    %v5024 = vshrl.u32 %v5023, 7
    %v5025 = vsub.s32 4, %v5024
    %v5026 = vrot.slane %v4974, %v5025
    %v5027 = vmul.f32 %v5021, %v5026
    %v5028 = vmul.f32 %v5022, %v5026
    %v5029 = vadd.f32 %v5019, %v5027
    %v5030 = vadd.f32 %v5020, %v5028
    %v5031 = vld [vmem:[#allocation2 + $0x5] sm:$0xff]
    %v5032 = vld [vmem:[#allocation2 + $0xd] sm:$0x3f]
    %v5033 = vlaneseq
    %v5034 = vshrl.u32 %v5033, 7
    %v5035 = vsub.s32 5, %v5034
    %v5036 = vrot.slane %v4974, %v5035
    %v5037 = vmul.f32 %v5031, %v5036
    %v5038 = vmul.f32 %v5032, %v5036
    %v5039 = vadd.f32 %v5029, %v5037
    %v5040 = vadd.f32 %v5030, %v5038
    %v5041 = vld [vmem:[#allocation2 + $0x6] sm:$0xff]
    %v5042 = vld [vmem:[#allocation2 + $0xe] sm:$0x3f]
    %v5043 = vlaneseq
    %v5044 = vshrl.u32 %v5043, 7
    %v5045 = vsub.s32 6, %v5044
    %v5046 = vrot.slane %v4974, %v5045
    %v5047 = vmul.f32 %v5041, %v5046
    %v5048 = vmul.f32 %v5042, %v5046
    %v5049 = vadd.f32 %v5039, %v5047
    %v5050 = vadd.f32 %v5040, %v5048
    %v5051 = vmax.f32 %v5049, 0.0
    %v5052 = vmax.f32 %v5050, 0.0
    %v5053 = vadd.f32 %v5051, %v4970
    %v5054 = vadd.f32 %v5052, %v4971
    %v5055 = vpack.c.bf16 %v5054, %v5053
    %v5056 = vld [vmem:[%s813] sm:$0xf]
    %v5057 = vld [vmem:[%s813 + $0x4] sm:$0xf]
    %v5058 = vld [vmem:[%s813 + $0x8] sm:$0xf]
    %v5059 = vld [vmem:[%s813 + $0xc] sm:$0xf]
    %v5060 = vld [vmem:[%s813 + $0x10] sm:$0xf]
    %v5061 = vld [vmem:[%s813 + $0x14] sm:$0xf]
    %v5062 = vld [vmem:[%s813 + $0x18] sm:$0xf]
    %v5063 = vld [vmem:[%s813 + $0x1c] sm:$0xf]
    %v5064 = vld [vmem:[%s6 + $0x3] sm:$0x1]
    %v5065 = vlaneseq
    %v5066 = vshrl.u32 %v5065, 7
    %v5067 = vsub.s32 0, %v5066
    %v5068 = vrot.slane %v5064, %v5067
    %v5077 = vunpack.c.l.b16 %v5056
    %v5078 = vunpack.c.l.b16 %v5057
    %v5079 = vunpack.c.l.b16 %v5058
    %v5080 = vunpack.c.l.b16 %v5059
    %v5081 = vunpack.c.l.b16 %v5060
    %v5082 = vunpack.c.l.b16 %v5061
    %v5083 = vunpack.c.l.b16 %v5062
    %v5084 = vunpack.c.l.b16 %v5063
    %v5085 = vpack.c.b16 %v5078, %v5077
    %v5086 = vpack.c.b16 %v5080, %v5079
    %v5087 = vpack.c.b16 %v5082, %v5081
    %v5088 = vpack.c.b16 %v5084, %v5083
    %v5094 = vsel %vm125, %v5055, 0
    %5096 = vmatprep.subr.bf16.mxu0 0
    %5097 = vmatpush1.bf16.msra.mxu0 %v5085
    %5098 = vmatprep.subr.bf16.mxu0 0
    %5099 = vmatpush1.bf16.msra.mxu0 %v5086
    %5100 = vmatprep.subr.bf16.mxu0 0
    %5101 = vmatpush1.bf16.msra.mxu0 %v5087
    %5102 = vmatprep.subr.bf16.mxu0 0
    %5103 = vmatpush1.bf16.msra.mxu0 %v5088
    %5104 = vmatprep.subr.bf16.mxu0 0
    %5105 = vmatpush1.bf16.msra.mxu0 0
    %5106 = vmatprep.subr.bf16.mxu0 0
    %5107 = vmatpush1.bf16.msra.mxu0 0
    %5108 = vmatprep.subr.bf16.mxu0 0
    %5109 = vmatpush1.bf16.msra.mxu0 0
    %5110 = vmatprep.subr.bf16.mxu0 0
    %5111 = vmatpush1.bf16.msra.mxu0 0
    %5112 = vmatprep.subr.bf16.mxu0 0
    %5113 = vmatpush1.bf16.msra.mxu0 0
    %5114 = vmatprep.subr.bf16.mxu0 0
    %5115 = vmatpush1.bf16.msra.mxu0 0
    %5116 = vmatprep.subr.bf16.mxu0 0
    %5117 = vmatpush1.bf16.msra.mxu0 0
    %5118 = vmatprep.subr.bf16.mxu0 0
    %5119 = vmatpush1.bf16.msra.mxu0 0
    %5120 = vmatprep.subr.bf16.mxu0 0
    %5121 = vmatpush1.bf16.msra.mxu0 0
    %5122 = vmatprep.subr.bf16.mxu0 0
    %5123 = vmatpush1.bf16.msra.mxu0 0
    %5124 = vmatprep.subr.bf16.mxu0 0
    %5125 = vmatpush1.bf16.msra.mxu0 0
    %5126 = vmatprep.subr.bf16.mxu0 0
    %5127 = vmatpush1.bf16.msra.mxu0 0
    %5128 = vmatprep.mubr.bf16.mxu0 0
    %5129 = vmatmul.mubr.bf16.gmra.mrb[0].mxu0 %v5094
    %v5130 = vpop.f32.mrb[0].mxu0
    %v5131 = vadd.f32 %v5068, %v5130
    %v5132 = vpop.f32.mrb[0].mxu0
    %v5133 = vpop.f32.mrb[0].mxu0
    %v5134 = vadd.f32 %v5068, %v5133
    %v5135 = vpop.f32.mrb[0].mxu0
    %5136 = vdwg.mxu0
    %v5137 = vmax.f32 %v5131, 0.0
    %v5138 = vmax.f32 %v5134, 0.0
    %5139 = vst.msk [vmem:[#allocation2 + $0x3] sm:$0xff] %vm125, %v5137
    %5140 = vst.msk [vmem:[#allocation2 + $0xb] sm:$0x3f] %vm223, %v5138
    %v5141 = vld [vmem:[%s899] sm:$0x7f]
    %v5142 = vld [vmem:[%s4 + $0x4] sm:$0x1]
    %v5143 = vlaneseq
    %v5144 = vshrl.u32 %v5143, 7
    %v5145 = vsub.s32 0, %v5144
    %v5146 = vrot.slane %v5142, %v5145
    %v5147 = vadd.f32 %v5146, 0.0
    %v5148 = vld [vmem:[#allocation2] sm:$0xff]
    %v5149 = vld [vmem:[#allocation2 + $0x8] sm:$0x3f]
    %v5150 = vlaneseq
    %v5151 = vshrl.u32 %v5150, 7
    %v5152 = vsub.s32 0, %v5151
    %v5153 = vrot.slane %v5141, %v5152
    %v5154 = vmul.f32 %v5148, %v5153
    %v5155 = vmul.f32 %v5149, %v5153
    %v5156 = vadd.f32 %v5147, %v5154
    %v5157 = vadd.f32 %v5147, %v5155
    %v5158 = vld [vmem:[#allocation2 + $0x1] sm:$0xff]
    %v5159 = vld [vmem:[#allocation2 + $0x9] sm:$0x3f]
    %v5160 = vlaneseq
    %v5161 = vshrl.u32 %v5160, 7
    %v5162 = vsub.s32 1, %v5161
    %v5163 = vrot.slane %v5141, %v5162
    %v5164 = vmul.f32 %v5158, %v5163
    %v5165 = vmul.f32 %v5159, %v5163
    %v5166 = vadd.f32 %v5156, %v5164
    %v5167 = vadd.f32 %v5157, %v5165
    %v5168 = vld [vmem:[#allocation2 + $0x2] sm:$0xff]
    %v5169 = vld [vmem:[#allocation2 + $0xa] sm:$0x3f]
    %v5170 = vlaneseq
    %v5171 = vshrl.u32 %v5170, 7
    %v5172 = vsub.s32 2, %v5171
    %v5173 = vrot.slane %v5141, %v5172
    %v5174 = vmul.f32 %v5168, %v5173
    %v5175 = vmul.f32 %v5169, %v5173
    %v5176 = vadd.f32 %v5166, %v5174
    %v5177 = vadd.f32 %v5167, %v5175
    %v5178 = vld [vmem:[#allocation2 + $0x3] sm:$0xff]
    %v5179 = vld [vmem:[#allocation2 + $0xb] sm:$0x3f]
    %v5180 = vlaneseq
    %v5181 = vshrl.u32 %v5180, 7
    %v5182 = vsub.s32 3, %v5181
    %v5183 = vrot.slane %v5141, %v5182
    %v5184 = vmul.f32 %v5178, %v5183
    %v5185 = vmul.f32 %v5179, %v5183
    %v5186 = vadd.f32 %v5176, %v5184
    %v5187 = vadd.f32 %v5177, %v5185
    %v5188 = vld [vmem:[#allocation2 + $0x4] sm:$0xff]
    %v5189 = vld [vmem:[#allocation2 + $0xc] sm:$0x3f]
    %v5190 = vlaneseq
    %v5191 = vshrl.u32 %v5190, 7
    %v5192 = vsub.s32 4, %v5191
    %v5193 = vrot.slane %v5141, %v5192
    %v5194 = vmul.f32 %v5188, %v5193
    %v5195 = vmul.f32 %v5189, %v5193
    %v5196 = vadd.f32 %v5186, %v5194
    %v5197 = vadd.f32 %v5187, %v5195
    %v5198 = vld [vmem:[#allocation2 + $0x5] sm:$0xff]
    %v5199 = vld [vmem:[#allocation2 + $0xd] sm:$0x3f]
    %v5200 = vlaneseq
    %v5201 = vshrl.u32 %v5200, 7
    %v5202 = vsub.s32 5, %v5201
    %v5203 = vrot.slane %v5141, %v5202
    %v5204 = vmul.f32 %v5198, %v5203
    %v5205 = vmul.f32 %v5199, %v5203
    %v5206 = vadd.f32 %v5196, %v5204
    %v5207 = vadd.f32 %v5197, %v5205
    %v5208 = vld [vmem:[#allocation2 + $0x6] sm:$0xff]
    %v5209 = vld [vmem:[#allocation2 + $0xe] sm:$0x3f]
    %v5210 = vlaneseq
    %v5211 = vshrl.u32 %v5210, 7
    %v5212 = vsub.s32 6, %v5211
    %v5213 = vrot.slane %v5141, %v5212
    %v5214 = vmul.f32 %v5208, %v5213
    %v5215 = vmul.f32 %v5209, %v5213
    %v5216 = vadd.f32 %v5206, %v5214
    %v5217 = vadd.f32 %v5207, %v5215
    %v5218 = vmax.f32 %v5216, 0.0
    %v5219 = vmax.f32 %v5217, 0.0
    %v5220 = vadd.f32 %v5218, %v5137
    %v5221 = vadd.f32 %v5219, %v5138
    %v5222 = vpack.c.bf16 %v5221, %v5220
    %v5223 = vld [vmem:[%s982] sm:$0xf]
    %v5224 = vld [vmem:[%s982 + $0x4] sm:$0xf]
    %v5225 = vld [vmem:[%s982 + $0x8] sm:$0xf]
    %v5226 = vld [vmem:[%s982 + $0xc] sm:$0xf]
    %v5227 = vld [vmem:[%s982 + $0x10] sm:$0xf]
    %v5228 = vld [vmem:[%s982 + $0x14] sm:$0xf]
    %v5229 = vld [vmem:[%s982 + $0x18] sm:$0xf]
    %v5230 = vld [vmem:[%s982 + $0x1c] sm:$0xf]
    %v5231 = vld [vmem:[%s6 + $0x4] sm:$0x1]
    %v5232 = vlaneseq
    %v5233 = vshrl.u32 %v5232, 7
    %v5234 = vsub.s32 0, %v5233
    %v5235 = vrot.slane %v5231, %v5234
    %v5244 = vunpack.c.l.b16 %v5223
    %v5245 = vunpack.c.l.b16 %v5224
    %v5246 = vunpack.c.l.b16 %v5225
    %v5247 = vunpack.c.l.b16 %v5226
    %v5248 = vunpack.c.l.b16 %v5227
    %v5249 = vunpack.c.l.b16 %v5228
    %v5250 = vunpack.c.l.b16 %v5229
    %v5251 = vunpack.c.l.b16 %v5230
    %v5252 = vpack.c.b16 %v5245, %v5244
    %v5253 = vpack.c.b16 %v5247, %v5246
    %v5254 = vpack.c.b16 %v5249, %v5248
    %v5255 = vpack.c.b16 %v5251, %v5250
    %v5261 = vsel %vm125, %v5222, 0
    %5263 = vmatprep.subr.bf16.mxu0 0
    %5264 = vmatpush1.bf16.msra.mxu0 %v5252
    %5265 = vmatprep.subr.bf16.mxu0 0
    %5266 = vmatpush1.bf16.msra.mxu0 %v5253
    %5267 = vmatprep.subr.bf16.mxu0 0
    %5268 = vmatpush1.bf16.msra.mxu0 %v5254
    %5269 = vmatprep.subr.bf16.mxu0 0
    %5270 = vmatpush1.bf16.msra.mxu0 %v5255
    %5271 = vmatprep.subr.bf16.mxu0 0
    %5272 = vmatpush1.bf16.msra.mxu0 0
    %5273 = vmatprep.subr.bf16.mxu0 0
    %5274 = vmatpush1.bf16.msra.mxu0 0
    %5275 = vmatprep.subr.bf16.mxu0 0
    %5276 = vmatpush1.bf16.msra.mxu0 0
    %5277 = vmatprep.subr.bf16.mxu0 0
    %5278 = vmatpush1.bf16.msra.mxu0 0
    %5279 = vmatprep.subr.bf16.mxu0 0
    %5280 = vmatpush1.bf16.msra.mxu0 0
    %5281 = vmatprep.subr.bf16.mxu0 0
    %5282 = vmatpush1.bf16.msra.mxu0 0
    %5283 = vmatprep.subr.bf16.mxu0 0
    %5284 = vmatpush1.bf16.msra.mxu0 0
    %5285 = vmatprep.subr.bf16.mxu0 0
    %5286 = vmatpush1.bf16.msra.mxu0 0
    %5287 = vmatprep.subr.bf16.mxu0 0
    %5288 = vmatpush1.bf16.msra.mxu0 0
    %5289 = vmatprep.subr.bf16.mxu0 0
    %5290 = vmatpush1.bf16.msra.mxu0 0
    %5291 = vmatprep.subr.bf16.mxu0 0
    %5292 = vmatpush1.bf16.msra.mxu0 0
    %5293 = vmatprep.subr.bf16.mxu0 0
    %5294 = vmatpush1.bf16.msra.mxu0 0
    %5295 = vmatprep.mubr.bf16.mxu0 0
    %5296 = vmatmul.mubr.bf16.gmra.mrb[0].mxu0 %v5261
    %v5297 = vpop.f32.mrb[0].mxu0
    %v5298 = vadd.f32 %v5235, %v5297
    %v5299 = vpop.f32.mrb[0].mxu0
    %v5300 = vpop.f32.mrb[0].mxu0
    %v5301 = vadd.f32 %v5235, %v5300
    %v5302 = vpop.f32.mrb[0].mxu0
    %5303 = vdwg.mxu0
    %v5304 = vmax.f32 %v5298, 0.0
    %v5305 = vmax.f32 %v5301, 0.0
    %v5306 = vld [vmem:[%s7] sm:$0x7f]
    %v5308 = vsel %vm1067, %v5306, 0
    %v5311 = vsel %vm165, %v5305, 0
    %5313 = vmatprep.subr.mxu0 0.0
    %5314 = vmatpush1.msra.mxu0 %v5304
    %5315 = vmatprep.subr.mxu0 0.0
    %5316 = vmatpush1.msra.mxu0 %v5311
    %5317 = vmatprep.subr.mxu0 0.0
    %5318 = vmatpush1.msra.mxu0 0.0
    %5319 = vmatprep.subr.mxu0 0.0
    %5320 = vmatpush1.msra.mxu0 0.0
    %5321 = vmatprep.subr.mxu0 0.0
    %5322 = vmatpush1.msra.mxu0 0.0
    %5323 = vmatprep.subr.mxu0 0.0
    %5324 = vmatpush1.msra.mxu0 0.0
    %5325 = vmatprep.subr.mxu0 0.0
    %5326 = vmatpush1.msra.mxu0 0.0
    %5327 = vmatprep.subr.mxu0 0.0
    %5328 = vmatpush1.msra.mxu0 0.0
    %5329 = vmatprep.subr.mxu0 0.0
    %5330 = vmatpush1.msra.mxu0 0.0
    %5331 = vmatprep.subr.mxu0 0.0
    %5332 = vmatpush1.msra.mxu0 0.0
    %5333 = vmatprep.subr.mxu0 0.0
    %5334 = vmatpush1.msra.mxu0 0.0
    %5335 = vmatprep.subr.mxu0 0.0
    %5336 = vmatpush1.msra.mxu0 0.0
    %5337 = vmatprep.subr.mxu0 0.0
    %5338 = vmatpush1.msra.mxu0 0.0
    %5339 = vmatprep.subr.mxu0 0.0
    %5340 = vmatpush1.msra.mxu0 0.0
    %5341 = vmatprep.subr.mxu0 0.0
    %5342 = vmatpush1.msra.mxu0 0.0
    %5343 = vmatprep.subr.mxu0 0.0
    %5344 = vmatpush1.msra.mxu0 0.0
    %5345 = vmatprep.subr.mxu0 0.0
    %5346 = vmatpush1.msra.mxu0 0.0
    %5347 = vmatprep.subr.mxu0 0.0
    %5348 = vmatpush1.msra.mxu0 0.0
    %5349 = vmatprep.subr.mxu0 0.0
    %5350 = vmatpush1.msra.mxu0 0.0
    %5351 = vmatprep.subr.mxu0 0.0
    %5352 = vmatpush1.msra.mxu0 0.0
    %5353 = vmatprep.subr.mxu0 0.0
    %5354 = vmatpush1.msra.mxu0 0.0
    %5355 = vmatprep.subr.mxu0 0.0
    %5356 = vmatpush1.msra.mxu0 0.0
    %5357 = vmatprep.subr.mxu0 0.0
    %5358 = vmatpush1.msra.mxu0 0.0
    %5359 = vmatprep.subr.mxu0 0.0
    %5360 = vmatpush1.msra.mxu0 0.0
    %5361 = vmatprep.subr.mxu0 0.0
    %5362 = vmatpush1.msra.mxu0 0.0
    %5363 = vmatprep.subr.mxu0 0.0
    %5364 = vmatpush1.msra.mxu0 0.0
    %5365 = vmatprep.subr.mxu0 0.0
    %5366 = vmatpush1.msra.mxu0 0.0
    %5367 = vmatprep.subr.mxu0 0.0
    %5368 = vmatpush1.msra.mxu0 0.0
    %5369 = vmatprep.subr.mxu0 0.0
    %5370 = vmatpush1.msra.mxu0 0.0
    %5371 = vmatprep.subr.mxu0 0.0
    %5372 = vmatpush1.msra.mxu0 0.0
    %5373 = vmatprep.subr.mxu0 0.0
    %5374 = vmatpush1.msra.mxu0 0.0
    %5375 = vmatprep.subr.mxu0 0.0
    %5376 = vmatpush1.msra.mxu0 0.0
    %5377 = vmatprep.mubr.f32.mxu0 0.0
    %5378 = vmatmul.mubr.f32.gmra.mrb[0].mxu0 %v5308
    %v5379 = vpop.f32.mrb[0].mxu0
    %v5380 = vadd.f32 0.0, %v5379
    %v5381 = vpop.f32.mrb[0].mxu0
    %5382 = vdwg.mxu0
    %v5383 = vpack.c.bf16 %v5380, %v5380
    %v5384 = vld [vmem:[#allocation11] sm:$0xff]
    %v5385 = vld [vmem:[#allocation11 + $0x8] sm:$0xff]
    %v5386 = vld [vmem:[#allocation11 + $0x10] sm:$0xff]
    %v5387 = vld [vmem:[#allocation11 + $0x18] sm:$0xff]
    %v5388 = vld [vmem:[#allocation11 + $0x20] sm:$0xff]
    %v5389 = vld [vmem:[#allocation11 + $0x28] sm:$0xff]
    %v5390 = vld [vmem:[#allocation11 + $0x30] sm:$0xff]
    %v5391 = vld [vmem:[#allocation11 + $0x38] sm:$0xff]
    %v5392 = vld [vmem:[#allocation11 + $0x40] sm:$0xff]
    %v5393 = vld [vmem:[#allocation11 + $0x48] sm:$0xff]
    %v5394 = vld [vmem:[#allocation11 + $0x50] sm:$0xff]
    %v5395 = vld [vmem:[#allocation11 + $0x58] sm:$0xff]
    %v5396 = vld [vmem:[#allocation11 + $0x60] sm:$0xff]
    %v5397 = vld [vmem:[#allocation11 + $0x68] sm:$0xff]
    %v5398 = vld [vmem:[#allocation11 + $0x70] sm:$0xff]
    %v5399 = vld [vmem:[#allocation11 + $0x78] sm:$0xff]
    %v5400 = vld [vmem:[#allocation11 + $0x80] sm:$0xff]
    %v5401 = vld [vmem:[#allocation11 + $0x88] sm:$0xff]
    %v5402 = vld [vmem:[#allocation11 + $0x90] sm:$0xff]
    %v5403 = vld [vmem:[#allocation11 + $0x98] sm:$0xff]
    %v5404 = vld [vmem:[#allocation11 + $0xa0] sm:$0xff]
    %v5405 = vld [vmem:[#allocation11 + $0xa8] sm:$0xff]
    %v5406 = vld [vmem:[#allocation11 + $0xb0] sm:$0xff]
    %v5407 = vld [vmem:[#allocation11 + $0xb8] sm:$0xff]
    %v5408 = vld [vmem:[#allocation11 + $0xc0] sm:$0xff]
    %v5409 = vld [vmem:[#allocation11 + $0xc8] sm:$0xff]
    %v5410 = vld [vmem:[#allocation11 + $0xd0] sm:$0xff]
    %v5411 = vld [vmem:[#allocation11 + $0xd8] sm:$0xff]
    %v5412 = vld [vmem:[#allocation11 + $0xe0] sm:$0xff]
    %v5413 = vld [vmem:[#allocation11 + $0xe8] sm:$0xff]
    %v5414 = vld [vmem:[#allocation11 + $0xf0] sm:$0xff]
    %v5415 = vld [vmem:[#allocation11 + $0xf8] sm:$0xff]
    %v5416 = vld [vmem:[%s1177] sm:$0xff]
    %v5417 = vld [vmem:[%s1177 + $0x8] sm:$0xff]
    %v5418 = vld [vmem:[%s1177 + $0x10] sm:$0xff]
    %v5419 = vld [vmem:[%s1177 + $0x18] sm:$0xff]
    %v5420 = vld [vmem:[%s1177 + $0x20] sm:$0xff]
    %v5421 = vld [vmem:[%s1177 + $0x28] sm:$0xff]
    %v5422 = vld [vmem:[%s1177 + $0x30] sm:$0xff]
    %v5423 = vld [vmem:[%s1177 + $0x38] sm:$0xff]
    %v5424 = vld [vmem:[%s1177 + $0x40] sm:$0xff]
    %v5425 = vld [vmem:[%s1177 + $0x48] sm:$0xff]
    %v5426 = vld [vmem:[%s1177 + $0x50] sm:$0xff]
    %v5427 = vld [vmem:[%s1177 + $0x58] sm:$0xff]
    %v5428 = vld [vmem:[%s1177 + $0x60] sm:$0xff]
    %v5429 = vld [vmem:[%s1177 + $0x68] sm:$0xff]
    %v5430 = vld [vmem:[%s1177 + $0x70] sm:$0xff]
    %v5431 = vld [vmem:[%s1177 + $0x78] sm:$0xff]
    %v5432 = vld [vmem:[%s1177 + $0x80] sm:$0xff]
    %v5433 = vld [vmem:[%s1177 + $0x88] sm:$0xff]
    %v5434 = vld [vmem:[%s1177 + $0x90] sm:$0xff]
    %v5435 = vld [vmem:[%s1177 + $0x98] sm:$0xff]
    %v5436 = vld [vmem:[%s1177 + $0xa0] sm:$0xff]
    %v5437 = vld [vmem:[%s1177 + $0xa8] sm:$0xff]
    %v5438 = vld [vmem:[%s1177 + $0xb0] sm:$0xff]
    %v5439 = vld [vmem:[%s1177 + $0xb8] sm:$0xff]
    %v5440 = vld [vmem:[%s1177 + $0xc0] sm:$0xff]
    %v5441 = vld [vmem:[%s1177 + $0xc8] sm:$0xff]
    %v5442 = vld [vmem:[%s1177 + $0xd0] sm:$0xff]
    %v5443 = vld [vmem:[%s1177 + $0xd8] sm:$0xff]
    %v5444 = vld [vmem:[%s1177 + $0xe0] sm:$0xff]
    %v5445 = vld [vmem:[%s1177 + $0xe8] sm:$0xff]
    %v5446 = vld [vmem:[%s1177 + $0xf0] sm:$0xff]
    %v5447 = vld [vmem:[%s1177 + $0xf8] sm:$0xff]
    %v5449 = vshrl.u32 %v5383, 16
    %v5483 = vunpack.c.l.b16 %v5416
    %v5484 = vunpack.c.h.b16 %v5416
    %v5485 = vunpack.c.l.b16 %v5417
    %v5486 = vunpack.c.h.b16 %v5417
    %v5487 = vunpack.c.l.b16 %v5418
    %v5488 = vunpack.c.h.b16 %v5418
    %v5489 = vunpack.c.l.b16 %v5419
    %v5490 = vunpack.c.h.b16 %v5419
    %v5491 = vunpack.c.l.b16 %v5420
    %v5492 = vunpack.c.h.b16 %v5420
    %v5493 = vunpack.c.l.b16 %v5421
    %v5494 = vunpack.c.h.b16 %v5421
    %v5495 = vunpack.c.l.b16 %v5422
    %v5496 = vunpack.c.h.b16 %v5422
    %v5497 = vunpack.c.l.b16 %v5423
    %v5498 = vunpack.c.h.b16 %v5423
    %v5499 = vunpack.c.l.b16 %v5424
    %v5500 = vunpack.c.h.b16 %v5424
    %v5501 = vunpack.c.l.b16 %v5425
    %v5502 = vunpack.c.h.b16 %v5425
    %v5503 = vunpack.c.l.b16 %v5426
    %v5504 = vunpack.c.h.b16 %v5426
    %v5505 = vunpack.c.l.b16 %v5427
    %v5506 = vunpack.c.h.b16 %v5427
    %v5507 = vunpack.c.l.b16 %v5428
    %v5508 = vunpack.c.h.b16 %v5428
    %v5509 = vunpack.c.l.b16 %v5429
    %v5510 = vunpack.c.h.b16 %v5429
    %v5511 = vunpack.c.l.b16 %v5430
    %v5512 = vunpack.c.h.b16 %v5430
    %v5513 = vunpack.c.l.b16 %v5431
    %v5514 = vunpack.c.h.b16 %v5431
    %v5515 = vunpack.c.l.b16 %v5432
    %v5516 = vunpack.c.h.b16 %v5432
    %v5517 = vunpack.c.l.b16 %v5433
    %v5518 = vunpack.c.h.b16 %v5433
    %v5519 = vunpack.c.l.b16 %v5434
    %v5520 = vunpack.c.h.b16 %v5434
    %v5521 = vunpack.c.l.b16 %v5435
    %v5522 = vunpack.c.h.b16 %v5435
    %v5523 = vunpack.c.l.b16 %v5436
    %v5524 = vunpack.c.h.b16 %v5436
    %v5525 = vunpack.c.l.b16 %v5437
    %v5526 = vunpack.c.h.b16 %v5437
    %v5527 = vunpack.c.l.b16 %v5438
    %v5528 = vunpack.c.h.b16 %v5438
    %v5529 = vunpack.c.l.b16 %v5439
    %v5530 = vunpack.c.h.b16 %v5439
    %v5531 = vunpack.c.l.b16 %v5440
    %v5532 = vunpack.c.h.b16 %v5440
    %v5533 = vunpack.c.l.b16 %v5441
    %v5534 = vunpack.c.h.b16 %v5441
    %v5535 = vunpack.c.l.b16 %v5442
    %v5536 = vunpack.c.h.b16 %v5442
    %v5537 = vunpack.c.l.b16 %v5443
    %v5538 = vunpack.c.h.b16 %v5443
    %v5539 = vunpack.c.l.b16 %v5444
    %v5540 = vunpack.c.h.b16 %v5444
    %v5541 = vunpack.c.l.b16 %v5445
    %v5542 = vunpack.c.h.b16 %v5445
    %v5543 = vunpack.c.l.b16 %v5446
    %v5544 = vunpack.c.h.b16 %v5446
    %v5545 = vunpack.c.l.b16 %v5447
    %v5546 = vunpack.c.h.b16 %v5447
    %v5547 = vpack.c.b16 %v5491, %v5483
    %v5548 = vpack.c.b16 %v5492, %v5484
    %v5549 = vpack.c.b16 %v5493, %v5485
    %v5550 = vpack.c.b16 %v5494, %v5486
    %v5551 = vpack.c.b16 %v5495, %v5487
    %v5552 = vpack.c.b16 %v5496, %v5488
    %v5553 = vpack.c.b16 %v5497, %v5489
    %v5554 = vpack.c.b16 %v5498, %v5490
    %v5555 = vpack.c.b16 %v5507, %v5499
    %v5556 = vpack.c.b16 %v5508, %v5500
    %v5557 = vpack.c.b16 %v5509, %v5501
    %v5558 = vpack.c.b16 %v5510, %v5502
    %v5559 = vpack.c.b16 %v5511, %v5503
    %v5560 = vpack.c.b16 %v5512, %v5504
    %v5561 = vpack.c.b16 %v5513, %v5505
    %v5562 = vpack.c.b16 %v5514, %v5506
    %v5563 = vpack.c.b16 %v5523, %v5515
    %v5564 = vpack.c.b16 %v5524, %v5516
    %v5565 = vpack.c.b16 %v5525, %v5517
    %v5566 = vpack.c.b16 %v5526, %v5518
    %v5567 = vpack.c.b16 %v5527, %v5519
    %v5568 = vpack.c.b16 %v5528, %v5520
    %v5569 = vpack.c.b16 %v5529, %v5521
    %v5570 = vpack.c.b16 %v5530, %v5522
    %v5571 = vpack.c.b16 %v5539, %v5531
    %v5572 = vpack.c.b16 %v5540, %v5532
    %v5573 = vpack.c.b16 %v5541, %v5533
    %v5574 = vpack.c.b16 %v5542, %v5534
    %v5575 = vpack.c.b16 %v5543, %v5535
    %v5576 = vpack.c.b16 %v5544, %v5536
    %v5577 = vpack.c.b16 %v5545, %v5537
    %v5578 = vpack.c.b16 %v5546, %v5538
    %v5612 = vsel %vm125, %v5449, 0
    %5614 = vmatprep.subr.bf16.mxu0 %v5548
    %5615 = vmatpush1.bf16.msra.mxu0 %v5547
    %5616 = vmatprep.subr.bf16.mxu0 %v5556
    %5617 = vmatpush1.bf16.msra.mxu0 %v5555
    %5618 = vmatprep.subr.bf16.mxu0 %v5564
    %5619 = vmatpush1.bf16.msra.mxu0 %v5563
    %5620 = vmatprep.subr.bf16.mxu0 %v5572
    %5621 = vmatpush1.bf16.msra.mxu0 %v5571
    %5622 = vmatprep.subr.bf16.mxu0 0
    %5623 = vmatpush1.bf16.msra.mxu0 0
    %5624 = vmatprep.subr.bf16.mxu0 0
    %5625 = vmatpush1.bf16.msra.mxu0 0
    %5626 = vmatprep.subr.bf16.mxu0 0
    %5627 = vmatpush1.bf16.msra.mxu0 0
    %5628 = vmatprep.subr.bf16.mxu0 0
    %5629 = vmatpush1.bf16.msra.mxu0 0
    %5630 = vmatprep.subr.bf16.mxu0 0
    %5631 = vmatpush1.bf16.msra.mxu0 0
    %5632 = vmatprep.subr.bf16.mxu0 0
    %5633 = vmatpush1.bf16.msra.mxu0 0
    %5634 = vmatprep.subr.bf16.mxu0 0
    %5635 = vmatpush1.bf16.msra.mxu0 0
    %5636 = vmatprep.subr.bf16.mxu0 0
    %5637 = vmatpush1.bf16.msra.mxu0 0
    %5638 = vmatprep.subr.bf16.mxu0 0
    %5639 = vmatpush1.bf16.msra.mxu0 0
    %5640 = vmatprep.subr.bf16.mxu0 0
    %5641 = vmatpush1.bf16.msra.mxu0 0
    %5642 = vmatprep.subr.bf16.mxu0 0
    %5643 = vmatpush1.bf16.msra.mxu0 0
    %5644 = vmatprep.subr.bf16.mxu0 0
    %5645 = vmatpush1.bf16.msra.mxu0 0
    %5646 = vmatprep.mubr.bf16.mxu0 0
    %5647 = vmatmul.mubr.bf16.gmra.mrb[0].mxu0 %v5612
    %v5648 = vpop.f32.mrb[0].mxu0
    %v5649 = vadd.f32 0.0, %v5648
    %v5650 = vpop.f32.mrb[0].mxu0
    %v5651 = vadd.f32 0.0, %v5650
    %v5652 = vpop.f32.mrb[0].mxu0
    %v5653 = vpop.f32.mrb[0].mxu0
    %5654 = vdwg.mxu0
    %5655 = vmatprep.subr.bf16.mxu0 %v5550
    %5656 = vmatpush1.bf16.msra.mxu0 %v5549
    %5657 = vmatprep.subr.bf16.mxu0 %v5558
    %5658 = vmatpush1.bf16.msra.mxu0 %v5557
    %5659 = vmatprep.subr.bf16.mxu0 %v5566
    %5660 = vmatpush1.bf16.msra.mxu0 %v5565
    %5661 = vmatprep.subr.bf16.mxu0 %v5574
    %5662 = vmatpush1.bf16.msra.mxu0 %v5573
    %5663 = vmatprep.subr.bf16.mxu0 0
    %5664 = vmatpush1.bf16.msra.mxu0 0
    %5665 = vmatprep.subr.bf16.mxu0 0
    %5666 = vmatpush1.bf16.msra.mxu0 0
    %5667 = vmatprep.subr.bf16.mxu0 0
    %5668 = vmatpush1.bf16.msra.mxu0 0
    %5669 = vmatprep.subr.bf16.mxu0 0
    %5670 = vmatpush1.bf16.msra.mxu0 0
    %5671 = vmatprep.subr.bf16.mxu0 0
    %5672 = vmatpush1.bf16.msra.mxu0 0
    %5673 = vmatprep.subr.bf16.mxu0 0
    %5674 = vmatpush1.bf16.msra.mxu0 0
    %5675 = vmatprep.subr.bf16.mxu0 0
    %5676 = vmatpush1.bf16.msra.mxu0 0
    %5677 = vmatprep.subr.bf16.mxu0 0
    %5678 = vmatpush1.bf16.msra.mxu0 0
    %5679 = vmatprep.subr.bf16.mxu0 0
    %5680 = vmatpush1.bf16.msra.mxu0 0
    %5681 = vmatprep.subr.bf16.mxu0 0
    %5682 = vmatpush1.bf16.msra.mxu0 0
    %5683 = vmatprep.subr.bf16.mxu0 0
    %5684 = vmatpush1.bf16.msra.mxu0 0
    %5685 = vmatprep.subr.bf16.mxu0 0
    %5686 = vmatpush1.bf16.msra.mxu0 0
    %5687 = vmatprep.mubr.bf16.mxu0 0
    %5688 = vmatmul.mubr.bf16.gmra.mrb[0].mxu0 %v5612
    %v5689 = vpop.f32.mrb[0].mxu0
    %v5690 = vadd.f32 0.0, %v5689
    %v5691 = vpop.f32.mrb[0].mxu0
    %v5692 = vadd.f32 0.0, %v5691
    %v5693 = vpop.f32.mrb[0].mxu0
    %v5694 = vpop.f32.mrb[0].mxu0
    %5695 = vdwg.mxu0
    %5696 = vmatprep.subr.bf16.mxu0 %v5552
    %5697 = vmatpush1.bf16.msra.mxu0 %v5551
    %5698 = vmatprep.subr.bf16.mxu0 %v5560
    %5699 = vmatpush1.bf16.msra.mxu0 %v5559
    %5700 = vmatprep.subr.bf16.mxu0 %v5568
    %5701 = vmatpush1.bf16.msra.mxu0 %v5567
    %5702 = vmatprep.subr.bf16.mxu0 %v5576
    %5703 = vmatpush1.bf16.msra.mxu0 %v5575
    %5704 = vmatprep.subr.bf16.mxu0 0
    %5705 = vmatpush1.bf16.msra.mxu0 0
    %5706 = vmatprep.subr.bf16.mxu0 0
    %5707 = vmatpush1.bf16.msra.mxu0 0
    %5708 = vmatprep.subr.bf16.mxu0 0
    %5709 = vmatpush1.bf16.msra.mxu0 0
    %5710 = vmatprep.subr.bf16.mxu0 0
    %5711 = vmatpush1.bf16.msra.mxu0 0
    %5712 = vmatprep.subr.bf16.mxu0 0
    %5713 = vmatpush1.bf16.msra.mxu0 0
    %5714 = vmatprep.subr.bf16.mxu0 0
    %5715 = vmatpush1.bf16.msra.mxu0 0
    %5716 = vmatprep.subr.bf16.mxu0 0
    %5717 = vmatpush1.bf16.msra.mxu0 0
    %5718 = vmatprep.subr.bf16.mxu0 0
    %5719 = vmatpush1.bf16.msra.mxu0 0
    %5720 = vmatprep.subr.bf16.mxu0 0
    %5721 = vmatpush1.bf16.msra.mxu0 0
    %5722 = vmatprep.subr.bf16.mxu0 0
    %5723 = vmatpush1.bf16.msra.mxu0 0
    %5724 = vmatprep.subr.bf16.mxu0 0
    %5725 = vmatpush1.bf16.msra.mxu0 0
    %5726 = vmatprep.subr.bf16.mxu0 0
    %5727 = vmatpush1.bf16.msra.mxu0 0
    %5728 = vmatprep.mubr.bf16.mxu0 0
    %5729 = vmatmul.mubr.bf16.gmra.mrb[0].mxu0 %v5612
    %v5730 = vpop.f32.mrb[0].mxu0
    %v5731 = vadd.f32 0.0, %v5730
    %v5732 = vpop.f32.mrb[0].mxu0
    %v5733 = vadd.f32 0.0, %v5732
    %v5734 = vpop.f32.mrb[0].mxu0
    %v5735 = vpop.f32.mrb[0].mxu0
    %5736 = vdwg.mxu0
    %5737 = vmatprep.subr.bf16.mxu0 %v5554
    %5738 = vmatpush1.bf16.msra.mxu0 %v5553
    %5739 = vmatprep.subr.bf16.mxu0 %v5562
    %5740 = vmatpush1.bf16.msra.mxu0 %v5561
    %5741 = vmatprep.subr.bf16.mxu0 %v5570
    %5742 = vmatpush1.bf16.msra.mxu0 %v5569
    %5743 = vmatprep.subr.bf16.mxu0 %v5578
    %5744 = vmatpush1.bf16.msra.mxu0 %v5577
    %5745 = vmatprep.subr.bf16.mxu0 0
    %5746 = vmatpush1.bf16.msra.mxu0 0
    %5747 = vmatprep.subr.bf16.mxu0 0
    %5748 = vmatpush1.bf16.msra.mxu0 0
    %5749 = vmatprep.subr.bf16.mxu0 0
    %5750 = vmatpush1.bf16.msra.mxu0 0
    %5751 = vmatprep.subr.bf16.mxu0 0
    %5752 = vmatpush1.bf16.msra.mxu0 0
    %5753 = vmatprep.subr.bf16.mxu0 0
    %5754 = vmatpush1.bf16.msra.mxu0 0
    %5755 = vmatprep.subr.bf16.mxu0 0
    %5756 = vmatpush1.bf16.msra.mxu0 0
    %5757 = vmatprep.subr.bf16.mxu0 0
    %5758 = vmatpush1.bf16.msra.mxu0 0
    %5759 = vmatprep.subr.bf16.mxu0 0
    %5760 = vmatpush1.bf16.msra.mxu0 0
    %5761 = vmatprep.subr.bf16.mxu0 0
    %5762 = vmatpush1.bf16.msra.mxu0 0
    %5763 = vmatprep.subr.bf16.mxu0 0
    %5764 = vmatpush1.bf16.msra.mxu0 0
    %5765 = vmatprep.subr.bf16.mxu0 0
    %5766 = vmatpush1.bf16.msra.mxu0 0
    %5767 = vmatprep.subr.bf16.mxu0 0
    %5768 = vmatpush1.bf16.msra.mxu0 0
    %5769 = vmatprep.mubr.bf16.mxu0 0
    %5770 = vmatmul.mubr.bf16.gmra.mrb[0].mxu0 %v5612
    %v5771 = vpop.f32.mrb[0].mxu0
    %v5772 = vadd.f32 0.0, %v5771
    %v5773 = vpop.f32.mrb[0].mxu0
    %v5774 = vadd.f32 0.0, %v5773
    %v5775 = vpop.f32.mrb[0].mxu0
    %v5776 = vpop.f32.mrb[0].mxu0
    %5777 = vdwg.mxu0
    %v5810 = vunpack.c.l.b16 %v5384
    %v5811 = vunpack.c.h.b16 %v5384
    %v5812 = vunpack.c.l.b16 %v5385
    %v5813 = vunpack.c.h.b16 %v5385
    %v5814 = vunpack.c.l.b16 %v5386
    %v5815 = vunpack.c.h.b16 %v5386
    %v5816 = vunpack.c.l.b16 %v5387
    %v5817 = vunpack.c.h.b16 %v5387
    %v5818 = vunpack.c.l.b16 %v5388
    %v5819 = vunpack.c.h.b16 %v5388
    %v5820 = vunpack.c.l.b16 %v5389
    %v5821 = vunpack.c.h.b16 %v5389
    %v5822 = vunpack.c.l.b16 %v5390
    %v5823 = vunpack.c.h.b16 %v5390
    %v5824 = vunpack.c.l.b16 %v5391
    %v5825 = vunpack.c.h.b16 %v5391
    %v5826 = vunpack.c.l.b16 %v5392
    %v5827 = vunpack.c.h.b16 %v5392
    %v5828 = vunpack.c.l.b16 %v5393
    %v5829 = vunpack.c.h.b16 %v5393
    %v5830 = vunpack.c.l.b16 %v5394
    %v5831 = vunpack.c.h.b16 %v5394
    %v5832 = vunpack.c.l.b16 %v5395
    %v5833 = vunpack.c.h.b16 %v5395
    %v5834 = vunpack.c.l.b16 %v5396
    %v5835 = vunpack.c.h.b16 %v5396
    %v5836 = vunpack.c.l.b16 %v5397
    %v5837 = vunpack.c.h.b16 %v5397
    %v5838 = vunpack.c.l.b16 %v5398
    %v5839 = vunpack.c.h.b16 %v5398
    %v5840 = vunpack.c.l.b16 %v5399
    %v5841 = vunpack.c.h.b16 %v5399
    %v5842 = vunpack.c.l.b16 %v5400
    %v5843 = vunpack.c.h.b16 %v5400
    %v5844 = vunpack.c.l.b16 %v5401
    %v5845 = vunpack.c.h.b16 %v5401
    %v5846 = vunpack.c.l.b16 %v5402
    %v5847 = vunpack.c.h.b16 %v5402
    %v5848 = vunpack.c.l.b16 %v5403
    %v5849 = vunpack.c.h.b16 %v5403
    %v5850 = vunpack.c.l.b16 %v5404
    %v5851 = vunpack.c.h.b16 %v5404
    %v5852 = vunpack.c.l.b16 %v5405
    %v5853 = vunpack.c.h.b16 %v5405
    %v5854 = vunpack.c.l.b16 %v5406
    %v5855 = vunpack.c.h.b16 %v5406
    %v5856 = vunpack.c.l.b16 %v5407
    %v5857 = vunpack.c.h.b16 %v5407
    %v5858 = vunpack.c.l.b16 %v5408
    %v5859 = vunpack.c.h.b16 %v5408
    %v5860 = vunpack.c.l.b16 %v5409
    %v5861 = vunpack.c.h.b16 %v5409
    %v5862 = vunpack.c.l.b16 %v5410
    %v5863 = vunpack.c.h.b16 %v5410
    %v5864 = vunpack.c.l.b16 %v5411
    %v5865 = vunpack.c.h.b16 %v5411
    %v5866 = vunpack.c.l.b16 %v5412
    %v5867 = vunpack.c.h.b16 %v5412
    %v5868 = vunpack.c.l.b16 %v5413
    %v5869 = vunpack.c.h.b16 %v5413
    %v5870 = vunpack.c.l.b16 %v5414
    %v5871 = vunpack.c.h.b16 %v5414
    %v5872 = vunpack.c.l.b16 %v5415
    %v5873 = vunpack.c.h.b16 %v5415
    %v5874 = vpack.c.b16 %v5818, %v5810
    %v5875 = vpack.c.b16 %v5819, %v5811
    %v5876 = vpack.c.b16 %v5820, %v5812
    %v5877 = vpack.c.b16 %v5821, %v5813
    %v5878 = vpack.c.b16 %v5822, %v5814
    %v5879 = vpack.c.b16 %v5823, %v5815
    %v5880 = vpack.c.b16 %v5824, %v5816
    %v5881 = vpack.c.b16 %v5825, %v5817
    %v5882 = vpack.c.b16 %v5834, %v5826
    %v5883 = vpack.c.b16 %v5835, %v5827
    %v5884 = vpack.c.b16 %v5836, %v5828
    %v5885 = vpack.c.b16 %v5837, %v5829
    %v5886 = vpack.c.b16 %v5838, %v5830
    %v5887 = vpack.c.b16 %v5839, %v5831
    %v5888 = vpack.c.b16 %v5840, %v5832
    %v5889 = vpack.c.b16 %v5841, %v5833
    %v5890 = vpack.c.b16 %v5850, %v5842
    %v5891 = vpack.c.b16 %v5851, %v5843
    %v5892 = vpack.c.b16 %v5852, %v5844
    %v5893 = vpack.c.b16 %v5853, %v5845
    %v5894 = vpack.c.b16 %v5854, %v5846
    %v5895 = vpack.c.b16 %v5855, %v5847
    %v5896 = vpack.c.b16 %v5856, %v5848
    %v5897 = vpack.c.b16 %v5857, %v5849
    %v5898 = vpack.c.b16 %v5866, %v5858
    %v5899 = vpack.c.b16 %v5867, %v5859
    %v5900 = vpack.c.b16 %v5868, %v5860
    %v5901 = vpack.c.b16 %v5869, %v5861
    %v5902 = vpack.c.b16 %v5870, %v5862
    %v5903 = vpack.c.b16 %v5871, %v5863
    %v5904 = vpack.c.b16 %v5872, %v5864
    %v5905 = vpack.c.b16 %v5873, %v5865
    %v5938 = vsel %vm125, %v5383, 0
    %5940 = vmatprep.subr.bf16.mxu0 %v5875
    %5941 = vmatpush1.bf16.msra.mxu0 %v5874
    %5942 = vmatprep.subr.bf16.mxu0 %v5883
    %5943 = vmatpush1.bf16.msra.mxu0 %v5882
    %5944 = vmatprep.subr.bf16.mxu0 %v5891
    %5945 = vmatpush1.bf16.msra.mxu0 %v5890
    %5946 = vmatprep.subr.bf16.mxu0 %v5899
    %5947 = vmatpush1.bf16.msra.mxu0 %v5898
    %5948 = vmatprep.subr.bf16.mxu0 0
    %5949 = vmatpush1.bf16.msra.mxu0 0
    %5950 = vmatprep.subr.bf16.mxu0 0
    %5951 = vmatpush1.bf16.msra.mxu0 0
    %5952 = vmatprep.subr.bf16.mxu0 0
    %5953 = vmatpush1.bf16.msra.mxu0 0
    %5954 = vmatprep.subr.bf16.mxu0 0
    %5955 = vmatpush1.bf16.msra.mxu0 0
    %5956 = vmatprep.subr.bf16.mxu0 0
    %5957 = vmatpush1.bf16.msra.mxu0 0
    %5958 = vmatprep.subr.bf16.mxu0 0
    %5959 = vmatpush1.bf16.msra.mxu0 0
    %5960 = vmatprep.subr.bf16.mxu0 0
    %5961 = vmatpush1.bf16.msra.mxu0 0
    %5962 = vmatprep.subr.bf16.mxu0 0
    %5963 = vmatpush1.bf16.msra.mxu0 0
    %5964 = vmatprep.subr.bf16.mxu0 0
    %5965 = vmatpush1.bf16.msra.mxu0 0
    %5966 = vmatprep.subr.bf16.mxu0 0
    %5967 = vmatpush1.bf16.msra.mxu0 0
    %5968 = vmatprep.subr.bf16.mxu0 0
    %5969 = vmatpush1.bf16.msra.mxu0 0
    %5970 = vmatprep.subr.bf16.mxu0 0
    %5971 = vmatpush1.bf16.msra.mxu0 0
    %5972 = vmatprep.mubr.bf16.mxu0 0
    %5973 = vmatmul.mubr.bf16.gmra.mrb[0].mxu0 %v5938
    %v5974 = vpop.f32.mrb[0].mxu0
    %v5975 = vadd.f32 %v5649, %v5974
    %v5976 = vpop.f32.mrb[0].mxu0
    %v5977 = vadd.f32 %v5651, %v5976
    %v5978 = vpop.f32.mrb[0].mxu0
    %v5979 = vpop.f32.mrb[0].mxu0
    %5980 = vdwg.mxu0
    %5981 = vmatprep.subr.bf16.mxu0 %v5877
    %5982 = vmatpush1.bf16.msra.mxu0 %v5876
    %5983 = vmatprep.subr.bf16.mxu0 %v5885
    %5984 = vmatpush1.bf16.msra.mxu0 %v5884
    %5985 = vmatprep.subr.bf16.mxu0 %v5893
    %5986 = vmatpush1.bf16.msra.mxu0 %v5892
    %5987 = vmatprep.subr.bf16.mxu0 %v5901
    %5988 = vmatpush1.bf16.msra.mxu0 %v5900
    %5989 = vmatprep.subr.bf16.mxu0 0
    %5990 = vmatpush1.bf16.msra.mxu0 0
    %5991 = vmatprep.subr.bf16.mxu0 0
    %5992 = vmatpush1.bf16.msra.mxu0 0
    %5993 = vmatprep.subr.bf16.mxu0 0
    %5994 = vmatpush1.bf16.msra.mxu0 0
    %5995 = vmatprep.subr.bf16.mxu0 0
    %5996 = vmatpush1.bf16.msra.mxu0 0
    %5997 = vmatprep.subr.bf16.mxu0 0
    %5998 = vmatpush1.bf16.msra.mxu0 0
    %5999 = vmatprep.subr.bf16.mxu0 0
    %6000 = vmatpush1.bf16.msra.mxu0 0
    %6001 = vmatprep.subr.bf16.mxu0 0
    %6002 = vmatpush1.bf16.msra.mxu0 0
    %6003 = vmatprep.subr.bf16.mxu0 0
    %6004 = vmatpush1.bf16.msra.mxu0 0
    %6005 = vmatprep.subr.bf16.mxu0 0
    %6006 = vmatpush1.bf16.msra.mxu0 0
    %6007 = vmatprep.subr.bf16.mxu0 0
    %6008 = vmatpush1.bf16.msra.mxu0 0
    %6009 = vmatprep.subr.bf16.mxu0 0
    %6010 = vmatpush1.bf16.msra.mxu0 0
    %6011 = vmatprep.subr.bf16.mxu0 0
    %6012 = vmatpush1.bf16.msra.mxu0 0
    %6013 = vmatprep.mubr.bf16.mxu0 0
    %6014 = vmatmul.mubr.bf16.gmra.mrb[0].mxu0 %v5938
    %v6015 = vpop.f32.mrb[0].mxu0
    %v6016 = vadd.f32 %v5690, %v6015
    %v6017 = vpop.f32.mrb[0].mxu0
    %v6018 = vadd.f32 %v5692, %v6017
    %v6019 = vpop.f32.mrb[0].mxu0
    %v6020 = vpop.f32.mrb[0].mxu0
    %6021 = vdwg.mxu0
    %6022 = vmatprep.subr.bf16.mxu0 %v5879
    %6023 = vmatpush1.bf16.msra.mxu0 %v5878
    %6024 = vmatprep.subr.bf16.mxu0 %v5887
    %6025 = vmatpush1.bf16.msra.mxu0 %v5886
    %6026 = vmatprep.subr.bf16.mxu0 %v5895
    %6027 = vmatpush1.bf16.msra.mxu0 %v5894
    %6028 = vmatprep.subr.bf16.mxu0 %v5903
    %6029 = vmatpush1.bf16.msra.mxu0 %v5902
    %6030 = vmatprep.subr.bf16.mxu0 0
    %6031 = vmatpush1.bf16.msra.mxu0 0
    %6032 = vmatprep.subr.bf16.mxu0 0
    %6033 = vmatpush1.bf16.msra.mxu0 0
    %6034 = vmatprep.subr.bf16.mxu0 0
    %6035 = vmatpush1.bf16.msra.mxu0 0
    %6036 = vmatprep.subr.bf16.mxu0 0
    %6037 = vmatpush1.bf16.msra.mxu0 0
    %6038 = vmatprep.subr.bf16.mxu0 0
    %6039 = vmatpush1.bf16.msra.mxu0 0
    %6040 = vmatprep.subr.bf16.mxu0 0
    %6041 = vmatpush1.bf16.msra.mxu0 0
    %6042 = vmatprep.subr.bf16.mxu0 0
    %6043 = vmatpush1.bf16.msra.mxu0 0
    %6044 = vmatprep.subr.bf16.mxu0 0
    %6045 = vmatpush1.bf16.msra.mxu0 0
    %6046 = vmatprep.subr.bf16.mxu0 0
    %6047 = vmatpush1.bf16.msra.mxu0 0
    %6048 = vmatprep.subr.bf16.mxu0 0
    %6049 = vmatpush1.bf16.msra.mxu0 0
    %6050 = vmatprep.subr.bf16.mxu0 0
    %6051 = vmatpush1.bf16.msra.mxu0 0
    %6052 = vmatprep.subr.bf16.mxu0 0
    %6053 = vmatpush1.bf16.msra.mxu0 0
    %6054 = vmatprep.mubr.bf16.mxu0 0
    %6055 = vmatmul.mubr.bf16.gmra.mrb[0].mxu0 %v5938
    %v6056 = vpop.f32.mrb[0].mxu0
    %v6057 = vadd.f32 %v5731, %v6056
    %v6058 = vpop.f32.mrb[0].mxu0
    %v6059 = vadd.f32 %v5733, %v6058
    %v6060 = vpop.f32.mrb[0].mxu0
    %v6061 = vpop.f32.mrb[0].mxu0
    %6062 = vdwg.mxu0
    %6063 = vmatprep.subr.bf16.mxu0 %v5881
    %6064 = vmatpush1.bf16.msra.mxu0 %v5880
    %6065 = vmatprep.subr.bf16.mxu0 %v5889
    %6066 = vmatpush1.bf16.msra.mxu0 %v5888
    %6067 = vmatprep.subr.bf16.mxu0 %v5897
    %6068 = vmatpush1.bf16.msra.mxu0 %v5896
    %6069 = vmatprep.subr.bf16.mxu0 %v5905
    %6070 = vmatpush1.bf16.msra.mxu0 %v5904
    %6071 = vmatprep.subr.bf16.mxu0 0
    %6072 = vmatpush1.bf16.msra.mxu0 0
    %6073 = vmatprep.subr.bf16.mxu0 0
    %6074 = vmatpush1.bf16.msra.mxu0 0
    %6075 = vmatprep.subr.bf16.mxu0 0
    %6076 = vmatpush1.bf16.msra.mxu0 0
    %6077 = vmatprep.subr.bf16.mxu0 0
    %6078 = vmatpush1.bf16.msra.mxu0 0
    %6079 = vmatprep.subr.bf16.mxu0 0
    %6080 = vmatpush1.bf16.msra.mxu0 0
    %6081 = vmatprep.subr.bf16.mxu0 0
    %6082 = vmatpush1.bf16.msra.mxu0 0
    %6083 = vmatprep.subr.bf16.mxu0 0
    %6084 = vmatpush1.bf16.msra.mxu0 0
    %6085 = vmatprep.subr.bf16.mxu0 0
    %6086 = vmatpush1.bf16.msra.mxu0 0
    %6087 = vmatprep.subr.bf16.mxu0 0
    %6088 = vmatpush1.bf16.msra.mxu0 0
    %6089 = vmatprep.subr.bf16.mxu0 0
    %6090 = vmatpush1.bf16.msra.mxu0 0
    %6091 = vmatprep.subr.bf16.mxu0 0
    %6092 = vmatpush1.bf16.msra.mxu0 0
    %6093 = vmatprep.subr.bf16.mxu0 0
    %6094 = vmatpush1.bf16.msra.mxu0 0
    %6095 = vmatprep.mubr.bf16.mxu0 0
    %6096 = vmatmul.mubr.bf16.gmra.mrb[0].mxu0 %v5938
    %v6097 = vpop.f32.mrb[0].mxu0
    %v6098 = vadd.f32 %v5772, %v6097
    %v6099 = vpop.f32.mrb[0].mxu0
    %v6100 = vadd.f32 %v5774, %v6099
    %v6101 = vpop.f32.mrb[0].mxu0
    %v6102 = vpop.f32.mrb[0].mxu0
    %6103 = vdwg.mxu0
    %v6104 = vld [vmem:[%s1866] sm:$0xff]
    %v6105 = vld [vmem:[%s1866 + $0x8] sm:$0xff]
    %v6106 = vld [vmem:[%s1866 + $0x10] sm:$0xff]
    %v6107 = vld [vmem:[%s1866 + $0x18] sm:$0xff]
    %v6108 = vld [vmem:[%s1866 + $0x20] sm:$0xff]
    %v6109 = vld [vmem:[%s1866 + $0x28] sm:$0xff]
    %v6110 = vld [vmem:[%s1866 + $0x30] sm:$0xff]
    %v6111 = vld [vmem:[%s1866 + $0x38] sm:$0xff]
    %v6112 = vld [vmem:[%s1866 + $0x40] sm:$0xff]
    %v6113 = vld [vmem:[%s1866 + $0x48] sm:$0xff]
    %v6114 = vld [vmem:[%s1866 + $0x50] sm:$0xff]
    %v6115 = vld [vmem:[%s1866 + $0x58] sm:$0xff]
    %v6116 = vld [vmem:[%s1866 + $0x60] sm:$0xff]
    %v6117 = vld [vmem:[%s1866 + $0x68] sm:$0xff]
    %v6118 = vld [vmem:[%s1866 + $0x70] sm:$0xff]
    %v6119 = vld [vmem:[%s1866 + $0x78] sm:$0xff]
    %v6120 = vld [vmem:[%s1866 + $0x80] sm:$0xff]
    %v6121 = vld [vmem:[%s1866 + $0x88] sm:$0xff]
    %v6122 = vld [vmem:[%s1866 + $0x90] sm:$0xff]
    %v6123 = vld [vmem:[%s1866 + $0x98] sm:$0xff]
    %v6124 = vld [vmem:[%s1866 + $0xa0] sm:$0xff]
    %v6125 = vld [vmem:[%s1866 + $0xa8] sm:$0xff]
    %v6126 = vld [vmem:[%s1866 + $0xb0] sm:$0xff]
    %v6127 = vld [vmem:[%s1866 + $0xb8] sm:$0xff]
    %v6128 = vld [vmem:[%s1866 + $0xc0] sm:$0xff]
    %v6129 = vld [vmem:[%s1866 + $0xc8] sm:$0xff]
    %v6130 = vld [vmem:[%s1866 + $0xd0] sm:$0xff]
    %v6131 = vld [vmem:[%s1866 + $0xd8] sm:$0xff]
    %v6132 = vld [vmem:[%s1866 + $0xe0] sm:$0xff]
    %v6133 = vld [vmem:[%s1866 + $0xe8] sm:$0xff]
    %v6134 = vld [vmem:[%s1866 + $0xf0] sm:$0xff]
    %v6135 = vld [vmem:[%s1866 + $0xf8] sm:$0xff]
    %v6137 = vrot.slane %v5383, 1
    %v6170 = vunpack.c.l.b16 %v6104
    %v6171 = vunpack.c.h.b16 %v6104
    %v6172 = vunpack.c.l.b16 %v6105
    %v6173 = vunpack.c.h.b16 %v6105
    %v6174 = vunpack.c.l.b16 %v6106
    %v6175 = vunpack.c.h.b16 %v6106
    %v6176 = vunpack.c.l.b16 %v6107
    %v6177 = vunpack.c.h.b16 %v6107
    %v6178 = vunpack.c.l.b16 %v6108
    %v6179 = vunpack.c.h.b16 %v6108
    %v6180 = vunpack.c.l.b16 %v6109
    %v6181 = vunpack.c.h.b16 %v6109
    %v6182 = vunpack.c.l.b16 %v6110
    %v6183 = vunpack.c.h.b16 %v6110
    %v6184 = vunpack.c.l.b16 %v6111
    %v6185 = vunpack.c.h.b16 %v6111
    %v6186 = vunpack.c.l.b16 %v6112
    %v6187 = vunpack.c.h.b16 %v6112
    %v6188 = vunpack.c.l.b16 %v6113
    %v6189 = vunpack.c.h.b16 %v6113
    %v6190 = vunpack.c.l.b16 %v6114
    %v6191 = vunpack.c.h.b16 %v6114
    %v6192 = vunpack.c.l.b16 %v6115
    %v6193 = vunpack.c.h.b16 %v6115
    %v6194 = vunpack.c.l.b16 %v6116
    %v6195 = vunpack.c.h.b16 %v6116
    %v6196 = vunpack.c.l.b16 %v6117
    %v6197 = vunpack.c.h.b16 %v6117
    %v6198 = vunpack.c.l.b16 %v6118
    %v6199 = vunpack.c.h.b16 %v6118
    %v6200 = vunpack.c.l.b16 %v6119
    %v6201 = vunpack.c.h.b16 %v6119
    %v6202 = vunpack.c.l.b16 %v6120
    %v6203 = vunpack.c.h.b16 %v6120
    %v6204 = vunpack.c.l.b16 %v6121
    %v6205 = vunpack.c.h.b16 %v6121
    %v6206 = vunpack.c.l.b16 %v6122
    %v6207 = vunpack.c.h.b16 %v6122
    %v6208 = vunpack.c.l.b16 %v6123
    %v6209 = vunpack.c.h.b16 %v6123
    %v6210 = vunpack.c.l.b16 %v6124
    %v6211 = vunpack.c.h.b16 %v6124
    %v6212 = vunpack.c.l.b16 %v6125
    %v6213 = vunpack.c.h.b16 %v6125
    %v6214 = vunpack.c.l.b16 %v6126
    %v6215 = vunpack.c.h.b16 %v6126
    %v6216 = vunpack.c.l.b16 %v6127
    %v6217 = vunpack.c.h.b16 %v6127
    %v6218 = vunpack.c.l.b16 %v6128
    %v6219 = vunpack.c.h.b16 %v6128
    %v6220 = vunpack.c.l.b16 %v6129
    %v6221 = vunpack.c.h.b16 %v6129
    %v6222 = vunpack.c.l.b16 %v6130
    %v6223 = vunpack.c.h.b16 %v6130
    %v6224 = vunpack.c.l.b16 %v6131
    %v6225 = vunpack.c.h.b16 %v6131
    %v6226 = vunpack.c.l.b16 %v6132
    %v6227 = vunpack.c.h.b16 %v6132
    %v6228 = vunpack.c.l.b16 %v6133
    %v6229 = vunpack.c.h.b16 %v6133
    %v6230 = vunpack.c.l.b16 %v6134
    %v6231 = vunpack.c.h.b16 %v6134
    %v6232 = vunpack.c.l.b16 %v6135
    %v6233 = vunpack.c.h.b16 %v6135
    %v6234 = vpack.c.b16 %v6178, %v6170
    %v6235 = vpack.c.b16 %v6179, %v6171
    %v6236 = vpack.c.b16 %v6180, %v6172
    %v6237 = vpack.c.b16 %v6181, %v6173
    %v6238 = vpack.c.b16 %v6182, %v6174
    %v6239 = vpack.c.b16 %v6183, %v6175
    %v6240 = vpack.c.b16 %v6184, %v6176
    %v6241 = vpack.c.b16 %v6185, %v6177
    %v6242 = vpack.c.b16 %v6194, %v6186
    %v6243 = vpack.c.b16 %v6195, %v6187
    %v6244 = vpack.c.b16 %v6196, %v6188
    %v6245 = vpack.c.b16 %v6197, %v6189
    %v6246 = vpack.c.b16 %v6198, %v6190
    %v6247 = vpack.c.b16 %v6199, %v6191
    %v6248 = vpack.c.b16 %v6200, %v6192
    %v6249 = vpack.c.b16 %v6201, %v6193
    %v6250 = vpack.c.b16 %v6210, %v6202
    %v6251 = vpack.c.b16 %v6211, %v6203
    %v6252 = vpack.c.b16 %v6212, %v6204
    %v6253 = vpack.c.b16 %v6213, %v6205
    %v6254 = vpack.c.b16 %v6214, %v6206
    %v6255 = vpack.c.b16 %v6215, %v6207
    %v6256 = vpack.c.b16 %v6216, %v6208
    %v6257 = vpack.c.b16 %v6217, %v6209
    %v6258 = vpack.c.b16 %v6226, %v6218
    %v6259 = vpack.c.b16 %v6227, %v6219
    %v6260 = vpack.c.b16 %v6228, %v6220
    %v6261 = vpack.c.b16 %v6229, %v6221
    %v6262 = vpack.c.b16 %v6230, %v6222
    %v6263 = vpack.c.b16 %v6231, %v6223
    %v6264 = vpack.c.b16 %v6232, %v6224
    %v6265 = vpack.c.b16 %v6233, %v6225
    %v6299 = vsel %vm125, %v6137, 0
    %6301 = vmatprep.subr.bf16.mxu0 %v6235
    %6302 = vmatpush1.bf16.msra.mxu0 %v6234
    %6303 = vmatprep.subr.bf16.mxu0 %v6243
    %6304 = vmatpush1.bf16.msra.mxu0 %v6242
    %6305 = vmatprep.subr.bf16.mxu0 %v6251
    %6306 = vmatpush1.bf16.msra.mxu0 %v6250
    %6307 = vmatprep.subr.bf16.mxu0 %v6259
    %6308 = vmatpush1.bf16.msra.mxu0 %v6258
    %6309 = vmatprep.subr.bf16.mxu0 0
    %6310 = vmatpush1.bf16.msra.mxu0 0
    %6311 = vmatprep.subr.bf16.mxu0 0
    %6312 = vmatpush1.bf16.msra.mxu0 0
    %6313 = vmatprep.subr.bf16.mxu0 0
    %6314 = vmatpush1.bf16.msra.mxu0 0
    %6315 = vmatprep.subr.bf16.mxu0 0
    %6316 = vmatpush1.bf16.msra.mxu0 0
    %6317 = vmatprep.subr.bf16.mxu0 0
    %6318 = vmatpush1.bf16.msra.mxu0 0
    %6319 = vmatprep.subr.bf16.mxu0 0
    %6320 = vmatpush1.bf16.msra.mxu0 0
    %6321 = vmatprep.subr.bf16.mxu0 0
    %6322 = vmatpush1.bf16.msra.mxu0 0
    %6323 = vmatprep.subr.bf16.mxu0 0
    %6324 = vmatpush1.bf16.msra.mxu0 0
    %6325 = vmatprep.subr.bf16.mxu0 0
    %6326 = vmatpush1.bf16.msra.mxu0 0
    %6327 = vmatprep.subr.bf16.mxu0 0
    %6328 = vmatpush1.bf16.msra.mxu0 0
    %6329 = vmatprep.subr.bf16.mxu0 0
    %6330 = vmatpush1.bf16.msra.mxu0 0
    %6331 = vmatprep.subr.bf16.mxu0 0
    %6332 = vmatpush1.bf16.msra.mxu0 0
    %6333 = vmatprep.mubr.bf16.mxu0 0
    %6334 = vmatmul.mubr.bf16.gmra.mrb[0].mxu0 %v6299
    %v6335 = vpop.f32.mrb[0].mxu0
    %v6336 = vadd.f32 0.0, %v6335
    %v6337 = vpop.f32.mrb[0].mxu0
    %v6338 = vadd.f32 0.0, %v6337
    %v6339 = vpop.f32.mrb[0].mxu0
    %v6340 = vpop.f32.mrb[0].mxu0
    %6341 = vdwg.mxu0
    %6342 = vmatprep.subr.bf16.mxu0 %v6237
    %6343 = vmatpush1.bf16.msra.mxu0 %v6236
    %6344 = vmatprep.subr.bf16.mxu0 %v6245
    %6345 = vmatpush1.bf16.msra.mxu0 %v6244
    %6346 = vmatprep.subr.bf16.mxu0 %v6253
    %6347 = vmatpush1.bf16.msra.mxu0 %v6252
    %6348 = vmatprep.subr.bf16.mxu0 %v6261
    %6349 = vmatpush1.bf16.msra.mxu0 %v6260
    %6350 = vmatprep.subr.bf16.mxu0 0
    %6351 = vmatpush1.bf16.msra.mxu0 0
    %6352 = vmatprep.subr.bf16.mxu0 0
    %6353 = vmatpush1.bf16.msra.mxu0 0
    %6354 = vmatprep.subr.bf16.mxu0 0
    %6355 = vmatpush1.bf16.msra.mxu0 0
    %6356 = vmatprep.subr.bf16.mxu0 0
    %6357 = vmatpush1.bf16.msra.mxu0 0
    %6358 = vmatprep.subr.bf16.mxu0 0
    %6359 = vmatpush1.bf16.msra.mxu0 0
    %6360 = vmatprep.subr.bf16.mxu0 0
    %6361 = vmatpush1.bf16.msra.mxu0 0
    %6362 = vmatprep.subr.bf16.mxu0 0
    %6363 = vmatpush1.bf16.msra.mxu0 0
    %6364 = vmatprep.subr.bf16.mxu0 0
    %6365 = vmatpush1.bf16.msra.mxu0 0
    %6366 = vmatprep.subr.bf16.mxu0 0
    %6367 = vmatpush1.bf16.msra.mxu0 0
    %6368 = vmatprep.subr.bf16.mxu0 0
    %6369 = vmatpush1.bf16.msra.mxu0 0
    %6370 = vmatprep.subr.bf16.mxu0 0
    %6371 = vmatpush1.bf16.msra.mxu0 0
    %6372 = vmatprep.subr.bf16.mxu0 0
    %6373 = vmatpush1.bf16.msra.mxu0 0
    %6374 = vmatprep.mubr.bf16.mxu0 0
    %6375 = vmatmul.mubr.bf16.gmra.mrb[0].mxu0 %v6299
    %v6376 = vpop.f32.mrb[0].mxu0
    %v6377 = vadd.f32 0.0, %v6376
    %v6378 = vpop.f32.mrb[0].mxu0
    %v6379 = vadd.f32 0.0, %v6378
    %v6380 = vpop.f32.mrb[0].mxu0
    %v6381 = vpop.f32.mrb[0].mxu0
    %6382 = vdwg.mxu0
    %6383 = vmatprep.subr.bf16.mxu0 %v6239
    %6384 = vmatpush1.bf16.msra.mxu0 %v6238
    %6385 = vmatprep.subr.bf16.mxu0 %v6247
    %6386 = vmatpush1.bf16.msra.mxu0 %v6246
    %6387 = vmatprep.subr.bf16.mxu0 %v6255
    %6388 = vmatpush1.bf16.msra.mxu0 %v6254
    %6389 = vmatprep.subr.bf16.mxu0 %v6263
    %6390 = vmatpush1.bf16.msra.mxu0 %v6262
    %6391 = vmatprep.subr.bf16.mxu0 0
    %6392 = vmatpush1.bf16.msra.mxu0 0
    %6393 = vmatprep.subr.bf16.mxu0 0
    %6394 = vmatpush1.bf16.msra.mxu0 0
    %6395 = vmatprep.subr.bf16.mxu0 0
    %6396 = vmatpush1.bf16.msra.mxu0 0
    %6397 = vmatprep.subr.bf16.mxu0 0
    %6398 = vmatpush1.bf16.msra.mxu0 0
    %6399 = vmatprep.subr.bf16.mxu0 0
    %6400 = vmatpush1.bf16.msra.mxu0 0
    %6401 = vmatprep.subr.bf16.mxu0 0
    %6402 = vmatpush1.bf16.msra.mxu0 0
    %6403 = vmatprep.subr.bf16.mxu0 0
    %6404 = vmatpush1.bf16.msra.mxu0 0
    %6405 = vmatprep.subr.bf16.mxu0 0
    %6406 = vmatpush1.bf16.msra.mxu0 0
    %6407 = vmatprep.subr.bf16.mxu0 0
    %6408 = vmatpush1.bf16.msra.mxu0 0
    %6409 = vmatprep.subr.bf16.mxu0 0
    %6410 = vmatpush1.bf16.msra.mxu0 0
    %6411 = vmatprep.subr.bf16.mxu0 0
    %6412 = vmatpush1.bf16.msra.mxu0 0
    %6413 = vmatprep.subr.bf16.mxu0 0
    %6414 = vmatpush1.bf16.msra.mxu0 0
    %6415 = vmatprep.mubr.bf16.mxu0 0
    %6416 = vmatmul.mubr.bf16.gmra.mrb[0].mxu0 %v6299
    %v6417 = vpop.f32.mrb[0].mxu0
    %v6418 = vadd.f32 0.0, %v6417
    %v6419 = vpop.f32.mrb[0].mxu0
    %v6420 = vadd.f32 0.0, %v6419
    %v6421 = vpop.f32.mrb[0].mxu0
    %v6422 = vpop.f32.mrb[0].mxu0
    %6423 = vdwg.mxu0
    %6424 = vmatprep.subr.bf16.mxu0 %v6241
    %6425 = vmatpush1.bf16.msra.mxu0 %v6240
    %6426 = vmatprep.subr.bf16.mxu0 %v6249
    %6427 = vmatpush1.bf16.msra.mxu0 %v6248
    %6428 = vmatprep.subr.bf16.mxu0 %v6257
    %6429 = vmatpush1.bf16.msra.mxu0 %v6256
    %6430 = vmatprep.subr.bf16.mxu0 %v6265
    %6431 = vmatpush1.bf16.msra.mxu0 %v6264
    %6432 = vmatprep.subr.bf16.mxu0 0
    %6433 = vmatpush1.bf16.msra.mxu0 0
    %6434 = vmatprep.subr.bf16.mxu0 0
    %6435 = vmatpush1.bf16.msra.mxu0 0
    %6436 = vmatprep.subr.bf16.mxu0 0
    %6437 = vmatpush1.bf16.msra.mxu0 0
    %6438 = vmatprep.subr.bf16.mxu0 0
    %6439 = vmatpush1.bf16.msra.mxu0 0
    %6440 = vmatprep.subr.bf16.mxu0 0
    %6441 = vmatpush1.bf16.msra.mxu0 0
    %6442 = vmatprep.subr.bf16.mxu0 0
    %6443 = vmatpush1.bf16.msra.mxu0 0
    %6444 = vmatprep.subr.bf16.mxu0 0
    %6445 = vmatpush1.bf16.msra.mxu0 0
    %6446 = vmatprep.subr.bf16.mxu0 0
    %6447 = vmatpush1.bf16.msra.mxu0 0
    %6448 = vmatprep.subr.bf16.mxu0 0
    %6449 = vmatpush1.bf16.msra.mxu0 0
    %6450 = vmatprep.subr.bf16.mxu0 0
    %6451 = vmatpush1.bf16.msra.mxu0 0
    %6452 = vmatprep.subr.bf16.mxu0 0
    %6453 = vmatpush1.bf16.msra.mxu0 0
    %6454 = vmatprep.subr.bf16.mxu0 0
    %6455 = vmatpush1.bf16.msra.mxu0 0
    %6456 = vmatprep.mubr.bf16.mxu0 0
    %6457 = vmatmul.mubr.bf16.gmra.mrb[0].mxu0 %v6299
    %v6458 = vpop.f32.mrb[0].mxu0
    %v6459 = vadd.f32 0.0, %v6458
    %v6460 = vpop.f32.mrb[0].mxu0
    %v6461 = vadd.f32 0.0, %v6460
    %v6462 = vpop.f32.mrb[0].mxu0
    %v6463 = vpop.f32.mrb[0].mxu0
    %6464 = vdwg.mxu0
    %v6465 = vadd.f32 %v5975, %v6336
    %v6466 = vadd.f32 %v5977, %v6338
    %v6467 = vadd.f32 %v6016, %v6377
    %v6468 = vadd.f32 %v6018, %v6379
    %v6469 = vadd.f32 %v6057, %v6418
    %v6470 = vadd.f32 %v6059, %v6420
    %v6471 = vadd.f32 %v6098, %v6459
    %v6472 = vadd.f32 %v6100, %v6461
    %v6473 = vld [vmem:[%s2236] sm:$0xff]
    %v6474 = vld [vmem:[%s2236 + $0x8] sm:$0xff]
    %v6475 = vld [vmem:[%s2236 + $0x10] sm:$0xff]
    %v6476 = vld [vmem:[%s2236 + $0x18] sm:$0xff]
    %v6477 = vld [vmem:[%s2236 + $0x20] sm:$0xff]
    %v6478 = vld [vmem:[%s2236 + $0x28] sm:$0xff]
    %v6479 = vld [vmem:[%s2236 + $0x30] sm:$0xff]
    %v6480 = vld [vmem:[%s2236 + $0x38] sm:$0xff]
    %v6481 = vld [vmem:[%s2236 + $0x40] sm:$0xff]
    %v6482 = vld [vmem:[%s2236 + $0x48] sm:$0xff]
    %v6483 = vld [vmem:[%s2236 + $0x50] sm:$0xff]
    %v6484 = vld [vmem:[%s2236 + $0x58] sm:$0xff]
    %v6485 = vld [vmem:[%s2236 + $0x60] sm:$0xff]
    %v6486 = vld [vmem:[%s2236 + $0x68] sm:$0xff]
    %v6487 = vld [vmem:[%s2236 + $0x70] sm:$0xff]
    %v6488 = vld [vmem:[%s2236 + $0x78] sm:$0xff]
    %v6489 = vld [vmem:[%s2236 + $0x80] sm:$0xff]
    %v6490 = vld [vmem:[%s2236 + $0x88] sm:$0xff]
    %v6491 = vld [vmem:[%s2236 + $0x90] sm:$0xff]
    %v6492 = vld [vmem:[%s2236 + $0x98] sm:$0xff]
    %v6493 = vld [vmem:[%s2236 + $0xa0] sm:$0xff]
    %v6494 = vld [vmem:[%s2236 + $0xa8] sm:$0xff]
    %v6495 = vld [vmem:[%s2236 + $0xb0] sm:$0xff]
    %v6496 = vld [vmem:[%s2236 + $0xb8] sm:$0xff]
    %v6497 = vld [vmem:[%s2236 + $0xc0] sm:$0xff]
    %v6498 = vld [vmem:[%s2236 + $0xc8] sm:$0xff]
    %v6499 = vld [vmem:[%s2236 + $0xd0] sm:$0xff]
    %v6500 = vld [vmem:[%s2236 + $0xd8] sm:$0xff]
    %v6501 = vld [vmem:[%s2236 + $0xe0] sm:$0xff]
    %v6502 = vld [vmem:[%s2236 + $0xe8] sm:$0xff]
    %v6503 = vld [vmem:[%s2236 + $0xf0] sm:$0xff]
    %v6504 = vld [vmem:[%s2236 + $0xf8] sm:$0xff]
    %v6505 = vrot.slane %v5449, 1
    %v6538 = vunpack.c.l.b16 %v6473
    %v6539 = vunpack.c.h.b16 %v6473
    %v6540 = vunpack.c.l.b16 %v6474
    %v6541 = vunpack.c.h.b16 %v6474
    %v6542 = vunpack.c.l.b16 %v6475
    %v6543 = vunpack.c.h.b16 %v6475
    %v6544 = vunpack.c.l.b16 %v6476
    %v6545 = vunpack.c.h.b16 %v6476
    %v6546 = vunpack.c.l.b16 %v6477
    %v6547 = vunpack.c.h.b16 %v6477
    %v6548 = vunpack.c.l.b16 %v6478
    %v6549 = vunpack.c.h.b16 %v6478
    %v6550 = vunpack.c.l.b16 %v6479
    %v6551 = vunpack.c.h.b16 %v6479
    %v6552 = vunpack.c.l.b16 %v6480
    %v6553 = vunpack.c.h.b16 %v6480
    %v6554 = vunpack.c.l.b16 %v6481
    %v6555 = vunpack.c.h.b16 %v6481
    %v6556 = vunpack.c.l.b16 %v6482
    %v6557 = vunpack.c.h.b16 %v6482
    %v6558 = vunpack.c.l.b16 %v6483
    %v6559 = vunpack.c.h.b16 %v6483
    %v6560 = vunpack.c.l.b16 %v6484
    %v6561 = vunpack.c.h.b16 %v6484
    %v6562 = vunpack.c.l.b16 %v6485
    %v6563 = vunpack.c.h.b16 %v6485
    %v6564 = vunpack.c.l.b16 %v6486
    %v6565 = vunpack.c.h.b16 %v6486
    %v6566 = vunpack.c.l.b16 %v6487
    %v6567 = vunpack.c.h.b16 %v6487
    %v6568 = vunpack.c.l.b16 %v6488
    %v6569 = vunpack.c.h.b16 %v6488
    %v6570 = vunpack.c.l.b16 %v6489
    %v6571 = vunpack.c.h.b16 %v6489
    %v6572 = vunpack.c.l.b16 %v6490
    %v6573 = vunpack.c.h.b16 %v6490
    %v6574 = vunpack.c.l.b16 %v6491
    %v6575 = vunpack.c.h.b16 %v6491
    %v6576 = vunpack.c.l.b16 %v6492
    %v6577 = vunpack.c.h.b16 %v6492
    %v6578 = vunpack.c.l.b16 %v6493
    %v6579 = vunpack.c.h.b16 %v6493
    %v6580 = vunpack.c.l.b16 %v6494
    %v6581 = vunpack.c.h.b16 %v6494
    %v6582 = vunpack.c.l.b16 %v6495
    %v6583 = vunpack.c.h.b16 %v6495
    %v6584 = vunpack.c.l.b16 %v6496
    %v6585 = vunpack.c.h.b16 %v6496
    %v6586 = vunpack.c.l.b16 %v6497
    %v6587 = vunpack.c.h.b16 %v6497
    %v6588 = vunpack.c.l.b16 %v6498
    %v6589 = vunpack.c.h.b16 %v6498
    %v6590 = vunpack.c.l.b16 %v6499
    %v6591 = vunpack.c.h.b16 %v6499
    %v6592 = vunpack.c.l.b16 %v6500
    %v6593 = vunpack.c.h.b16 %v6500
    %v6594 = vunpack.c.l.b16 %v6501
    %v6595 = vunpack.c.h.b16 %v6501
    %v6596 = vunpack.c.l.b16 %v6502
    %v6597 = vunpack.c.h.b16 %v6502
    %v6598 = vunpack.c.l.b16 %v6503
    %v6599 = vunpack.c.h.b16 %v6503
    %v6600 = vunpack.c.l.b16 %v6504
    %v6601 = vunpack.c.h.b16 %v6504
    %v6602 = vpack.c.b16 %v6546, %v6538
    %v6603 = vpack.c.b16 %v6547, %v6539
    %v6604 = vpack.c.b16 %v6548, %v6540
    %v6605 = vpack.c.b16 %v6549, %v6541
    %v6606 = vpack.c.b16 %v6550, %v6542
    %v6607 = vpack.c.b16 %v6551, %v6543
    %v6608 = vpack.c.b16 %v6552, %v6544
    %v6609 = vpack.c.b16 %v6553, %v6545
    %v6610 = vpack.c.b16 %v6562, %v6554
    %v6611 = vpack.c.b16 %v6563, %v6555
    %v6612 = vpack.c.b16 %v6564, %v6556
    %v6613 = vpack.c.b16 %v6565, %v6557
    %v6614 = vpack.c.b16 %v6566, %v6558
    %v6615 = vpack.c.b16 %v6567, %v6559
    %v6616 = vpack.c.b16 %v6568, %v6560
    %v6617 = vpack.c.b16 %v6569, %v6561
    %v6618 = vpack.c.b16 %v6578, %v6570
    %v6619 = vpack.c.b16 %v6579, %v6571
    %v6620 = vpack.c.b16 %v6580, %v6572
    %v6621 = vpack.c.b16 %v6581, %v6573
    %v6622 = vpack.c.b16 %v6582, %v6574
    %v6623 = vpack.c.b16 %v6583, %v6575
    %v6624 = vpack.c.b16 %v6584, %v6576
    %v6625 = vpack.c.b16 %v6585, %v6577
    %v6626 = vpack.c.b16 %v6594, %v6586
    %v6627 = vpack.c.b16 %v6595, %v6587
    %v6628 = vpack.c.b16 %v6596, %v6588
    %v6629 = vpack.c.b16 %v6597, %v6589
    %v6630 = vpack.c.b16 %v6598, %v6590
    %v6631 = vpack.c.b16 %v6599, %v6591
    %v6632 = vpack.c.b16 %v6600, %v6592
    %v6633 = vpack.c.b16 %v6601, %v6593
    %v6667 = vsel %vm125, %v6505, 0
    %6669 = vmatprep.subr.bf16.mxu0 %v6603
    %6670 = vmatpush1.bf16.msra.mxu0 %v6602
    %6671 = vmatprep.subr.bf16.mxu0 %v6611
    %6672 = vmatpush1.bf16.msra.mxu0 %v6610
    %6673 = vmatprep.subr.bf16.mxu0 %v6619
    %6674 = vmatpush1.bf16.msra.mxu0 %v6618
    %6675 = vmatprep.subr.bf16.mxu0 %v6627
    %6676 = vmatpush1.bf16.msra.mxu0 %v6626
    %6677 = vmatprep.subr.bf16.mxu0 0
    %6678 = vmatpush1.bf16.msra.mxu0 0
    %6679 = vmatprep.subr.bf16.mxu0 0
    %6680 = vmatpush1.bf16.msra.mxu0 0
    %6681 = vmatprep.subr.bf16.mxu0 0
    %6682 = vmatpush1.bf16.msra.mxu0 0
    %6683 = vmatprep.subr.bf16.mxu0 0
    %6684 = vmatpush1.bf16.msra.mxu0 0
    %6685 = vmatprep.subr.bf16.mxu0 0
    %6686 = vmatpush1.bf16.msra.mxu0 0
    %6687 = vmatprep.subr.bf16.mxu0 0
    %6688 = vmatpush1.bf16.msra.mxu0 0
    %6689 = vmatprep.subr.bf16.mxu0 0
    %6690 = vmatpush1.bf16.msra.mxu0 0
    %6691 = vmatprep.subr.bf16.mxu0 0
    %6692 = vmatpush1.bf16.msra.mxu0 0
    %6693 = vmatprep.subr.bf16.mxu0 0
    %6694 = vmatpush1.bf16.msra.mxu0 0
    %6695 = vmatprep.subr.bf16.mxu0 0
    %6696 = vmatpush1.bf16.msra.mxu0 0
    %6697 = vmatprep.subr.bf16.mxu0 0
    %6698 = vmatpush1.bf16.msra.mxu0 0
    %6699 = vmatprep.subr.bf16.mxu0 0
    %6700 = vmatpush1.bf16.msra.mxu0 0
    %6701 = vmatprep.mubr.bf16.mxu0 0
    %6702 = vmatmul.mubr.bf16.gmra.mrb[0].mxu0 %v6667
    %v6703 = vpop.f32.mrb[0].mxu0
    %v6704 = vadd.f32 0.0, %v6703
    %v6705 = vpop.f32.mrb[0].mxu0
    %v6706 = vadd.f32 0.0, %v6705
    %v6707 = vpop.f32.mrb[0].mxu0
    %v6708 = vpop.f32.mrb[0].mxu0
    %6709 = vdwg.mxu0
    %6710 = vmatprep.subr.bf16.mxu0 %v6605
    %6711 = vmatpush1.bf16.msra.mxu0 %v6604
    %6712 = vmatprep.subr.bf16.mxu0 %v6613
    %6713 = vmatpush1.bf16.msra.mxu0 %v6612
    %6714 = vmatprep.subr.bf16.mxu0 %v6621
    %6715 = vmatpush1.bf16.msra.mxu0 %v6620
    %6716 = vmatprep.subr.bf16.mxu0 %v6629
    %6717 = vmatpush1.bf16.msra.mxu0 %v6628
    %6718 = vmatprep.subr.bf16.mxu0 0
    %6719 = vmatpush1.bf16.msra.mxu0 0
    %6720 = vmatprep.subr.bf16.mxu0 0
    %6721 = vmatpush1.bf16.msra.mxu0 0
    %6722 = vmatprep.subr.bf16.mxu0 0
    %6723 = vmatpush1.bf16.msra.mxu0 0
    %6724 = vmatprep.subr.bf16.mxu0 0
    %6725 = vmatpush1.bf16.msra.mxu0 0
    %6726 = vmatprep.subr.bf16.mxu0 0
    %6727 = vmatpush1.bf16.msra.mxu0 0
    %6728 = vmatprep.subr.bf16.mxu0 0
    %6729 = vmatpush1.bf16.msra.mxu0 0
    %6730 = vmatprep.subr.bf16.mxu0 0
    %6731 = vmatpush1.bf16.msra.mxu0 0
    %6732 = vmatprep.subr.bf16.mxu0 0
    %6733 = vmatpush1.bf16.msra.mxu0 0
    %6734 = vmatprep.subr.bf16.mxu0 0
    %6735 = vmatpush1.bf16.msra.mxu0 0
    %6736 = vmatprep.subr.bf16.mxu0 0
    %6737 = vmatpush1.bf16.msra.mxu0 0
    %6738 = vmatprep.subr.bf16.mxu0 0
    %6739 = vmatpush1.bf16.msra.mxu0 0
    %6740 = vmatprep.subr.bf16.mxu0 0
    %6741 = vmatpush1.bf16.msra.mxu0 0
    %6742 = vmatprep.mubr.bf16.mxu0 0
    %6743 = vmatmul.mubr.bf16.gmra.mrb[0].mxu0 %v6667
    %v6744 = vpop.f32.mrb[0].mxu0
    %v6745 = vadd.f32 0.0, %v6744
    %v6746 = vpop.f32.mrb[0].mxu0
    %v6747 = vadd.f32 0.0, %v6746
    %v6748 = vpop.f32.mrb[0].mxu0
    %v6749 = vpop.f32.mrb[0].mxu0
    %6750 = vdwg.mxu0
    %6751 = vmatprep.subr.bf16.mxu0 %v6607
    %6752 = vmatpush1.bf16.msra.mxu0 %v6606
    %6753 = vmatprep.subr.bf16.mxu0 %v6615
    %6754 = vmatpush1.bf16.msra.mxu0 %v6614
    %6755 = vmatprep.subr.bf16.mxu0 %v6623
    %6756 = vmatpush1.bf16.msra.mxu0 %v6622
    %6757 = vmatprep.subr.bf16.mxu0 %v6631
    %6758 = vmatpush1.bf16.msra.mxu0 %v6630
    %6759 = vmatprep.subr.bf16.mxu0 0
    %6760 = vmatpush1.bf16.msra.mxu0 0
    %6761 = vmatprep.subr.bf16.mxu0 0
    %6762 = vmatpush1.bf16.msra.mxu0 0
    %6763 = vmatprep.subr.bf16.mxu0 0
    %6764 = vmatpush1.bf16.msra.mxu0 0
    %6765 = vmatprep.subr.bf16.mxu0 0
    %6766 = vmatpush1.bf16.msra.mxu0 0
    %6767 = vmatprep.subr.bf16.mxu0 0
    %6768 = vmatpush1.bf16.msra.mxu0 0
    %6769 = vmatprep.subr.bf16.mxu0 0
    %6770 = vmatpush1.bf16.msra.mxu0 0
    %6771 = vmatprep.subr.bf16.mxu0 0
    %6772 = vmatpush1.bf16.msra.mxu0 0
    %6773 = vmatprep.subr.bf16.mxu0 0
    %6774 = vmatpush1.bf16.msra.mxu0 0
    %6775 = vmatprep.subr.bf16.mxu0 0
    %6776 = vmatpush1.bf16.msra.mxu0 0
    %6777 = vmatprep.subr.bf16.mxu0 0
    %6778 = vmatpush1.bf16.msra.mxu0 0
    %6779 = vmatprep.subr.bf16.mxu0 0
    %6780 = vmatpush1.bf16.msra.mxu0 0
    %6781 = vmatprep.subr.bf16.mxu0 0
    %6782 = vmatpush1.bf16.msra.mxu0 0
    %6783 = vmatprep.mubr.bf16.mxu0 0
    %6784 = vmatmul.mubr.bf16.gmra.mrb[0].mxu0 %v6667
    %v6785 = vpop.f32.mrb[0].mxu0
    %v6786 = vadd.f32 0.0, %v6785
    %v6787 = vpop.f32.mrb[0].mxu0
    %v6788 = vadd.f32 0.0, %v6787
    %v6789 = vpop.f32.mrb[0].mxu0
    %v6790 = vpop.f32.mrb[0].mxu0
    %6791 = vdwg.mxu0
    %6792 = vmatprep.subr.bf16.mxu0 %v6609
    %6793 = vmatpush1.bf16.msra.mxu0 %v6608
    %6794 = vmatprep.subr.bf16.mxu0 %v6617
    %6795 = vmatpush1.bf16.msra.mxu0 %v6616
    %6796 = vmatprep.subr.bf16.mxu0 %v6625
    %6797 = vmatpush1.bf16.msra.mxu0 %v6624
    %6798 = vmatprep.subr.bf16.mxu0 %v6633
    %6799 = vmatpush1.bf16.msra.mxu0 %v6632
    %6800 = vmatprep.subr.bf16.mxu0 0
    %6801 = vmatpush1.bf16.msra.mxu0 0
    %6802 = vmatprep.subr.bf16.mxu0 0
    %6803 = vmatpush1.bf16.msra.mxu0 0
    %6804 = vmatprep.subr.bf16.mxu0 0
    %6805 = vmatpush1.bf16.msra.mxu0 0
    %6806 = vmatprep.subr.bf16.mxu0 0
    %6807 = vmatpush1.bf16.msra.mxu0 0
    %6808 = vmatprep.subr.bf16.mxu0 0
    %6809 = vmatpush1.bf16.msra.mxu0 0
    %6810 = vmatprep.subr.bf16.mxu0 0
    %6811 = vmatpush1.bf16.msra.mxu0 0
    %6812 = vmatprep.subr.bf16.mxu0 0
    %6813 = vmatpush1.bf16.msra.mxu0 0
    %6814 = vmatprep.subr.bf16.mxu0 0
    %6815 = vmatpush1.bf16.msra.mxu0 0
    %6816 = vmatprep.subr.bf16.mxu0 0
    %6817 = vmatpush1.bf16.msra.mxu0 0
    %6818 = vmatprep.subr.bf16.mxu0 0
    %6819 = vmatpush1.bf16.msra.mxu0 0
    %6820 = vmatprep.subr.bf16.mxu0 0
    %6821 = vmatpush1.bf16.msra.mxu0 0
    %6822 = vmatprep.subr.bf16.mxu0 0
    %6823 = vmatpush1.bf16.msra.mxu0 0
    %6824 = vmatprep.mubr.bf16.mxu0 0
    %6825 = vmatmul.mubr.bf16.gmra.mrb[0].mxu0 %v6667
    %v6826 = vpop.f32.mrb[0].mxu0
    %v6827 = vadd.f32 0.0, %v6826
    %v6828 = vpop.f32.mrb[0].mxu0
    %v6829 = vadd.f32 0.0, %v6828
    %v6830 = vpop.f32.mrb[0].mxu0
    %v6831 = vpop.f32.mrb[0].mxu0
    %6832 = vdwg.mxu0
    %v6833 = vadd.f32 %v6465, %v6704
    %v6834 = vadd.f32 %v6466, %v6706
    %v6835 = vadd.f32 %v6467, %v6745
    %v6836 = vadd.f32 %v6468, %v6747
    %v6837 = vadd.f32 %v6469, %v6786
    %v6838 = vadd.f32 %v6470, %v6788
    %v6839 = vadd.f32 %v6471, %v6827
    %v6840 = vadd.f32 %v6472, %v6829
    %v6841 = vld [vmem:[%s2605] sm:$0xff]
    %v6842 = vld [vmem:[%s2605 + $0x8] sm:$0xff]
    %v6843 = vld [vmem:[%s2605 + $0x10] sm:$0xff]
    %v6844 = vld [vmem:[%s2605 + $0x18] sm:$0xff]
    %v6845 = vld [vmem:[%s2605 + $0x20] sm:$0xff]
    %v6846 = vld [vmem:[%s2605 + $0x28] sm:$0xff]
    %v6847 = vld [vmem:[%s2605 + $0x30] sm:$0xff]
    %v6848 = vld [vmem:[%s2605 + $0x38] sm:$0xff]
    %v6849 = vld [vmem:[%s2605 + $0x40] sm:$0xff]
    %v6850 = vld [vmem:[%s2605 + $0x48] sm:$0xff]
    %v6851 = vld [vmem:[%s2605 + $0x50] sm:$0xff]
    %v6852 = vld [vmem:[%s2605 + $0x58] sm:$0xff]
    %v6853 = vld [vmem:[%s2605 + $0x60] sm:$0xff]
    %v6854 = vld [vmem:[%s2605 + $0x68] sm:$0xff]
    %v6855 = vld [vmem:[%s2605 + $0x70] sm:$0xff]
    %v6856 = vld [vmem:[%s2605 + $0x78] sm:$0xff]
    %v6857 = vld [vmem:[%s2605 + $0x80] sm:$0xff]
    %v6858 = vld [vmem:[%s2605 + $0x88] sm:$0xff]
    %v6859 = vld [vmem:[%s2605 + $0x90] sm:$0xff]
    %v6860 = vld [vmem:[%s2605 + $0x98] sm:$0xff]
    %v6861 = vld [vmem:[%s2605 + $0xa0] sm:$0xff]
    %v6862 = vld [vmem:[%s2605 + $0xa8] sm:$0xff]
    %v6863 = vld [vmem:[%s2605 + $0xb0] sm:$0xff]
    %v6864 = vld [vmem:[%s2605 + $0xb8] sm:$0xff]
    %v6865 = vld [vmem:[%s2605 + $0xc0] sm:$0xff]
    %v6866 = vld [vmem:[%s2605 + $0xc8] sm:$0xff]
    %v6867 = vld [vmem:[%s2605 + $0xd0] sm:$0xff]
    %v6868 = vld [vmem:[%s2605 + $0xd8] sm:$0xff]
    %v6869 = vld [vmem:[%s2605 + $0xe0] sm:$0xff]
    %v6870 = vld [vmem:[%s2605 + $0xe8] sm:$0xff]
    %v6871 = vld [vmem:[%s2605 + $0xf0] sm:$0xff]
    %v6872 = vld [vmem:[%s2605 + $0xf8] sm:$0xff]
    %v6873 = vrot.slane %v5383, 2
    %v6906 = vunpack.c.l.b16 %v6841
    %v6907 = vunpack.c.h.b16 %v6841
    %v6908 = vunpack.c.l.b16 %v6842
    %v6909 = vunpack.c.h.b16 %v6842
    %v6910 = vunpack.c.l.b16 %v6843
    %v6911 = vunpack.c.h.b16 %v6843
    %v6912 = vunpack.c.l.b16 %v6844
    %v6913 = vunpack.c.h.b16 %v6844
    %v6914 = vunpack.c.l.b16 %v6845
    %v6915 = vunpack.c.h.b16 %v6845
    %v6916 = vunpack.c.l.b16 %v6846
    %v6917 = vunpack.c.h.b16 %v6846
    %v6918 = vunpack.c.l.b16 %v6847
    %v6919 = vunpack.c.h.b16 %v6847
    %v6920 = vunpack.c.l.b16 %v6848
    %v6921 = vunpack.c.h.b16 %v6848
    %v6922 = vunpack.c.l.b16 %v6849
    %v6923 = vunpack.c.h.b16 %v6849
    %v6924 = vunpack.c.l.b16 %v6850
    %v6925 = vunpack.c.h.b16 %v6850
    %v6926 = vunpack.c.l.b16 %v6851
    %v6927 = vunpack.c.h.b16 %v6851
    %v6928 = vunpack.c.l.b16 %v6852
    %v6929 = vunpack.c.h.b16 %v6852
    %v6930 = vunpack.c.l.b16 %v6853
    %v6931 = vunpack.c.h.b16 %v6853
    %v6932 = vunpack.c.l.b16 %v6854
    %v6933 = vunpack.c.h.b16 %v6854
    %v6934 = vunpack.c.l.b16 %v6855
    %v6935 = vunpack.c.h.b16 %v6855
    %v6936 = vunpack.c.l.b16 %v6856
    %v6937 = vunpack.c.h.b16 %v6856
    %v6938 = vunpack.c.l.b16 %v6857
    %v6939 = vunpack.c.h.b16 %v6857
    %v6940 = vunpack.c.l.b16 %v6858
    %v6941 = vunpack.c.h.b16 %v6858
    %v6942 = vunpack.c.l.b16 %v6859
    %v6943 = vunpack.c.h.b16 %v6859
    %v6944 = vunpack.c.l.b16 %v6860
    %v6945 = vunpack.c.h.b16 %v6860
    %v6946 = vunpack.c.l.b16 %v6861
    %v6947 = vunpack.c.h.b16 %v6861
    %v6948 = vunpack.c.l.b16 %v6862
    %v6949 = vunpack.c.h.b16 %v6862
    %v6950 = vunpack.c.l.b16 %v6863
    %v6951 = vunpack.c.h.b16 %v6863
    %v6952 = vunpack.c.l.b16 %v6864
    %v6953 = vunpack.c.h.b16 %v6864
    %v6954 = vunpack.c.l.b16 %v6865
    %v6955 = vunpack.c.h.b16 %v6865
    %v6956 = vunpack.c.l.b16 %v6866
    %v6957 = vunpack.c.h.b16 %v6866
    %v6958 = vunpack.c.l.b16 %v6867
    %v6959 = vunpack.c.h.b16 %v6867
    %v6960 = vunpack.c.l.b16 %v6868
    %v6961 = vunpack.c.h.b16 %v6868
    %v6962 = vunpack.c.l.b16 %v6869
    %v6963 = vunpack.c.h.b16 %v6869
    %v6964 = vunpack.c.l.b16 %v6870
    %v6965 = vunpack.c.h.b16 %v6870
    %v6966 = vunpack.c.l.b16 %v6871
    %v6967 = vunpack.c.h.b16 %v6871
    %v6968 = vunpack.c.l.b16 %v6872
    %v6969 = vunpack.c.h.b16 %v6872
    %v6970 = vpack.c.b16 %v6914, %v6906
    %v6971 = vpack.c.b16 %v6915, %v6907
    %v6972 = vpack.c.b16 %v6916, %v6908
    %v6973 = vpack.c.b16 %v6917, %v6909
    %v6974 = vpack.c.b16 %v6918, %v6910
    %v6975 = vpack.c.b16 %v6919, %v6911
    %v6976 = vpack.c.b16 %v6920, %v6912
    %v6977 = vpack.c.b16 %v6921, %v6913
    %v6978 = vpack.c.b16 %v6930, %v6922
    %v6979 = vpack.c.b16 %v6931, %v6923
    %v6980 = vpack.c.b16 %v6932, %v6924
    %v6981 = vpack.c.b16 %v6933, %v6925
    %v6982 = vpack.c.b16 %v6934, %v6926
    %v6983 = vpack.c.b16 %v6935, %v6927
    %v6984 = vpack.c.b16 %v6936, %v6928
    %v6985 = vpack.c.b16 %v6937, %v6929
    %v6986 = vpack.c.b16 %v6946, %v6938
    %v6987 = vpack.c.b16 %v6947, %v6939
    %v6988 = vpack.c.b16 %v6948, %v6940
    %v6989 = vpack.c.b16 %v6949, %v6941
    %v6990 = vpack.c.b16 %v6950, %v6942
    %v6991 = vpack.c.b16 %v6951, %v6943
    %v6992 = vpack.c.b16 %v6952, %v6944
    %v6993 = vpack.c.b16 %v6953, %v6945
    %v6994 = vpack.c.b16 %v6962, %v6954
    %v6995 = vpack.c.b16 %v6963, %v6955
    %v6996 = vpack.c.b16 %v6964, %v6956
    %v6997 = vpack.c.b16 %v6965, %v6957
    %v6998 = vpack.c.b16 %v6966, %v6958
    %v6999 = vpack.c.b16 %v6967, %v6959
    %v7000 = vpack.c.b16 %v6968, %v6960
    %v7001 = vpack.c.b16 %v6969, %v6961
    %v7035 = vsel %vm125, %v6873, 0
    %7037 = vmatprep.subr.bf16.mxu0 %v6971
    %7038 = vmatpush1.bf16.msra.mxu0 %v6970
    %7039 = vmatprep.subr.bf16.mxu0 %v6979
    %7040 = vmatpush1.bf16.msra.mxu0 %v6978
    %7041 = vmatprep.subr.bf16.mxu0 %v6987
    %7042 = vmatpush1.bf16.msra.mxu0 %v6986
    %7043 = vmatprep.subr.bf16.mxu0 %v6995
    %7044 = vmatpush1.bf16.msra.mxu0 %v6994
    %7045 = vmatprep.subr.bf16.mxu0 0
    %7046 = vmatpush1.bf16.msra.mxu0 0
    %7047 = vmatprep.subr.bf16.mxu0 0
    %7048 = vmatpush1.bf16.msra.mxu0 0
    %7049 = vmatprep.subr.bf16.mxu0 0
    %7050 = vmatpush1.bf16.msra.mxu0 0
    %7051 = vmatprep.subr.bf16.mxu0 0
    %7052 = vmatpush1.bf16.msra.mxu0 0
    %7053 = vmatprep.subr.bf16.mxu0 0
    %7054 = vmatpush1.bf16.msra.mxu0 0
    %7055 = vmatprep.subr.bf16.mxu0 0
    %7056 = vmatpush1.bf16.msra.mxu0 0
    %7057 = vmatprep.subr.bf16.mxu0 0
    %7058 = vmatpush1.bf16.msra.mxu0 0
    %7059 = vmatprep.subr.bf16.mxu0 0
    %7060 = vmatpush1.bf16.msra.mxu0 0
    %7061 = vmatprep.subr.bf16.mxu0 0
    %7062 = vmatpush1.bf16.msra.mxu0 0
    %7063 = vmatprep.subr.bf16.mxu0 0
    %7064 = vmatpush1.bf16.msra.mxu0 0
    %7065 = vmatprep.subr.bf16.mxu0 0
    %7066 = vmatpush1.bf16.msra.mxu0 0
    %7067 = vmatprep.subr.bf16.mxu0 0
    %7068 = vmatpush1.bf16.msra.mxu0 0
    %7069 = vmatprep.mubr.bf16.mxu0 0
    %7070 = vmatmul.mubr.bf16.gmra.mrb[0].mxu0 %v7035
    %v7071 = vpop.f32.mrb[0].mxu0
    %v7072 = vadd.f32 0.0, %v7071
    %v7073 = vpop.f32.mrb[0].mxu0
    %v7074 = vadd.f32 0.0, %v7073
    %v7075 = vpop.f32.mrb[0].mxu0
    %v7076 = vpop.f32.mrb[0].mxu0
    %7077 = vdwg.mxu0
    %7078 = vmatprep.subr.bf16.mxu0 %v6973
    %7079 = vmatpush1.bf16.msra.mxu0 %v6972
    %7080 = vmatprep.subr.bf16.mxu0 %v6981
    %7081 = vmatpush1.bf16.msra.mxu0 %v6980
    %7082 = vmatprep.subr.bf16.mxu0 %v6989
    %7083 = vmatpush1.bf16.msra.mxu0 %v6988
    %7084 = vmatprep.subr.bf16.mxu0 %v6997
    %7085 = vmatpush1.bf16.msra.mxu0 %v6996
    %7086 = vmatprep.subr.bf16.mxu0 0
    %7087 = vmatpush1.bf16.msra.mxu0 0
    %7088 = vmatprep.subr.bf16.mxu0 0
    %7089 = vmatpush1.bf16.msra.mxu0 0
    %7090 = vmatprep.subr.bf16.mxu0 0
    %7091 = vmatpush1.bf16.msra.mxu0 0
    %7092 = vmatprep.subr.bf16.mxu0 0
    %7093 = vmatpush1.bf16.msra.mxu0 0
    %7094 = vmatprep.subr.bf16.mxu0 0
    %7095 = vmatpush1.bf16.msra.mxu0 0
    %7096 = vmatprep.subr.bf16.mxu0 0
    %7097 = vmatpush1.bf16.msra.mxu0 0
    %7098 = vmatprep.subr.bf16.mxu0 0
    %7099 = vmatpush1.bf16.msra.mxu0 0
    %7100 = vmatprep.subr.bf16.mxu0 0
    %7101 = vmatpush1.bf16.msra.mxu0 0
    %7102 = vmatprep.subr.bf16.mxu0 0
    %7103 = vmatpush1.bf16.msra.mxu0 0
    %7104 = vmatprep.subr.bf16.mxu0 0
    %7105 = vmatpush1.bf16.msra.mxu0 0
    %7106 = vmatprep.subr.bf16.mxu0 0
    %7107 = vmatpush1.bf16.msra.mxu0 0
    %7108 = vmatprep.subr.bf16.mxu0 0
    %7109 = vmatpush1.bf16.msra.mxu0 0
    %7110 = vmatprep.mubr.bf16.mxu0 0
    %7111 = vmatmul.mubr.bf16.gmra.mrb[0].mxu0 %v7035
    %v7112 = vpop.f32.mrb[0].mxu0
    %v7113 = vadd.f32 0.0, %v7112
    %v7114 = vpop.f32.mrb[0].mxu0
    %v7115 = vadd.f32 0.0, %v7114
    %v7116 = vpop.f32.mrb[0].mxu0
    %v7117 = vpop.f32.mrb[0].mxu0
    %7118 = vdwg.mxu0
    %7119 = vmatprep.subr.bf16.mxu0 %v6975
    %7120 = vmatpush1.bf16.msra.mxu0 %v6974
    %7121 = vmatprep.subr.bf16.mxu0 %v6983
    %7122 = vmatpush1.bf16.msra.mxu0 %v6982
    %7123 = vmatprep.subr.bf16.mxu0 %v6991
    %7124 = vmatpush1.bf16.msra.mxu0 %v6990
    %7125 = vmatprep.subr.bf16.mxu0 %v6999
    %7126 = vmatpush1.bf16.msra.mxu0 %v6998
    %7127 = vmatprep.subr.bf16.mxu0 0
    %7128 = vmatpush1.bf16.msra.mxu0 0
    %7129 = vmatprep.subr.bf16.mxu0 0
    %7130 = vmatpush1.bf16.msra.mxu0 0
    %7131 = vmatprep.subr.bf16.mxu0 0
    %7132 = vmatpush1.bf16.msra.mxu0 0
    %7133 = vmatprep.subr.bf16.mxu0 0
    %7134 = vmatpush1.bf16.msra.mxu0 0
    %7135 = vmatprep.subr.bf16.mxu0 0
    %7136 = vmatpush1.bf16.msra.mxu0 0
    %7137 = vmatprep.subr.bf16.mxu0 0
    %7138 = vmatpush1.bf16.msra.mxu0 0
    %7139 = vmatprep.subr.bf16.mxu0 0
    %7140 = vmatpush1.bf16.msra.mxu0 0
    %7141 = vmatprep.subr.bf16.mxu0 0
    %7142 = vmatpush1.bf16.msra.mxu0 0
    %7143 = vmatprep.subr.bf16.mxu0 0
    %7144 = vmatpush1.bf16.msra.mxu0 0
    %7145 = vmatprep.subr.bf16.mxu0 0
    %7146 = vmatpush1.bf16.msra.mxu0 0
    %7147 = vmatprep.subr.bf16.mxu0 0
    %7148 = vmatpush1.bf16.msra.mxu0 0
    %7149 = vmatprep.subr.bf16.mxu0 0
    %7150 = vmatpush1.bf16.msra.mxu0 0
    %7151 = vmatprep.mubr.bf16.mxu0 0
    %7152 = vmatmul.mubr.bf16.gmra.mrb[0].mxu0 %v7035
    %v7153 = vpop.f32.mrb[0].mxu0
    %v7154 = vadd.f32 0.0, %v7153
    %v7155 = vpop.f32.mrb[0].mxu0
    %v7156 = vadd.f32 0.0, %v7155
    %v7157 = vpop.f32.mrb[0].mxu0
    %v7158 = vpop.f32.mrb[0].mxu0
    %7159 = vdwg.mxu0
    %7160 = vmatprep.subr.bf16.mxu0 %v6977
    %7161 = vmatpush1.bf16.msra.mxu0 %v6976
    %7162 = vmatprep.subr.bf16.mxu0 %v6985
    %7163 = vmatpush1.bf16.msra.mxu0 %v6984
    %7164 = vmatprep.subr.bf16.mxu0 %v6993
    %7165 = vmatpush1.bf16.msra.mxu0 %v6992
    %7166 = vmatprep.subr.bf16.mxu0 %v7001
    %7167 = vmatpush1.bf16.msra.mxu0 %v7000
    %7168 = vmatprep.subr.bf16.mxu0 0
    %7169 = vmatpush1.bf16.msra.mxu0 0
    %7170 = vmatprep.subr.bf16.mxu0 0
    %7171 = vmatpush1.bf16.msra.mxu0 0
    %7172 = vmatprep.subr.bf16.mxu0 0
    %7173 = vmatpush1.bf16.msra.mxu0 0
    %7174 = vmatprep.subr.bf16.mxu0 0
    %7175 = vmatpush1.bf16.msra.mxu0 0
    %7176 = vmatprep.subr.bf16.mxu0 0
    %7177 = vmatpush1.bf16.msra.mxu0 0
    %7178 = vmatprep.subr.bf16.mxu0 0
    %7179 = vmatpush1.bf16.msra.mxu0 0
    %7180 = vmatprep.subr.bf16.mxu0 0
    %7181 = vmatpush1.bf16.msra.mxu0 0
    %7182 = vmatprep.subr.bf16.mxu0 0
    %7183 = vmatpush1.bf16.msra.mxu0 0
    %7184 = vmatprep.subr.bf16.mxu0 0
    %7185 = vmatpush1.bf16.msra.mxu0 0
    %7186 = vmatprep.subr.bf16.mxu0 0
    %7187 = vmatpush1.bf16.msra.mxu0 0
    %7188 = vmatprep.subr.bf16.mxu0 0
    %7189 = vmatpush1.bf16.msra.mxu0 0
    %7190 = vmatprep.subr.bf16.mxu0 0
    %7191 = vmatpush1.bf16.msra.mxu0 0
    %7192 = vmatprep.mubr.bf16.mxu0 0
    %7193 = vmatmul.mubr.bf16.gmra.mrb[0].mxu0 %v7035
    %v7194 = vpop.f32.mrb[0].mxu0
    %v7195 = vadd.f32 0.0, %v7194
    %v7196 = vpop.f32.mrb[0].mxu0
    %v7197 = vadd.f32 0.0, %v7196
    %v7198 = vpop.f32.mrb[0].mxu0
    %v7199 = vpop.f32.mrb[0].mxu0
    %7200 = vdwg.mxu0
    %v7201 = vadd.f32 %v6833, %v7072
    %v7202 = vadd.f32 %v6834, %v7074
    %v7203 = vadd.f32 %v6835, %v7113
    %v7204 = vadd.f32 %v6836, %v7115
    %v7205 = vadd.f32 %v6837, %v7154
    %v7206 = vadd.f32 %v6838, %v7156
    %v7207 = vadd.f32 %v6839, %v7195
    %v7208 = vadd.f32 %v6840, %v7197
    %v7209 = vld [vmem:[%s2974] sm:$0xff]
    %v7210 = vld [vmem:[%s2974 + $0x8] sm:$0xff]
    %v7211 = vld [vmem:[%s2974 + $0x10] sm:$0xff]
    %v7212 = vld [vmem:[%s2974 + $0x18] sm:$0xff]
    %v7213 = vld [vmem:[%s2974 + $0x20] sm:$0xff]
    %v7214 = vld [vmem:[%s2974 + $0x28] sm:$0xff]
    %v7215 = vld [vmem:[%s2974 + $0x30] sm:$0xff]
    %v7216 = vld [vmem:[%s2974 + $0x38] sm:$0xff]
    %v7217 = vld [vmem:[%s2974 + $0x40] sm:$0xff]
    %v7218 = vld [vmem:[%s2974 + $0x48] sm:$0xff]
    %v7219 = vld [vmem:[%s2974 + $0x50] sm:$0xff]
    %v7220 = vld [vmem:[%s2974 + $0x58] sm:$0xff]
    %v7221 = vld [vmem:[%s2974 + $0x60] sm:$0xff]
    %v7222 = vld [vmem:[%s2974 + $0x68] sm:$0xff]
    %v7223 = vld [vmem:[%s2974 + $0x70] sm:$0xff]
    %v7224 = vld [vmem:[%s2974 + $0x78] sm:$0xff]
    %v7225 = vld [vmem:[%s2974 + $0x80] sm:$0xff]
    %v7226 = vld [vmem:[%s2974 + $0x88] sm:$0xff]
    %v7227 = vld [vmem:[%s2974 + $0x90] sm:$0xff]
    %v7228 = vld [vmem:[%s2974 + $0x98] sm:$0xff]
    %v7229 = vld [vmem:[%s2974 + $0xa0] sm:$0xff]
    %v7230 = vld [vmem:[%s2974 + $0xa8] sm:$0xff]
    %v7231 = vld [vmem:[%s2974 + $0xb0] sm:$0xff]
    %v7232 = vld [vmem:[%s2974 + $0xb8] sm:$0xff]
    %v7233 = vld [vmem:[%s2974 + $0xc0] sm:$0xff]
    %v7234 = vld [vmem:[%s2974 + $0xc8] sm:$0xff]
    %v7235 = vld [vmem:[%s2974 + $0xd0] sm:$0xff]
    %v7236 = vld [vmem:[%s2974 + $0xd8] sm:$0xff]
    %v7237 = vld [vmem:[%s2974 + $0xe0] sm:$0xff]
    %v7238 = vld [vmem:[%s2974 + $0xe8] sm:$0xff]
    %v7239 = vld [vmem:[%s2974 + $0xf0] sm:$0xff]
    %v7240 = vld [vmem:[%s2974 + $0xf8] sm:$0xff]
    %v7241 = vrot.slane %v5449, 2
    %v7274 = vunpack.c.l.b16 %v7209
    %v7275 = vunpack.c.h.b16 %v7209
    %v7276 = vunpack.c.l.b16 %v7210
    %v7277 = vunpack.c.h.b16 %v7210
    %v7278 = vunpack.c.l.b16 %v7211
    %v7279 = vunpack.c.h.b16 %v7211
    %v7280 = vunpack.c.l.b16 %v7212
    %v7281 = vunpack.c.h.b16 %v7212
    %v7282 = vunpack.c.l.b16 %v7213
    %v7283 = vunpack.c.h.b16 %v7213
    %v7284 = vunpack.c.l.b16 %v7214
    %v7285 = vunpack.c.h.b16 %v7214
    %v7286 = vunpack.c.l.b16 %v7215
    %v7287 = vunpack.c.h.b16 %v7215
    %v7288 = vunpack.c.l.b16 %v7216
    %v7289 = vunpack.c.h.b16 %v7216
    %v7290 = vunpack.c.l.b16 %v7217
    %v7291 = vunpack.c.h.b16 %v7217
    %v7292 = vunpack.c.l.b16 %v7218
    %v7293 = vunpack.c.h.b16 %v7218
    %v7294 = vunpack.c.l.b16 %v7219
    %v7295 = vunpack.c.h.b16 %v7219
    %v7296 = vunpack.c.l.b16 %v7220
    %v7297 = vunpack.c.h.b16 %v7220
    %v7298 = vunpack.c.l.b16 %v7221
    %v7299 = vunpack.c.h.b16 %v7221
    %v7300 = vunpack.c.l.b16 %v7222
    %v7301 = vunpack.c.h.b16 %v7222
    %v7302 = vunpack.c.l.b16 %v7223
    %v7303 = vunpack.c.h.b16 %v7223
    %v7304 = vunpack.c.l.b16 %v7224
    %v7305 = vunpack.c.h.b16 %v7224
    %v7306 = vunpack.c.l.b16 %v7225
    %v7307 = vunpack.c.h.b16 %v7225
    %v7308 = vunpack.c.l.b16 %v7226
    %v7309 = vunpack.c.h.b16 %v7226
    %v7310 = vunpack.c.l.b16 %v7227
    %v7311 = vunpack.c.h.b16 %v7227
    %v7312 = vunpack.c.l.b16 %v7228
    %v7313 = vunpack.c.h.b16 %v7228
    %v7314 = vunpack.c.l.b16 %v7229
    %v7315 = vunpack.c.h.b16 %v7229
    %v7316 = vunpack.c.l.b16 %v7230
    %v7317 = vunpack.c.h.b16 %v7230
    %v7318 = vunpack.c.l.b16 %v7231
    %v7319 = vunpack.c.h.b16 %v7231
    %v7320 = vunpack.c.l.b16 %v7232
    %v7321 = vunpack.c.h.b16 %v7232
    %v7322 = vunpack.c.l.b16 %v7233
    %v7323 = vunpack.c.h.b16 %v7233
    %v7324 = vunpack.c.l.b16 %v7234
    %v7325 = vunpack.c.h.b16 %v7234
    %v7326 = vunpack.c.l.b16 %v7235
    %v7327 = vunpack.c.h.b16 %v7235
    %v7328 = vunpack.c.l.b16 %v7236
    %v7329 = vunpack.c.h.b16 %v7236
    %v7330 = vunpack.c.l.b16 %v7237
    %v7331 = vunpack.c.h.b16 %v7237
    %v7332 = vunpack.c.l.b16 %v7238
    %v7333 = vunpack.c.h.b16 %v7238
    %v7334 = vunpack.c.l.b16 %v7239
    %v7335 = vunpack.c.h.b16 %v7239
    %v7336 = vunpack.c.l.b16 %v7240
    %v7337 = vunpack.c.h.b16 %v7240
    %v7338 = vpack.c.b16 %v7282, %v7274
    %v7339 = vpack.c.b16 %v7283, %v7275
    %v7340 = vpack.c.b16 %v7284, %v7276
    %v7341 = vpack.c.b16 %v7285, %v7277
    %v7342 = vpack.c.b16 %v7286, %v7278
    %v7343 = vpack.c.b16 %v7287, %v7279
    %v7344 = vpack.c.b16 %v7288, %v7280
    %v7345 = vpack.c.b16 %v7289, %v7281
    %v7346 = vpack.c.b16 %v7298, %v7290
    %v7347 = vpack.c.b16 %v7299, %v7291
    %v7348 = vpack.c.b16 %v7300, %v7292
    %v7349 = vpack.c.b16 %v7301, %v7293
    %v7350 = vpack.c.b16 %v7302, %v7294
    %v7351 = vpack.c.b16 %v7303, %v7295
    %v7352 = vpack.c.b16 %v7304, %v7296
    %v7353 = vpack.c.b16 %v7305, %v7297
    %v7354 = vpack.c.b16 %v7314, %v7306
    %v7355 = vpack.c.b16 %v7315, %v7307
    %v7356 = vpack.c.b16 %v7316, %v7308
    %v7357 = vpack.c.b16 %v7317, %v7309
    %v7358 = vpack.c.b16 %v7318, %v7310
    %v7359 = vpack.c.b16 %v7319, %v7311
    %v7360 = vpack.c.b16 %v7320, %v7312
    %v7361 = vpack.c.b16 %v7321, %v7313
    %v7362 = vpack.c.b16 %v7330, %v7322
    %v7363 = vpack.c.b16 %v7331, %v7323
    %v7364 = vpack.c.b16 %v7332, %v7324
    %v7365 = vpack.c.b16 %v7333, %v7325
    %v7366 = vpack.c.b16 %v7334, %v7326
    %v7367 = vpack.c.b16 %v7335, %v7327
    %v7368 = vpack.c.b16 %v7336, %v7328
    %v7369 = vpack.c.b16 %v7337, %v7329
    %v7403 = vsel %vm125, %v7241, 0
    %7405 = vmatprep.subr.bf16.mxu0 %v7339
    %7406 = vmatpush1.bf16.msra.mxu0 %v7338
    %7407 = vmatprep.subr.bf16.mxu0 %v7347
    %7408 = vmatpush1.bf16.msra.mxu0 %v7346
    %7409 = vmatprep.subr.bf16.mxu0 %v7355
    %7410 = vmatpush1.bf16.msra.mxu0 %v7354
    %7411 = vmatprep.subr.bf16.mxu0 %v7363
    %7412 = vmatpush1.bf16.msra.mxu0 %v7362
    %7413 = vmatprep.subr.bf16.mxu0 0
    %7414 = vmatpush1.bf16.msra.mxu0 0
    %7415 = vmatprep.subr.bf16.mxu0 0
    %7416 = vmatpush1.bf16.msra.mxu0 0
    %7417 = vmatprep.subr.bf16.mxu0 0
    %7418 = vmatpush1.bf16.msra.mxu0 0
    %7419 = vmatprep.subr.bf16.mxu0 0
    %7420 = vmatpush1.bf16.msra.mxu0 0
    %7421 = vmatprep.subr.bf16.mxu0 0
    %7422 = vmatpush1.bf16.msra.mxu0 0
    %7423 = vmatprep.subr.bf16.mxu0 0
    %7424 = vmatpush1.bf16.msra.mxu0 0
    %7425 = vmatprep.subr.bf16.mxu0 0
    %7426 = vmatpush1.bf16.msra.mxu0 0
    %7427 = vmatprep.subr.bf16.mxu0 0
    %7428 = vmatpush1.bf16.msra.mxu0 0
    %7429 = vmatprep.subr.bf16.mxu0 0
    %7430 = vmatpush1.bf16.msra.mxu0 0
    %7431 = vmatprep.subr.bf16.mxu0 0
    %7432 = vmatpush1.bf16.msra.mxu0 0
    %7433 = vmatprep.subr.bf16.mxu0 0
    %7434 = vmatpush1.bf16.msra.mxu0 0
    %7435 = vmatprep.subr.bf16.mxu0 0
    %7436 = vmatpush1.bf16.msra.mxu0 0
    %7437 = vmatprep.mubr.bf16.mxu0 0
    %7438 = vmatmul.mubr.bf16.gmra.mrb[0].mxu0 %v7403
    %v7439 = vpop.f32.mrb[0].mxu0
    %v7440 = vadd.f32 0.0, %v7439
    %v7441 = vpop.f32.mrb[0].mxu0
    %v7442 = vadd.f32 0.0, %v7441
    %v7443 = vpop.f32.mrb[0].mxu0
    %v7444 = vpop.f32.mrb[0].mxu0
    %7445 = vdwg.mxu0
    %7446 = vmatprep.subr.bf16.mxu0 %v7341
    %7447 = vmatpush1.bf16.msra.mxu0 %v7340
    %7448 = vmatprep.subr.bf16.mxu0 %v7349
    %7449 = vmatpush1.bf16.msra.mxu0 %v7348
    %7450 = vmatprep.subr.bf16.mxu0 %v7357
    %7451 = vmatpush1.bf16.msra.mxu0 %v7356
    %7452 = vmatprep.subr.bf16.mxu0 %v7365
    %7453 = vmatpush1.bf16.msra.mxu0 %v7364
    %7454 = vmatprep.subr.bf16.mxu0 0
    %7455 = vmatpush1.bf16.msra.mxu0 0
    %7456 = vmatprep.subr.bf16.mxu0 0
    %7457 = vmatpush1.bf16.msra.mxu0 0
    %7458 = vmatprep.subr.bf16.mxu0 0
    %7459 = vmatpush1.bf16.msra.mxu0 0
    %7460 = vmatprep.subr.bf16.mxu0 0
    %7461 = vmatpush1.bf16.msra.mxu0 0
    %7462 = vmatprep.subr.bf16.mxu0 0
    %7463 = vmatpush1.bf16.msra.mxu0 0
    %7464 = vmatprep.subr.bf16.mxu0 0
    %7465 = vmatpush1.bf16.msra.mxu0 0
    %7466 = vmatprep.subr.bf16.mxu0 0
    %7467 = vmatpush1.bf16.msra.mxu0 0
    %7468 = vmatprep.subr.bf16.mxu0 0
    %7469 = vmatpush1.bf16.msra.mxu0 0
    %7470 = vmatprep.subr.bf16.mxu0 0
    %7471 = vmatpush1.bf16.msra.mxu0 0
    %7472 = vmatprep.subr.bf16.mxu0 0
    %7473 = vmatpush1.bf16.msra.mxu0 0
    %7474 = vmatprep.subr.bf16.mxu0 0
    %7475 = vmatpush1.bf16.msra.mxu0 0
    %7476 = vmatprep.subr.bf16.mxu0 0
    %7477 = vmatpush1.bf16.msra.mxu0 0
    %7478 = vmatprep.mubr.bf16.mxu0 0
    %7479 = vmatmul.mubr.bf16.gmra.mrb[0].mxu0 %v7403
    %v7480 = vpop.f32.mrb[0].mxu0
    %v7481 = vadd.f32 0.0, %v7480
    %v7482 = vpop.f32.mrb[0].mxu0
    %v7483 = vadd.f32 0.0, %v7482
    %v7484 = vpop.f32.mrb[0].mxu0
    %v7485 = vpop.f32.mrb[0].mxu0
    %7486 = vdwg.mxu0
    %7487 = vmatprep.subr.bf16.mxu0 %v7343
    %7488 = vmatpush1.bf16.msra.mxu0 %v7342
    %7489 = vmatprep.subr.bf16.mxu0 %v7351
    %7490 = vmatpush1.bf16.msra.mxu0 %v7350
    %7491 = vmatprep.subr.bf16.mxu0 %v7359
    %7492 = vmatpush1.bf16.msra.mxu0 %v7358
    %7493 = vmatprep.subr.bf16.mxu0 %v7367
    %7494 = vmatpush1.bf16.msra.mxu0 %v7366
    %7495 = vmatprep.subr.bf16.mxu0 0
    %7496 = vmatpush1.bf16.msra.mxu0 0
    %7497 = vmatprep.subr.bf16.mxu0 0
    %7498 = vmatpush1.bf16.msra.mxu0 0
    %7499 = vmatprep.subr.bf16.mxu0 0
    %7500 = vmatpush1.bf16.msra.mxu0 0
    %7501 = vmatprep.subr.bf16.mxu0 0
    %7502 = vmatpush1.bf16.msra.mxu0 0
    %7503 = vmatprep.subr.bf16.mxu0 0
    %7504 = vmatpush1.bf16.msra.mxu0 0
    %7505 = vmatprep.subr.bf16.mxu0 0
    %7506 = vmatpush1.bf16.msra.mxu0 0
    %7507 = vmatprep.subr.bf16.mxu0 0
    %7508 = vmatpush1.bf16.msra.mxu0 0
    %7509 = vmatprep.subr.bf16.mxu0 0
    %7510 = vmatpush1.bf16.msra.mxu0 0
    %7511 = vmatprep.subr.bf16.mxu0 0
    %7512 = vmatpush1.bf16.msra.mxu0 0
    %7513 = vmatprep.subr.bf16.mxu0 0
    %7514 = vmatpush1.bf16.msra.mxu0 0
    %7515 = vmatprep.subr.bf16.mxu0 0
    %7516 = vmatpush1.bf16.msra.mxu0 0
    %7517 = vmatprep.subr.bf16.mxu0 0
    %7518 = vmatpush1.bf16.msra.mxu0 0
    %7519 = vmatprep.mubr.bf16.mxu0 0
    %7520 = vmatmul.mubr.bf16.gmra.mrb[0].mxu0 %v7403
    %v7521 = vpop.f32.mrb[0].mxu0
    %v7522 = vadd.f32 0.0, %v7521
    %v7523 = vpop.f32.mrb[0].mxu0
    %v7524 = vadd.f32 0.0, %v7523
    %v7525 = vpop.f32.mrb[0].mxu0
    %v7526 = vpop.f32.mrb[0].mxu0
    %7527 = vdwg.mxu0
    %7528 = vmatprep.subr.bf16.mxu0 %v7345
    %7529 = vmatpush1.bf16.msra.mxu0 %v7344
    %7530 = vmatprep.subr.bf16.mxu0 %v7353
    %7531 = vmatpush1.bf16.msra.mxu0 %v7352
    %7532 = vmatprep.subr.bf16.mxu0 %v7361
    %7533 = vmatpush1.bf16.msra.mxu0 %v7360
    %7534 = vmatprep.subr.bf16.mxu0 %v7369
    %7535 = vmatpush1.bf16.msra.mxu0 %v7368
    %7536 = vmatprep.subr.bf16.mxu0 0
    %7537 = vmatpush1.bf16.msra.mxu0 0
    %7538 = vmatprep.subr.bf16.mxu0 0
    %7539 = vmatpush1.bf16.msra.mxu0 0
    %7540 = vmatprep.subr.bf16.mxu0 0
    %7541 = vmatpush1.bf16.msra.mxu0 0
    %7542 = vmatprep.subr.bf16.mxu0 0
    %7543 = vmatpush1.bf16.msra.mxu0 0
    %7544 = vmatprep.subr.bf16.mxu0 0
    %7545 = vmatpush1.bf16.msra.mxu0 0
    %7546 = vmatprep.subr.bf16.mxu0 0
    %7547 = vmatpush1.bf16.msra.mxu0 0
    %7548 = vmatprep.subr.bf16.mxu0 0
    %7549 = vmatpush1.bf16.msra.mxu0 0
    %7550 = vmatprep.subr.bf16.mxu0 0
    %7551 = vmatpush1.bf16.msra.mxu0 0
    %7552 = vmatprep.subr.bf16.mxu0 0
    %7553 = vmatpush1.bf16.msra.mxu0 0
    %7554 = vmatprep.subr.bf16.mxu0 0
    %7555 = vmatpush1.bf16.msra.mxu0 0
    %7556 = vmatprep.subr.bf16.mxu0 0
    %7557 = vmatpush1.bf16.msra.mxu0 0
    %7558 = vmatprep.subr.bf16.mxu0 0
    %7559 = vmatpush1.bf16.msra.mxu0 0
    %7560 = vmatprep.mubr.bf16.mxu0 0
    %7561 = vmatmul.mubr.bf16.gmra.mrb[0].mxu0 %v7403
    %v7562 = vpop.f32.mrb[0].mxu0
    %v7563 = vadd.f32 0.0, %v7562
    %v7564 = vpop.f32.mrb[0].mxu0
    %v7565 = vadd.f32 0.0, %v7564
    %v7566 = vpop.f32.mrb[0].mxu0
    %v7567 = vpop.f32.mrb[0].mxu0
    %7568 = vdwg.mxu0
    %v7569 = vadd.f32 %v7201, %v7440
    %v7570 = vadd.f32 %v7202, %v7442
    %v7571 = vadd.f32 %v7203, %v7481
    %v7572 = vadd.f32 %v7204, %v7483
    %v7573 = vadd.f32 %v7205, %v7522
    %v7574 = vadd.f32 %v7206, %v7524
    %v7575 = vadd.f32 %v7207, %v7563
    %v7576 = vadd.f32 %v7208, %v7565
    %v7577 = vld [vmem:[%s3343] sm:$0xff]
    %v7578 = vld [vmem:[%s3343 + $0x8] sm:$0xff]
    %v7579 = vld [vmem:[%s3343 + $0x10] sm:$0xff]
    %v7580 = vld [vmem:[%s3343 + $0x18] sm:$0xff]
    %v7581 = vld [vmem:[%s3343 + $0x20] sm:$0xff]
    %v7582 = vld [vmem:[%s3343 + $0x28] sm:$0xff]
    %v7583 = vld [vmem:[%s3343 + $0x30] sm:$0xff]
    %v7584 = vld [vmem:[%s3343 + $0x38] sm:$0xff]
    %v7585 = vld [vmem:[%s3343 + $0x40] sm:$0xff]
    %v7586 = vld [vmem:[%s3343 + $0x48] sm:$0xff]
    %v7587 = vld [vmem:[%s3343 + $0x50] sm:$0xff]
    %v7588 = vld [vmem:[%s3343 + $0x58] sm:$0xff]
    %v7589 = vld [vmem:[%s3343 + $0x60] sm:$0xff]
    %v7590 = vld [vmem:[%s3343 + $0x68] sm:$0xff]
    %v7591 = vld [vmem:[%s3343 + $0x70] sm:$0xff]
    %v7592 = vld [vmem:[%s3343 + $0x78] sm:$0xff]
    %v7593 = vld [vmem:[%s3343 + $0x80] sm:$0xff]
    %v7594 = vld [vmem:[%s3343 + $0x88] sm:$0xff]
    %v7595 = vld [vmem:[%s3343 + $0x90] sm:$0xff]
    %v7596 = vld [vmem:[%s3343 + $0x98] sm:$0xff]
    %v7597 = vld [vmem:[%s3343 + $0xa0] sm:$0xff]
    %v7598 = vld [vmem:[%s3343 + $0xa8] sm:$0xff]
    %v7599 = vld [vmem:[%s3343 + $0xb0] sm:$0xff]
    %v7600 = vld [vmem:[%s3343 + $0xb8] sm:$0xff]
    %v7601 = vld [vmem:[%s3343 + $0xc0] sm:$0xff]
    %v7602 = vld [vmem:[%s3343 + $0xc8] sm:$0xff]
    %v7603 = vld [vmem:[%s3343 + $0xd0] sm:$0xff]
    %v7604 = vld [vmem:[%s3343 + $0xd8] sm:$0xff]
    %v7605 = vld [vmem:[%s3343 + $0xe0] sm:$0xff]
    %v7606 = vld [vmem:[%s3343 + $0xe8] sm:$0xff]
    %v7607 = vld [vmem:[%s3343 + $0xf0] sm:$0xff]
    %v7608 = vld [vmem:[%s3343 + $0xf8] sm:$0xff]
    %v7609 = vrot.slane %v5383, 3
    %v7642 = vunpack.c.l.b16 %v7577
    %v7643 = vunpack.c.h.b16 %v7577
    %v7644 = vunpack.c.l.b16 %v7578
    %v7645 = vunpack.c.h.b16 %v7578
    %v7646 = vunpack.c.l.b16 %v7579
    %v7647 = vunpack.c.h.b16 %v7579
    %v7648 = vunpack.c.l.b16 %v7580
    %v7649 = vunpack.c.h.b16 %v7580
    %v7650 = vunpack.c.l.b16 %v7581
    %v7651 = vunpack.c.h.b16 %v7581
    %v7652 = vunpack.c.l.b16 %v7582
    %v7653 = vunpack.c.h.b16 %v7582
    %v7654 = vunpack.c.l.b16 %v7583
    %v7655 = vunpack.c.h.b16 %v7583
    %v7656 = vunpack.c.l.b16 %v7584
    %v7657 = vunpack.c.h.b16 %v7584
    %v7658 = vunpack.c.l.b16 %v7585
    %v7659 = vunpack.c.h.b16 %v7585
    %v7660 = vunpack.c.l.b16 %v7586
    %v7661 = vunpack.c.h.b16 %v7586
    %v7662 = vunpack.c.l.b16 %v7587
    %v7663 = vunpack.c.h.b16 %v7587
    %v7664 = vunpack.c.l.b16 %v7588
    %v7665 = vunpack.c.h.b16 %v7588
    %v7666 = vunpack.c.l.b16 %v7589
    %v7667 = vunpack.c.h.b16 %v7589
    %v7668 = vunpack.c.l.b16 %v7590
    %v7669 = vunpack.c.h.b16 %v7590
    %v7670 = vunpack.c.l.b16 %v7591
    %v7671 = vunpack.c.h.b16 %v7591
    %v7672 = vunpack.c.l.b16 %v7592
    %v7673 = vunpack.c.h.b16 %v7592
    %v7674 = vunpack.c.l.b16 %v7593
    %v7675 = vunpack.c.h.b16 %v7593
    %v7676 = vunpack.c.l.b16 %v7594
    %v7677 = vunpack.c.h.b16 %v7594
    %v7678 = vunpack.c.l.b16 %v7595
    %v7679 = vunpack.c.h.b16 %v7595
    %v7680 = vunpack.c.l.b16 %v7596
    %v7681 = vunpack.c.h.b16 %v7596
    %v7682 = vunpack.c.l.b16 %v7597
    %v7683 = vunpack.c.h.b16 %v7597
    %v7684 = vunpack.c.l.b16 %v7598
    %v7685 = vunpack.c.h.b16 %v7598
    %v7686 = vunpack.c.l.b16 %v7599
    %v7687 = vunpack.c.h.b16 %v7599
    %v7688 = vunpack.c.l.b16 %v7600
    %v7689 = vunpack.c.h.b16 %v7600
    %v7690 = vunpack.c.l.b16 %v7601
    %v7691 = vunpack.c.h.b16 %v7601
    %v7692 = vunpack.c.l.b16 %v7602
    %v7693 = vunpack.c.h.b16 %v7602
    %v7694 = vunpack.c.l.b16 %v7603
    %v7695 = vunpack.c.h.b16 %v7603
    %v7696 = vunpack.c.l.b16 %v7604
    %v7697 = vunpack.c.h.b16 %v7604
    %v7698 = vunpack.c.l.b16 %v7605
    %v7699 = vunpack.c.h.b16 %v7605
    %v7700 = vunpack.c.l.b16 %v7606
    %v7701 = vunpack.c.h.b16 %v7606
    %v7702 = vunpack.c.l.b16 %v7607
    %v7703 = vunpack.c.h.b16 %v7607
    %v7704 = vunpack.c.l.b16 %v7608
    %v7705 = vunpack.c.h.b16 %v7608
    %v7706 = vpack.c.b16 %v7650, %v7642
    %v7707 = vpack.c.b16 %v7651, %v7643
    %v7708 = vpack.c.b16 %v7652, %v7644
    %v7709 = vpack.c.b16 %v7653, %v7645
    %v7710 = vpack.c.b16 %v7654, %v7646
    %v7711 = vpack.c.b16 %v7655, %v7647
    %v7712 = vpack.c.b16 %v7656, %v7648
    %v7713 = vpack.c.b16 %v7657, %v7649
    %v7714 = vpack.c.b16 %v7666, %v7658
    %v7715 = vpack.c.b16 %v7667, %v7659
    %v7716 = vpack.c.b16 %v7668, %v7660
    %v7717 = vpack.c.b16 %v7669, %v7661
    %v7718 = vpack.c.b16 %v7670, %v7662
    %v7719 = vpack.c.b16 %v7671, %v7663
    %v7720 = vpack.c.b16 %v7672, %v7664
    %v7721 = vpack.c.b16 %v7673, %v7665
    %v7722 = vpack.c.b16 %v7682, %v7674
    %v7723 = vpack.c.b16 %v7683, %v7675
    %v7724 = vpack.c.b16 %v7684, %v7676
    %v7725 = vpack.c.b16 %v7685, %v7677
    %v7726 = vpack.c.b16 %v7686, %v7678
    %v7727 = vpack.c.b16 %v7687, %v7679
    %v7728 = vpack.c.b16 %v7688, %v7680
    %v7729 = vpack.c.b16 %v7689, %v7681
    %v7730 = vpack.c.b16 %v7698, %v7690
    %v7731 = vpack.c.b16 %v7699, %v7691
    %v7732 = vpack.c.b16 %v7700, %v7692
    %v7733 = vpack.c.b16 %v7701, %v7693
    %v7734 = vpack.c.b16 %v7702, %v7694
    %v7735 = vpack.c.b16 %v7703, %v7695
    %v7736 = vpack.c.b16 %v7704, %v7696
    %v7737 = vpack.c.b16 %v7705, %v7697
    %v7771 = vsel %vm125, %v7609, 0
    %7773 = vmatprep.subr.bf16.mxu0 %v7707
    %7774 = vmatpush1.bf16.msra.mxu0 %v7706
    %7775 = vmatprep.subr.bf16.mxu0 %v7715
    %7776 = vmatpush1.bf16.msra.mxu0 %v7714
    %7777 = vmatprep.subr.bf16.mxu0 %v7723
    %7778 = vmatpush1.bf16.msra.mxu0 %v7722
    %7779 = vmatprep.subr.bf16.mxu0 %v7731
    %7780 = vmatpush1.bf16.msra.mxu0 %v7730
    %7781 = vmatprep.subr.bf16.mxu0 0
    %7782 = vmatpush1.bf16.msra.mxu0 0
    %7783 = vmatprep.subr.bf16.mxu0 0
    %7784 = vmatpush1.bf16.msra.mxu0 0
    %7785 = vmatprep.subr.bf16.mxu0 0
    %7786 = vmatpush1.bf16.msra.mxu0 0
    %7787 = vmatprep.subr.bf16.mxu0 0
    %7788 = vmatpush1.bf16.msra.mxu0 0
    %7789 = vmatprep.subr.bf16.mxu0 0
    %7790 = vmatpush1.bf16.msra.mxu0 0
    %7791 = vmatprep.subr.bf16.mxu0 0
    %7792 = vmatpush1.bf16.msra.mxu0 0
    %7793 = vmatprep.subr.bf16.mxu0 0
    %7794 = vmatpush1.bf16.msra.mxu0 0
    %7795 = vmatprep.subr.bf16.mxu0 0
    %7796 = vmatpush1.bf16.msra.mxu0 0
    %7797 = vmatprep.subr.bf16.mxu0 0
    %7798 = vmatpush1.bf16.msra.mxu0 0
    %7799 = vmatprep.subr.bf16.mxu0 0
    %7800 = vmatpush1.bf16.msra.mxu0 0
    %7801 = vmatprep.subr.bf16.mxu0 0
    %7802 = vmatpush1.bf16.msra.mxu0 0
    %7803 = vmatprep.subr.bf16.mxu0 0
    %7804 = vmatpush1.bf16.msra.mxu0 0
    %7805 = vmatprep.mubr.bf16.mxu0 0
    %7806 = vmatmul.mubr.bf16.gmra.mrb[0].mxu0 %v7771
    %v7807 = vpop.f32.mrb[0].mxu0
    %v7808 = vadd.f32 0.0, %v7807
    %v7809 = vpop.f32.mrb[0].mxu0
    %v7810 = vadd.f32 0.0, %v7809
    %v7811 = vpop.f32.mrb[0].mxu0
    %v7812 = vpop.f32.mrb[0].mxu0
    %7813 = vdwg.mxu0
    %7814 = vmatprep.subr.bf16.mxu0 %v7709
    %7815 = vmatpush1.bf16.msra.mxu0 %v7708
    %7816 = vmatprep.subr.bf16.mxu0 %v7717
    %7817 = vmatpush1.bf16.msra.mxu0 %v7716
    %7818 = vmatprep.subr.bf16.mxu0 %v7725
    %7819 = vmatpush1.bf16.msra.mxu0 %v7724
    %7820 = vmatprep.subr.bf16.mxu0 %v7733
    %7821 = vmatpush1.bf16.msra.mxu0 %v7732
    %7822 = vmatprep.subr.bf16.mxu0 0
    %7823 = vmatpush1.bf16.msra.mxu0 0
    %7824 = vmatprep.subr.bf16.mxu0 0
    %7825 = vmatpush1.bf16.msra.mxu0 0
    %7826 = vmatprep.subr.bf16.mxu0 0
    %7827 = vmatpush1.bf16.msra.mxu0 0
    %7828 = vmatprep.subr.bf16.mxu0 0
    %7829 = vmatpush1.bf16.msra.mxu0 0
    %7830 = vmatprep.subr.bf16.mxu0 0
    %7831 = vmatpush1.bf16.msra.mxu0 0
    %7832 = vmatprep.subr.bf16.mxu0 0
    %7833 = vmatpush1.bf16.msra.mxu0 0
    %7834 = vmatprep.subr.bf16.mxu0 0
    %7835 = vmatpush1.bf16.msra.mxu0 0
    %7836 = vmatprep.subr.bf16.mxu0 0
    %7837 = vmatpush1.bf16.msra.mxu0 0
    %7838 = vmatprep.subr.bf16.mxu0 0
    %7839 = vmatpush1.bf16.msra.mxu0 0
    %7840 = vmatprep.subr.bf16.mxu0 0
    %7841 = vmatpush1.bf16.msra.mxu0 0
    %7842 = vmatprep.subr.bf16.mxu0 0
    %7843 = vmatpush1.bf16.msra.mxu0 0
    %7844 = vmatprep.subr.bf16.mxu0 0
    %7845 = vmatpush1.bf16.msra.mxu0 0
    %7846 = vmatprep.mubr.bf16.mxu0 0
    %7847 = vmatmul.mubr.bf16.gmra.mrb[0].mxu0 %v7771
    %v7848 = vpop.f32.mrb[0].mxu0
    %v7849 = vadd.f32 0.0, %v7848
    %v7850 = vpop.f32.mrb[0].mxu0
    %v7851 = vadd.f32 0.0, %v7850
    %v7852 = vpop.f32.mrb[0].mxu0
    %v7853 = vpop.f32.mrb[0].mxu0
    %7854 = vdwg.mxu0
    %7855 = vmatprep.subr.bf16.mxu0 %v7711
    %7856 = vmatpush1.bf16.msra.mxu0 %v7710
    %7857 = vmatprep.subr.bf16.mxu0 %v7719
    %7858 = vmatpush1.bf16.msra.mxu0 %v7718
    %7859 = vmatprep.subr.bf16.mxu0 %v7727
    %7860 = vmatpush1.bf16.msra.mxu0 %v7726
    %7861 = vmatprep.subr.bf16.mxu0 %v7735
    %7862 = vmatpush1.bf16.msra.mxu0 %v7734
    %7863 = vmatprep.subr.bf16.mxu0 0
    %7864 = vmatpush1.bf16.msra.mxu0 0
    %7865 = vmatprep.subr.bf16.mxu0 0
    %7866 = vmatpush1.bf16.msra.mxu0 0
    %7867 = vmatprep.subr.bf16.mxu0 0
    %7868 = vmatpush1.bf16.msra.mxu0 0
    %7869 = vmatprep.subr.bf16.mxu0 0
    %7870 = vmatpush1.bf16.msra.mxu0 0
    %7871 = vmatprep.subr.bf16.mxu0 0
    %7872 = vmatpush1.bf16.msra.mxu0 0
    %7873 = vmatprep.subr.bf16.mxu0 0
    %7874 = vmatpush1.bf16.msra.mxu0 0
    %7875 = vmatprep.subr.bf16.mxu0 0
    %7876 = vmatpush1.bf16.msra.mxu0 0
    %7877 = vmatprep.subr.bf16.mxu0 0
    %7878 = vmatpush1.bf16.msra.mxu0 0
    %7879 = vmatprep.subr.bf16.mxu0 0
    %7880 = vmatpush1.bf16.msra.mxu0 0
    %7881 = vmatprep.subr.bf16.mxu0 0
    %7882 = vmatpush1.bf16.msra.mxu0 0
    %7883 = vmatprep.subr.bf16.mxu0 0
    %7884 = vmatpush1.bf16.msra.mxu0 0
    %7885 = vmatprep.subr.bf16.mxu0 0
    %7886 = vmatpush1.bf16.msra.mxu0 0
    %7887 = vmatprep.mubr.bf16.mxu0 0
    %7888 = vmatmul.mubr.bf16.gmra.mrb[0].mxu0 %v7771
    %v7889 = vpop.f32.mrb[0].mxu0
    %v7890 = vadd.f32 0.0, %v7889
    %v7891 = vpop.f32.mrb[0].mxu0
    %v7892 = vadd.f32 0.0, %v7891
    %v7893 = vpop.f32.mrb[0].mxu0
    %v7894 = vpop.f32.mrb[0].mxu0
    %7895 = vdwg.mxu0
    %7896 = vmatprep.subr.bf16.mxu0 %v7713
    %7897 = vmatpush1.bf16.msra.mxu0 %v7712
    %7898 = vmatprep.subr.bf16.mxu0 %v7721
    %7899 = vmatpush1.bf16.msra.mxu0 %v7720
    %7900 = vmatprep.subr.bf16.mxu0 %v7729
    %7901 = vmatpush1.bf16.msra.mxu0 %v7728
    %7902 = vmatprep.subr.bf16.mxu0 %v7737
    %7903 = vmatpush1.bf16.msra.mxu0 %v7736
    %7904 = vmatprep.subr.bf16.mxu0 0
    %7905 = vmatpush1.bf16.msra.mxu0 0
    %7906 = vmatprep.subr.bf16.mxu0 0
    %7907 = vmatpush1.bf16.msra.mxu0 0
    %7908 = vmatprep.subr.bf16.mxu0 0
    %7909 = vmatpush1.bf16.msra.mxu0 0
    %7910 = vmatprep.subr.bf16.mxu0 0
    %7911 = vmatpush1.bf16.msra.mxu0 0
    %7912 = vmatprep.subr.bf16.mxu0 0
    %7913 = vmatpush1.bf16.msra.mxu0 0
    %7914 = vmatprep.subr.bf16.mxu0 0
    %7915 = vmatpush1.bf16.msra.mxu0 0
    %7916 = vmatprep.subr.bf16.mxu0 0
    %7917 = vmatpush1.bf16.msra.mxu0 0
    %7918 = vmatprep.subr.bf16.mxu0 0
    %7919 = vmatpush1.bf16.msra.mxu0 0
    %7920 = vmatprep.subr.bf16.mxu0 0
    %7921 = vmatpush1.bf16.msra.mxu0 0
    %7922 = vmatprep.subr.bf16.mxu0 0
    %7923 = vmatpush1.bf16.msra.mxu0 0
    %7924 = vmatprep.subr.bf16.mxu0 0
    %7925 = vmatpush1.bf16.msra.mxu0 0
    %7926 = vmatprep.subr.bf16.mxu0 0
    %7927 = vmatpush1.bf16.msra.mxu0 0
    %7928 = vmatprep.mubr.bf16.mxu0 0
    %7929 = vmatmul.mubr.bf16.gmra.mrb[0].mxu0 %v7771
    %v7930 = vpop.f32.mrb[0].mxu0
    %v7931 = vadd.f32 0.0, %v7930
    %v7932 = vpop.f32.mrb[0].mxu0
    %v7933 = vadd.f32 0.0, %v7932
    %v7934 = vpop.f32.mrb[0].mxu0
    %v7935 = vpop.f32.mrb[0].mxu0
    %7936 = vdwg.mxu0
    %v7937 = vadd.f32 %v7569, %v7808
    %v7938 = vadd.f32 %v7570, %v7810
    %v7939 = vadd.f32 %v7571, %v7849
    %v7940 = vadd.f32 %v7572, %v7851
    %v7941 = vadd.f32 %v7573, %v7890
    %v7942 = vadd.f32 %v7574, %v7892
    %v7943 = vadd.f32 %v7575, %v7931
    %v7944 = vadd.f32 %v7576, %v7933
    %v7945 = vld [vmem:[%s9] sm:$0xff]
    %v7947 = vlaneseq
    %v7948 = vshrl.u32 %v7947, 7
    %v7949 = vsub.s32 0, %v7948
    %v7950 = vrot.slane %v7945, %v7949
    %v7951 = vlaneseq
    %v7952 = vshrl.u32 %v7951, 7
    %v7953 = vsub.s32 1, %v7952
    %v7954 = vrot.slane %v7945, %v7953
    %v7955 = vlaneseq
    %v7956 = vshrl.u32 %v7955, 7
    %v7957 = vsub.s32 2, %v7956
    %v7958 = vrot.slane %v7945, %v7957
    %v7959 = vlaneseq
    %v7960 = vshrl.u32 %v7959, 7
    %v7961 = vsub.s32 3, %v7960
    %v7962 = vrot.slane %v7945, %v7961
    %v7963 = vlaneseq
    %v7964 = vshrl.u32 %v7963, 7
    %v7965 = vsub.s32 4, %v7964
    %v7966 = vrot.slane %v7945, %v7965
    %v7967 = vlaneseq
    %v7968 = vshrl.u32 %v7967, 7
    %v7969 = vsub.s32 5, %v7968
    %v7970 = vrot.slane %v7945, %v7969
    %v7971 = vlaneseq
    %v7972 = vshrl.u32 %v7971, 7
    %v7973 = vsub.s32 6, %v7972
    %v7974 = vrot.slane %v7945, %v7973
    %v7975 = vlaneseq
    %v7976 = vshrl.u32 %v7975, 7
    %v7977 = vsub.s32 7, %v7976
    %v7978 = vrot.slane %v7945, %v7977
    %v7987 = vadd.f32 %v7937, %v7950
    %v7988 = vadd.f32 %v7938, %v7954
    %v7989 = vadd.f32 %v7939, %v7958
    %v7990 = vadd.f32 %v7940, %v7962
    %v7991 = vadd.f32 %v7941, %v7966
    %v7992 = vadd.f32 %v7942, %v7970
    %v7993 = vadd.f32 %v7943, %v7974
    %v7994 = vadd.f32 %v7944, %v7978
    %v7995 = vmax.f32 %v7987, 0.0
    %v7996 = vmax.f32 %v7988, 0.0
    %v7997 = vmax.f32 %v7989, 0.0
    %v7998 = vmax.f32 %v7990, 0.0
    %v7999 = vmax.f32 %v7991, 0.0
    %v8000 = vmax.f32 %v7992, 0.0
    %v8001 = vmax.f32 %v7993, 0.0
    %v8002 = vmax.f32 %v7994, 0.0
    %v8003 = vpack.c.bf16 %v7995, %v7995
    %v8004 = vpack.c.bf16 %v7996, %v7996
    %v8005 = vpack.c.bf16 %v7997, %v7997
    %v8006 = vpack.c.bf16 %v7998, %v7998
    %v8007 = vpack.c.bf16 %v7999, %v7999
    %v8008 = vpack.c.bf16 %v8000, %v8000
    %v8009 = vpack.c.bf16 %v8001, %v8001
    %v8010 = vpack.c.bf16 %v8002, %v8002
    %v8011 = vld [vmem:[#allocation12] sm:$0xf]
    %v8012 = vld [vmem:[#allocation12 + $0x4] sm:$0xf]
    %v8013 = vld [vmem:[#allocation12 + $0x8] sm:$0xf]
    %v8014 = vld [vmem:[#allocation12 + $0xc] sm:$0xf]
    %v8015 = vld [vmem:[#allocation12 + $0x10] sm:$0xf]
    %v8016 = vld [vmem:[#allocation12 + $0x14] sm:$0xf]
    %v8017 = vld [vmem:[#allocation12 + $0x18] sm:$0xf]
    %v8018 = vld [vmem:[#allocation12 + $0x1c] sm:$0xf]
    %v8019 = vld [vmem:[#allocation12 + $0x20] sm:$0xf]
    %v8020 = vld [vmem:[#allocation12 + $0x24] sm:$0xf]
    %v8021 = vld [vmem:[#allocation12 + $0x28] sm:$0xf]
    %v8022 = vld [vmem:[#allocation12 + $0x2c] sm:$0xf]
    %v8023 = vld [vmem:[#allocation12 + $0x30] sm:$0xf]
    %v8024 = vld [vmem:[#allocation12 + $0x34] sm:$0xf]
    %v8025 = vld [vmem:[#allocation12 + $0x38] sm:$0xf]
    %v8026 = vld [vmem:[#allocation12 + $0x3c] sm:$0xf]
    %v8027 = vld [vmem:[#allocation12 + $0x40] sm:$0xf]
    %v8028 = vld [vmem:[#allocation12 + $0x44] sm:$0xf]
    %v8029 = vld [vmem:[#allocation12 + $0x48] sm:$0xf]
    %v8030 = vld [vmem:[#allocation12 + $0x4c] sm:$0xf]
    %v8031 = vld [vmem:[#allocation12 + $0x50] sm:$0xf]
    %v8032 = vld [vmem:[#allocation12 + $0x54] sm:$0xf]
    %v8033 = vld [vmem:[#allocation12 + $0x58] sm:$0xf]
    %v8034 = vld [vmem:[#allocation12 + $0x5c] sm:$0xf]
    %v8035 = vld [vmem:[#allocation12 + $0x60] sm:$0xf]
    %v8036 = vld [vmem:[#allocation12 + $0x64] sm:$0xf]
    %v8037 = vld [vmem:[#allocation12 + $0x68] sm:$0xf]
    %v8038 = vld [vmem:[#allocation12 + $0x6c] sm:$0xf]
    %v8039 = vld [vmem:[#allocation12 + $0x70] sm:$0xf]
    %v8040 = vld [vmem:[#allocation12 + $0x74] sm:$0xf]
    %v8041 = vld [vmem:[#allocation12 + $0x78] sm:$0xf]
    %v8042 = vld [vmem:[#allocation12 + $0x7c] sm:$0xf]
    %v8043 = vld [vmem:[#allocation12 + $0x80] sm:$0xf]
    %v8044 = vld [vmem:[#allocation12 + $0x84] sm:$0xf]
    %v8045 = vld [vmem:[#allocation12 + $0x88] sm:$0xf]
    %v8046 = vld [vmem:[#allocation12 + $0x8c] sm:$0xf]
    %v8047 = vld [vmem:[#allocation12 + $0x90] sm:$0xf]
    %v8048 = vld [vmem:[#allocation12 + $0x94] sm:$0xf]
    %v8049 = vld [vmem:[#allocation12 + $0x98] sm:$0xf]
    %v8050 = vld [vmem:[#allocation12 + $0x9c] sm:$0xf]
    %v8051 = vld [vmem:[#allocation12 + $0xa0] sm:$0xf]
    %v8052 = vld [vmem:[#allocation12 + $0xa4] sm:$0xf]
    %v8053 = vld [vmem:[#allocation12 + $0xa8] sm:$0xf]
    %v8054 = vld [vmem:[#allocation12 + $0xac] sm:$0xf]
    %v8055 = vld [vmem:[#allocation12 + $0xb0] sm:$0xf]
    %v8056 = vld [vmem:[#allocation12 + $0xb4] sm:$0xf]
    %v8057 = vld [vmem:[#allocation12 + $0xb8] sm:$0xf]
    %v8058 = vld [vmem:[#allocation12 + $0xbc] sm:$0xf]
    %v8059 = vld [vmem:[#allocation12 + $0xc0] sm:$0xf]
    %v8060 = vld [vmem:[#allocation12 + $0xc4] sm:$0xf]
    %v8061 = vld [vmem:[#allocation12 + $0xc8] sm:$0xf]
    %v8062 = vld [vmem:[#allocation12 + $0xcc] sm:$0xf]
    %v8063 = vld [vmem:[#allocation12 + $0xd0] sm:$0xf]
    %v8064 = vld [vmem:[#allocation12 + $0xd4] sm:$0xf]
    %v8065 = vld [vmem:[#allocation12 + $0xd8] sm:$0xf]
    %v8066 = vld [vmem:[#allocation12 + $0xdc] sm:$0xf]
    %v8067 = vld [vmem:[#allocation12 + $0xe0] sm:$0xf]
    %v8068 = vld [vmem:[#allocation12 + $0xe4] sm:$0xf]
    %v8069 = vld [vmem:[#allocation12 + $0xe8] sm:$0xf]
    %v8070 = vld [vmem:[#allocation12 + $0xec] sm:$0xf]
    %v8071 = vld [vmem:[#allocation12 + $0xf0] sm:$0xf]
    %v8072 = vld [vmem:[#allocation12 + $0xf4] sm:$0xf]
    %v8073 = vld [vmem:[#allocation12 + $0xf8] sm:$0xf]
    %v8074 = vld [vmem:[#allocation12 + $0xfc] sm:$0xf]
    %v8075 = vld [vmem:[#allocation12 + $0x100] sm:$0xf]
    %v8076 = vld [vmem:[#allocation12 + $0x104] sm:$0xf]
    %v8077 = vld [vmem:[#allocation12 + $0x108] sm:$0xf]
    %v8078 = vld [vmem:[#allocation12 + $0x10c] sm:$0xf]
    %v8079 = vld [vmem:[#allocation12 + $0x110] sm:$0xf]
    %v8080 = vld [vmem:[#allocation12 + $0x114] sm:$0xf]
    %v8081 = vld [vmem:[#allocation12 + $0x118] sm:$0xf]
    %v8082 = vld [vmem:[#allocation12 + $0x11c] sm:$0xf]
    %v8083 = vld [vmem:[#allocation12 + $0x120] sm:$0xf]
    %v8084 = vld [vmem:[#allocation12 + $0x124] sm:$0xf]
    %v8085 = vld [vmem:[#allocation12 + $0x128] sm:$0xf]
    %v8086 = vld [vmem:[#allocation12 + $0x12c] sm:$0xf]
    %v8087 = vld [vmem:[#allocation12 + $0x130] sm:$0xf]
    %v8088 = vld [vmem:[#allocation12 + $0x134] sm:$0xf]
    %v8089 = vld [vmem:[#allocation12 + $0x138] sm:$0xf]
    %v8090 = vld [vmem:[#allocation12 + $0x13c] sm:$0xf]
    %v8091 = vld [vmem:[#allocation12 + $0x140] sm:$0xf]
    %v8092 = vld [vmem:[#allocation12 + $0x144] sm:$0xf]
    %v8093 = vld [vmem:[#allocation12 + $0x148] sm:$0xf]
    %v8094 = vld [vmem:[#allocation12 + $0x14c] sm:$0xf]
    %v8095 = vld [vmem:[#allocation12 + $0x150] sm:$0xf]
    %v8096 = vld [vmem:[#allocation12 + $0x154] sm:$0xf]
    %v8097 = vld [vmem:[#allocation12 + $0x158] sm:$0xf]
    %v8098 = vld [vmem:[#allocation12 + $0x15c] sm:$0xf]
    %v8099 = vld [vmem:[#allocation12 + $0x160] sm:$0xf]
    %v8100 = vld [vmem:[#allocation12 + $0x164] sm:$0xf]
    %v8101 = vld [vmem:[#allocation12 + $0x168] sm:$0xf]
    %v8102 = vld [vmem:[#allocation12 + $0x16c] sm:$0xf]
    %v8103 = vld [vmem:[#allocation12 + $0x170] sm:$0xf]
    %v8104 = vld [vmem:[#allocation12 + $0x174] sm:$0xf]
    %v8105 = vld [vmem:[#allocation12 + $0x178] sm:$0xf]
    %v8106 = vld [vmem:[#allocation12 + $0x17c] sm:$0xf]
    %v8107 = vld [vmem:[#allocation12 + $0x180] sm:$0xf]
    %v8108 = vld [vmem:[#allocation12 + $0x184] sm:$0xf]
    %v8109 = vld [vmem:[#allocation12 + $0x188] sm:$0xf]
    %v8110 = vld [vmem:[#allocation12 + $0x18c] sm:$0xf]
    %v8111 = vld [vmem:[#allocation12 + $0x190] sm:$0xf]
    %v8112 = vld [vmem:[#allocation12 + $0x194] sm:$0xf]
    %v8113 = vld [vmem:[#allocation12 + $0x198] sm:$0xf]
    %v8114 = vld [vmem:[#allocation12 + $0x19c] sm:$0xf]
    %v8115 = vld [vmem:[#allocation12 + $0x1a0] sm:$0xf]
    %v8116 = vld [vmem:[#allocation12 + $0x1a4] sm:$0xf]
    %v8117 = vld [vmem:[#allocation12 + $0x1a8] sm:$0xf]
    %v8118 = vld [vmem:[#allocation12 + $0x1ac] sm:$0xf]
    %v8119 = vld [vmem:[#allocation12 + $0x1b0] sm:$0xf]
    %v8120 = vld [vmem:[#allocation12 + $0x1b4] sm:$0xf]
    %v8121 = vld [vmem:[#allocation12 + $0x1b8] sm:$0xf]
    %v8122 = vld [vmem:[#allocation12 + $0x1bc] sm:$0xf]
    %v8123 = vld [vmem:[#allocation12 + $0x1c0] sm:$0xf]
    %v8124 = vld [vmem:[#allocation12 + $0x1c4] sm:$0xf]
    %v8125 = vld [vmem:[#allocation12 + $0x1c8] sm:$0xf]
    %v8126 = vld [vmem:[#allocation12 + $0x1cc] sm:$0xf]
    %v8127 = vld [vmem:[#allocation12 + $0x1d0] sm:$0xf]
    %v8128 = vld [vmem:[#allocation12 + $0x1d4] sm:$0xf]
    %v8129 = vld [vmem:[#allocation12 + $0x1d8] sm:$0xf]
    %v8130 = vld [vmem:[#allocation12 + $0x1dc] sm:$0xf]
    %v8131 = vld [vmem:[#allocation12 + $0x1e0] sm:$0xf]
    %v8132 = vld [vmem:[#allocation12 + $0x1e4] sm:$0xf]
    %v8133 = vld [vmem:[#allocation12 + $0x1e8] sm:$0xf]
    %v8134 = vld [vmem:[#allocation12 + $0x1ec] sm:$0xf]
    %v8135 = vld [vmem:[#allocation12 + $0x1f0] sm:$0xf]
    %v8136 = vld [vmem:[#allocation12 + $0x1f4] sm:$0xf]
    %v8137 = vld [vmem:[#allocation12 + $0x1f8] sm:$0xf]
    %v8138 = vld [vmem:[#allocation12 + $0x1fc] sm:$0xf]
    %v8139 = vld [vmem:[%s11] sm:$0x1]
    %v8268 = vunpack.c.l.b16 %v8011
    %v8269 = vunpack.c.l.b16 %v8012
    %v8270 = vunpack.c.l.b16 %v8013
    %v8271 = vunpack.c.l.b16 %v8014
    %v8272 = vunpack.c.l.b16 %v8015
    %v8273 = vunpack.c.l.b16 %v8016
    %v8274 = vunpack.c.l.b16 %v8017
    %v8275 = vunpack.c.l.b16 %v8018
    %v8276 = vunpack.c.l.b16 %v8019
    %v8277 = vunpack.c.l.b16 %v8020
    %v8278 = vunpack.c.l.b16 %v8021
    %v8279 = vunpack.c.l.b16 %v8022
    %v8280 = vunpack.c.l.b16 %v8023
    %v8281 = vunpack.c.l.b16 %v8024
    %v8282 = vunpack.c.l.b16 %v8025
    %v8283 = vunpack.c.l.b16 %v8026
    %v8284 = vunpack.c.l.b16 %v8027
    %v8285 = vunpack.c.l.b16 %v8028
    %v8286 = vunpack.c.l.b16 %v8029
    %v8287 = vunpack.c.l.b16 %v8030
    %v8288 = vunpack.c.l.b16 %v8031
    %v8289 = vunpack.c.l.b16 %v8032
    %v8290 = vunpack.c.l.b16 %v8033
    %v8291 = vunpack.c.l.b16 %v8034
    %v8292 = vunpack.c.l.b16 %v8035
    %v8293 = vunpack.c.l.b16 %v8036
    %v8294 = vunpack.c.l.b16 %v8037
    %v8295 = vunpack.c.l.b16 %v8038
    %v8296 = vunpack.c.l.b16 %v8039
    %v8297 = vunpack.c.l.b16 %v8040
    %v8298 = vunpack.c.l.b16 %v8041
    %v8299 = vunpack.c.l.b16 %v8042
    %v8300 = vunpack.c.l.b16 %v8043
    %v8301 = vunpack.c.l.b16 %v8044
    %v8302 = vunpack.c.l.b16 %v8045
    %v8303 = vunpack.c.l.b16 %v8046
    %v8304 = vunpack.c.l.b16 %v8047
    %v8305 = vunpack.c.l.b16 %v8048
    %v8306 = vunpack.c.l.b16 %v8049
    %v8307 = vunpack.c.l.b16 %v8050
    %v8308 = vunpack.c.l.b16 %v8051
    %v8309 = vunpack.c.l.b16 %v8052
    %v8310 = vunpack.c.l.b16 %v8053
    %v8311 = vunpack.c.l.b16 %v8054
    %v8312 = vunpack.c.l.b16 %v8055
    %v8313 = vunpack.c.l.b16 %v8056
    %v8314 = vunpack.c.l.b16 %v8057
    %v8315 = vunpack.c.l.b16 %v8058
    %v8316 = vunpack.c.l.b16 %v8059
    %v8317 = vunpack.c.l.b16 %v8060
    %v8318 = vunpack.c.l.b16 %v8061
    %v8319 = vunpack.c.l.b16 %v8062
    %v8320 = vunpack.c.l.b16 %v8063
    %v8321 = vunpack.c.l.b16 %v8064
    %v8322 = vunpack.c.l.b16 %v8065
    %v8323 = vunpack.c.l.b16 %v8066
    %v8324 = vunpack.c.l.b16 %v8067
    %v8325 = vunpack.c.l.b16 %v8068
    %v8326 = vunpack.c.l.b16 %v8069
    %v8327 = vunpack.c.l.b16 %v8070
    %v8328 = vunpack.c.l.b16 %v8071
    %v8329 = vunpack.c.l.b16 %v8072
    %v8330 = vunpack.c.l.b16 %v8073
    %v8331 = vunpack.c.l.b16 %v8074
    %v8332 = vunpack.c.l.b16 %v8075
    %v8333 = vunpack.c.l.b16 %v8076
    %v8334 = vunpack.c.l.b16 %v8077
    %v8335 = vunpack.c.l.b16 %v8078
    %v8336 = vunpack.c.l.b16 %v8079
    %v8337 = vunpack.c.l.b16 %v8080
    %v8338 = vunpack.c.l.b16 %v8081
    %v8339 = vunpack.c.l.b16 %v8082
    %v8340 = vunpack.c.l.b16 %v8083
    %v8341 = vunpack.c.l.b16 %v8084
    %v8342 = vunpack.c.l.b16 %v8085
    %v8343 = vunpack.c.l.b16 %v8086
    %v8344 = vunpack.c.l.b16 %v8087
    %v8345 = vunpack.c.l.b16 %v8088
    %v8346 = vunpack.c.l.b16 %v8089
    %v8347 = vunpack.c.l.b16 %v8090
    %v8348 = vunpack.c.l.b16 %v8091
    %v8349 = vunpack.c.l.b16 %v8092
    %v8350 = vunpack.c.l.b16 %v8093
    %v8351 = vunpack.c.l.b16 %v8094
    %v8352 = vunpack.c.l.b16 %v8095
    %v8353 = vunpack.c.l.b16 %v8096
    %v8354 = vunpack.c.l.b16 %v8097
    %v8355 = vunpack.c.l.b16 %v8098
    %v8356 = vunpack.c.l.b16 %v8099
    %v8357 = vunpack.c.l.b16 %v8100
    %v8358 = vunpack.c.l.b16 %v8101
    %v8359 = vunpack.c.l.b16 %v8102
    %v8360 = vunpack.c.l.b16 %v8103
    %v8361 = vunpack.c.l.b16 %v8104
    %v8362 = vunpack.c.l.b16 %v8105
    %v8363 = vunpack.c.l.b16 %v8106
    %v8364 = vunpack.c.l.b16 %v8107
    %v8365 = vunpack.c.l.b16 %v8108
    %v8366 = vunpack.c.l.b16 %v8109
    %v8367 = vunpack.c.l.b16 %v8110
    %v8368 = vunpack.c.l.b16 %v8111
    %v8369 = vunpack.c.l.b16 %v8112
    %v8370 = vunpack.c.l.b16 %v8113
    %v8371 = vunpack.c.l.b16 %v8114
    %v8372 = vunpack.c.l.b16 %v8115
    %v8373 = vunpack.c.l.b16 %v8116
    %v8374 = vunpack.c.l.b16 %v8117
    %v8375 = vunpack.c.l.b16 %v8118
    %v8376 = vunpack.c.l.b16 %v8119
    %v8377 = vunpack.c.l.b16 %v8120
    %v8378 = vunpack.c.l.b16 %v8121
    %v8379 = vunpack.c.l.b16 %v8122
    %v8380 = vunpack.c.l.b16 %v8123
    %v8381 = vunpack.c.l.b16 %v8124
    %v8382 = vunpack.c.l.b16 %v8125
    %v8383 = vunpack.c.l.b16 %v8126
    %v8384 = vunpack.c.l.b16 %v8127
    %v8385 = vunpack.c.l.b16 %v8128
    %v8386 = vunpack.c.l.b16 %v8129
    %v8387 = vunpack.c.l.b16 %v8130
    %v8388 = vunpack.c.l.b16 %v8131
    %v8389 = vunpack.c.l.b16 %v8132
    %v8390 = vunpack.c.l.b16 %v8133
    %v8391 = vunpack.c.l.b16 %v8134
    %v8392 = vunpack.c.l.b16 %v8135
    %v8393 = vunpack.c.l.b16 %v8136
    %v8394 = vunpack.c.l.b16 %v8137
    %v8395 = vunpack.c.l.b16 %v8138
    %v8396 = vpack.c.b16 %v8269, %v8268
    %v8397 = vpack.c.b16 %v8271, %v8270
    %v8398 = vpack.c.b16 %v8273, %v8272
    %v8399 = vpack.c.b16 %v8275, %v8274
    %v8400 = vpack.c.b16 %v8277, %v8276
    %v8401 = vpack.c.b16 %v8279, %v8278
    %v8402 = vpack.c.b16 %v8281, %v8280
    %v8403 = vpack.c.b16 %v8283, %v8282
    %v8404 = vpack.c.b16 %v8285, %v8284
    %v8405 = vpack.c.b16 %v8287, %v8286
    %v8406 = vpack.c.b16 %v8289, %v8288
    %v8407 = vpack.c.b16 %v8291, %v8290
    %v8408 = vpack.c.b16 %v8293, %v8292
    %v8409 = vpack.c.b16 %v8295, %v8294
    %v8410 = vpack.c.b16 %v8297, %v8296
    %v8411 = vpack.c.b16 %v8299, %v8298
    %v8412 = vpack.c.b16 %v8301, %v8300
    %v8413 = vpack.c.b16 %v8303, %v8302
    %v8414 = vpack.c.b16 %v8305, %v8304
    %v8415 = vpack.c.b16 %v8307, %v8306
    %v8416 = vpack.c.b16 %v8309, %v8308
    %v8417 = vpack.c.b16 %v8311, %v8310
    %v8418 = vpack.c.b16 %v8313, %v8312
    %v8419 = vpack.c.b16 %v8315, %v8314
    %v8420 = vpack.c.b16 %v8317, %v8316
    %v8421 = vpack.c.b16 %v8319, %v8318
    %v8422 = vpack.c.b16 %v8321, %v8320
    %v8423 = vpack.c.b16 %v8323, %v8322
    %v8424 = vpack.c.b16 %v8325, %v8324
    %v8425 = vpack.c.b16 %v8327, %v8326
    %v8426 = vpack.c.b16 %v8329, %v8328
    %v8427 = vpack.c.b16 %v8331, %v8330
    %v8428 = vpack.c.b16 %v8333, %v8332
    %v8429 = vpack.c.b16 %v8335, %v8334
    %v8430 = vpack.c.b16 %v8337, %v8336
    %v8431 = vpack.c.b16 %v8339, %v8338
    %v8432 = vpack.c.b16 %v8341, %v8340
    %v8433 = vpack.c.b16 %v8343, %v8342
    %v8434 = vpack.c.b16 %v8345, %v8344
    %v8435 = vpack.c.b16 %v8347, %v8346
    %v8436 = vpack.c.b16 %v8349, %v8348
    %v8437 = vpack.c.b16 %v8351, %v8350
    %v8438 = vpack.c.b16 %v8353, %v8352
    %v8439 = vpack.c.b16 %v8355, %v8354
    %v8440 = vpack.c.b16 %v8357, %v8356
    %v8441 = vpack.c.b16 %v8359, %v8358
    %v8442 = vpack.c.b16 %v8361, %v8360
    %v8443 = vpack.c.b16 %v8363, %v8362
    %v8444 = vpack.c.b16 %v8365, %v8364
    %v8445 = vpack.c.b16 %v8367, %v8366
    %v8446 = vpack.c.b16 %v8369, %v8368
    %v8447 = vpack.c.b16 %v8371, %v8370
    %v8448 = vpack.c.b16 %v8373, %v8372
    %v8449 = vpack.c.b16 %v8375, %v8374
    %v8450 = vpack.c.b16 %v8377, %v8376
    %v8451 = vpack.c.b16 %v8379, %v8378
    %v8452 = vpack.c.b16 %v8381, %v8380
    %v8453 = vpack.c.b16 %v8383, %v8382
    %v8454 = vpack.c.b16 %v8385, %v8384
    %v8455 = vpack.c.b16 %v8387, %v8386
    %v8456 = vpack.c.b16 %v8389, %v8388
    %v8457 = vpack.c.b16 %v8391, %v8390
    %v8458 = vpack.c.b16 %v8393, %v8392
    %v8459 = vpack.c.b16 %v8395, %v8394
    %8524 = vmatprep.subr.bf16.mxu0 0
    %8525 = vmatpush1.bf16.msra.mxu0 %v8396
    %8526 = vmatprep.subr.bf16.mxu0 0
    %8527 = vmatpush1.bf16.msra.mxu0 %v8397
    %8528 = vmatprep.subr.bf16.mxu0 0
    %8529 = vmatpush1.bf16.msra.mxu0 %v8398
    %8530 = vmatprep.subr.bf16.mxu0 0
    %8531 = vmatpush1.bf16.msra.mxu0 %v8399
    %8532 = vmatprep.subr.bf16.mxu0 0
    %8533 = vmatpush1.bf16.msra.mxu0 %v8400
    %8534 = vmatprep.subr.bf16.mxu0 0
    %8535 = vmatpush1.bf16.msra.mxu0 %v8401
    %8536 = vmatprep.subr.bf16.mxu0 0
    %8537 = vmatpush1.bf16.msra.mxu0 %v8402
    %8538 = vmatprep.subr.bf16.mxu0 0
    %8539 = vmatpush1.bf16.msra.mxu0 %v8403
    %8540 = vmatprep.subr.bf16.mxu0 0
    %8541 = vmatpush1.bf16.msra.mxu0 %v8404
    %8542 = vmatprep.subr.bf16.mxu0 0
    %8543 = vmatpush1.bf16.msra.mxu0 %v8405
    %8544 = vmatprep.subr.bf16.mxu0 0
    %8545 = vmatpush1.bf16.msra.mxu0 %v8406
    %8546 = vmatprep.subr.bf16.mxu0 0
    %8547 = vmatpush1.bf16.msra.mxu0 %v8407
    %8548 = vmatprep.subr.bf16.mxu0 0
    %8549 = vmatpush1.bf16.msra.mxu0 %v8408
    %8550 = vmatprep.subr.bf16.mxu0 0
    %8551 = vmatpush1.bf16.msra.mxu0 %v8409
    %8552 = vmatprep.subr.bf16.mxu0 0
    %8553 = vmatpush1.bf16.msra.mxu0 %v8410
    %8554 = vmatprep.subr.bf16.mxu0 0
    %8555 = vmatpush1.bf16.msra.mxu0 %v8411
    %8556 = vmatprep.mubr.bf16.mxu0 %v8004
    %8557 = vmatmul.mubr.bf16.gmra.mrb[0].mxu0 %v8003
    %v8558 = vpop.f32.mrb[0].mxu0
    %v8559 = vadd.f32 %v8139, %v8558
    %v8560 = vpop.f32.mrb[0].mxu0
    %v8561 = vpop.f32.mrb[0].mxu0
    %v8562 = vpop.f32.mrb[0].mxu0
    %8563 = vdwg.mxu0
    %8564 = vmatprep.subr.bf16.mxu0 0
    %8565 = vmatpush1.bf16.msra.mxu0 %v8412
    %8566 = vmatprep.subr.bf16.mxu0 0
    %8567 = vmatpush1.bf16.msra.mxu0 %v8413
    %8568 = vmatprep.subr.bf16.mxu0 0
    %8569 = vmatpush1.bf16.msra.mxu0 %v8414
    %8570 = vmatprep.subr.bf16.mxu0 0
    %8571 = vmatpush1.bf16.msra.mxu0 %v8415
    %8572 = vmatprep.subr.bf16.mxu0 0
    %8573 = vmatpush1.bf16.msra.mxu0 %v8416
    %8574 = vmatprep.subr.bf16.mxu0 0
    %8575 = vmatpush1.bf16.msra.mxu0 %v8417
    %8576 = vmatprep.subr.bf16.mxu0 0
    %8577 = vmatpush1.bf16.msra.mxu0 %v8418
    %8578 = vmatprep.subr.bf16.mxu0 0
    %8579 = vmatpush1.bf16.msra.mxu0 %v8419
    %8580 = vmatprep.subr.bf16.mxu0 0
    %8581 = vmatpush1.bf16.msra.mxu0 %v8420
    %8582 = vmatprep.subr.bf16.mxu0 0
    %8583 = vmatpush1.bf16.msra.mxu0 %v8421
    %8584 = vmatprep.subr.bf16.mxu0 0
    %8585 = vmatpush1.bf16.msra.mxu0 %v8422
    %8586 = vmatprep.subr.bf16.mxu0 0
    %8587 = vmatpush1.bf16.msra.mxu0 %v8423
    %8588 = vmatprep.subr.bf16.mxu0 0
    %8589 = vmatpush1.bf16.msra.mxu0 %v8424
    %8590 = vmatprep.subr.bf16.mxu0 0
    %8591 = vmatpush1.bf16.msra.mxu0 %v8425
    %8592 = vmatprep.subr.bf16.mxu0 0
    %8593 = vmatpush1.bf16.msra.mxu0 %v8426
    %8594 = vmatprep.subr.bf16.mxu0 0
    %8595 = vmatpush1.bf16.msra.mxu0 %v8427
    %8596 = vmatprep.mubr.bf16.mxu0 %v8006
    %8597 = vmatmul.mubr.bf16.gmra.mrb[0].mxu0 %v8005
    %v8598 = vpop.f32.mrb[0].mxu0
    %v8599 = vadd.f32 %v8559, %v8598
    %v8600 = vpop.f32.mrb[0].mxu0
    %v8601 = vpop.f32.mrb[0].mxu0
    %v8602 = vpop.f32.mrb[0].mxu0
    %8603 = vdwg.mxu0
    %8604 = vmatprep.subr.bf16.mxu0 0
    %8605 = vmatpush1.bf16.msra.mxu0 %v8428
    %8606 = vmatprep.subr.bf16.mxu0 0
    %8607 = vmatpush1.bf16.msra.mxu0 %v8429
    %8608 = vmatprep.subr.bf16.mxu0 0
    %8609 = vmatpush1.bf16.msra.mxu0 %v8430
    %8610 = vmatprep.subr.bf16.mxu0 0
    %8611 = vmatpush1.bf16.msra.mxu0 %v8431
    %8612 = vmatprep.subr.bf16.mxu0 0
    %8613 = vmatpush1.bf16.msra.mxu0 %v8432
    %8614 = vmatprep.subr.bf16.mxu0 0
    %8615 = vmatpush1.bf16.msra.mxu0 %v8433
    %8616 = vmatprep.subr.bf16.mxu0 0
    %8617 = vmatpush1.bf16.msra.mxu0 %v8434
    %8618 = vmatprep.subr.bf16.mxu0 0
    %8619 = vmatpush1.bf16.msra.mxu0 %v8435
    %8620 = vmatprep.subr.bf16.mxu0 0
    %8621 = vmatpush1.bf16.msra.mxu0 %v8436
    %8622 = vmatprep.subr.bf16.mxu0 0
    %8623 = vmatpush1.bf16.msra.mxu0 %v8437
    %8624 = vmatprep.subr.bf16.mxu0 0
    %8625 = vmatpush1.bf16.msra.mxu0 %v8438
    %8626 = vmatprep.subr.bf16.mxu0 0
    %8627 = vmatpush1.bf16.msra.mxu0 %v8439
    %8628 = vmatprep.subr.bf16.mxu0 0
    %8629 = vmatpush1.bf16.msra.mxu0 %v8440
    %8630 = vmatprep.subr.bf16.mxu0 0
    %8631 = vmatpush1.bf16.msra.mxu0 %v8441
    %8632 = vmatprep.subr.bf16.mxu0 0
    %8633 = vmatpush1.bf16.msra.mxu0 %v8442
    %8634 = vmatprep.subr.bf16.mxu0 0
    %8635 = vmatpush1.bf16.msra.mxu0 %v8443
    %8636 = vmatprep.mubr.bf16.mxu0 %v8008
    %8637 = vmatmul.mubr.bf16.gmra.mrb[0].mxu0 %v8007
    %v8638 = vpop.f32.mrb[0].mxu0
    %v8639 = vadd.f32 %v8599, %v8638
    %v8640 = vpop.f32.mrb[0].mxu0
    %v8641 = vpop.f32.mrb[0].mxu0
    %v8642 = vpop.f32.mrb[0].mxu0
    %8643 = vdwg.mxu0
    %8644 = vmatprep.subr.bf16.mxu0 0
    %8645 = vmatpush1.bf16.msra.mxu0 %v8444
    %8646 = vmatprep.subr.bf16.mxu0 0
    %8647 = vmatpush1.bf16.msra.mxu0 %v8445
    %8648 = vmatprep.subr.bf16.mxu0 0
    %8649 = vmatpush1.bf16.msra.mxu0 %v8446
    %8650 = vmatprep.subr.bf16.mxu0 0
    %8651 = vmatpush1.bf16.msra.mxu0 %v8447
    %8652 = vmatprep.subr.bf16.mxu0 0
    %8653 = vmatpush1.bf16.msra.mxu0 %v8448
    %8654 = vmatprep.subr.bf16.mxu0 0
    %8655 = vmatpush1.bf16.msra.mxu0 %v8449
    %8656 = vmatprep.subr.bf16.mxu0 0
    %8657 = vmatpush1.bf16.msra.mxu0 %v8450
    %8658 = vmatprep.subr.bf16.mxu0 0
    %8659 = vmatpush1.bf16.msra.mxu0 %v8451
    %8660 = vmatprep.subr.bf16.mxu0 0
    %8661 = vmatpush1.bf16.msra.mxu0 %v8452
    %8662 = vmatprep.subr.bf16.mxu0 0
    %8663 = vmatpush1.bf16.msra.mxu0 %v8453
    %8664 = vmatprep.subr.bf16.mxu0 0
    %8665 = vmatpush1.bf16.msra.mxu0 %v8454
    %8666 = vmatprep.subr.bf16.mxu0 0
    %8667 = vmatpush1.bf16.msra.mxu0 %v8455
    %8668 = vmatprep.subr.bf16.mxu0 0
    %8669 = vmatpush1.bf16.msra.mxu0 %v8456
    %8670 = vmatprep.subr.bf16.mxu0 0
    %8671 = vmatpush1.bf16.msra.mxu0 %v8457
    %8672 = vmatprep.subr.bf16.mxu0 0
    %8673 = vmatpush1.bf16.msra.mxu0 %v8458
    %8674 = vmatprep.subr.bf16.mxu0 0
    %8675 = vmatpush1.bf16.msra.mxu0 %v8459
    %8676 = vmatprep.mubr.bf16.mxu0 %v8010
    %8677 = vmatmul.mubr.bf16.gmra.mrb[0].mxu0 %v8009
    %v8678 = vpop.f32.mrb[0].mxu0
    %v8679 = vadd.f32 %v8639, %v8678
    %v8680 = vpop.f32.mrb[0].mxu0
    %v8681 = vpop.f32.mrb[0].mxu0
    %v8682 = vpop.f32.mrb[0].mxu0
    %8683 = vdwg.mxu0
    %v8684 = vxor.u32 %v8679, 2147483648
    %v8685 = vmul.f32 %v8684, 1.442695
    %v8686 = vpow.pop %v8685
    %v8687 = vadd.f32 %v8686, 1.0
    %v8688 = vrcp.pop %v8687
    %v8689 = vmul.f32 1.0, %v8688
    %8690 = vst [vmem:[#allocation14 + $0x1] sm:$0x1] %v8689
    // Predicated region
    $region74: #{tpu_custom_call.1} parent=1 // pred_check
      _
    $region75: #{tpu_custom_call.1} parent=1 // pred_check_branch
      %8692 = sbr.rel (0) target = $region77
    $region76: #{tpu_custom_call.1} parent=1 // pred_region
      %s8694 = ssub.s32 32, 32
      %8695 = vsyncadd [#allocation5], %s8694
      %s8697 = sshll.u32 [#allocation14], 4
      %s8698 = int_to_ptr.vmem [resolvable:$true] %s8697
      %8700 = dma.vmem_to_hbm [thread:$0]  %s8698, 32, %s12, [#allocation5]
    $region77: #{tpu_custom_call.1} parent=1 // pred_fallthru
      _
    // Predicated region
    $region78: #{tpu_custom_call.1} parent=1 // pred_check
      _
    $region79: #{tpu_custom_call.1} parent=1 // pred_check_branch
      %8702 = sbr.rel (0) target = $region81
    $region80: #{tpu_custom_call.1} parent=1 // pred_region
      %8703 = dma.done [#allocation5], 32
    $region81: #{tpu_custom_call.1} parent=1 // pred_fallthru
      _
    %8704 = vsyncpa [#allocation4], 1
    %8705 = vsyncpa [#allocation7], 1
    %8706 = vsyncpa [#allocation10], 1
    %8707 = vsyncpa [#allocation13], 1
    %8708 = vsyncpa [#allocation5], 1

</llo_original>
